<compile_context>
chip_gen: v5e
topology: v5e:2x2
jax: 0.10.0
libtpu: 0.0.40
codegen_flags: <defaults>
</compile_context>

<pallas_src>
import jax
import jax.numpy as jnp
from jax import lax
from jax.experimental import pallas as pl
from jax.experimental.pallas import tpu as pltpu

F32 = jnp.float32
BF16 = jnp.bfloat16


# ----------------------------------------------------------------------------
# In-kernel helpers (spatial-major (H, W, bt, C) activations; values in VMEM)
# ----------------------------------------------------------------------------
def _maxpool2x2(x):
    """2x2 max-pool, stride 2, on (H, W, bt, C) f32 -> (H/2, W/2, bt, C).
    Two 5-D relabel-reshapes + max over a middle axis (minor dims untouched)."""
    H, W, bt, C = x.shape
    x = jnp.max(x.reshape(H, W // 2, 2, bt, C), axis=2)       # pool W
    x = jnp.max(x.reshape(H // 2, 2, W // 2, bt, C), axis=1)  # pool H
    return x


def _conv3x3(x, w_ref, b_ref):
    """3x3 / stride 1 / SAME conv as 3 accumulated MXU dots (one per dy).

    x: (H, W, bt, C) bf16 (already cast).  w_ref: (9*C, Cout) bf16, rows ordered
    (dy, dx, cin).  Returns (H*W*bt, Cout) f32 pre-activation (+bias).
    Only a 3x (not 9x) im2col duplication: per dy, the 3 dx windows are
    concatenated along channels -> K=192 slab.
    """
    H, W, bt, C = x.shape
    cout = w_ref.shape[1]
    zc = jnp.zeros((H, 1, bt, C), BF16)
    xp = jnp.concatenate([zc, x, zc], axis=1)                 # (H, W+2, bt, C)
    zr = jnp.zeros((1, W + 2, bt, C), BF16)
    xp = jnp.concatenate([zr, xp, zr], axis=0)                # (H+2, W+2, bt, C)

    acc = None
    for dy in range(3):
        slab = jnp.concatenate(
            [xp[dy:dy + H, dx:dx + W] for dx in range(3)], axis=3)   # (H,W,bt,3C)
        slab = slab.reshape(H * W * bt, 3 * C)                        # relabel only
        part = jnp.dot(slab, w_ref[dy * 3 * C:(dy + 1) * 3 * C, :],
                       preferred_element_type=F32)
        acc = part if acc is None else acc + part
    return acc + b_ref[...]


# ----------------------------------------------------------------------------
# Fused kernel: conv2 -> pool -> conv3 -> conv4 -> linear1 -> linear2
# ----------------------------------------------------------------------------
def _fused_kernel(act1_ref, w2_ref, b2_ref, w3_ref, b3_ref, w4_ref, b4_ref,
                  wl1_ref, bl1_ref, wl2_ref, bl2_ref,
                  out_ref, f2_ref, f4_ref):
    bt = act1_ref.shape[1]

    # conv2 on the pooled 14x14 activation (f2 returned pre-ReLU, bf16).
    a = act1_ref[...].reshape(14, 14, bt, 64)                 # bf16, relabel only
    f2 = _conv3x3(a, w2_ref, b2_ref)                          # (196*bt, 64) f32
    f2_ref[...] = f2.astype(BF16).reshape(196, bt, 64)

    a = _maxpool2x2(jnp.maximum(f2, 0.0).reshape(14, 14, bt, 64))   # (7,7,bt,64) f32

    # conv3 + ReLU, then conv4 (f4 returned pre-ReLU, bf16).
    a = _conv3x3(a.astype(BF16), w3_ref, b3_ref)              # (49*bt, 64) f32
    a = jnp.maximum(a, 0.0).reshape(7, 7, bt, 64)
    f4 = _conv3x3(a.astype(BF16), w4_ref, b4_ref)             # (49*bt, 64) f32
    f4_ref[...] = f4.astype(BF16).reshape(49, bt, 64)

    # ReLU + linear1 as a batched contraction over the 49 spatial positions:
    # out[b,j] = sum_s sum_c h3[s,b,c] * wl1[s,c,j]   (wl1 pre-permuted to HWC order)
    h3 = jnp.maximum(f4, 0.0).reshape(49, bt, 64).astype(BF16)
    part = lax.dot_general(h3, wl1_ref[...],
                           dimension_numbers=(((2,), (1,)), ((0,), (0,))),
                           preferred_element_type=F32)        # (49, bt, 64)
    h = jnp.maximum(jnp.sum(part, axis=0) + bl1_ref[...], 0.0)       # (bt, 64)

    logits = jnp.dot(h.astype(BF16), wl2_ref[...], preferred_element_type=F32)
    out_ref[...] = logits + bl2_ref[...]                      # (bt, 10) f32


# ----------------------------------------------------------------------------
# Wrapper
# ----------------------------------------------------------------------------
def _conv1_pool(x_nchw, w1, b1):
    """conv1 (Cin=1) + ReLU + 2x2 pool in XLA (review option (a)):
    (B,1,28,28) f32 -> spatial-major pooled activation (196, B, 64) bf16."""
    B = x_nchw.shape[0]
    img = x_nchw[:, 0, :, :]
    xp = jnp.pad(img, ((0, 0), (1, 1), (1, 1)))
    cols = [xp[:, dy:dy + 28, dx:dx + 28] for dy in range(3) for dx in range(3)]
    patches = jnp.stack(cols, axis=-1).reshape(B * 784, 9).astype(BF16)
    y = jnp.dot(patches, w1, preferred_element_type=F32) + b1
    y = jnp.maximum(y, 0.0).reshape(B, 28, 28, 64)
    # relu(pool(relu(x))) == pool(relu(x)): the second ReLU in the graph is a no-op.
    y = jnp.max(y.reshape(B, 14, 2, 14, 2, 64), axis=(2, 4))         # (B,14,14,64)
    return jnp.transpose(y, (1, 2, 0, 3)).reshape(196, B, 64).astype(BF16)


def _pick_tiling(B):
    """Per-generation batch tile + VMEM limit.  Working set ~1.2 MB/image."""
    kind = ""
    try:
        kind = jax.devices()[0].device_kind.lower()
    except Exception:
        pass
    if ("v5" in kind) or ("v6" in kind):          # 128 MiB physical VMEM
        vmem_limit, cap = 96 * 1024 * 1024, 32
    elif ("v7" in kind) or ("7x" in kind):        # 64 MiB physical VMEM
        vmem_limit, cap = 48 * 1024 * 1024, 16
    else:                                         # unknown: stay conservative
        vmem_limit, cap = 32 * 1024 * 1024, 8
    if B <= cap:
        return B, B, vmem_limit                   # single step, block == full dims
    Bp = ((B + 7) // 8) * 8                       # pad so a multiple-of-8 tile exists
    bt = 8
    for cand in range(8, cap + 1, 8):
        if Bp % cand == 0:
            bt = cand
    return Bp, bt, vmem_limit


def neural_net_forward(x_nchw, kp):
    """x_nchw: (B,1,28,28) f32.  kp: kernel-layout params (see prepare_params).
    Returns (logits (B,10), f2 (B,64,14,14), f4 (B,64,7,7)) like the PyTorch module."""
    B = x_nchw.shape[0]
    Bp, bt, vmem_limit = _pick_tiling(B)
    if Bp != B:
        x_nchw = jnp.pad(x_nchw, ((0, Bp - B), (0, 0), (0, 0), (0, 0)))

    act1 = _conv1_pool(x_nchw, kp["w1"], kp["b1"])            # (196, Bp, 64) bf16

    def whole(name):
        rank = len(kp[name].shape)
        return pl.BlockSpec(kp[name].shape, lambda i, _r=rank: (0,) * _r)

    param_order = ("w2", "b2", "w3", "b3", "w4", "b4", "wl1", "bl1", "wl2", "bl2")
    in_specs = [pl.BlockSpec((196, bt, 64), lambda i: (0, i, 0))]
    in_specs += [whole(n) for n in param_order]

    out_shape = (
        jax.ShapeDtypeStruct((Bp, 10), F32),        # logits
        jax.ShapeDtypeStruct((196, Bp, 64), BF16),  # f2, spatial-major, bf16
        jax.ShapeDtypeStruct((49, Bp, 64), BF16),   # f4, spatial-major, bf16
    )
    out_specs = (
        pl.BlockSpec((bt, 10), lambda i: (i, 0)),
        pl.BlockSpec((196, bt, 64), lambda i: (0, i, 0)),
        pl.BlockSpec((49, bt, 64), lambda i: (0, i, 0)),
    )

    logits, f2s, f4s = pl.pallas_call(
        _fused_kernel,
        out_shape=out_shape,
        grid=(Bp // bt,),
        in_specs=in_specs,
        out_specs=out_specs,
        compiler_params=pltpu.CompilerParams(
            dimension_semantics=("parallel",),
            vmem_limit_bytes=vmem_limit),
    )(act1, *[kp[n] for n in param_order])

    out = logits[:B]
    f2 = f2s[:, :B, :].astype(F32).reshape(14, 14, B, 64).transpose(2, 3, 0, 1)
    f4 = f4s[:, :B, :].astype(F32).reshape(7, 7, B, 64).transpose(2, 3, 0, 1)
    return out, f2, f4


# ----------------------------------------------------------------------------
# Parameters (PyTorch layouts) and one-time conversion to kernel layouts
# ----------------------------------------------------------------------------
def init_torch_params(key):
    ks = jax.random.split(key, 12)
    s = 0.05
    return {
        "conv1_w": s * jax.random.normal(ks[0], (64, 1, 3, 3), F32),
        "conv1_b": s * jax.random.normal(ks[1], (64,), F32),
        "conv2_w": s * jax.random.normal(ks[2], (64, 64, 3, 3), F32),
        "conv2_b": s * jax.random.normal(ks[3], (64,), F32),
        "conv3_w": s * jax.random.normal(ks[4], (64, 64, 3, 3), F32),
        "conv3_b": s * jax.random.normal(ks[5], (64,), F32),
        "conv4_w": s * jax.random.normal(ks[6], (64, 64, 3, 3), F32),
        "conv4_b": s * jax.random.normal(ks[7], (64,), F32),
        "lin1_w": s * jax.random.normal(ks[8], (64, 64 * 7 * 7), F32),
        "lin1_b": s * jax.random.normal(ks[9], (64,), F32),
        "lin2_w": s * jax.random.normal(ks[10], (10, 64), F32),
        "lin2_b": s * jax.random.normal(ks[11], (10,), F32),
    }


def prepare_params(tp):
    """PyTorch layouts -> kernel layouts (done once, e.g. at checkpoint load)."""
    def conv_w(w):       # (Cout, Cin, 3, 3) -> (9*Cin, Cout), row order (dy, dx, cin)
        cout = w.shape[0]
        return jnp.transpose(w, (2, 3, 1, 0)).reshape(-1, cout).astype(BF16)

    def bias(b):
        return b.reshape(1, -1).astype(F32)

    # linear1: PyTorch flattens NCHW (c*49 + h*7 + w); the kernel contracts a
    # spatial-major (s=h*7+w, cin) activation, so reorder the rows once here and
    # expose them as (49, cin, cout) for the batched dot.
    wl1 = jnp.transpose(tp["lin1_w"].reshape(64, 64, 7, 7), (2, 3, 1, 0))
    wl1 = wl1.reshape(49, 64, 64).astype(BF16)

    return {
        "w1": conv_w(tp["conv1_w"]), "b1": bias(tp["conv1_b"]),
        "w2": conv_w(tp["conv2_w"]), "b2": bias(tp["conv2_b"]),
        "w3": conv_w(tp["conv3_w"]), "b3": bias(tp["conv3_b"]),
        "w4": conv_w(tp["conv4_w"]), "b4": bias(tp["conv4_b"]),
        "wl1": wl1, "bl1": bias(tp["lin1_b"]),
        "wl2": jnp.transpose(tp["lin2_w"]).astype(BF16), "bl2": bias(tp["lin2_b"]),
    }


# ----------------------------------------------------------------------------
# Pure-XLA reference with the same bf16-operand / f32-accumulate policy
# ----------------------------------------------------------------------------
def reference_forward(x_nchw, tp):
    def conv(x, w, b):
        y = lax.conv_general_dilated(
            x.astype(BF16), w.astype(BF16), window_strides=(1, 1),
            padding=((1, 1), (1, 1)), dimension_numbers=("NCHW", "OIHW", "NCHW"),
            preferred_element_type=F32)
        return y + b.reshape(1, -1, 1, 1)

    def pool(t):
        return lax.reduce_window(t, -jnp.inf, lax.max,
                                 (1, 1, 2, 2), (1, 1, 2, 2), "VALID")

    relu = lambda t: jnp.maximum(t, 0.0)
    B = x_nchw.shape[0]
    out = relu(conv(x_nchw, tp["conv1_w"], tp["conv1_b"]))
    out = relu(pool(out))
    f2 = conv(out, tp["conv2_w"], tp["conv2_b"])
    out = pool(relu(f2))
    out = relu(conv(out, tp["conv3_w"], tp["conv3_b"]))
    f4 = conv(out, tp["conv4_w"], tp["conv4_b"])
    out = relu(f4).reshape(B, -1)
    out = relu(jnp.dot(out.astype(BF16), tp["lin1_w"].T.astype(BF16),
                       preferred_element_type=F32) + tp["lin1_b"])
    out = jnp.dot(out.astype(BF16), tp["lin2_w"].T.astype(BF16),
                  preferred_element_type=F32) + tp["lin2_b"]
    return out, f2, f4


if __name__ == "__main__":
    import numpy as np

    key = jax.random.PRNGKey(0)
    kx, kw = jax.random.split(key)
    B = 2
    # The module's linear layer (64*7*7 inputs) fixes the spatial size at 28x28.
    x = jax.random.normal(kx, (B, 1, 28, 28), F32)

    torch_params = init_torch_params(kw)
    kparams = prepare_params(torch_params)

    fwd = jax.jit(neural_net_forward)
    out, f2, f4 = fwd(x, kparams)
    jax.block_until_ready((out, f2, f4))

    assert out.shape == (B, 10)
    assert f2.shape == (B, 64, 14, 14)
    assert f4.shape == (B, 64, 7, 7)

    # Cross-check against the pure-XLA reference (same bf16 matmul policy).
    r_out, r_f2, r_f4 = jax.jit(reference_forward)(x, torch_params)
    np.testing.assert_allclose(np.asarray(out), np.asarray(r_out), rtol=5e-2, atol=5e-3)
    np.testing.assert_allclose(np.asarray(f2), np.asarray(r_f2), rtol=5e-2, atol=5e-3)
    np.testing.assert_allclose(np.asarray(f4), np.asarray(r_f4), rtol=5e-2, atol=5e-3)

    print("KERNEL_OK")
</pallas_src>

<mosaic_0001>
module attributes {stable_mosaic.version = 11 : i64} {
  func.func @_fused_kernel(%arg0: i32, %arg1: memref<196x2x64xbf16, #tpu.memory_space<vmem>>, %arg2: memref<576x64xbf16, #tpu.memory_space<vmem>>, %arg3: memref<1x64xf32, #tpu.memory_space<vmem>>, %arg4: memref<576x64xbf16, #tpu.memory_space<vmem>>, %arg5: memref<1x64xf32, #tpu.memory_space<vmem>>, %arg6: memref<576x64xbf16, #tpu.memory_space<vmem>>, %arg7: memref<1x64xf32, #tpu.memory_space<vmem>>, %arg8: memref<49x64x64xbf16, #tpu.memory_space<vmem>>, %arg9: memref<1x64xf32, #tpu.memory_space<vmem>>, %arg10: memref<64x10xbf16, #tpu.memory_space<vmem>>, %arg11: memref<1x10xf32, #tpu.memory_space<vmem>>, %arg12: memref<2x10xf32, #tpu.memory_space<vmem>>, %arg13: memref<196x2x64xbf16, #tpu.memory_space<vmem>>, %arg14: memref<49x2x64xbf16, #tpu.memory_space<vmem>>) attributes {dimension_semantics = [#tpu.dimension_semantics<parallel>], iteration_bounds = array<i64: 1>, scalar_prefetch = 0 : i64, scratch_operands = 0 : i64, tpu.core_type = #tpu.core_type<tc>, window_params = [{transform_indices = @transform_0, window_bounds = array<i64: 196, 2, 64>}, {pipeline_mode = #tpu.pipeline_mode<synchronous>, transform_indices = @transform_1, window_bounds = array<i64: 576, 64>}, {pipeline_mode = #tpu.pipeline_mode<synchronous>, transform_indices = @transform_2, window_bounds = array<i64: 1, 64>}, {pipeline_mode = #tpu.pipeline_mode<synchronous>, transform_indices = @transform_3, window_bounds = array<i64: 576, 64>}, {pipeline_mode = #tpu.pipeline_mode<synchronous>, transform_indices = @transform_4, window_bounds = array<i64: 1, 64>}, {pipeline_mode = #tpu.pipeline_mode<synchronous>, transform_indices = @transform_5, window_bounds = array<i64: 576, 64>}, {pipeline_mode = #tpu.pipeline_mode<synchronous>, transform_indices = @transform_6, window_bounds = array<i64: 1, 64>}, {pipeline_mode = #tpu.pipeline_mode<synchronous>, transform_indices = @transform_7, window_bounds = array<i64: 49, 64, 64>}, {pipeline_mode = #tpu.pipeline_mode<synchronous>, transform_indices = @transform_8, window_bounds = array<i64: 1, 64>}, {pipeline_mode = #tpu.pipeline_mode<synchronous>, transform_indices = @transform_9, window_bounds = array<i64: 64, 10>}, {pipeline_mode = #tpu.pipeline_mode<synchronous>, transform_indices = @transform_10, window_bounds = array<i64: 1, 10>}, {transform_indices = @transform_11, window_bounds = array<i64: 2, 10>}, {transform_indices = @transform_12, window_bounds = array<i64: 196, 2, 64>}, {transform_indices = @transform_13, window_bounds = array<i64: 49, 2, 64>}]} {
    %c0 = arith.constant 0 : index
    %c0_0 = arith.constant 0 : index
    %c0_1 = arith.constant 0 : index
    %0 = vector.load %arg1[%c0, %c0_0, %c0_1] : memref<196x2x64xbf16, #tpu.memory_space<vmem>>, vector<196x2x64xbf16>
    %1 = vector.shape_cast %0 : vector<196x2x64xbf16> to vector<14x14x2x64xbf16>
    %cst = arith.constant 0.000000e+00 : bf16
    %2 = vector.broadcast %cst : bf16 to vector<14x1x2x64xbf16>
    %3 = tpu.concatenate %2, %1, %2 in 1 : vector<14x1x2x64xbf16>, vector<14x14x2x64xbf16>, vector<14x1x2x64xbf16> -> vector<14x16x2x64xbf16>
    %cst_2 = arith.constant 0.000000e+00 : bf16
    %4 = vector.broadcast %cst_2 : bf16 to vector<1x16x2x64xbf16>
    %5 = tpu.concatenate %4, %3, %4 in 0 : vector<1x16x2x64xbf16>, vector<14x16x2x64xbf16>, vector<1x16x2x64xbf16> -> vector<16x16x2x64xbf16>
    %6 = vector.extract_strided_slice %5 {offsets = [0, 0, 0, 0], sizes = [14, 14, 2, 64], strides = [1, 1, 1, 1]} : vector<16x16x2x64xbf16> to vector<14x14x2x64xbf16>
    %7 = vector.extract_strided_slice %5 {offsets = [0, 1, 0, 0], sizes = [14, 14, 2, 64], strides = [1, 1, 1, 1]} : vector<16x16x2x64xbf16> to vector<14x14x2x64xbf16>
    %8 = vector.extract_strided_slice %5 {offsets = [0, 2, 0, 0], sizes = [14, 14, 2, 64], strides = [1, 1, 1, 1]} : vector<16x16x2x64xbf16> to vector<14x14x2x64xbf16>
    %9 = tpu.concatenate %6, %7, %8 in 3 : vector<14x14x2x64xbf16>, vector<14x14x2x64xbf16>, vector<14x14x2x64xbf16> -> vector<14x14x2x192xbf16>
    %10 = vector.shape_cast %9 : vector<14x14x2x192xbf16> to vector<392x192xbf16>
    %c0_3 = arith.constant 0 : index
    %c0_4 = arith.constant 0 : index
    %11 = vector.load %arg2[%c0_3, %c0_4] : memref<576x64xbf16, #tpu.memory_space<vmem>>, vector<192x64xbf16>
    %cst_5 = arith.constant dense<0.000000e+00> : vector<392x64xf32>
    %12 = tpu.matmul %10, %11, %cst_5 {dimension_numbers = #tpu.dot_dimension_numbers<[1], [0], [0], [1], [0, 0, 1, 1], [], []>} : vector<392x192xbf16>, vector<192x64xbf16>, vector<392x64xf32> -> vector<392x64xf32>
    %13 = vector.extract_strided_slice %5 {offsets = [1, 0, 0, 0], sizes = [14, 14, 2, 64], strides = [1, 1, 1, 1]} : vector<16x16x2x64xbf16> to vector<14x14x2x64xbf16>
    %14 = vector.extract_strided_slice %5 {offsets = [1, 1, 0, 0], sizes = [14, 14, 2, 64], strides = [1, 1, 1, 1]} : vector<16x16x2x64xbf16> to vector<14x14x2x64xbf16>
    %15 = vector.extract_strided_slice %5 {offsets = [1, 2, 0, 0], sizes = [14, 14, 2, 64], strides = [1, 1, 1, 1]} : vector<16x16x2x64xbf16> to vector<14x14x2x64xbf16>
    %16 = tpu.concatenate %13, %14, %15 in 3 : vector<14x14x2x64xbf16>, vector<14x14x2x64xbf16>, vector<14x14x2x64xbf16> -> vector<14x14x2x192xbf16>
    %17 = vector.shape_cast %16 : vector<14x14x2x192xbf16> to vector<392x192xbf16>
    %c192 = arith.constant 192 : index
    %c0_6 = arith.constant 0 : index
    %18 = vector.load %arg2[%c192, %c0_6] : memref<576x64xbf16, #tpu.memory_space<vmem>>, vector<192x64xbf16>
    %cst_7 = arith.constant dense<0.000000e+00> : vector<392x64xf32>
    %19 = tpu.matmul %17, %18, %cst_7 {dimension_numbers = #tpu.dot_dimension_numbers<[1], [0], [0], [1], [0, 0, 1, 1], [], []>} : vector<392x192xbf16>, vector<192x64xbf16>, vector<392x64xf32> -> vector<392x64xf32>
    %20 = arith.addf %12, %19 : vector<392x64xf32>
    %21 = vector.extract_strided_slice %5 {offsets = [2, 0, 0, 0], sizes = [14, 14, 2, 64], strides = [1, 1, 1, 1]} : vector<16x16x2x64xbf16> to vector<14x14x2x64xbf16>
    %22 = vector.extract_strided_slice %5 {offsets = [2, 1, 0, 0], sizes = [14, 14, 2, 64], strides = [1, 1, 1, 1]} : vector<16x16x2x64xbf16> to vector<14x14x2x64xbf16>
    %23 = vector.extract_strided_slice %5 {offsets = [2, 2, 0, 0], sizes = [14, 14, 2, 64], strides = [1, 1, 1, 1]} : vector<16x16x2x64xbf16> to vector<14x14x2x64xbf16>
    %24 = tpu.concatenate %21, %22, %23 in 3 : vector<14x14x2x64xbf16>, vector<14x14x2x64xbf16>, vector<14x14x2x64xbf16> -> vector<14x14x2x192xbf16>
    %25 = vector.shape_cast %24 : vector<14x14x2x192xbf16> to vector<392x192xbf16>
    %c384 = arith.constant 384 : index
    %c0_8 = arith.constant 0 : index
    %26 = vector.load %arg2[%c384, %c0_8] : memref<576x64xbf16, #tpu.memory_space<vmem>>, vector<192x64xbf16>
    %cst_9 = arith.constant dense<0.000000e+00> : vector<392x64xf32>
    %27 = tpu.matmul %25, %26, %cst_9 {dimension_numbers = #tpu.dot_dimension_numbers<[1], [0], [0], [1], [0, 0, 1, 1], [], []>} : vector<392x192xbf16>, vector<192x64xbf16>, vector<392x64xf32> -> vector<392x64xf32>
    %28 = arith.addf %20, %27 : vector<392x64xf32>
    %c0_10 = arith.constant 0 : index
    %c0_11 = arith.constant 0 : index
    %29 = vector.load %arg3[%c0_10, %c0_11] : memref<1x64xf32, #tpu.memory_space<vmem>>, vector<1x64xf32>
    %30 = vector.broadcast %29 : vector<1x64xf32> to vector<392x64xf32>
    %31 = arith.addf %28, %30 : vector<392x64xf32>
    %32 = arith.truncf %31 : vector<392x64xf32> to vector<392x64xbf16>
    %33 = vector.shape_cast %32 : vector<392x64xbf16> to vector<196x2x64xbf16>
    %c0_12 = arith.constant 0 : index
    %c0_13 = arith.constant 0 : index
    %c0_14 = arith.constant 0 : index
    %34 = vector.load %arg13[%c0_12, %c0_13, %c0_14] : memref<196x2x64xbf16, #tpu.memory_space<vmem>>, vector<196x2x64xbf16>
    tpu.vector_store %arg13[%c0_12, %c0_13, %c0_14], %33 {strides = array<i32>} : memref<196x2x64xbf16, #tpu.memory_space<vmem>>, vector<196x2x64xbf16>,
    %cst_15 = arith.constant 0.000000e+00 : f32
    %35 = vector.broadcast %cst_15 : f32 to vector<392x64xf32>
    %36 = arith.maximumf %31, %35 : vector<392x64xf32>
    %37 = vector.shape_cast %36 : vector<392x64xf32> to vector<14x14x2x64xf32>
    %38 = vector.shape_cast %37 : vector<14x14x2x64xf32> to vector<14x7x2x2x64xf32>
    %cst_16 = arith.constant dense<0xFF800000> : vector<14x7x2x64xf32>
    %39 = vector.multi_reduction <maximumf>, %38, %cst_16 [2] : vector<14x7x2x2x64xf32> to vector<14x7x2x64xf32>
    %40 = vector.shape_cast %39 : vector<14x7x2x64xf32> to vector<7x2x7x2x64xf32>
    %cst_17 = arith.constant dense<0xFF800000> : vector<7x7x2x64xf32>
    %41 = vector.multi_reduction <maximumf>, %40, %cst_17 [1] : vector<7x2x7x2x64xf32> to vector<7x7x2x64xf32>
    %42 = arith.truncf %41 : vector<7x7x2x64xf32> to vector<7x7x2x64xbf16>
    %cst_18 = arith.constant 0.000000e+00 : bf16
    %43 = vector.broadcast %cst_18 : bf16 to vector<7x1x2x64xbf16>
    %44 = tpu.concatenate %43, %42, %43 in 1 : vector<7x1x2x64xbf16>, vector<7x7x2x64xbf16>, vector<7x1x2x64xbf16> -> vector<7x9x2x64xbf16>
    %cst_19 = arith.constant 0.000000e+00 : bf16
    %45 = vector.broadcast %cst_19 : bf16 to vector<1x9x2x64xbf16>
    %46 = tpu.concatenate %45, %44, %45 in 0 : vector<1x9x2x64xbf16>, vector<7x9x2x64xbf16>, vector<1x9x2x64xbf16> -> vector<9x9x2x64xbf16>
    %47 = vector.extract_strided_slice %46 {offsets = [0, 0, 0, 0], sizes = [7, 7, 2, 64], strides = [1, 1, 1, 1]} : vector<9x9x2x64xbf16> to vector<7x7x2x64xbf16>
    %48 = vector.extract_strided_slice %46 {offsets = [0, 1, 0, 0], sizes = [7, 7, 2, 64], strides = [1, 1, 1, 1]} : vector<9x9x2x64xbf16> to vector<7x7x2x64xbf16>
    %49 = vector.extract_strided_slice %46 {offsets = [0, 2, 0, 0], sizes = [7, 7, 2, 64], strides = [1, 1, 1, 1]} : vector<9x9x2x64xbf16> to vector<7x7x2x64xbf16>
    %50 = tpu.concatenate %47, %48, %49 in 3 : vector<7x7x2x64xbf16>, vector<7x7x2x64xbf16>, vector<7x7x2x64xbf16> -> vector<7x7x2x192xbf16>
    %51 = vector.shape_cast %50 : vector<7x7x2x192xbf16> to vector<98x192xbf16>
    %c0_20 = arith.constant 0 : index
    %c0_21 = arith.constant 0 : index
    %52 = vector.load %arg4[%c0_20, %c0_21] : memref<576x64xbf16, #tpu.memory_space<vmem>>, vector<192x64xbf16>
    %cst_22 = arith.constant dense<0.000000e+00> : vector<98x64xf32>
    %53 = tpu.matmul %51, %52, %cst_22 {dimension_numbers = #tpu.dot_dimension_numbers<[1], [0], [0], [1], [0, 0, 1, 1], [], []>} : vector<98x192xbf16>, vector<192x64xbf16>, vector<98x64xf32> -> vector<98x64xf32>
    %54 = vector.extract_strided_slice %46 {offsets = [1, 0, 0, 0], sizes = [7, 7, 2, 64], strides = [1, 1, 1, 1]} : vector<9x9x2x64xbf16> to vector<7x7x2x64xbf16>
    %55 = vector.extract_strided_slice %46 {offsets = [1, 1, 0, 0], sizes = [7, 7, 2, 64], strides = [1, 1, 1, 1]} : vector<9x9x2x64xbf16> to vector<7x7x2x64xbf16>
    %56 = vector.extract_strided_slice %46 {offsets = [1, 2, 0, 0], sizes = [7, 7, 2, 64], strides = [1, 1, 1, 1]} : vector<9x9x2x64xbf16> to vector<7x7x2x64xbf16>
    %57 = tpu.concatenate %54, %55, %56 in 3 : vector<7x7x2x64xbf16>, vector<7x7x2x64xbf16>, vector<7x7x2x64xbf16> -> vector<7x7x2x192xbf16>
    %58 = vector.shape_cast %57 : vector<7x7x2x192xbf16> to vector<98x192xbf16>
    %c192_23 = arith.constant 192 : index
    %c0_24 = arith.constant 0 : index
    %59 = vector.load %arg4[%c192_23, %c0_24] : memref<576x64xbf16, #tpu.memory_space<vmem>>, vector<192x64xbf16>
    %cst_25 = arith.constant dense<0.000000e+00> : vector<98x64xf32>
    %60 = tpu.matmul %58, %59, %cst_25 {dimension_numbers = #tpu.dot_dimension_numbers<[1], [0], [0], [1], [0, 0, 1, 1], [], []>} : vector<98x192xbf16>, vector<192x64xbf16>, vector<98x64xf32> -> vector<98x64xf32>
    %61 = arith.addf %53, %60 : vector<98x64xf32>
    %62 = vector.extract_strided_slice %46 {offsets = [2, 0, 0, 0], sizes = [7, 7, 2, 64], strides = [1, 1, 1, 1]} : vector<9x9x2x64xbf16> to vector<7x7x2x64xbf16>
    %63 = vector.extract_strided_slice %46 {offsets = [2, 1, 0, 0], sizes = [7, 7, 2, 64], strides = [1, 1, 1, 1]} : vector<9x9x2x64xbf16> to vector<7x7x2x64xbf16>
    %64 = vector.extract_strided_slice %46 {offsets = [2, 2, 0, 0], sizes = [7, 7, 2, 64], strides = [1, 1, 1, 1]} : vector<9x9x2x64xbf16> to vector<7x7x2x64xbf16>
    %65 = tpu.concatenate %62, %63, %64 in 3 : vector<7x7x2x64xbf16>, vector<7x7x2x64xbf16>, vector<7x7x2x64xbf16> -> vector<7x7x2x192xbf16>
    %66 = vector.shape_cast %65 : vector<7x7x2x192xbf16> to vector<98x192xbf16>
    %c384_26 = arith.constant 384 : index
    %c0_27 = arith.constant 0 : index
    %67 = vector.load %arg4[%c384_26, %c0_27] : memref<576x64xbf16, #tpu.memory_space<vmem>>, vector<192x64xbf16>
    %cst_28 = arith.constant dense<0.000000e+00> : vector<98x64xf32>
    %68 = tpu.matmul %66, %67, %cst_28 {dimension_numbers = #tpu.dot_dimension_numbers<[1], [0], [0], [1], [0, 0, 1, 1], [], []>} : vector<98x192xbf16>, vector<192x64xbf16>, vector<98x64xf32> -> vector<98x64xf32>
    %69 = arith.addf %61, %68 : vector<98x64xf32>
    %c0_29 = arith.constant 0 : index
    %c0_30 = arith.constant 0 : index
    %70 = vector.load %arg5[%c0_29, %c0_30] : memref<1x64xf32, #tpu.memory_space<vmem>>, vector<1x64xf32>
    %71 = vector.broadcast %70 : vector<1x64xf32> to vector<98x64xf32>
    %72 = arith.addf %69, %71 : vector<98x64xf32>
    %cst_31 = arith.constant 0.000000e+00 : f32
    %73 = vector.broadcast %cst_31 : f32 to vector<98x64xf32>
    %74 = arith.maximumf %72, %73 : vector<98x64xf32>
    %75 = vector.shape_cast %74 : vector<98x64xf32> to vector<7x7x2x64xf32>
    %76 = arith.truncf %75 : vector<7x7x2x64xf32> to vector<7x7x2x64xbf16>
    %cst_32 = arith.constant 0.000000e+00 : bf16
    %77 = vector.broadcast %cst_32 : bf16 to vector<7x1x2x64xbf16>
    %78 = tpu.concatenate %77, %76, %77 in 1 : vector<7x1x2x64xbf16>, vector<7x7x2x64xbf16>, vector<7x1x2x64xbf16> -> vector<7x9x2x64xbf16>
    %cst_33 = arith.constant 0.000000e+00 : bf16
    %79 = vector.broadcast %cst_33 : bf16 to vector<1x9x2x64xbf16>
    %80 = tpu.concatenate %79, %78, %79 in 0 : vector<1x9x2x64xbf16>, vector<7x9x2x64xbf16>, vector<1x9x2x64xbf16> -> vector<9x9x2x64xbf16>
    %81 = vector.extract_strided_slice %80 {offsets = [0, 0, 0, 0], sizes = [7, 7, 2, 64], strides = [1, 1, 1, 1]} : vector<9x9x2x64xbf16> to vector<7x7x2x64xbf16>
    %82 = vector.extract_strided_slice %80 {offsets = [0, 1, 0, 0], sizes = [7, 7, 2, 64], strides = [1, 1, 1, 1]} : vector<9x9x2x64xbf16> to vector<7x7x2x64xbf16>
    %83 = vector.extract_strided_slice %80 {offsets = [0, 2, 0, 0], sizes = [7, 7, 2, 64], strides = [1, 1, 1, 1]} : vector<9x9x2x64xbf16> to vector<7x7x2x64xbf16>
    %84 = tpu.concatenate %81, %82, %83 in 3 : vector<7x7x2x64xbf16>, vector<7x7x2x64xbf16>, vector<7x7x2x64xbf16> -> vector<7x7x2x192xbf16>
    %85 = vector.shape_cast %84 : vector<7x7x2x192xbf16> to vector<98x192xbf16>
    %c0_34 = arith.constant 0 : index
    %c0_35 = arith.constant 0 : index
    %86 = vector.load %arg6[%c0_34, %c0_35] : memref<576x64xbf16, #tpu.memory_space<vmem>>, vector<192x64xbf16>
    %cst_36 = arith.constant dense<0.000000e+00> : vector<98x64xf32>
    %87 = tpu.matmul %85, %86, %cst_36 {dimension_numbers = #tpu.dot_dimension_numbers<[1], [0], [0], [1], [0, 0, 1, 1], [], []>} : vector<98x192xbf16>, vector<192x64xbf16>, vector<98x64xf32> -> vector<98x64xf32>
    %88 = vector.extract_strided_slice %80 {offsets = [1, 0, 0, 0], sizes = [7, 7, 2, 64], strides = [1, 1, 1, 1]} : vector<9x9x2x64xbf16> to vector<7x7x2x64xbf16>
    %89 = vector.extract_strided_slice %80 {offsets = [1, 1, 0, 0], sizes = [7, 7, 2, 64], strides = [1, 1, 1, 1]} : vector<9x9x2x64xbf16> to vector<7x7x2x64xbf16>
    %90 = vector.extract_strided_slice %80 {offsets = [1, 2, 0, 0], sizes = [7, 7, 2, 64], strides = [1, 1, 1, 1]} : vector<9x9x2x64xbf16> to vector<7x7x2x64xbf16>
    %91 = tpu.concatenate %88, %89, %90 in 3 : vector<7x7x2x64xbf16>, vector<7x7x2x64xbf16>, vector<7x7x2x64xbf16> -> vector<7x7x2x192xbf16>
    %92 = vector.shape_cast %91 : vector<7x7x2x192xbf16> to vector<98x192xbf16>
    %c192_37 = arith.constant 192 : index
    %c0_38 = arith.constant 0 : index
    %93 = vector.load %arg6[%c192_37, %c0_38] : memref<576x64xbf16, #tpu.memory_space<vmem>>, vector<192x64xbf16>
    %cst_39 = arith.constant dense<0.000000e+00> : vector<98x64xf32>
    %94 = tpu.matmul %92, %93, %cst_39 {dimension_numbers = #tpu.dot_dimension_numbers<[1], [0], [0], [1], [0, 0, 1, 1], [], []>} : vector<98x192xbf16>, vector<192x64xbf16>, vector<98x64xf32> -> vector<98x64xf32>
    %95 = arith.addf %87, %94 : vector<98x64xf32>
    %96 = vector.extract_strided_slice %80 {offsets = [2, 0, 0, 0], sizes = [7, 7, 2, 64], strides = [1, 1, 1, 1]} : vector<9x9x2x64xbf16> to vector<7x7x2x64xbf16>
    %97 = vector.extract_strided_slice %80 {offsets = [2, 1, 0, 0], sizes = [7, 7, 2, 64], strides = [1, 1, 1, 1]} : vector<9x9x2x64xbf16> to vector<7x7x2x64xbf16>
    %98 = vector.extract_strided_slice %80 {offsets = [2, 2, 0, 0], sizes = [7, 7, 2, 64], strides = [1, 1, 1, 1]} : vector<9x9x2x64xbf16> to vector<7x7x2x64xbf16>
    %99 = tpu.concatenate %96, %97, %98 in 3 : vector<7x7x2x64xbf16>, vector<7x7x2x64xbf16>, vector<7x7x2x64xbf16> -> vector<7x7x2x192xbf16>
    %100 = vector.shape_cast %99 : vector<7x7x2x192xbf16> to vector<98x192xbf16>
    %c384_40 = arith.constant 384 : index
    %c0_41 = arith.constant 0 : index
    %101 = vector.load %arg6[%c384_40, %c0_41] : memref<576x64xbf16, #tpu.memory_space<vmem>>, vector<192x64xbf16>
    %cst_42 = arith.constant dense<0.000000e+00> : vector<98x64xf32>
    %102 = tpu.matmul %100, %101, %cst_42 {dimension_numbers = #tpu.dot_dimension_numbers<[1], [0], [0], [1], [0, 0, 1, 1], [], []>} : vector<98x192xbf16>, vector<192x64xbf16>, vector<98x64xf32> -> vector<98x64xf32>
    %103 = arith.addf %95, %102 : vector<98x64xf32>
    %c0_43 = arith.constant 0 : index
    %c0_44 = arith.constant 0 : index
    %104 = vector.load %arg7[%c0_43, %c0_44] : memref<1x64xf32, #tpu.memory_space<vmem>>, vector<1x64xf32>
    %105 = vector.broadcast %104 : vector<1x64xf32> to vector<98x64xf32>
    %106 = arith.addf %103, %105 : vector<98x64xf32>
    %107 = arith.truncf %106 : vector<98x64xf32> to vector<98x64xbf16>
    %108 = vector.shape_cast %107 : vector<98x64xbf16> to vector<49x2x64xbf16>
    %c0_45 = arith.constant 0 : index
    %c0_46 = arith.constant 0 : index
    %c0_47 = arith.constant 0 : index
    %109 = vector.load %arg14[%c0_45, %c0_46, %c0_47] : memref<49x2x64xbf16, #tpu.memory_space<vmem>>, vector<49x2x64xbf16>
    tpu.vector_store %arg14[%c0_45, %c0_46, %c0_47], %108 {strides = array<i32>} : memref<49x2x64xbf16, #tpu.memory_space<vmem>>, vector<49x2x64xbf16>,
    %cst_48 = arith.constant 0.000000e+00 : f32
    %110 = vector.broadcast %cst_48 : f32 to vector<98x64xf32>
    %111 = arith.maximumf %106, %110 : vector<98x64xf32>
    %112 = vector.shape_cast %111 : vector<98x64xf32> to vector<49x2x64xf32>
    %113 = arith.truncf %112 : vector<49x2x64xf32> to vector<49x2x64xbf16>
    %c0_49 = arith.constant 0 : index
    %c0_50 = arith.constant 0 : index
    %c0_51 = arith.constant 0 : index
    %114 = vector.load %arg8[%c0_49, %c0_50, %c0_51] : memref<49x64x64xbf16, #tpu.memory_space<vmem>>, vector<49x64x64xbf16>
    %cst_52 = arith.constant dense<0.000000e+00> : vector<49x2x64xf32>
    %115 = tpu.matmul %113, %114, %cst_52 {dimension_numbers = #tpu.dot_dimension_numbers<[2], [1], [1], [2], [0, 0, 0, 1, 1, 2], [0], [0]>} : vector<49x2x64xbf16>, vector<49x64x64xbf16>, vector<49x2x64xf32> -> vector<49x2x64xf32>
    %cst_53 = arith.constant dense<0.000000e+00> : vector<2x64xf32>
    %116 = vector.multi_reduction <add>, %115, %cst_53 [0] : vector<49x2x64xf32> to vector<2x64xf32>
    %c0_54 = arith.constant 0 : index
    %c0_55 = arith.constant 0 : index
    %117 = vector.load %arg9[%c0_54, %c0_55] : memref<1x64xf32, #tpu.memory_space<vmem>>, vector<1x64xf32>
    %118 = vector.broadcast %117 : vector<1x64xf32> to vector<2x64xf32>
    %119 = arith.addf %116, %118 : vector<2x64xf32>
    %cst_56 = arith.constant 0.000000e+00 : f32
    %120 = vector.broadcast %cst_56 : f32 to vector<2x64xf32>
    %121 = arith.maximumf %119, %120 : vector<2x64xf32>
    %122 = arith.truncf %121 : vector<2x64xf32> to vector<2x64xbf16>
    %c0_57 = arith.constant 0 : index
    %c0_58 = arith.constant 0 : index
    %123 = vector.load %arg10[%c0_57, %c0_58] : memref<64x10xbf16, #tpu.memory_space<vmem>>, vector<64x10xbf16>
    %cst_59 = arith.constant dense<0.000000e+00> : vector<2x10xf32>
    %124 = tpu.matmul %122, %123, %cst_59 {dimension_numbers = #tpu.dot_dimension_numbers<[1], [0], [0], [1], [0, 0, 1, 1], [], []>} : vector<2x64xbf16>, vector<64x10xbf16>, vector<2x10xf32> -> vector<2x10xf32>
    %c0_60 = arith.constant 0 : index
    %c0_61 = arith.constant 0 : index
    %125 = vector.load %arg11[%c0_60, %c0_61] : memref<1x10xf32, #tpu.memory_space<vmem>>, vector<1x10xf32>
    %126 = vector.broadcast %125 : vector<1x10xf32> to vector<2x10xf32>
    %127 = arith.addf %124, %126 : vector<2x10xf32>
    %c0_62 = arith.constant 0 : index
    %c0_63 = arith.constant 0 : index
    %128 = vector.load %arg12[%c0_62, %c0_63] : memref<2x10xf32, #tpu.memory_space<vmem>>, vector<2x10xf32>
    tpu.vector_store %arg12[%c0_62, %c0_63], %127 {strides = array<i32>} : memref<2x10xf32, #tpu.memory_space<vmem>>, vector<2x10xf32>,
    return
  }
  func.func @transform_0(%arg0: i32) -> (i32, i32, i32) {
    %c0_i32 = arith.constant 0 : i32
    %c0_i32_0 = arith.constant 0 : i32
    %c0_i32_1 = arith.constant 0 : i32
    return %c0_i32, %arg0, %c0_i32_0 : i32, i32, i32
  }
  func.func @transform_1(%arg0: i32) -> (i32, i32) {
    %c0_i32 = arith.constant 0 : i32
    %c0_i32_0 = arith.constant 0 : i32
    %c0_i32_1 = arith.constant 0 : i32
    return %c0_i32, %c0_i32_0 : i32, i32
  }
  func.func @transform_2(%arg0: i32) -> (i32, i32) {
    %c0_i32 = arith.constant 0 : i32
    %c0_i32_0 = arith.constant 0 : i32
    %c0_i32_1 = arith.constant 0 : i32
    return %c0_i32, %c0_i32_0 : i32, i32
  }
  func.func @transform_3(%arg0: i32) -> (i32, i32) {
    %c0_i32 = arith.constant 0 : i32
    %c0_i32_0 = arith.constant 0 : i32
    %c0_i32_1 = arith.constant 0 : i32
    return %c0_i32, %c0_i32_0 : i32, i32
  }
  func.func @transform_4(%arg0: i32) -> (i32, i32) {
    %c0_i32 = arith.constant 0 : i32
    %c0_i32_0 = arith.constant 0 : i32
    %c0_i32_1 = arith.constant 0 : i32
    return %c0_i32, %c0_i32_0 : i32, i32
  }
  func.func @transform_5(%arg0: i32) -> (i32, i32) {
    %c0_i32 = arith.constant 0 : i32
    %c0_i32_0 = arith.constant 0 : i32
    %c0_i32_1 = arith.constant 0 : i32
    return %c0_i32, %c0_i32_0 : i32, i32
  }
  func.func @transform_6(%arg0: i32) -> (i32, i32) {
    %c0_i32 = arith.constant 0 : i32
    %c0_i32_0 = arith.constant 0 : i32
    %c0_i32_1 = arith.constant 0 : i32
    return %c0_i32, %c0_i32_0 : i32, i32
  }
  func.func @transform_7(%arg0: i32) -> (i32, i32, i32) {
    %c0_i32 = arith.constant 0 : i32
    %c0_i32_0 = arith.constant 0 : i32
    %c0_i32_1 = arith.constant 0 : i32
    %c0_i32_2 = arith.constant 0 : i32
    return %c0_i32, %c0_i32_0, %c0_i32_1 : i32, i32, i32
  }
  func.func @transform_8(%arg0: i32) -> (i32, i32) {
    %c0_i32 = arith.constant 0 : i32
    %c0_i32_0 = arith.constant 0 : i32
    %c0_i32_1 = arith.constant 0 : i32
    return %c0_i32, %c0_i32_0 : i32, i32
  }
  func.func @transform_9(%arg0: i32) -> (i32, i32) {
    %c0_i32 = arith.constant 0 : i32
    %c0_i32_0 = arith.constant 0 : i32
    %c0_i32_1 = arith.constant 0 : i32
    return %c0_i32, %c0_i32_0 : i32, i32
  }
  func.func @transform_10(%arg0: i32) -> (i32, i32) {
    %c0_i32 = arith.constant 0 : i32
    %c0_i32_0 = arith.constant 0 : i32
    %c0_i32_1 = arith.constant 0 : i32
    return %c0_i32, %c0_i32_0 : i32, i32
  }
  func.func @transform_11(%arg0: i32) -> (i32, i32) {
    %c0_i32 = arith.constant 0 : i32
    %c0_i32_0 = arith.constant 0 : i32
    return %arg0, %c0_i32 : i32, i32
  }
  func.func @transform_12(%arg0: i32) -> (i32, i32, i32) {
    %c0_i32 = arith.constant 0 : i32
    %c0_i32_0 = arith.constant 0 : i32
    %c0_i32_1 = arith.constant 0 : i32
    return %c0_i32, %arg0, %c0_i32_0 : i32, i32, i32
  }
  func.func @transform_13(%arg0: i32) -> (i32, i32, i32) {
    %c0_i32 = arith.constant 0 : i32
    %c0_i32_0 = arith.constant 0 : i32
    %c0_i32_1 = arith.constant 0 : i32
    return %c0_i32, %arg0, %c0_i32_0 : i32, i32, i32
  }
}

</mosaic_0001>

<llo_original>
// kernel: neural_net_forward.1
$region0: #{neural_net_forward.1}
  #allocation0 [shape = 'u32[]', space=smem, size = 0x4, offset = 0x4, fixed_abs, tag = 'smem constant byte address 0x4 - core index']
  #allocation1 [shape = 'u32[72,128]{1,0:T(1,128)}', space=vmem, size = 0x9000, scoped, tag = 'internal scratch']
  %s0 = inlined_call_operand.vmem [shape: bf16[196,2,64], index: 0, kind: input, shape index: {}]
  %s1 = inlined_call_operand.vmem [shape: bf16[576,64], index: 1, kind: input, shape index: {}]
  %s2 = inlined_call_operand.vmem [shape: f32[1,64], index: 2, kind: input, shape index: {}]
  %s3 = inlined_call_operand.vmem [shape: bf16[576,64], index: 3, kind: input, shape index: {}]
  %s4 = inlined_call_operand.vmem [shape: f32[1,64], index: 4, kind: input, shape index: {}]
  %s5 = inlined_call_operand.vmem [shape: bf16[576,64], index: 5, kind: input, shape index: {}]
  %s6 = inlined_call_operand.vmem [shape: f32[1,64], index: 6, kind: input, shape index: {}]
  %s7 = inlined_call_operand.vmem [shape: bf16[49,64,64], index: 7, kind: input, shape index: {}]
  %s8 = inlined_call_operand.vmem [shape: f32[1,64], index: 8, kind: input, shape index: {}]
  %s9 = inlined_call_operand.vmem [shape: bf16[64,10], index: 9, kind: input, shape index: {}]
  %s10 = inlined_call_operand.vmem [shape: f32[1,10], index: 10, kind: input, shape index: {}]
  %s11 = inlined_call_operand.hbm [shape: f32[2,10], index: 11, kind: output, shape index: {0}]
  %s12 = inlined_call_operand.vmem [shape: bf16[196,2,64], index: 12, kind: output, shape index: {1}]
  %s13 = inlined_call_operand.vmem [shape: bf16[49,2,64], index: 13, kind: output, shape index: {2}]
  %14 = xla_tuple %s11, %s12, %s13
  %s15 = sld [smem:[#allocation0]]
  $region70: #{neural_net_forward.1} parent=0
    _
  %s17 = ssub.s32 1, %s15
  %s18 = scalar_select 0, %s17, %s15
  $region1: #{neural_net_forward.1} parent=0
    #allocation2 [shape = 'u8[1024]{0}', space=vmem, size = 0x400, scoped, tag = 'output window, operand 0, single buffered']
    #allocation3 [shape = 's32[1]{0}', space=sflag, size = 0x4, scoped, tag = 'scoped memory for neural_net_forward.1']
    %19 = vsyncpa [#allocation3], 0
    // Predicated region
    $region2: #{neural_net_forward.1} parent=1 // pred_check
      _
    $region3: #{neural_net_forward.1} parent=1 // pred_check_branch
      %21 = sbr.rel (0) target = $region5
    $region4: #{neural_net_forward.1} parent=1 // pred_region
      _
    $region5: #{neural_net_forward.1} parent=1 // pred_fallthru
      _
    // Predicated region
    $region6: #{neural_net_forward.1} parent=1 // pred_check
      _
    $region7: #{neural_net_forward.1} parent=1 // pred_check_branch
      %23 = sbr.rel (0) target = $region9
    $region8: #{neural_net_forward.1} parent=1 // pred_region
      _
    $region9: #{neural_net_forward.1} parent=1 // pred_fallthru
      _
    // Predicated region
    $region10: #{neural_net_forward.1} parent=1 // pred_check
      _
    $region11: #{neural_net_forward.1} parent=1 // pred_check_branch
      %25 = sbr.rel (0) target = $region13
    $region12: #{neural_net_forward.1} parent=1 // pred_region
      _
    $region13: #{neural_net_forward.1} parent=1 // pred_fallthru
      _
    // Predicated region
    $region14: #{neural_net_forward.1} parent=1 // pred_check
      _
    $region15: #{neural_net_forward.1} parent=1 // pred_check_branch
      %27 = sbr.rel (0) target = $region17
    $region16: #{neural_net_forward.1} parent=1 // pred_region
      _
    $region17: #{neural_net_forward.1} parent=1 // pred_fallthru
      _
    // Predicated region
    $region18: #{neural_net_forward.1} parent=1 // pred_check
      _
    $region19: #{neural_net_forward.1} parent=1 // pred_check_branch
      %29 = sbr.rel (0) target = $region21
    $region20: #{neural_net_forward.1} parent=1 // pred_region
      _
    $region21: #{neural_net_forward.1} parent=1 // pred_fallthru
      _
    // Predicated region
    $region22: #{neural_net_forward.1} parent=1 // pred_check
      _
    $region23: #{neural_net_forward.1} parent=1 // pred_check_branch
      %31 = sbr.rel (0) target = $region25
    $region24: #{neural_net_forward.1} parent=1 // pred_region
      _
    $region25: #{neural_net_forward.1} parent=1 // pred_fallthru
      _
    // Predicated region
    $region26: #{neural_net_forward.1} parent=1 // pred_check
      _
    $region27: #{neural_net_forward.1} parent=1 // pred_check_branch
      %33 = sbr.rel (0) target = $region29
    $region28: #{neural_net_forward.1} parent=1 // pred_region
      _
    $region29: #{neural_net_forward.1} parent=1 // pred_fallthru
      _
    // Predicated region
    $region30: #{neural_net_forward.1} parent=1 // pred_check
      _
    $region31: #{neural_net_forward.1} parent=1 // pred_check_branch
      %35 = sbr.rel (0) target = $region33
    $region32: #{neural_net_forward.1} parent=1 // pred_region
      _
    $region33: #{neural_net_forward.1} parent=1 // pred_fallthru
      _
    // Predicated region
    $region34: #{neural_net_forward.1} parent=1 // pred_check
      _
    $region35: #{neural_net_forward.1} parent=1 // pred_check_branch
      %37 = sbr.rel (0) target = $region37
    $region36: #{neural_net_forward.1} parent=1 // pred_region
      _
    $region37: #{neural_net_forward.1} parent=1 // pred_fallthru
      _
    // Predicated region
    $region38: #{neural_net_forward.1} parent=1 // pred_check
      _
    $region39: #{neural_net_forward.1} parent=1 // pred_check_branch
      %39 = sbr.rel (0) target = $region41
    $region40: #{neural_net_forward.1} parent=1 // pred_region
      _
    $region41: #{neural_net_forward.1} parent=1 // pred_fallthru
      _
    // Predicated region
    $region42: #{neural_net_forward.1} parent=1 // pred_check
      _
    $region43: #{neural_net_forward.1} parent=1 // pred_check_branch
      %41 = sbr.rel (0) target = $region45
    $region44: #{neural_net_forward.1} parent=1 // pred_region
      _
    $region45: #{neural_net_forward.1} parent=1 // pred_fallthru
      _
    %v43 = vld [vmem:[%s0] sm:$0x1]
    %v44 = vld [vmem:[%s0 + $0x1] sm:$0x1]
    %v45 = vld [vmem:[%s0 + $0x2] sm:$0x1]
    %v46 = vld [vmem:[%s0 + $0x3] sm:$0x1]
    %v47 = vld [vmem:[%s0 + $0x4] sm:$0x1]
    %v48 = vld [vmem:[%s0 + $0x5] sm:$0x1]
    %v49 = vld [vmem:[%s0 + $0x6] sm:$0x1]
    %v50 = vld [vmem:[%s0 + $0x7] sm:$0x1]
    %v51 = vld [vmem:[%s0 + $0x8] sm:$0x1]
    %v52 = vld [vmem:[%s0 + $0x9] sm:$0x1]
    %v53 = vld [vmem:[%s0 + $0xa] sm:$0x1]
    %v54 = vld [vmem:[%s0 + $0xb] sm:$0x1]
    %v55 = vld [vmem:[%s0 + $0xc] sm:$0x1]
    %v56 = vld [vmem:[%s0 + $0xd] sm:$0x1]
    %v57 = vld [vmem:[%s0 + $0xe] sm:$0x1]
    %v58 = vld [vmem:[%s0 + $0xf] sm:$0x1]
    %v59 = vld [vmem:[%s0 + $0x10] sm:$0x1]
    %v60 = vld [vmem:[%s0 + $0x11] sm:$0x1]
    %v61 = vld [vmem:[%s0 + $0x12] sm:$0x1]
    %v62 = vld [vmem:[%s0 + $0x13] sm:$0x1]
    %v63 = vld [vmem:[%s0 + $0x14] sm:$0x1]
    %v64 = vld [vmem:[%s0 + $0x15] sm:$0x1]
    %v65 = vld [vmem:[%s0 + $0x16] sm:$0x1]
    %v66 = vld [vmem:[%s0 + $0x17] sm:$0x1]
    %v67 = vld [vmem:[%s0 + $0x18] sm:$0x1]
    %v68 = vld [vmem:[%s0 + $0x19] sm:$0x1]
    %v69 = vld [vmem:[%s0 + $0x1a] sm:$0x1]
    %v70 = vld [vmem:[%s0 + $0x1b] sm:$0x1]
    %v71 = vld [vmem:[%s0 + $0x1c] sm:$0x1]
    %v72 = vld [vmem:[%s0 + $0x1d] sm:$0x1]
    %v73 = vld [vmem:[%s0 + $0x1e] sm:$0x1]
    %v74 = vld [vmem:[%s0 + $0x1f] sm:$0x1]
    %v75 = vld [vmem:[%s0 + $0x20] sm:$0x1]
    %v76 = vld [vmem:[%s0 + $0x21] sm:$0x1]
    %v77 = vld [vmem:[%s0 + $0x22] sm:$0x1]
    %v78 = vld [vmem:[%s0 + $0x23] sm:$0x1]
    %v79 = vld [vmem:[%s0 + $0x24] sm:$0x1]
    %v80 = vld [vmem:[%s0 + $0x25] sm:$0x1]
    %v81 = vld [vmem:[%s0 + $0x26] sm:$0x1]
    %v82 = vld [vmem:[%s0 + $0x27] sm:$0x1]
    %v83 = vld [vmem:[%s0 + $0x28] sm:$0x1]
    %v84 = vld [vmem:[%s0 + $0x29] sm:$0x1]
    %v85 = vld [vmem:[%s0 + $0x2a] sm:$0x1]
    %v86 = vld [vmem:[%s0 + $0x2b] sm:$0x1]
    %v87 = vld [vmem:[%s0 + $0x2c] sm:$0x1]
    %v88 = vld [vmem:[%s0 + $0x2d] sm:$0x1]
    %v89 = vld [vmem:[%s0 + $0x2e] sm:$0x1]
    %v90 = vld [vmem:[%s0 + $0x2f] sm:$0x1]
    %v91 = vld [vmem:[%s0 + $0x30] sm:$0x1]
    %v92 = vld [vmem:[%s0 + $0x31] sm:$0x1]
    %v93 = vld [vmem:[%s0 + $0x32] sm:$0x1]
    %v94 = vld [vmem:[%s0 + $0x33] sm:$0x1]
    %v95 = vld [vmem:[%s0 + $0x34] sm:$0x1]
    %v96 = vld [vmem:[%s0 + $0x35] sm:$0x1]
    %v97 = vld [vmem:[%s0 + $0x36] sm:$0x1]
    %v98 = vld [vmem:[%s0 + $0x37] sm:$0x1]
    %v99 = vld [vmem:[%s0 + $0x38] sm:$0x1]
    %v100 = vld [vmem:[%s0 + $0x39] sm:$0x1]
    %v101 = vld [vmem:[%s0 + $0x3a] sm:$0x1]
    %v102 = vld [vmem:[%s0 + $0x3b] sm:$0x1]
    %v103 = vld [vmem:[%s0 + $0x3c] sm:$0x1]
    %v104 = vld [vmem:[%s0 + $0x3d] sm:$0x1]
    %v105 = vld [vmem:[%s0 + $0x3e] sm:$0x1]
    %v106 = vld [vmem:[%s0 + $0x3f] sm:$0x1]
    %v107 = vld [vmem:[%s0 + $0x40] sm:$0x1]
    %v108 = vld [vmem:[%s0 + $0x41] sm:$0x1]
    %v109 = vld [vmem:[%s0 + $0x42] sm:$0x1]
    %v110 = vld [vmem:[%s0 + $0x43] sm:$0x1]
    %v111 = vld [vmem:[%s0 + $0x44] sm:$0x1]
    %v112 = vld [vmem:[%s0 + $0x45] sm:$0x1]
    %v113 = vld [vmem:[%s0 + $0x46] sm:$0x1]
    %v114 = vld [vmem:[%s0 + $0x47] sm:$0x1]
    %v115 = vld [vmem:[%s0 + $0x48] sm:$0x1]
    %v116 = vld [vmem:[%s0 + $0x49] sm:$0x1]
    %v117 = vld [vmem:[%s0 + $0x4a] sm:$0x1]
    %v118 = vld [vmem:[%s0 + $0x4b] sm:$0x1]
    %v119 = vld [vmem:[%s0 + $0x4c] sm:$0x1]
    %v120 = vld [vmem:[%s0 + $0x4d] sm:$0x1]
    %v121 = vld [vmem:[%s0 + $0x4e] sm:$0x1]
    %v122 = vld [vmem:[%s0 + $0x4f] sm:$0x1]
    %v123 = vld [vmem:[%s0 + $0x50] sm:$0x1]
    %v124 = vld [vmem:[%s0 + $0x51] sm:$0x1]
    %v125 = vld [vmem:[%s0 + $0x52] sm:$0x1]
    %v126 = vld [vmem:[%s0 + $0x53] sm:$0x1]
    %v127 = vld [vmem:[%s0 + $0x54] sm:$0x1]
    %v128 = vld [vmem:[%s0 + $0x55] sm:$0x1]
    %v129 = vld [vmem:[%s0 + $0x56] sm:$0x1]
    %v130 = vld [vmem:[%s0 + $0x57] sm:$0x1]
    %v131 = vld [vmem:[%s0 + $0x58] sm:$0x1]
    %v132 = vld [vmem:[%s0 + $0x59] sm:$0x1]
    %v133 = vld [vmem:[%s0 + $0x5a] sm:$0x1]
    %v134 = vld [vmem:[%s0 + $0x5b] sm:$0x1]
    %v135 = vld [vmem:[%s0 + $0x5c] sm:$0x1]
    %v136 = vld [vmem:[%s0 + $0x5d] sm:$0x1]
    %v137 = vld [vmem:[%s0 + $0x5e] sm:$0x1]
    %v138 = vld [vmem:[%s0 + $0x5f] sm:$0x1]
    %v139 = vld [vmem:[%s0 + $0x60] sm:$0x1]
    %v140 = vld [vmem:[%s0 + $0x61] sm:$0x1]
    %v141 = vld [vmem:[%s0 + $0x62] sm:$0x1]
    %v142 = vld [vmem:[%s0 + $0x63] sm:$0x1]
    %v143 = vld [vmem:[%s0 + $0x64] sm:$0x1]
    %v144 = vld [vmem:[%s0 + $0x65] sm:$0x1]
    %v145 = vld [vmem:[%s0 + $0x66] sm:$0x1]
    %v146 = vld [vmem:[%s0 + $0x67] sm:$0x1]
    %v147 = vld [vmem:[%s0 + $0x68] sm:$0x1]
    %v148 = vld [vmem:[%s0 + $0x69] sm:$0x1]
    %v149 = vld [vmem:[%s0 + $0x6a] sm:$0x1]
    %v150 = vld [vmem:[%s0 + $0x6b] sm:$0x1]
    %v151 = vld [vmem:[%s0 + $0x6c] sm:$0x1]
    %v152 = vld [vmem:[%s0 + $0x6d] sm:$0x1]
    %v153 = vld [vmem:[%s0 + $0x6e] sm:$0x1]
    %v154 = vld [vmem:[%s0 + $0x6f] sm:$0x1]
    %v155 = vld [vmem:[%s0 + $0x70] sm:$0x1]
    %v156 = vld [vmem:[%s0 + $0x71] sm:$0x1]
    %v157 = vld [vmem:[%s0 + $0x72] sm:$0x1]
    %v158 = vld [vmem:[%s0 + $0x73] sm:$0x1]
    %v159 = vld [vmem:[%s0 + $0x74] sm:$0x1]
    %v160 = vld [vmem:[%s0 + $0x75] sm:$0x1]
    %v161 = vld [vmem:[%s0 + $0x76] sm:$0x1]
    %v162 = vld [vmem:[%s0 + $0x77] sm:$0x1]
    %v163 = vld [vmem:[%s0 + $0x78] sm:$0x1]
    %v164 = vld [vmem:[%s0 + $0x79] sm:$0x1]
    %v165 = vld [vmem:[%s0 + $0x7a] sm:$0x1]
    %v166 = vld [vmem:[%s0 + $0x7b] sm:$0x1]
    %v167 = vld [vmem:[%s0 + $0x7c] sm:$0x1]
    %v168 = vld [vmem:[%s0 + $0x7d] sm:$0x1]
    %v169 = vld [vmem:[%s0 + $0x7e] sm:$0x1]
    %v170 = vld [vmem:[%s0 + $0x7f] sm:$0x1]
    %v171 = vld [vmem:[%s0 + $0x80] sm:$0x1]
    %v172 = vld [vmem:[%s0 + $0x81] sm:$0x1]
    %v173 = vld [vmem:[%s0 + $0x82] sm:$0x1]
    %v174 = vld [vmem:[%s0 + $0x83] sm:$0x1]
    %v175 = vld [vmem:[%s0 + $0x84] sm:$0x1]
    %v176 = vld [vmem:[%s0 + $0x85] sm:$0x1]
    %v177 = vld [vmem:[%s0 + $0x86] sm:$0x1]
    %v178 = vld [vmem:[%s0 + $0x87] sm:$0x1]
    %v179 = vld [vmem:[%s0 + $0x88] sm:$0x1]
    %v180 = vld [vmem:[%s0 + $0x89] sm:$0x1]
    %v181 = vld [vmem:[%s0 + $0x8a] sm:$0x1]
    %v182 = vld [vmem:[%s0 + $0x8b] sm:$0x1]
    %v183 = vld [vmem:[%s0 + $0x8c] sm:$0x1]
    %v184 = vld [vmem:[%s0 + $0x8d] sm:$0x1]
    %v185 = vld [vmem:[%s0 + $0x8e] sm:$0x1]
    %v186 = vld [vmem:[%s0 + $0x8f] sm:$0x1]
    %v187 = vld [vmem:[%s0 + $0x90] sm:$0x1]
    %v188 = vld [vmem:[%s0 + $0x91] sm:$0x1]
    %v189 = vld [vmem:[%s0 + $0x92] sm:$0x1]
    %v190 = vld [vmem:[%s0 + $0x93] sm:$0x1]
    %v191 = vld [vmem:[%s0 + $0x94] sm:$0x1]
    %v192 = vld [vmem:[%s0 + $0x95] sm:$0x1]
    %v193 = vld [vmem:[%s0 + $0x96] sm:$0x1]
    %v194 = vld [vmem:[%s0 + $0x97] sm:$0x1]
    %v195 = vld [vmem:[%s0 + $0x98] sm:$0x1]
    %v196 = vld [vmem:[%s0 + $0x99] sm:$0x1]
    %v197 = vld [vmem:[%s0 + $0x9a] sm:$0x1]
    %v198 = vld [vmem:[%s0 + $0x9b] sm:$0x1]
    %v199 = vld [vmem:[%s0 + $0x9c] sm:$0x1]
    %v200 = vld [vmem:[%s0 + $0x9d] sm:$0x1]
    %v201 = vld [vmem:[%s0 + $0x9e] sm:$0x1]
    %v202 = vld [vmem:[%s0 + $0x9f] sm:$0x1]
    %v203 = vld [vmem:[%s0 + $0xa0] sm:$0x1]
    %v204 = vld [vmem:[%s0 + $0xa1] sm:$0x1]
    %v205 = vld [vmem:[%s0 + $0xa2] sm:$0x1]
    %v206 = vld [vmem:[%s0 + $0xa3] sm:$0x1]
    %v207 = vld [vmem:[%s0 + $0xa4] sm:$0x1]
    %v208 = vld [vmem:[%s0 + $0xa5] sm:$0x1]
    %v209 = vld [vmem:[%s0 + $0xa6] sm:$0x1]
    %v210 = vld [vmem:[%s0 + $0xa7] sm:$0x1]
    %v211 = vld [vmem:[%s0 + $0xa8] sm:$0x1]
    %v212 = vld [vmem:[%s0 + $0xa9] sm:$0x1]
    %v213 = vld [vmem:[%s0 + $0xaa] sm:$0x1]
    %v214 = vld [vmem:[%s0 + $0xab] sm:$0x1]
    %v215 = vld [vmem:[%s0 + $0xac] sm:$0x1]
    %v216 = vld [vmem:[%s0 + $0xad] sm:$0x1]
    %v217 = vld [vmem:[%s0 + $0xae] sm:$0x1]
    %v218 = vld [vmem:[%s0 + $0xaf] sm:$0x1]
    %v219 = vld [vmem:[%s0 + $0xb0] sm:$0x1]
    %v220 = vld [vmem:[%s0 + $0xb1] sm:$0x1]
    %v221 = vld [vmem:[%s0 + $0xb2] sm:$0x1]
    %v222 = vld [vmem:[%s0 + $0xb3] sm:$0x1]
    %v223 = vld [vmem:[%s0 + $0xb4] sm:$0x1]
    %v224 = vld [vmem:[%s0 + $0xb5] sm:$0x1]
    %v225 = vld [vmem:[%s0 + $0xb6] sm:$0x1]
    %v226 = vld [vmem:[%s0 + $0xb7] sm:$0x1]
    %v227 = vld [vmem:[%s0 + $0xb8] sm:$0x1]
    %v228 = vld [vmem:[%s0 + $0xb9] sm:$0x1]
    %v229 = vld [vmem:[%s0 + $0xba] sm:$0x1]
    %v230 = vld [vmem:[%s0 + $0xbb] sm:$0x1]
    %v231 = vld [vmem:[%s0 + $0xbc] sm:$0x1]
    %v232 = vld [vmem:[%s0 + $0xbd] sm:$0x1]
    %v233 = vld [vmem:[%s0 + $0xbe] sm:$0x1]
    %v234 = vld [vmem:[%s0 + $0xbf] sm:$0x1]
    %v235 = vld [vmem:[%s0 + $0xc0] sm:$0x1]
    %v236 = vld [vmem:[%s0 + $0xc1] sm:$0x1]
    %v237 = vld [vmem:[%s0 + $0xc2] sm:$0x1]
    %v238 = vld [vmem:[%s0 + $0xc3] sm:$0x1]
    %422 = vrot.lane.b32.xlu0 0, 64
    %v423 = vpop.permute.xlu0 %422
    %424 = vrot.lane.b32.xlu0 %v43, 64
    %v425 = vpop.permute.xlu0 %424
    %426 = vrot.lane.b32.xlu0 %v44, 64
    %v427 = vpop.permute.xlu0 %426
    %428 = vrot.lane.b32.xlu0 %v45, 64
    %v429 = vpop.permute.xlu0 %428
    %430 = vrot.lane.b32.xlu0 %v46, 64
    %v431 = vpop.permute.xlu0 %430
    %432 = vrot.lane.b32.xlu0 %v47, 64
    %v433 = vpop.permute.xlu0 %432
    %434 = vrot.lane.b32.xlu0 %v48, 64
    %v435 = vpop.permute.xlu0 %434
    %436 = vrot.lane.b32.xlu0 %v49, 64
    %v437 = vpop.permute.xlu0 %436
    %438 = vrot.lane.b32.xlu0 %v50, 64
    %v439 = vpop.permute.xlu0 %438
    %440 = vrot.lane.b32.xlu0 %v51, 64
    %v441 = vpop.permute.xlu0 %440
    %442 = vrot.lane.b32.xlu0 %v52, 64
    %v443 = vpop.permute.xlu0 %442
    %444 = vrot.lane.b32.xlu0 %v53, 64
    %v445 = vpop.permute.xlu0 %444
    %446 = vrot.lane.b32.xlu0 %v54, 64
    %v447 = vpop.permute.xlu0 %446
    %448 = vrot.lane.b32.xlu0 %v55, 64
    %v449 = vpop.permute.xlu0 %448
    %450 = vrot.lane.b32.xlu0 %v56, 64
    %v451 = vpop.permute.xlu0 %450
    %452 = vrot.lane.b32.xlu0 %v57, 64
    %v453 = vpop.permute.xlu0 %452
    %454 = vrot.lane.b32.xlu0 %v58, 64
    %v455 = vpop.permute.xlu0 %454
    %456 = vrot.lane.b32.xlu0 %v59, 64
    %v457 = vpop.permute.xlu0 %456
    %458 = vrot.lane.b32.xlu0 %v60, 64
    %v459 = vpop.permute.xlu0 %458
    %460 = vrot.lane.b32.xlu0 %v61, 64
    %v461 = vpop.permute.xlu0 %460
    %462 = vrot.lane.b32.xlu0 %v62, 64
    %v463 = vpop.permute.xlu0 %462
    %464 = vrot.lane.b32.xlu0 %v63, 64
    %v465 = vpop.permute.xlu0 %464
    %466 = vrot.lane.b32.xlu0 %v64, 64
    %v467 = vpop.permute.xlu0 %466
    %468 = vrot.lane.b32.xlu0 %v65, 64
    %v469 = vpop.permute.xlu0 %468
    %470 = vrot.lane.b32.xlu0 %v66, 64
    %v471 = vpop.permute.xlu0 %470
    %472 = vrot.lane.b32.xlu0 %v67, 64
    %v473 = vpop.permute.xlu0 %472
    %474 = vrot.lane.b32.xlu0 %v68, 64
    %v475 = vpop.permute.xlu0 %474
    %476 = vrot.lane.b32.xlu0 %v69, 64
    %v477 = vpop.permute.xlu0 %476
    %478 = vrot.lane.b32.xlu0 %v70, 64
    %v479 = vpop.permute.xlu0 %478
    %480 = vrot.lane.b32.xlu0 %v71, 64
    %v481 = vpop.permute.xlu0 %480
    %482 = vrot.lane.b32.xlu0 %v72, 64
    %v483 = vpop.permute.xlu0 %482
    %484 = vrot.lane.b32.xlu0 %v73, 64
    %v485 = vpop.permute.xlu0 %484
    %486 = vrot.lane.b32.xlu0 %v74, 64
    %v487 = vpop.permute.xlu0 %486
    %488 = vrot.lane.b32.xlu0 %v75, 64
    %v489 = vpop.permute.xlu0 %488
    %490 = vrot.lane.b32.xlu0 %v76, 64
    %v491 = vpop.permute.xlu0 %490
    %492 = vrot.lane.b32.xlu0 %v77, 64
    %v493 = vpop.permute.xlu0 %492
    %494 = vrot.lane.b32.xlu0 %v78, 64
    %v495 = vpop.permute.xlu0 %494
    %496 = vrot.lane.b32.xlu0 %v79, 64
    %v497 = vpop.permute.xlu0 %496
    %498 = vrot.lane.b32.xlu0 %v80, 64
    %v499 = vpop.permute.xlu0 %498
    %500 = vrot.lane.b32.xlu0 %v81, 64
    %v501 = vpop.permute.xlu0 %500
    %502 = vrot.lane.b32.xlu0 %v82, 64
    %v503 = vpop.permute.xlu0 %502
    %504 = vrot.lane.b32.xlu0 %v83, 64
    %v505 = vpop.permute.xlu0 %504
    %506 = vrot.lane.b32.xlu0 %v84, 64
    %v507 = vpop.permute.xlu0 %506
    %508 = vrot.lane.b32.xlu0 %v85, 64
    %v509 = vpop.permute.xlu0 %508
    %510 = vrot.lane.b32.xlu0 %v86, 64
    %v511 = vpop.permute.xlu0 %510
    %512 = vrot.lane.b32.xlu0 %v87, 64
    %v513 = vpop.permute.xlu0 %512
    %514 = vrot.lane.b32.xlu0 %v88, 64
    %v515 = vpop.permute.xlu0 %514
    %516 = vrot.lane.b32.xlu0 %v89, 64
    %v517 = vpop.permute.xlu0 %516
    %518 = vrot.lane.b32.xlu0 %v90, 64
    %v519 = vpop.permute.xlu0 %518
    %520 = vrot.lane.b32.xlu0 %v91, 64
    %v521 = vpop.permute.xlu0 %520
    %522 = vrot.lane.b32.xlu0 %v92, 64
    %v523 = vpop.permute.xlu0 %522
    %524 = vrot.lane.b32.xlu0 %v93, 64
    %v525 = vpop.permute.xlu0 %524
    %526 = vrot.lane.b32.xlu0 %v94, 64
    %v527 = vpop.permute.xlu0 %526
    %528 = vrot.lane.b32.xlu0 %v95, 64
    %v529 = vpop.permute.xlu0 %528
    %530 = vrot.lane.b32.xlu0 %v96, 64
    %v531 = vpop.permute.xlu0 %530
    %532 = vrot.lane.b32.xlu0 %v97, 64
    %v533 = vpop.permute.xlu0 %532
    %534 = vrot.lane.b32.xlu0 %v98, 64
    %v535 = vpop.permute.xlu0 %534
    %536 = vrot.lane.b32.xlu0 %v99, 64
    %v537 = vpop.permute.xlu0 %536
    %538 = vrot.lane.b32.xlu0 %v100, 64
    %v539 = vpop.permute.xlu0 %538
    %540 = vrot.lane.b32.xlu0 %v101, 64
    %v541 = vpop.permute.xlu0 %540
    %542 = vrot.lane.b32.xlu0 %v102, 64
    %v543 = vpop.permute.xlu0 %542
    %544 = vrot.lane.b32.xlu0 %v103, 64
    %v545 = vpop.permute.xlu0 %544
    %546 = vrot.lane.b32.xlu0 %v104, 64
    %v547 = vpop.permute.xlu0 %546
    %548 = vrot.lane.b32.xlu0 %v105, 64
    %v549 = vpop.permute.xlu0 %548
    %550 = vrot.lane.b32.xlu0 %v106, 64
    %v551 = vpop.permute.xlu0 %550
    %552 = vrot.lane.b32.xlu0 %v107, 64
    %v553 = vpop.permute.xlu0 %552
    %554 = vrot.lane.b32.xlu0 %v108, 64
    %v555 = vpop.permute.xlu0 %554
    %556 = vrot.lane.b32.xlu0 %v109, 64
    %v557 = vpop.permute.xlu0 %556
    %558 = vrot.lane.b32.xlu0 %v110, 64
    %v559 = vpop.permute.xlu0 %558
    %560 = vrot.lane.b32.xlu0 %v111, 64
    %v561 = vpop.permute.xlu0 %560
    %562 = vrot.lane.b32.xlu0 %v112, 64
    %v563 = vpop.permute.xlu0 %562
    %564 = vrot.lane.b32.xlu0 %v113, 64
    %v565 = vpop.permute.xlu0 %564
    %566 = vrot.lane.b32.xlu0 %v114, 64
    %v567 = vpop.permute.xlu0 %566
    %568 = vrot.lane.b32.xlu0 %v115, 64
    %v569 = vpop.permute.xlu0 %568
    %570 = vrot.lane.b32.xlu0 %v116, 64
    %v571 = vpop.permute.xlu0 %570
    %572 = vrot.lane.b32.xlu0 %v117, 64
    %v573 = vpop.permute.xlu0 %572
    %574 = vrot.lane.b32.xlu0 %v118, 64
    %v575 = vpop.permute.xlu0 %574
    %576 = vrot.lane.b32.xlu0 %v119, 64
    %v577 = vpop.permute.xlu0 %576
    %578 = vrot.lane.b32.xlu0 %v120, 64
    %v579 = vpop.permute.xlu0 %578
    %580 = vrot.lane.b32.xlu0 %v121, 64
    %v581 = vpop.permute.xlu0 %580
    %582 = vrot.lane.b32.xlu0 %v122, 64
    %v583 = vpop.permute.xlu0 %582
    %584 = vrot.lane.b32.xlu0 %v123, 64
    %v585 = vpop.permute.xlu0 %584
    %586 = vrot.lane.b32.xlu0 %v124, 64
    %v587 = vpop.permute.xlu0 %586
    %588 = vrot.lane.b32.xlu0 %v125, 64
    %v589 = vpop.permute.xlu0 %588
    %590 = vrot.lane.b32.xlu0 %v126, 64
    %v591 = vpop.permute.xlu0 %590
    %592 = vrot.lane.b32.xlu0 %v127, 64
    %v593 = vpop.permute.xlu0 %592
    %594 = vrot.lane.b32.xlu0 %v128, 64
    %v595 = vpop.permute.xlu0 %594
    %596 = vrot.lane.b32.xlu0 %v129, 64
    %v597 = vpop.permute.xlu0 %596
    %598 = vrot.lane.b32.xlu0 %v130, 64
    %v599 = vpop.permute.xlu0 %598
    %600 = vrot.lane.b32.xlu0 %v131, 64
    %v601 = vpop.permute.xlu0 %600
    %602 = vrot.lane.b32.xlu0 %v132, 64
    %v603 = vpop.permute.xlu0 %602
    %604 = vrot.lane.b32.xlu0 %v133, 64
    %v605 = vpop.permute.xlu0 %604
    %606 = vrot.lane.b32.xlu0 %v134, 64
    %v607 = vpop.permute.xlu0 %606
    %608 = vrot.lane.b32.xlu0 %v135, 64
    %v609 = vpop.permute.xlu0 %608
    %610 = vrot.lane.b32.xlu0 %v136, 64
    %v611 = vpop.permute.xlu0 %610
    %612 = vrot.lane.b32.xlu0 %v137, 64
    %v613 = vpop.permute.xlu0 %612
    %614 = vrot.lane.b32.xlu0 %v138, 64
    %v615 = vpop.permute.xlu0 %614
    %616 = vrot.lane.b32.xlu0 %v139, 64
    %v617 = vpop.permute.xlu0 %616
    %618 = vrot.lane.b32.xlu0 %v140, 64
    %v619 = vpop.permute.xlu0 %618
    %620 = vrot.lane.b32.xlu0 %v141, 64
    %v621 = vpop.permute.xlu0 %620
    %622 = vrot.lane.b32.xlu0 %v142, 64
    %v623 = vpop.permute.xlu0 %622
    %624 = vrot.lane.b32.xlu0 %v143, 64
    %v625 = vpop.permute.xlu0 %624
    %626 = vrot.lane.b32.xlu0 %v144, 64
    %v627 = vpop.permute.xlu0 %626
    %628 = vrot.lane.b32.xlu0 %v145, 64
    %v629 = vpop.permute.xlu0 %628
    %630 = vrot.lane.b32.xlu0 %v146, 64
    %v631 = vpop.permute.xlu0 %630
    %632 = vrot.lane.b32.xlu0 %v147, 64
    %v633 = vpop.permute.xlu0 %632
    %634 = vrot.lane.b32.xlu0 %v148, 64
    %v635 = vpop.permute.xlu0 %634
    %636 = vrot.lane.b32.xlu0 %v149, 64
    %v637 = vpop.permute.xlu0 %636
    %638 = vrot.lane.b32.xlu0 %v150, 64
    %v639 = vpop.permute.xlu0 %638
    %640 = vrot.lane.b32.xlu0 %v151, 64
    %v641 = vpop.permute.xlu0 %640
    %642 = vrot.lane.b32.xlu0 %v152, 64
    %v643 = vpop.permute.xlu0 %642
    %644 = vrot.lane.b32.xlu0 %v153, 64
    %v645 = vpop.permute.xlu0 %644
    %646 = vrot.lane.b32.xlu0 %v154, 64
    %v647 = vpop.permute.xlu0 %646
    %648 = vrot.lane.b32.xlu0 %v155, 64
    %v649 = vpop.permute.xlu0 %648
    %650 = vrot.lane.b32.xlu0 %v156, 64
    %v651 = vpop.permute.xlu0 %650
    %652 = vrot.lane.b32.xlu0 %v157, 64
    %v653 = vpop.permute.xlu0 %652
    %654 = vrot.lane.b32.xlu0 %v158, 64
    %v655 = vpop.permute.xlu0 %654
    %656 = vrot.lane.b32.xlu0 %v159, 64
    %v657 = vpop.permute.xlu0 %656
    %658 = vrot.lane.b32.xlu0 %v160, 64
    %v659 = vpop.permute.xlu0 %658
    %660 = vrot.lane.b32.xlu0 %v161, 64
    %v661 = vpop.permute.xlu0 %660
    %662 = vrot.lane.b32.xlu0 %v162, 64
    %v663 = vpop.permute.xlu0 %662
    %664 = vrot.lane.b32.xlu0 %v163, 64
    %v665 = vpop.permute.xlu0 %664
    %666 = vrot.lane.b32.xlu0 %v164, 64
    %v667 = vpop.permute.xlu0 %666
    %668 = vrot.lane.b32.xlu0 %v165, 64
    %v669 = vpop.permute.xlu0 %668
    %670 = vrot.lane.b32.xlu0 %v166, 64
    %v671 = vpop.permute.xlu0 %670
    %672 = vrot.lane.b32.xlu0 %v167, 64
    %v673 = vpop.permute.xlu0 %672
    %674 = vrot.lane.b32.xlu0 %v168, 64
    %v675 = vpop.permute.xlu0 %674
    %676 = vrot.lane.b32.xlu0 %v169, 64
    %v677 = vpop.permute.xlu0 %676
    %678 = vrot.lane.b32.xlu0 %v170, 64
    %v679 = vpop.permute.xlu0 %678
    %680 = vrot.lane.b32.xlu0 %v171, 64
    %v681 = vpop.permute.xlu0 %680
    %682 = vrot.lane.b32.xlu0 %v172, 64
    %v683 = vpop.permute.xlu0 %682
    %684 = vrot.lane.b32.xlu0 %v173, 64
    %v685 = vpop.permute.xlu0 %684
    %686 = vrot.lane.b32.xlu0 %v174, 64
    %v687 = vpop.permute.xlu0 %686
    %688 = vrot.lane.b32.xlu0 %v175, 64
    %v689 = vpop.permute.xlu0 %688
    %690 = vrot.lane.b32.xlu0 %v176, 64
    %v691 = vpop.permute.xlu0 %690
    %692 = vrot.lane.b32.xlu0 %v177, 64
    %v693 = vpop.permute.xlu0 %692
    %694 = vrot.lane.b32.xlu0 %v178, 64
    %v695 = vpop.permute.xlu0 %694
    %696 = vrot.lane.b32.xlu0 %v179, 64
    %v697 = vpop.permute.xlu0 %696
    %698 = vrot.lane.b32.xlu0 %v180, 64
    %v699 = vpop.permute.xlu0 %698
    %700 = vrot.lane.b32.xlu0 %v181, 64
    %v701 = vpop.permute.xlu0 %700
    %702 = vrot.lane.b32.xlu0 %v182, 64
    %v703 = vpop.permute.xlu0 %702
    %704 = vrot.lane.b32.xlu0 %v183, 64
    %v705 = vpop.permute.xlu0 %704
    %706 = vrot.lane.b32.xlu0 %v184, 64
    %v707 = vpop.permute.xlu0 %706
    %708 = vrot.lane.b32.xlu0 %v185, 64
    %v709 = vpop.permute.xlu0 %708
    %710 = vrot.lane.b32.xlu0 %v186, 64
    %v711 = vpop.permute.xlu0 %710
    %712 = vrot.lane.b32.xlu0 %v187, 64
    %v713 = vpop.permute.xlu0 %712
    %714 = vrot.lane.b32.xlu0 %v188, 64
    %v715 = vpop.permute.xlu0 %714
    %716 = vrot.lane.b32.xlu0 %v189, 64
    %v717 = vpop.permute.xlu0 %716
    %718 = vrot.lane.b32.xlu0 %v190, 64
    %v719 = vpop.permute.xlu0 %718
    %720 = vrot.lane.b32.xlu0 %v191, 64
    %v721 = vpop.permute.xlu0 %720
    %722 = vrot.lane.b32.xlu0 %v192, 64
    %v723 = vpop.permute.xlu0 %722
    %724 = vrot.lane.b32.xlu0 %v193, 64
    %v725 = vpop.permute.xlu0 %724
    %726 = vrot.lane.b32.xlu0 %v194, 64
    %v727 = vpop.permute.xlu0 %726
    %728 = vrot.lane.b32.xlu0 %v195, 64
    %v729 = vpop.permute.xlu0 %728
    %730 = vrot.lane.b32.xlu0 %v196, 64
    %v731 = vpop.permute.xlu0 %730
    %732 = vrot.lane.b32.xlu0 %v197, 64
    %v733 = vpop.permute.xlu0 %732
    %734 = vrot.lane.b32.xlu0 %v198, 64
    %v735 = vpop.permute.xlu0 %734
    %736 = vrot.lane.b32.xlu0 %v199, 64
    %v737 = vpop.permute.xlu0 %736
    %738 = vrot.lane.b32.xlu0 %v200, 64
    %v739 = vpop.permute.xlu0 %738
    %740 = vrot.lane.b32.xlu0 %v201, 64
    %v741 = vpop.permute.xlu0 %740
    %742 = vrot.lane.b32.xlu0 %v202, 64
    %v743 = vpop.permute.xlu0 %742
    %744 = vrot.lane.b32.xlu0 %v203, 64
    %v745 = vpop.permute.xlu0 %744
    %746 = vrot.lane.b32.xlu0 %v204, 64
    %v747 = vpop.permute.xlu0 %746
    %748 = vrot.lane.b32.xlu0 %v205, 64
    %v749 = vpop.permute.xlu0 %748
    %750 = vrot.lane.b32.xlu0 %v206, 64
    %v751 = vpop.permute.xlu0 %750
    %752 = vrot.lane.b32.xlu0 %v207, 64
    %v753 = vpop.permute.xlu0 %752
    %754 = vrot.lane.b32.xlu0 %v208, 64
    %v755 = vpop.permute.xlu0 %754
    %756 = vrot.lane.b32.xlu0 %v209, 64
    %v757 = vpop.permute.xlu0 %756
    %758 = vrot.lane.b32.xlu0 %v210, 64
    %v759 = vpop.permute.xlu0 %758
    %760 = vrot.lane.b32.xlu0 %v211, 64
    %v761 = vpop.permute.xlu0 %760
    %762 = vrot.lane.b32.xlu0 %v212, 64
    %v763 = vpop.permute.xlu0 %762
    %764 = vrot.lane.b32.xlu0 %v213, 64
    %v765 = vpop.permute.xlu0 %764
    %766 = vrot.lane.b32.xlu0 %v214, 64
    %v767 = vpop.permute.xlu0 %766
    %768 = vrot.lane.b32.xlu0 %v215, 64
    %v769 = vpop.permute.xlu0 %768
    %770 = vrot.lane.b32.xlu0 %v216, 64
    %v771 = vpop.permute.xlu0 %770
    %772 = vrot.lane.b32.xlu0 %v217, 64
    %v773 = vpop.permute.xlu0 %772
    %774 = vrot.lane.b32.xlu0 %v218, 64
    %v775 = vpop.permute.xlu0 %774
    %776 = vrot.lane.b32.xlu0 %v219, 64
    %v777 = vpop.permute.xlu0 %776
    %778 = vrot.lane.b32.xlu0 %v220, 64
    %v779 = vpop.permute.xlu0 %778
    %780 = vrot.lane.b32.xlu0 %v221, 64
    %v781 = vpop.permute.xlu0 %780
    %782 = vrot.lane.b32.xlu0 %v222, 64
    %v783 = vpop.permute.xlu0 %782
    %784 = vrot.lane.b32.xlu0 %v223, 64
    %v785 = vpop.permute.xlu0 %784
    %786 = vrot.lane.b32.xlu0 %v224, 64
    %v787 = vpop.permute.xlu0 %786
    %vm788 = vcmask 523264
    %v791 = vsel %vm788, 0, %v423
    %v793 = vsel %vm788, 0, %v425
    %v796 = vsel %vm788, %v43, %v427
    %v799 = vsel %vm788, %v44, %v429
    %v802 = vsel %vm788, %v45, %v431
    %v805 = vsel %vm788, %v46, %v433
    %v808 = vsel %vm788, %v47, %v435
    %v811 = vsel %vm788, %v48, %v437
    %v814 = vsel %vm788, %v49, %v439
    %v817 = vsel %vm788, %v50, %v441
    %v820 = vsel %vm788, %v51, %v443
    %v823 = vsel %vm788, %v52, %v445
    %v826 = vsel %vm788, %v53, %v447
    %v829 = vsel %vm788, %v54, %v449
    %v832 = vsel %vm788, %v55, %v451
    %v834 = vsel %vm788, 0, %v453
    %v837 = vsel %vm788, %v57, %v455
    %v840 = vsel %vm788, %v58, %v457
    %v843 = vsel %vm788, %v59, %v459
    %v846 = vsel %vm788, %v60, %v461
    %v849 = vsel %vm788, %v61, %v463
    %v852 = vsel %vm788, %v62, %v465
    %v855 = vsel %vm788, %v63, %v467
    %v858 = vsel %vm788, %v64, %v469
    %v861 = vsel %vm788, %v65, %v471
    %v864 = vsel %vm788, %v66, %v473
    %v867 = vsel %vm788, %v67, %v475
    %v870 = vsel %vm788, %v68, %v477
    %v873 = vsel %vm788, %v69, %v479
    %v875 = vsel %vm788, 0, %v481
    %v878 = vsel %vm788, %v71, %v483
    %v881 = vsel %vm788, %v72, %v485
    %v884 = vsel %vm788, %v73, %v487
    %v887 = vsel %vm788, %v74, %v489
    %v890 = vsel %vm788, %v75, %v491
    %v893 = vsel %vm788, %v76, %v493
    %v896 = vsel %vm788, %v77, %v495
    %v899 = vsel %vm788, %v78, %v497
    %v902 = vsel %vm788, %v79, %v499
    %v905 = vsel %vm788, %v80, %v501
    %v908 = vsel %vm788, %v81, %v503
    %v911 = vsel %vm788, %v82, %v505
    %v914 = vsel %vm788, %v83, %v507
    %v916 = vsel %vm788, 0, %v509
    %v919 = vsel %vm788, %v85, %v511
    %v922 = vsel %vm788, %v86, %v513
    %v925 = vsel %vm788, %v87, %v515
    %v928 = vsel %vm788, %v88, %v517
    %v931 = vsel %vm788, %v89, %v519
    %v934 = vsel %vm788, %v90, %v521
    %v937 = vsel %vm788, %v91, %v523
    %v940 = vsel %vm788, %v92, %v525
    %v943 = vsel %vm788, %v93, %v527
    %v946 = vsel %vm788, %v94, %v529
    %v949 = vsel %vm788, %v95, %v531
    %v952 = vsel %vm788, %v96, %v533
    %v955 = vsel %vm788, %v97, %v535
    %v957 = vsel %vm788, 0, %v537
    %v960 = vsel %vm788, %v99, %v539
    %v963 = vsel %vm788, %v100, %v541
    %v966 = vsel %vm788, %v101, %v543
    %v969 = vsel %vm788, %v102, %v545
    %v972 = vsel %vm788, %v103, %v547
    %v975 = vsel %vm788, %v104, %v549
    %v978 = vsel %vm788, %v105, %v551
    %v981 = vsel %vm788, %v106, %v553
    %v984 = vsel %vm788, %v107, %v555
    %v987 = vsel %vm788, %v108, %v557
    %v990 = vsel %vm788, %v109, %v559
    %v993 = vsel %vm788, %v110, %v561
    %v996 = vsel %vm788, %v111, %v563
    %v998 = vsel %vm788, 0, %v565
    %v1001 = vsel %vm788, %v113, %v567
    %v1004 = vsel %vm788, %v114, %v569
    %v1007 = vsel %vm788, %v115, %v571
    %v1010 = vsel %vm788, %v116, %v573
    %v1013 = vsel %vm788, %v117, %v575
    %v1016 = vsel %vm788, %v118, %v577
    %v1019 = vsel %vm788, %v119, %v579
    %v1022 = vsel %vm788, %v120, %v581
    %v1025 = vsel %vm788, %v121, %v583
    %v1028 = vsel %vm788, %v122, %v585
    %v1031 = vsel %vm788, %v123, %v587
    %v1034 = vsel %vm788, %v124, %v589
    %v1037 = vsel %vm788, %v125, %v591
    %v1039 = vsel %vm788, 0, %v593
    %v1042 = vsel %vm788, %v127, %v595
    %v1045 = vsel %vm788, %v128, %v597
    %v1048 = vsel %vm788, %v129, %v599
    %v1051 = vsel %vm788, %v130, %v601
    %v1054 = vsel %vm788, %v131, %v603
    %v1057 = vsel %vm788, %v132, %v605
    %v1060 = vsel %vm788, %v133, %v607
    %v1063 = vsel %vm788, %v134, %v609
    %v1066 = vsel %vm788, %v135, %v611
    %v1069 = vsel %vm788, %v136, %v613
    %v1072 = vsel %vm788, %v137, %v615
    %v1075 = vsel %vm788, %v138, %v617
    %v1078 = vsel %vm788, %v139, %v619
    %v1080 = vsel %vm788, 0, %v621
    %v1083 = vsel %vm788, %v141, %v623
    %v1086 = vsel %vm788, %v142, %v625
    %v1089 = vsel %vm788, %v143, %v627
    %v1092 = vsel %vm788, %v144, %v629
    %v1095 = vsel %vm788, %v145, %v631
    %v1098 = vsel %vm788, %v146, %v633
    %v1101 = vsel %vm788, %v147, %v635
    %v1104 = vsel %vm788, %v148, %v637
    %v1107 = vsel %vm788, %v149, %v639
    %v1110 = vsel %vm788, %v150, %v641
    %v1113 = vsel %vm788, %v151, %v643
    %v1116 = vsel %vm788, %v152, %v645
    %v1119 = vsel %vm788, %v153, %v647
    %v1121 = vsel %vm788, 0, %v649
    %v1124 = vsel %vm788, %v155, %v651
    %v1127 = vsel %vm788, %v156, %v653
    %v1130 = vsel %vm788, %v157, %v655
    %v1133 = vsel %vm788, %v158, %v657
    %v1136 = vsel %vm788, %v159, %v659
    %v1139 = vsel %vm788, %v160, %v661
    %v1142 = vsel %vm788, %v161, %v663
    %v1145 = vsel %vm788, %v162, %v665
    %v1148 = vsel %vm788, %v163, %v667
    %v1151 = vsel %vm788, %v164, %v669
    %v1154 = vsel %vm788, %v165, %v671
    %v1157 = vsel %vm788, %v166, %v673
    %v1160 = vsel %vm788, %v167, %v675
    %v1162 = vsel %vm788, 0, %v677
    %v1165 = vsel %vm788, %v169, %v679
    %v1168 = vsel %vm788, %v170, %v681
    %v1171 = vsel %vm788, %v171, %v683
    %v1174 = vsel %vm788, %v172, %v685
    %v1177 = vsel %vm788, %v173, %v687
    %v1180 = vsel %vm788, %v174, %v689
    %v1183 = vsel %vm788, %v175, %v691
    %v1186 = vsel %vm788, %v176, %v693
    %v1189 = vsel %vm788, %v177, %v695
    %v1192 = vsel %vm788, %v178, %v697
    %v1195 = vsel %vm788, %v179, %v699
    %v1198 = vsel %vm788, %v180, %v701
    %v1201 = vsel %vm788, %v181, %v703
    %v1203 = vsel %vm788, 0, %v705
    %v1206 = vsel %vm788, %v183, %v707
    %v1209 = vsel %vm788, %v184, %v709
    %v1212 = vsel %vm788, %v185, %v711
    %v1215 = vsel %vm788, %v186, %v713
    %v1218 = vsel %vm788, %v187, %v715
    %v1221 = vsel %vm788, %v188, %v717
    %v1224 = vsel %vm788, %v189, %v719
    %v1227 = vsel %vm788, %v190, %v721
    %v1230 = vsel %vm788, %v191, %v723
    %v1233 = vsel %vm788, %v192, %v725
    %v1236 = vsel %vm788, %v193, %v727
    %v1239 = vsel %vm788, %v194, %v729
    %v1242 = vsel %vm788, %v195, %v731
    %v1244 = vsel %vm788, 0, %v733
    %v1247 = vsel %vm788, %v197, %v735
    %v1250 = vsel %vm788, %v198, %v737
    %v1253 = vsel %vm788, %v199, %v739
    %v1256 = vsel %vm788, %v200, %v741
    %v1259 = vsel %vm788, %v201, %v743
    %v1262 = vsel %vm788, %v202, %v745
    %v1265 = vsel %vm788, %v203, %v747
    %v1268 = vsel %vm788, %v204, %v749
    %v1271 = vsel %vm788, %v205, %v751
    %v1274 = vsel %vm788, %v206, %v753
    %v1277 = vsel %vm788, %v207, %v755
    %v1280 = vsel %vm788, %v208, %v757
    %v1283 = vsel %vm788, %v209, %v759
    %v1285 = vsel %vm788, 0, %v761
    %v1288 = vsel %vm788, %v211, %v763
    %v1291 = vsel %vm788, %v212, %v765
    %v1294 = vsel %vm788, %v213, %v767
    %v1297 = vsel %vm788, %v214, %v769
    %v1300 = vsel %vm788, %v215, %v771
    %v1303 = vsel %vm788, %v216, %v773
    %v1306 = vsel %vm788, %v217, %v775
    %v1309 = vsel %vm788, %v218, %v777
    %v1312 = vsel %vm788, %v219, %v779
    %v1315 = vsel %vm788, %v220, %v781
    %v1318 = vsel %vm788, %v221, %v783
    %v1321 = vsel %vm788, %v222, %v785
    %v1324 = vsel %vm788, %v223, %v787
    %v1325 = vrot.slane 0, 7
    %v1326 = vrot.slane %v44, 7
    %v1327 = vrot.slane %v45, 7
    %v1328 = vrot.slane %v46, 7
    %v1329 = vrot.slane %v47, 7
    %v1330 = vrot.slane %v48, 7
    %v1331 = vrot.slane %v49, 7
    %v1332 = vrot.slane %v50, 7
    %v1333 = vrot.slane %v51, 7
    %v1334 = vrot.slane %v52, 7
    %v1335 = vrot.slane %v53, 7
    %v1336 = vrot.slane %v54, 7
    %v1337 = vrot.slane %v55, 7
    %v1338 = vrot.slane %v56, 7
    %v1339 = vrot.slane %v58, 7
    %v1340 = vrot.slane %v59, 7
    %v1341 = vrot.slane %v60, 7
    %v1342 = vrot.slane %v61, 7
    %v1343 = vrot.slane %v62, 7
    %v1344 = vrot.slane %v63, 7
    %v1345 = vrot.slane %v64, 7
    %v1346 = vrot.slane %v65, 7
    %v1347 = vrot.slane %v66, 7
    %v1348 = vrot.slane %v67, 7
    %v1349 = vrot.slane %v68, 7
    %v1350 = vrot.slane %v69, 7
    %v1351 = vrot.slane %v70, 7
    %v1352 = vrot.slane %v72, 7
    %v1353 = vrot.slane %v73, 7
    %v1354 = vrot.slane %v74, 7
    %v1355 = vrot.slane %v75, 7
    %v1356 = vrot.slane %v76, 7
    %v1357 = vrot.slane %v77, 7
    %v1358 = vrot.slane %v78, 7
    %v1359 = vrot.slane %v79, 7
    %v1360 = vrot.slane %v80, 7
    %v1361 = vrot.slane %v81, 7
    %v1362 = vrot.slane %v82, 7
    %v1363 = vrot.slane %v83, 7
    %v1364 = vrot.slane %v84, 7
    %v1365 = vrot.slane %v86, 7
    %v1366 = vrot.slane %v87, 7
    %v1367 = vrot.slane %v88, 7
    %v1368 = vrot.slane %v89, 7
    %v1369 = vrot.slane %v90, 7
    %v1370 = vrot.slane %v91, 7
    %v1371 = vrot.slane %v92, 7
    %v1372 = vrot.slane %v93, 7
    %v1373 = vrot.slane %v94, 7
    %v1374 = vrot.slane %v95, 7
    %v1375 = vrot.slane %v96, 7
    %v1376 = vrot.slane %v97, 7
    %v1377 = vrot.slane %v98, 7
    %v1378 = vrot.slane %v100, 7
    %v1379 = vrot.slane %v101, 7
    %v1380 = vrot.slane %v102, 7
    %v1381 = vrot.slane %v103, 7
    %v1382 = vrot.slane %v104, 7
    %v1383 = vrot.slane %v105, 7
    %v1384 = vrot.slane %v106, 7
    %v1385 = vrot.slane %v107, 7
    %v1386 = vrot.slane %v108, 7
    %v1387 = vrot.slane %v109, 7
    %v1388 = vrot.slane %v110, 7
    %v1389 = vrot.slane %v111, 7
    %v1390 = vrot.slane %v112, 7
    %v1391 = vrot.slane %v114, 7
    %v1392 = vrot.slane %v115, 7
    %v1393 = vrot.slane %v116, 7
    %v1394 = vrot.slane %v117, 7
    %v1395 = vrot.slane %v118, 7
    %v1396 = vrot.slane %v119, 7
    %v1397 = vrot.slane %v120, 7
    %v1398 = vrot.slane %v121, 7
    %v1399 = vrot.slane %v122, 7
    %v1400 = vrot.slane %v123, 7
    %v1401 = vrot.slane %v124, 7
    %v1402 = vrot.slane %v125, 7
    %v1403 = vrot.slane %v126, 7
    %v1404 = vrot.slane %v128, 7
    %v1405 = vrot.slane %v129, 7
    %v1406 = vrot.slane %v130, 7
    %v1407 = vrot.slane %v131, 7
    %v1408 = vrot.slane %v132, 7
    %v1409 = vrot.slane %v133, 7
    %v1410 = vrot.slane %v134, 7
    %v1411 = vrot.slane %v135, 7
    %v1412 = vrot.slane %v136, 7
    %v1413 = vrot.slane %v137, 7
    %v1414 = vrot.slane %v138, 7
    %v1415 = vrot.slane %v139, 7
    %v1416 = vrot.slane %v140, 7
    %v1417 = vrot.slane %v142, 7
    %v1418 = vrot.slane %v143, 7
    %v1419 = vrot.slane %v144, 7
    %v1420 = vrot.slane %v145, 7
    %v1421 = vrot.slane %v146, 7
    %v1422 = vrot.slane %v147, 7
    %v1423 = vrot.slane %v148, 7
    %v1424 = vrot.slane %v149, 7
    %v1425 = vrot.slane %v150, 7
    %v1426 = vrot.slane %v151, 7
    %v1427 = vrot.slane %v152, 7
    %v1428 = vrot.slane %v153, 7
    %v1429 = vrot.slane %v154, 7
    %v1430 = vrot.slane %v156, 7
    %v1431 = vrot.slane %v157, 7
    %v1432 = vrot.slane %v158, 7
    %v1433 = vrot.slane %v159, 7
    %v1434 = vrot.slane %v160, 7
    %v1435 = vrot.slane %v161, 7
    %v1436 = vrot.slane %v162, 7
    %v1437 = vrot.slane %v163, 7
    %v1438 = vrot.slane %v164, 7
    %v1439 = vrot.slane %v165, 7
    %v1440 = vrot.slane %v166, 7
    %v1441 = vrot.slane %v167, 7
    %v1442 = vrot.slane %v168, 7
    %v1443 = vrot.slane %v170, 7
    %v1444 = vrot.slane %v171, 7
    %v1445 = vrot.slane %v172, 7
    %v1446 = vrot.slane %v173, 7
    %v1447 = vrot.slane %v174, 7
    %v1448 = vrot.slane %v175, 7
    %v1449 = vrot.slane %v176, 7
    %v1450 = vrot.slane %v177, 7
    %v1451 = vrot.slane %v178, 7
    %v1452 = vrot.slane %v179, 7
    %v1453 = vrot.slane %v180, 7
    %v1454 = vrot.slane %v181, 7
    %v1455 = vrot.slane %v182, 7
    %v1456 = vrot.slane %v184, 7
    %v1457 = vrot.slane %v185, 7
    %v1458 = vrot.slane %v186, 7
    %v1459 = vrot.slane %v187, 7
    %v1460 = vrot.slane %v188, 7
    %v1461 = vrot.slane %v189, 7
    %v1462 = vrot.slane %v190, 7
    %v1463 = vrot.slane %v191, 7
    %v1464 = vrot.slane %v192, 7
    %v1465 = vrot.slane %v193, 7
    %v1466 = vrot.slane %v194, 7
    %v1467 = vrot.slane %v195, 7
    %v1468 = vrot.slane %v196, 7
    %v1469 = vrot.slane %v198, 7
    %v1470 = vrot.slane %v199, 7
    %v1471 = vrot.slane %v200, 7
    %v1472 = vrot.slane %v201, 7
    %v1473 = vrot.slane %v202, 7
    %v1474 = vrot.slane %v203, 7
    %v1475 = vrot.slane %v204, 7
    %v1476 = vrot.slane %v205, 7
    %v1477 = vrot.slane %v206, 7
    %v1478 = vrot.slane %v207, 7
    %v1479 = vrot.slane %v208, 7
    %v1480 = vrot.slane %v209, 7
    %v1481 = vrot.slane %v210, 7
    %v1482 = vrot.slane %v212, 7
    %v1483 = vrot.slane %v213, 7
    %v1484 = vrot.slane %v214, 7
    %v1485 = vrot.slane %v215, 7
    %v1486 = vrot.slane %v216, 7
    %v1487 = vrot.slane %v217, 7
    %v1488 = vrot.slane %v218, 7
    %v1489 = vrot.slane %v219, 7
    %v1490 = vrot.slane %v220, 7
    %v1491 = vrot.slane %v221, 7
    %v1492 = vrot.slane %v222, 7
    %v1493 = vrot.slane %v223, 7
    %v1494 = vrot.slane %v224, 7
    %vm1495 = vcmask 1040384
    %v1497 = vsel %vm1495, %v791, %v1325
    %v1499 = vsel %vm1495, %v793, %v1326
    %v1501 = vsel %vm1495, %v796, %v1327
    %v1503 = vsel %vm1495, %v799, %v1328
    %v1505 = vsel %vm1495, %v802, %v1329
    %v1507 = vsel %vm1495, %v805, %v1330
    %v1509 = vsel %vm1495, %v808, %v1331
    %v1511 = vsel %vm1495, %v811, %v1332
    %v1513 = vsel %vm1495, %v814, %v1333
    %v1515 = vsel %vm1495, %v817, %v1334
    %v1517 = vsel %vm1495, %v820, %v1335
    %v1519 = vsel %vm1495, %v823, %v1336
    %v1521 = vsel %vm1495, %v826, %v1337
    %v1523 = vsel %vm1495, %v829, %v1338
    %v1524 = vsel %vm1495, %v832, %v1325
    %v1526 = vsel %vm1495, %v834, %v1339
    %v1528 = vsel %vm1495, %v837, %v1340
    %v1530 = vsel %vm1495, %v840, %v1341
    %v1532 = vsel %vm1495, %v843, %v1342
    %v1534 = vsel %vm1495, %v846, %v1343
    %v1536 = vsel %vm1495, %v849, %v1344
    %v1538 = vsel %vm1495, %v852, %v1345
    %v1540 = vsel %vm1495, %v855, %v1346
    %v1542 = vsel %vm1495, %v858, %v1347
    %v1544 = vsel %vm1495, %v861, %v1348
    %v1546 = vsel %vm1495, %v864, %v1349
    %v1548 = vsel %vm1495, %v867, %v1350
    %v1550 = vsel %vm1495, %v870, %v1351
    %v1551 = vsel %vm1495, %v873, %v1325
    %v1553 = vsel %vm1495, %v875, %v1352
    %v1555 = vsel %vm1495, %v878, %v1353
    %v1557 = vsel %vm1495, %v881, %v1354
    %v1559 = vsel %vm1495, %v884, %v1355
    %v1561 = vsel %vm1495, %v887, %v1356
    %v1563 = vsel %vm1495, %v890, %v1357
    %v1565 = vsel %vm1495, %v893, %v1358
    %v1567 = vsel %vm1495, %v896, %v1359
    %v1569 = vsel %vm1495, %v899, %v1360
    %v1571 = vsel %vm1495, %v902, %v1361
    %v1573 = vsel %vm1495, %v905, %v1362
    %v1575 = vsel %vm1495, %v908, %v1363
    %v1577 = vsel %vm1495, %v911, %v1364
    %v1578 = vsel %vm1495, %v914, %v1325
    %v1580 = vsel %vm1495, %v916, %v1365
    %v1582 = vsel %vm1495, %v919, %v1366
    %v1584 = vsel %vm1495, %v922, %v1367
    %v1586 = vsel %vm1495, %v925, %v1368
    %v1588 = vsel %vm1495, %v928, %v1369
    %v1590 = vsel %vm1495, %v931, %v1370
    %v1592 = vsel %vm1495, %v934, %v1371
    %v1594 = vsel %vm1495, %v937, %v1372
    %v1596 = vsel %vm1495, %v940, %v1373
    %v1598 = vsel %vm1495, %v943, %v1374
    %v1600 = vsel %vm1495, %v946, %v1375
    %v1602 = vsel %vm1495, %v949, %v1376
    %v1604 = vsel %vm1495, %v952, %v1377
    %v1605 = vsel %vm1495, %v955, %v1325
    %v1607 = vsel %vm1495, %v957, %v1378
    %v1609 = vsel %vm1495, %v960, %v1379
    %v1611 = vsel %vm1495, %v963, %v1380
    %v1613 = vsel %vm1495, %v966, %v1381
    %v1615 = vsel %vm1495, %v969, %v1382
    %v1617 = vsel %vm1495, %v972, %v1383
    %v1619 = vsel %vm1495, %v975, %v1384
    %v1621 = vsel %vm1495, %v978, %v1385
    %v1623 = vsel %vm1495, %v981, %v1386
    %v1625 = vsel %vm1495, %v984, %v1387
    %v1627 = vsel %vm1495, %v987, %v1388
    %v1629 = vsel %vm1495, %v990, %v1389
    %v1631 = vsel %vm1495, %v993, %v1390
    %v1632 = vsel %vm1495, %v996, %v1325
    %v1634 = vsel %vm1495, %v998, %v1391
    %v1636 = vsel %vm1495, %v1001, %v1392
    %v1638 = vsel %vm1495, %v1004, %v1393
    %v1640 = vsel %vm1495, %v1007, %v1394
    %v1642 = vsel %vm1495, %v1010, %v1395
    %v1644 = vsel %vm1495, %v1013, %v1396
    %v1646 = vsel %vm1495, %v1016, %v1397
    %v1648 = vsel %vm1495, %v1019, %v1398
    %v1650 = vsel %vm1495, %v1022, %v1399
    %v1652 = vsel %vm1495, %v1025, %v1400
    %v1654 = vsel %vm1495, %v1028, %v1401
    %v1656 = vsel %vm1495, %v1031, %v1402
    %v1658 = vsel %vm1495, %v1034, %v1403
    %v1659 = vsel %vm1495, %v1037, %v1325
    %v1661 = vsel %vm1495, %v1039, %v1404
    %v1663 = vsel %vm1495, %v1042, %v1405
    %v1665 = vsel %vm1495, %v1045, %v1406
    %v1667 = vsel %vm1495, %v1048, %v1407
    %v1669 = vsel %vm1495, %v1051, %v1408
    %v1671 = vsel %vm1495, %v1054, %v1409
    %v1673 = vsel %vm1495, %v1057, %v1410
    %v1675 = vsel %vm1495, %v1060, %v1411
    %v1677 = vsel %vm1495, %v1063, %v1412
    %v1679 = vsel %vm1495, %v1066, %v1413
    %v1681 = vsel %vm1495, %v1069, %v1414
    %v1683 = vsel %vm1495, %v1072, %v1415
    %v1685 = vsel %vm1495, %v1075, %v1416
    %v1686 = vsel %vm1495, %v1078, %v1325
    %v1688 = vsel %vm1495, %v1080, %v1417
    %v1690 = vsel %vm1495, %v1083, %v1418
    %v1692 = vsel %vm1495, %v1086, %v1419
    %v1694 = vsel %vm1495, %v1089, %v1420
    %v1696 = vsel %vm1495, %v1092, %v1421
    %v1698 = vsel %vm1495, %v1095, %v1422
    %v1700 = vsel %vm1495, %v1098, %v1423
    %v1702 = vsel %vm1495, %v1101, %v1424
    %v1704 = vsel %vm1495, %v1104, %v1425
    %v1706 = vsel %vm1495, %v1107, %v1426
    %v1708 = vsel %vm1495, %v1110, %v1427
    %v1710 = vsel %vm1495, %v1113, %v1428
    %v1712 = vsel %vm1495, %v1116, %v1429
    %v1713 = vsel %vm1495, %v1119, %v1325
    %v1715 = vsel %vm1495, %v1121, %v1430
    %v1717 = vsel %vm1495, %v1124, %v1431
    %v1719 = vsel %vm1495, %v1127, %v1432
    %v1721 = vsel %vm1495, %v1130, %v1433
    %v1723 = vsel %vm1495, %v1133, %v1434
    %v1725 = vsel %vm1495, %v1136, %v1435
    %v1727 = vsel %vm1495, %v1139, %v1436
    %v1729 = vsel %vm1495, %v1142, %v1437
    %v1731 = vsel %vm1495, %v1145, %v1438
    %v1733 = vsel %vm1495, %v1148, %v1439
    %v1735 = vsel %vm1495, %v1151, %v1440
    %v1737 = vsel %vm1495, %v1154, %v1441
    %v1739 = vsel %vm1495, %v1157, %v1442
    %v1740 = vsel %vm1495, %v1160, %v1325
    %v1742 = vsel %vm1495, %v1162, %v1443
    %v1744 = vsel %vm1495, %v1165, %v1444
    %v1746 = vsel %vm1495, %v1168, %v1445
    %v1748 = vsel %vm1495, %v1171, %v1446
    %v1750 = vsel %vm1495, %v1174, %v1447
    %v1752 = vsel %vm1495, %v1177, %v1448
    %v1754 = vsel %vm1495, %v1180, %v1449
    %v1756 = vsel %vm1495, %v1183, %v1450
    %v1758 = vsel %vm1495, %v1186, %v1451
    %v1760 = vsel %vm1495, %v1189, %v1452
    %v1762 = vsel %vm1495, %v1192, %v1453
    %v1764 = vsel %vm1495, %v1195, %v1454
    %v1766 = vsel %vm1495, %v1198, %v1455
    %v1767 = vsel %vm1495, %v1201, %v1325
    %v1769 = vsel %vm1495, %v1203, %v1456
    %v1771 = vsel %vm1495, %v1206, %v1457
    %v1773 = vsel %vm1495, %v1209, %v1458
    %v1775 = vsel %vm1495, %v1212, %v1459
    %v1777 = vsel %vm1495, %v1215, %v1460
    %v1779 = vsel %vm1495, %v1218, %v1461
    %v1781 = vsel %vm1495, %v1221, %v1462
    %v1783 = vsel %vm1495, %v1224, %v1463
    %v1785 = vsel %vm1495, %v1227, %v1464
    %v1787 = vsel %vm1495, %v1230, %v1465
    %v1789 = vsel %vm1495, %v1233, %v1466
    %v1791 = vsel %vm1495, %v1236, %v1467
    %v1793 = vsel %vm1495, %v1239, %v1468
    %v1794 = vsel %vm1495, %v1242, %v1325
    %v1796 = vsel %vm1495, %v1244, %v1469
    %v1798 = vsel %vm1495, %v1247, %v1470
    %v1800 = vsel %vm1495, %v1250, %v1471
    %v1802 = vsel %vm1495, %v1253, %v1472
    %v1804 = vsel %vm1495, %v1256, %v1473
    %v1806 = vsel %vm1495, %v1259, %v1474
    %v1808 = vsel %vm1495, %v1262, %v1475
    %v1810 = vsel %vm1495, %v1265, %v1476
    %v1812 = vsel %vm1495, %v1268, %v1477
    %v1814 = vsel %vm1495, %v1271, %v1478
    %v1816 = vsel %vm1495, %v1274, %v1479
    %v1818 = vsel %vm1495, %v1277, %v1480
    %v1820 = vsel %vm1495, %v1280, %v1481
    %v1821 = vsel %vm1495, %v1283, %v1325
    %v1823 = vsel %vm1495, %v1285, %v1482
    %v1825 = vsel %vm1495, %v1288, %v1483
    %v1827 = vsel %vm1495, %v1291, %v1484
    %v1829 = vsel %vm1495, %v1294, %v1485
    %v1831 = vsel %vm1495, %v1297, %v1486
    %v1833 = vsel %vm1495, %v1300, %v1487
    %v1835 = vsel %vm1495, %v1303, %v1488
    %v1837 = vsel %vm1495, %v1306, %v1489
    %v1839 = vsel %vm1495, %v1309, %v1490
    %v1841 = vsel %vm1495, %v1312, %v1491
    %v1843 = vsel %vm1495, %v1315, %v1492
    %v1845 = vsel %vm1495, %v1318, %v1493
    %v1847 = vsel %vm1495, %v1321, %v1494
    %v1848 = vsel %vm1495, %v1324, %v1325
    %v1849 = vld [vmem:[%s1] sm:$0xf]
    %v1850 = vld [vmem:[%s1 + $0x4] sm:$0xf]
    %v1851 = vld [vmem:[%s1 + $0x8] sm:$0xf]
    %v1852 = vld [vmem:[%s1 + $0xc] sm:$0xf]
    %v1853 = vld [vmem:[%s1 + $0x10] sm:$0xf]
    %v1854 = vld [vmem:[%s1 + $0x14] sm:$0xf]
    %v1855 = vld [vmem:[%s1 + $0x18] sm:$0xf]
    %v1856 = vld [vmem:[%s1 + $0x1c] sm:$0xf]
    %v1857 = vld [vmem:[%s1 + $0x20] sm:$0xf]
    %v1858 = vld [vmem:[%s1 + $0x24] sm:$0xf]
    %v1859 = vld [vmem:[%s1 + $0x28] sm:$0xf]
    %v1860 = vld [vmem:[%s1 + $0x2c] sm:$0xf]
    %v1861 = vld [vmem:[%s1 + $0x30] sm:$0xf]
    %v1862 = vld [vmem:[%s1 + $0x34] sm:$0xf]
    %v1863 = vld [vmem:[%s1 + $0x38] sm:$0xf]
    %v1864 = vld [vmem:[%s1 + $0x3c] sm:$0xf]
    %v1865 = vld [vmem:[%s1 + $0x40] sm:$0xf]
    %v1866 = vld [vmem:[%s1 + $0x44] sm:$0xf]
    %v1867 = vld [vmem:[%s1 + $0x48] sm:$0xf]
    %v1868 = vld [vmem:[%s1 + $0x4c] sm:$0xf]
    %v1869 = vld [vmem:[%s1 + $0x50] sm:$0xf]
    %v1870 = vld [vmem:[%s1 + $0x54] sm:$0xf]
    %v1871 = vld [vmem:[%s1 + $0x58] sm:$0xf]
    %v1872 = vld [vmem:[%s1 + $0x5c] sm:$0xf]
    %1887 = vrot.lane.b32.xlu0 %v225, 64
    %v1888 = vpop.permute.xlu0 %1887
    %1889 = vrot.lane.b32.xlu0 %v226, 64
    %v1890 = vpop.permute.xlu0 %1889
    %1891 = vrot.lane.b32.xlu0 %v227, 64
    %v1892 = vpop.permute.xlu0 %1891
    %1893 = vrot.lane.b32.xlu0 %v228, 64
    %v1894 = vpop.permute.xlu0 %1893
    %1895 = vrot.lane.b32.xlu0 %v229, 64
    %v1896 = vpop.permute.xlu0 %1895
    %1897 = vrot.lane.b32.xlu0 %v230, 64
    %v1898 = vpop.permute.xlu0 %1897
    %1899 = vrot.lane.b32.xlu0 %v231, 64
    %v1900 = vpop.permute.xlu0 %1899
    %1901 = vrot.lane.b32.xlu0 %v232, 64
    %v1902 = vpop.permute.xlu0 %1901
    %1903 = vrot.lane.b32.xlu0 %v233, 64
    %v1904 = vpop.permute.xlu0 %1903
    %1905 = vrot.lane.b32.xlu0 %v234, 64
    %v1906 = vpop.permute.xlu0 %1905
    %1907 = vrot.lane.b32.xlu0 %v235, 64
    %v1908 = vpop.permute.xlu0 %1907
    %1909 = vrot.lane.b32.xlu0 %v236, 64
    %v1910 = vpop.permute.xlu0 %1909
    %1911 = vrot.lane.b32.xlu0 %v237, 64
    %v1912 = vpop.permute.xlu0 %1911
    %1913 = vrot.lane.b32.xlu0 %v238, 64
    %v1914 = vpop.permute.xlu0 %1913
    %v1916 = vsel %vm788, 0, %v1888
    %v1919 = vsel %vm788, %v225, %v1890
    %v1922 = vsel %vm788, %v226, %v1892
    %v1925 = vsel %vm788, %v227, %v1894
    %v1928 = vsel %vm788, %v228, %v1896
    %v1931 = vsel %vm788, %v229, %v1898
    %v1934 = vsel %vm788, %v230, %v1900
    %v1937 = vsel %vm788, %v231, %v1902
    %v1940 = vsel %vm788, %v232, %v1904
    %v1943 = vsel %vm788, %v233, %v1906
    %v1946 = vsel %vm788, %v234, %v1908
    %v1949 = vsel %vm788, %v235, %v1910
    %v1952 = vsel %vm788, %v236, %v1912
    %v1955 = vsel %vm788, %v237, %v1914
    %v1956 = vrot.slane %v226, 7
    %v1957 = vrot.slane %v227, 7
    %v1958 = vrot.slane %v228, 7
    %v1959 = vrot.slane %v229, 7
    %v1960 = vrot.slane %v230, 7
    %v1961 = vrot.slane %v231, 7
    %v1962 = vrot.slane %v232, 7
    %v1963 = vrot.slane %v233, 7
    %v1964 = vrot.slane %v234, 7
    %v1965 = vrot.slane %v235, 7
    %v1966 = vrot.slane %v236, 7
    %v1967 = vrot.slane %v237, 7
    %v1968 = vrot.slane %v238, 7
    %v1970 = vsel %vm1495, %v1916, %v1956
    %v1972 = vsel %vm1495, %v1919, %v1957
    %v1974 = vsel %vm1495, %v1922, %v1958
    %v1976 = vsel %vm1495, %v1925, %v1959
    %v1978 = vsel %vm1495, %v1928, %v1960
    %v1980 = vsel %vm1495, %v1931, %v1961
    %v1982 = vsel %vm1495, %v1934, %v1962
    %v1984 = vsel %vm1495, %v1937, %v1963
    %v1986 = vsel %vm1495, %v1940, %v1964
    %v1988 = vsel %vm1495, %v1943, %v1965
    %v1990 = vsel %vm1495, %v1946, %v1966
    %v1992 = vsel %vm1495, %v1949, %v1967
    %v1994 = vsel %vm1495, %v1952, %v1968
    %v1995 = vsel %vm1495, %v1955, %v1325
    %v1996 = vld [vmem:[%s1 + $0x60] sm:$0xf]
    %v1997 = vld [vmem:[%s1 + $0x64] sm:$0xf]
    %v1998 = vld [vmem:[%s1 + $0x68] sm:$0xf]
    %v1999 = vld [vmem:[%s1 + $0x6c] sm:$0xf]
    %v2000 = vld [vmem:[%s1 + $0x70] sm:$0xf]
    %v2001 = vld [vmem:[%s1 + $0x74] sm:$0xf]
    %v2002 = vld [vmem:[%s1 + $0x78] sm:$0xf]
    %v2003 = vld [vmem:[%s1 + $0x7c] sm:$0xf]
    %v2004 = vld [vmem:[%s1 + $0x80] sm:$0xf]
    %v2005 = vld [vmem:[%s1 + $0x84] sm:$0xf]
    %v2006 = vld [vmem:[%s1 + $0x88] sm:$0xf]
    %v2007 = vld [vmem:[%s1 + $0x8c] sm:$0xf]
    %v2008 = vld [vmem:[%s1 + $0x90] sm:$0xf]
    %v2009 = vld [vmem:[%s1 + $0x94] sm:$0xf]
    %v2010 = vld [vmem:[%s1 + $0x98] sm:$0xf]
    %v2011 = vld [vmem:[%s1 + $0x9c] sm:$0xf]
    %v2012 = vld [vmem:[%s1 + $0xa0] sm:$0xf]
    %v2013 = vld [vmem:[%s1 + $0xa4] sm:$0xf]
    %v2014 = vld [vmem:[%s1 + $0xa8] sm:$0xf]
    %v2015 = vld [vmem:[%s1 + $0xac] sm:$0xf]
    %v2016 = vld [vmem:[%s1 + $0xb0] sm:$0xf]
    %v2017 = vld [vmem:[%s1 + $0xb4] sm:$0xf]
    %v2018 = vld [vmem:[%s1 + $0xb8] sm:$0xf]
    %v2019 = vld [vmem:[%s1 + $0xbc] sm:$0xf]
    %2020 = vst [vmem:[#allocation1] ss:$9 sm:$0xff] %v1499
    %s2021 = scalar_lea.vmem [#allocation1], 1
    %2022 = vst [vmem:[%s2021] ss:$9 sm:$0xff] %v1501
    %s2023 = scalar_lea.vmem [#allocation1], 2
    %2024 = vst [vmem:[%s2023] ss:$9 sm:$0xff] %v1503
    %s2025 = scalar_lea.vmem [#allocation1], 3
    %2026 = vst [vmem:[%s2025] ss:$9 sm:$0xff] %v1505
    %s2027 = scalar_lea.vmem [#allocation1], 4
    %2028 = vst [vmem:[%s2027] ss:$9 sm:$0xff] %v1507
    %s2029 = scalar_lea.vmem [#allocation1], 5
    %2030 = vst [vmem:[%s2029] ss:$9 sm:$0xff] %v1509
    %s2031 = scalar_lea.vmem [#allocation1], 6
    %2032 = vst [vmem:[%s2031] ss:$9 sm:$0xff] %v1511
    %s2033 = scalar_lea.vmem [#allocation1], 7
    %2034 = vst [vmem:[%s2033] ss:$9 sm:$0xff] %v1513
    %v2035 = vld [vmem:[#allocation1] sm:$0xff]
    %v2036 = vld [vmem:[#allocation1 + $0x9] sm:$0xff]
    %2037 = vst [vmem:[#allocation1] ss:$9 sm:$0xff] %v1515
    %2038 = vst [vmem:[%s2021] ss:$9 sm:$0xff] %v1517
    %2039 = vst [vmem:[%s2023] ss:$9 sm:$0xff] %v1519
    %2040 = vst [vmem:[%s2025] ss:$9 sm:$0xff] %v1521
    %2041 = vst [vmem:[%s2027] ss:$9 sm:$0xff] %v1523
    %2042 = vst [vmem:[%s2029] ss:$9 sm:$0xff] %v1524
    %2043 = vst [vmem:[%s2031] ss:$9 sm:$0xff] %v1526
    %2044 = vst [vmem:[%s2033] ss:$9 sm:$0xff] %v1528
    %v2045 = vld [vmem:[#allocation1] sm:$0xff]
    %v2046 = vld [vmem:[#allocation1 + $0x9] sm:$0xff]
    %2047 = vst [vmem:[#allocation1] ss:$9 sm:$0xff] %v1530
    %2048 = vst [vmem:[%s2021] ss:$9 sm:$0xff] %v1532
    %2049 = vst [vmem:[%s2023] ss:$9 sm:$0xff] %v1534
    %2050 = vst [vmem:[%s2025] ss:$9 sm:$0xff] %v1536
    %2051 = vst [vmem:[%s2027] ss:$9 sm:$0xff] %v1538
    %2052 = vst [vmem:[%s2029] ss:$9 sm:$0xff] %v1540
    %2053 = vst [vmem:[%s2031] ss:$9 sm:$0xff] %v1542
    %2054 = vst [vmem:[%s2033] ss:$9 sm:$0xff] %v1544
    %v2055 = vld [vmem:[#allocation1] sm:$0xff]
    %v2056 = vld [vmem:[#allocation1 + $0x9] sm:$0xff]
    %2057 = vst [vmem:[#allocation1] ss:$9 sm:$0xff] %v1546
    %2058 = vst [vmem:[%s2021] ss:$9 sm:$0xff] %v1548
    %2059 = vst [vmem:[%s2023] ss:$9 sm:$0xff] %v1550
    %2060 = vst [vmem:[%s2025] ss:$9 sm:$0xff] %v1551
    %2061 = vst [vmem:[%s2027] ss:$9 sm:$0xff] %v1553
    %2062 = vst [vmem:[%s2029] ss:$9 sm:$0xff] %v1555
    %2063 = vst [vmem:[%s2031] ss:$9 sm:$0xff] %v1557
    %2064 = vst [vmem:[%s2033] ss:$9 sm:$0xff] %v1559
    %v2065 = vld [vmem:[#allocation1] sm:$0xff]
    %v2066 = vld [vmem:[#allocation1 + $0x9] sm:$0xff]
    %2067 = vst [vmem:[#allocation1] ss:$9 sm:$0xff] %v1561
    %2068 = vst [vmem:[%s2021] ss:$9 sm:$0xff] %v1563
    %2069 = vst [vmem:[%s2023] ss:$9 sm:$0xff] %v1565
    %2070 = vst [vmem:[%s2025] ss:$9 sm:$0xff] %v1567
    %2071 = vst [vmem:[%s2027] ss:$9 sm:$0xff] %v1569
    %2072 = vst [vmem:[%s2029] ss:$9 sm:$0xff] %v1571
    %2073 = vst [vmem:[%s2031] ss:$9 sm:$0xff] %v1573
    %2074 = vst [vmem:[%s2033] ss:$9 sm:$0xff] %v1575
    %v2075 = vld [vmem:[#allocation1] sm:$0xff]
    %v2076 = vld [vmem:[#allocation1 + $0x9] sm:$0xff]
    %2077 = vst [vmem:[#allocation1] ss:$9 sm:$0xff] %v1577
    %2078 = vst [vmem:[%s2021] ss:$9 sm:$0xff] %v1578
    %2079 = vst [vmem:[%s2023] ss:$9 sm:$0xff] %v1580
    %2080 = vst [vmem:[%s2025] ss:$9 sm:$0xff] %v1582
    %2081 = vst [vmem:[%s2027] ss:$9 sm:$0xff] %v1584
    %2082 = vst [vmem:[%s2029] ss:$9 sm:$0xff] %v1586
    %2083 = vst [vmem:[%s2031] ss:$9 sm:$0xff] %v1588
    %2084 = vst [vmem:[%s2033] ss:$9 sm:$0xff] %v1590
    %v2085 = vld [vmem:[#allocation1] sm:$0xff]
    %v2086 = vld [vmem:[#allocation1 + $0x9] sm:$0xff]
    %2087 = vst [vmem:[#allocation1] ss:$9 sm:$0xff] %v1592
    %2088 = vst [vmem:[%s2021] ss:$9 sm:$0xff] %v1594
    %2089 = vst [vmem:[%s2023] ss:$9 sm:$0xff] %v1596
    %2090 = vst [vmem:[%s2025] ss:$9 sm:$0xff] %v1598
    %2091 = vst [vmem:[%s2027] ss:$9 sm:$0xff] %v1600
    %2092 = vst [vmem:[%s2029] ss:$9 sm:$0xff] %v1602
    %2093 = vst [vmem:[%s2031] ss:$9 sm:$0xff] %v1604
    %2094 = vst [vmem:[%s2033] ss:$9 sm:$0xff] %v1605
    %v2095 = vld [vmem:[#allocation1] sm:$0xff]
    %v2096 = vld [vmem:[#allocation1 + $0x9] sm:$0xff]
    %2097 = vst [vmem:[#allocation1] ss:$9 sm:$0xff] %v1607
    %2098 = vst [vmem:[%s2021] ss:$9 sm:$0xff] %v1609
    %2099 = vst [vmem:[%s2023] ss:$9 sm:$0xff] %v1611
    %2100 = vst [vmem:[%s2025] ss:$9 sm:$0xff] %v1613
    %2101 = vst [vmem:[%s2027] ss:$9 sm:$0xff] %v1615
    %2102 = vst [vmem:[%s2029] ss:$9 sm:$0xff] %v1617
    %2103 = vst [vmem:[%s2031] ss:$9 sm:$0xff] %v1619
    %2104 = vst [vmem:[%s2033] ss:$9 sm:$0xff] %v1621
    %v2105 = vld [vmem:[#allocation1] sm:$0xff]
    %v2106 = vld [vmem:[#allocation1 + $0x9] sm:$0xff]
    %2107 = vst [vmem:[#allocation1] ss:$9 sm:$0xff] %v1623
    %2108 = vst [vmem:[%s2021] ss:$9 sm:$0xff] %v1625
    %2109 = vst [vmem:[%s2023] ss:$9 sm:$0xff] %v1627
    %2110 = vst [vmem:[%s2025] ss:$9 sm:$0xff] %v1629
    %2111 = vst [vmem:[%s2027] ss:$9 sm:$0xff] %v1631
    %2112 = vst [vmem:[%s2029] ss:$9 sm:$0xff] %v1632
    %2113 = vst [vmem:[%s2031] ss:$9 sm:$0xff] %v1634
    %2114 = vst [vmem:[%s2033] ss:$9 sm:$0xff] %v1636
    %v2115 = vld [vmem:[#allocation1] sm:$0xff]
    %v2116 = vld [vmem:[#allocation1 + $0x9] sm:$0xff]
    %2117 = vst [vmem:[#allocation1] ss:$9 sm:$0xff] %v1638
    %2118 = vst [vmem:[%s2021] ss:$9 sm:$0xff] %v1640
    %2119 = vst [vmem:[%s2023] ss:$9 sm:$0xff] %v1642
    %2120 = vst [vmem:[%s2025] ss:$9 sm:$0xff] %v1644
    %2121 = vst [vmem:[%s2027] ss:$9 sm:$0xff] %v1646
    %2122 = vst [vmem:[%s2029] ss:$9 sm:$0xff] %v1648
    %2123 = vst [vmem:[%s2031] ss:$9 sm:$0xff] %v1650
    %2124 = vst [vmem:[%s2033] ss:$9 sm:$0xff] %v1652
    %v2125 = vld [vmem:[#allocation1] sm:$0xff]
    %v2126 = vld [vmem:[#allocation1 + $0x9] sm:$0xff]
    %2127 = vst [vmem:[#allocation1] ss:$9 sm:$0xff] %v1654
    %2128 = vst [vmem:[%s2021] ss:$9 sm:$0xff] %v1656
    %2129 = vst [vmem:[%s2023] ss:$9 sm:$0xff] %v1658
    %2130 = vst [vmem:[%s2025] ss:$9 sm:$0xff] %v1659
    %2131 = vst [vmem:[%s2027] ss:$9 sm:$0xff] %v1661
    %2132 = vst [vmem:[%s2029] ss:$9 sm:$0xff] %v1663
    %2133 = vst [vmem:[%s2031] ss:$9 sm:$0xff] %v1665
    %2134 = vst [vmem:[%s2033] ss:$9 sm:$0xff] %v1667
    %v2135 = vld [vmem:[#allocation1] sm:$0xff]
    %v2136 = vld [vmem:[#allocation1 + $0x9] sm:$0xff]
    %2137 = vst [vmem:[#allocation1] ss:$9 sm:$0xff] %v1669
    %2138 = vst [vmem:[%s2021] ss:$9 sm:$0xff] %v1671
    %2139 = vst [vmem:[%s2023] ss:$9 sm:$0xff] %v1673
    %2140 = vst [vmem:[%s2025] ss:$9 sm:$0xff] %v1675
    %2141 = vst [vmem:[%s2027] ss:$9 sm:$0xff] %v1677
    %2142 = vst [vmem:[%s2029] ss:$9 sm:$0xff] %v1679
    %2143 = vst [vmem:[%s2031] ss:$9 sm:$0xff] %v1681
    %2144 = vst [vmem:[%s2033] ss:$9 sm:$0xff] %v1683
    %v2145 = vld [vmem:[#allocation1] sm:$0xff]
    %v2146 = vld [vmem:[#allocation1 + $0x9] sm:$0xff]
    %2147 = vst [vmem:[#allocation1] ss:$9 sm:$0xff] %v1685
    %2148 = vst [vmem:[%s2021] ss:$9 sm:$0xff] %v1686
    %2149 = vst [vmem:[%s2023] ss:$9 sm:$0xff] %v1688
    %2150 = vst [vmem:[%s2025] ss:$9 sm:$0xff] %v1690
    %2151 = vst [vmem:[%s2027] ss:$9 sm:$0xff] %v1692
    %2152 = vst [vmem:[%s2029] ss:$9 sm:$0xff] %v1694
    %2153 = vst [vmem:[%s2031] ss:$9 sm:$0xff] %v1696
    %2154 = vst [vmem:[%s2033] ss:$9 sm:$0xff] %v1698
    %v2155 = vld [vmem:[#allocation1] sm:$0xff]
    %v2156 = vld [vmem:[#allocation1 + $0x9] sm:$0xff]
    %2157 = vst [vmem:[#allocation1] ss:$9 sm:$0xff] %v1700
    %2158 = vst [vmem:[%s2021] ss:$9 sm:$0xff] %v1702
    %2159 = vst [vmem:[%s2023] ss:$9 sm:$0xff] %v1704
    %2160 = vst [vmem:[%s2025] ss:$9 sm:$0xff] %v1706
    %2161 = vst [vmem:[%s2027] ss:$9 sm:$0xff] %v1708
    %2162 = vst [vmem:[%s2029] ss:$9 sm:$0xff] %v1710
    %2163 = vst [vmem:[%s2031] ss:$9 sm:$0xff] %v1712
    %2164 = vst [vmem:[%s2033] ss:$9 sm:$0xff] %v1713
    %v2165 = vld [vmem:[#allocation1] sm:$0xff]
    %v2166 = vld [vmem:[#allocation1 + $0x9] sm:$0xff]
    %2167 = vst [vmem:[#allocation1] ss:$9 sm:$0xff] %v1715
    %2168 = vst [vmem:[%s2021] ss:$9 sm:$0xff] %v1717
    %2169 = vst [vmem:[%s2023] ss:$9 sm:$0xff] %v1719
    %2170 = vst [vmem:[%s2025] ss:$9 sm:$0xff] %v1721
    %2171 = vst [vmem:[%s2027] ss:$9 sm:$0xff] %v1723
    %2172 = vst [vmem:[%s2029] ss:$9 sm:$0xff] %v1725
    %2173 = vst [vmem:[%s2031] ss:$9 sm:$0xff] %v1727
    %2174 = vst [vmem:[%s2033] ss:$9 sm:$0xff] %v1729
    %v2175 = vld [vmem:[#allocation1] sm:$0xff]
    %v2176 = vld [vmem:[#allocation1 + $0x9] sm:$0xff]
    %2177 = vst [vmem:[#allocation1] ss:$9 sm:$0xff] %v1731
    %2178 = vst [vmem:[%s2021] ss:$9 sm:$0xff] %v1733
    %2179 = vst [vmem:[%s2023] ss:$9 sm:$0xff] %v1735
    %2180 = vst [vmem:[%s2025] ss:$9 sm:$0xff] %v1737
    %2181 = vst [vmem:[%s2027] ss:$9 sm:$0xff] %v1739
    %2182 = vst [vmem:[%s2029] ss:$9 sm:$0xff] %v1740
    %2183 = vst [vmem:[%s2031] ss:$9 sm:$0xff] %v1742
    %2184 = vst [vmem:[%s2033] ss:$9 sm:$0xff] %v1744
    %v2185 = vld [vmem:[#allocation1] sm:$0xff]
    %v2186 = vld [vmem:[#allocation1 + $0x9] sm:$0xff]
    %2187 = vst [vmem:[#allocation1] ss:$9 sm:$0xff] %v1746
    %2188 = vst [vmem:[%s2021] ss:$9 sm:$0xff] %v1748
    %2189 = vst [vmem:[%s2023] ss:$9 sm:$0xff] %v1750
    %2190 = vst [vmem:[%s2025] ss:$9 sm:$0xff] %v1752
    %2191 = vst [vmem:[%s2027] ss:$9 sm:$0xff] %v1754
    %2192 = vst [vmem:[%s2029] ss:$9 sm:$0xff] %v1756
    %2193 = vst [vmem:[%s2031] ss:$9 sm:$0xff] %v1758
    %2194 = vst [vmem:[%s2033] ss:$9 sm:$0xff] %v1760
    %v2195 = vld [vmem:[#allocation1] sm:$0xff]
    %v2196 = vld [vmem:[#allocation1 + $0x9] sm:$0xff]
    %2197 = vst [vmem:[#allocation1] ss:$9 sm:$0xff] %v1762
    %2198 = vst [vmem:[%s2021] ss:$9 sm:$0xff] %v1764
    %2199 = vst [vmem:[%s2023] ss:$9 sm:$0xff] %v1766
    %2200 = vst [vmem:[%s2025] ss:$9 sm:$0xff] %v1767
    %2201 = vst [vmem:[%s2027] ss:$9 sm:$0xff] %v1769
    %2202 = vst [vmem:[%s2029] ss:$9 sm:$0xff] %v1771
    %2203 = vst [vmem:[%s2031] ss:$9 sm:$0xff] %v1773
    %2204 = vst [vmem:[%s2033] ss:$9 sm:$0xff] %v1775
    %v2205 = vld [vmem:[#allocation1] sm:$0xff]
    %v2206 = vld [vmem:[#allocation1 + $0x9] sm:$0xff]
    %2207 = vst [vmem:[#allocation1] ss:$9 sm:$0xff] %v1777
    %2208 = vst [vmem:[%s2021] ss:$9 sm:$0xff] %v1779
    %2209 = vst [vmem:[%s2023] ss:$9 sm:$0xff] %v1781
    %2210 = vst [vmem:[%s2025] ss:$9 sm:$0xff] %v1783
    %2211 = vst [vmem:[%s2027] ss:$9 sm:$0xff] %v1785
    %2212 = vst [vmem:[%s2029] ss:$9 sm:$0xff] %v1787
    %2213 = vst [vmem:[%s2031] ss:$9 sm:$0xff] %v1789
    %2214 = vst [vmem:[%s2033] ss:$9 sm:$0xff] %v1791
    %v2215 = vld [vmem:[#allocation1] sm:$0xff]
    %v2216 = vld [vmem:[#allocation1 + $0x9] sm:$0xff]
    %2217 = vst [vmem:[#allocation1] ss:$9 sm:$0xff] %v1793
    %2218 = vst [vmem:[%s2021] ss:$9 sm:$0xff] %v1794
    %2219 = vst [vmem:[%s2023] ss:$9 sm:$0xff] %v1796
    %2220 = vst [vmem:[%s2025] ss:$9 sm:$0xff] %v1798
    %2221 = vst [vmem:[%s2027] ss:$9 sm:$0xff] %v1800
    %2222 = vst [vmem:[%s2029] ss:$9 sm:$0xff] %v1802
    %2223 = vst [vmem:[%s2031] ss:$9 sm:$0xff] %v1804
    %2224 = vst [vmem:[%s2033] ss:$9 sm:$0xff] %v1806
    %v2225 = vld [vmem:[#allocation1] sm:$0xff]
    %v2226 = vld [vmem:[#allocation1 + $0x9] sm:$0xff]
    %2227 = vst [vmem:[#allocation1] ss:$9 sm:$0xff] %v1808
    %2228 = vst [vmem:[%s2021] ss:$9 sm:$0xff] %v1810
    %2229 = vst [vmem:[%s2023] ss:$9 sm:$0xff] %v1812
    %2230 = vst [vmem:[%s2025] ss:$9 sm:$0xff] %v1814
    %2231 = vst [vmem:[%s2027] ss:$9 sm:$0xff] %v1816
    %2232 = vst [vmem:[%s2029] ss:$9 sm:$0xff] %v1818
    %2233 = vst [vmem:[%s2031] ss:$9 sm:$0xff] %v1820
    %2234 = vst [vmem:[%s2033] ss:$9 sm:$0xff] %v1821
    %v2235 = vld [vmem:[#allocation1] sm:$0xff]
    %v2236 = vld [vmem:[#allocation1 + $0x9] sm:$0xff]
    %2237 = vst [vmem:[#allocation1] ss:$9 sm:$0xff] %v1823
    %2238 = vst [vmem:[%s2021] ss:$9 sm:$0xff] %v1825
    %2239 = vst [vmem:[%s2023] ss:$9 sm:$0xff] %v1827
    %2240 = vst [vmem:[%s2025] ss:$9 sm:$0xff] %v1829
    %2241 = vst [vmem:[%s2027] ss:$9 sm:$0xff] %v1831
    %2242 = vst [vmem:[%s2029] ss:$9 sm:$0xff] %v1833
    %2243 = vst [vmem:[%s2031] ss:$9 sm:$0xff] %v1835
    %2244 = vst [vmem:[%s2033] ss:$9 sm:$0xff] %v1837
    %v2245 = vld [vmem:[#allocation1] sm:$0xff]
    %v2246 = vld [vmem:[#allocation1 + $0x9] sm:$0xff]
    %2247 = vst [vmem:[#allocation1] ss:$9 sm:$0xff] %v1839
    %2248 = vst [vmem:[%s2021] ss:$9 sm:$0xff] %v1841
    %2249 = vst [vmem:[%s2023] ss:$9 sm:$0xff] %v1843
    %2250 = vst [vmem:[%s2025] ss:$9 sm:$0xff] %v1845
    %2251 = vst [vmem:[%s2027] ss:$9 sm:$0xff] %v1847
    %2252 = vst [vmem:[%s2029] ss:$9 sm:$0xff] %v1848
    %2253 = vst [vmem:[%s2031] ss:$9 sm:$0xff] %v1970
    %2254 = vst [vmem:[%s2033] ss:$9 sm:$0xff] %v1972
    %v2255 = vld [vmem:[#allocation1] sm:$0xff]
    %v2256 = vld [vmem:[#allocation1 + $0x9] sm:$0xff]
    %2257 = vst [vmem:[#allocation1] ss:$9 sm:$0xff] %v1974
    %2258 = vst [vmem:[%s2021] ss:$9 sm:$0xff] %v1976
    %2259 = vst [vmem:[%s2023] ss:$9 sm:$0xff] %v1978
    %2260 = vst [vmem:[%s2025] ss:$9 sm:$0xff] %v1980
    %2261 = vst [vmem:[%s2027] ss:$9 sm:$0xff] %v1982
    %2262 = vst [vmem:[%s2029] ss:$9 sm:$0xff] %v1984
    %2263 = vst [vmem:[%s2031] ss:$9 sm:$0xff] %v1986
    %2264 = vst [vmem:[%s2033] ss:$9 sm:$0xff] %v1988
    %v2265 = vld [vmem:[#allocation1] sm:$0xff]
    %v2266 = vld [vmem:[#allocation1 + $0x9] sm:$0xff]
    %2267 = vst [vmem:[#allocation1] ss:$9 sm:$0xff] %v1990
    %2268 = vst [vmem:[%s2021] ss:$9 sm:$0xff] %v1992
    %2269 = vst [vmem:[%s2023] ss:$9 sm:$0xff] %v1994
    %2270 = vst [vmem:[%s2025] ss:$9 sm:$0xff] %v1995
    %v2271 = vld [vmem:[#allocation1] sm:$0xff]
    %v2272 = vld [vmem:[#allocation1 + $0x9] sm:$0xff]
    %v2322 = vunpack.c.l.b16 %v1996
    %v2323 = vunpack.c.l.b16 %v1997
    %v2324 = vunpack.c.l.b16 %v1998
    %v2325 = vunpack.c.l.b16 %v1999
    %v2326 = vunpack.c.l.b16 %v2000
    %v2327 = vunpack.c.l.b16 %v2001
    %v2328 = vunpack.c.l.b16 %v2002
    %v2329 = vunpack.c.l.b16 %v2003
    %v2330 = vunpack.c.l.b16 %v2004
    %v2331 = vunpack.c.l.b16 %v2005
    %v2332 = vunpack.c.l.b16 %v2006
    %v2333 = vunpack.c.l.b16 %v2007
    %v2334 = vunpack.c.l.b16 %v2008
    %v2335 = vunpack.c.l.b16 %v2009
    %v2336 = vunpack.c.l.b16 %v2010
    %v2337 = vunpack.c.l.b16 %v2011
    %v2338 = vunpack.c.l.b16 %v2012
    %v2339 = vunpack.c.l.b16 %v2013
    %v2340 = vunpack.c.l.b16 %v2014
    %v2341 = vunpack.c.l.b16 %v2015
    %v2342 = vunpack.c.l.b16 %v2016
    %v2343 = vunpack.c.l.b16 %v2017
    %v2344 = vunpack.c.l.b16 %v2018
    %v2345 = vunpack.c.l.b16 %v2019
    %v2346 = vpack.c.b16 %v2323, %v2322
    %v2347 = vpack.c.b16 %v2325, %v2324
    %v2348 = vpack.c.b16 %v2327, %v2326
    %v2349 = vpack.c.b16 %v2329, %v2328
    %v2350 = vpack.c.b16 %v2331, %v2330
    %v2351 = vpack.c.b16 %v2333, %v2332
    %v2352 = vpack.c.b16 %v2335, %v2334
    %v2353 = vpack.c.b16 %v2337, %v2336
    %v2354 = vpack.c.b16 %v2339, %v2338
    %v2355 = vpack.c.b16 %v2341, %v2340
    %v2356 = vpack.c.b16 %v2343, %v2342
    %v2357 = vpack.c.b16 %v2345, %v2344
    %v2370 = vsel %vm788, %v2036, 0
    %v2372 = vsel %vm788, %v2046, 0
    %v2374 = vsel %vm788, %v2056, 0
    %v2376 = vsel %vm788, %v2066, 0
    %v2378 = vsel %vm788, %v2076, 0
    %v2380 = vsel %vm788, %v2086, 0
    %v2382 = vsel %vm788, %v2096, 0
    %v2384 = vsel %vm788, %v2106, 0
    %v2386 = vsel %vm788, %v2116, 0
    %v2388 = vsel %vm788, %v2126, 0
    %v2390 = vsel %vm788, %v2136, 0
    %v2392 = vsel %vm788, %v2146, 0
    %v2394 = vsel %vm788, %v2156, 0
    %v2396 = vsel %vm788, %v2166, 0
    %v2398 = vsel %vm788, %v2176, 0
    %v2400 = vsel %vm788, %v2186, 0
    %v2402 = vsel %vm788, %v2196, 0
    %v2404 = vsel %vm788, %v2206, 0
    %v2406 = vsel %vm788, %v2216, 0
    %v2408 = vsel %vm788, %v2226, 0
    %v2410 = vsel %vm788, %v2236, 0
    %v2412 = vsel %vm788, %v2246, 0
    %v2414 = vsel %vm788, %v2256, 0
    %v2416 = vsel %vm788, %v2266, 0
    %v2418 = vsel %vm788, %v2272, 0
    %2420 = vmatpush.bf16.msra.mxu0 %v2353
    %2421 = vmatpush.bf16.msra.mxu0 %v2352
    %2422 = vmatpush.bf16.msra.mxu0 %v2351
    %2423 = vmatpush.bf16.msra.mxu0 %v2350
    %2424 = vmatpush.bf16.msra.mxu0 %v2349
    %2425 = vmatpush.bf16.msra.mxu0 %v2348
    %2426 = vmatpush.bf16.msra.mxu0 %v2347
    %2427 = vmatpush.bf16.msra.mxu0 %v2346
    %2428 = vmatmul.bf16.gmra.mxu0 %v2035
    %v2429 = vpop.f32.mrf.mxu0
    %v2430 = vadd.f32 0.0, %v2429
    %v2431 = vpop.f32.mrf.mxu0
    %v2432 = vadd.f32 0.0, %v2431
    %2433 = vmatmul.bf16.gmra.mxu0 %v2045
    %v2434 = vpop.f32.mrf.mxu0
    %v2435 = vadd.f32 0.0, %v2434
    %v2436 = vpop.f32.mrf.mxu0
    %v2437 = vadd.f32 0.0, %v2436
    %2438 = vmatmul.bf16.gmra.mxu0 %v2055
    %v2439 = vpop.f32.mrf.mxu0
    %v2440 = vadd.f32 0.0, %v2439
    %v2441 = vpop.f32.mrf.mxu0
    %v2442 = vadd.f32 0.0, %v2441
    %2443 = vmatmul.bf16.gmra.mxu0 %v2065
    %v2444 = vpop.f32.mrf.mxu0
    %v2445 = vadd.f32 0.0, %v2444
    %v2446 = vpop.f32.mrf.mxu0
    %v2447 = vadd.f32 0.0, %v2446
    %2448 = vmatmul.bf16.gmra.mxu0 %v2075
    %v2449 = vpop.f32.mrf.mxu0
    %v2450 = vadd.f32 0.0, %v2449
    %v2451 = vpop.f32.mrf.mxu0
    %v2452 = vadd.f32 0.0, %v2451
    %2453 = vmatmul.bf16.gmra.mxu0 %v2085
    %v2454 = vpop.f32.mrf.mxu0
    %v2455 = vadd.f32 0.0, %v2454
    %v2456 = vpop.f32.mrf.mxu0
    %v2457 = vadd.f32 0.0, %v2456
    %2458 = vmatmul.bf16.gmra.mxu0 %v2095
    %v2459 = vpop.f32.mrf.mxu0
    %v2460 = vadd.f32 0.0, %v2459
    %v2461 = vpop.f32.mrf.mxu0
    %v2462 = vadd.f32 0.0, %v2461
    %2463 = vmatmul.bf16.gmra.mxu0 %v2105
    %v2464 = vpop.f32.mrf.mxu0
    %v2465 = vadd.f32 0.0, %v2464
    %v2466 = vpop.f32.mrf.mxu0
    %v2467 = vadd.f32 0.0, %v2466
    %2468 = vmatmul.bf16.gmra.mxu0 %v2115
    %v2469 = vpop.f32.mrf.mxu0
    %v2470 = vadd.f32 0.0, %v2469
    %v2471 = vpop.f32.mrf.mxu0
    %v2472 = vadd.f32 0.0, %v2471
    %2473 = vmatmul.bf16.gmra.mxu0 %v2125
    %v2474 = vpop.f32.mrf.mxu0
    %v2475 = vadd.f32 0.0, %v2474
    %v2476 = vpop.f32.mrf.mxu0
    %v2477 = vadd.f32 0.0, %v2476
    %2478 = vmatmul.bf16.gmra.mxu0 %v2135
    %v2479 = vpop.f32.mrf.mxu0
    %v2480 = vadd.f32 0.0, %v2479
    %v2481 = vpop.f32.mrf.mxu0
    %v2482 = vadd.f32 0.0, %v2481
    %2483 = vmatmul.bf16.gmra.mxu0 %v2145
    %v2484 = vpop.f32.mrf.mxu0
    %v2485 = vadd.f32 0.0, %v2484
    %v2486 = vpop.f32.mrf.mxu0
    %v2487 = vadd.f32 0.0, %v2486
    %2488 = vmatmul.bf16.gmra.mxu0 %v2155
    %v2489 = vpop.f32.mrf.mxu0
    %v2490 = vadd.f32 0.0, %v2489
    %v2491 = vpop.f32.mrf.mxu0
    %v2492 = vadd.f32 0.0, %v2491
    %2493 = vmatmul.bf16.gmra.mxu0 %v2165
    %v2494 = vpop.f32.mrf.mxu0
    %v2495 = vadd.f32 0.0, %v2494
    %v2496 = vpop.f32.mrf.mxu0
    %v2497 = vadd.f32 0.0, %v2496
    %2498 = vmatmul.bf16.gmra.mxu0 %v2175
    %v2499 = vpop.f32.mrf.mxu0
    %v2500 = vadd.f32 0.0, %v2499
    %v2501 = vpop.f32.mrf.mxu0
    %v2502 = vadd.f32 0.0, %v2501
    %2503 = vmatmul.bf16.gmra.mxu0 %v2185
    %v2504 = vpop.f32.mrf.mxu0
    %v2505 = vadd.f32 0.0, %v2504
    %v2506 = vpop.f32.mrf.mxu0
    %v2507 = vadd.f32 0.0, %v2506
    %2508 = vmatmul.bf16.gmra.mxu0 %v2195
    %v2509 = vpop.f32.mrf.mxu0
    %v2510 = vadd.f32 0.0, %v2509
    %v2511 = vpop.f32.mrf.mxu0
    %v2512 = vadd.f32 0.0, %v2511
    %2513 = vmatmul.bf16.gmra.mxu0 %v2205
    %v2514 = vpop.f32.mrf.mxu0
    %v2515 = vadd.f32 0.0, %v2514
    %v2516 = vpop.f32.mrf.mxu0
    %v2517 = vadd.f32 0.0, %v2516
    %2518 = vmatmul.bf16.gmra.mxu0 %v2215
    %v2519 = vpop.f32.mrf.mxu0
    %v2520 = vadd.f32 0.0, %v2519
    %v2521 = vpop.f32.mrf.mxu0
    %v2522 = vadd.f32 0.0, %v2521
    %2523 = vmatmul.bf16.gmra.mxu0 %v2225
    %v2524 = vpop.f32.mrf.mxu0
    %v2525 = vadd.f32 0.0, %v2524
    %v2526 = vpop.f32.mrf.mxu0
    %v2527 = vadd.f32 0.0, %v2526
    %2528 = vmatmul.bf16.gmra.mxu0 %v2235
    %v2529 = vpop.f32.mrf.mxu0
    %v2530 = vadd.f32 0.0, %v2529
    %v2531 = vpop.f32.mrf.mxu0
    %v2532 = vadd.f32 0.0, %v2531
    %2533 = vmatmul.bf16.gmra.mxu0 %v2245
    %v2534 = vpop.f32.mrf.mxu0
    %v2535 = vadd.f32 0.0, %v2534
    %v2536 = vpop.f32.mrf.mxu0
    %v2537 = vadd.f32 0.0, %v2536
    %2538 = vmatmul.bf16.gmra.mxu0 %v2255
    %v2539 = vpop.f32.mrf.mxu0
    %v2540 = vadd.f32 0.0, %v2539
    %v2541 = vpop.f32.mrf.mxu0
    %v2542 = vadd.f32 0.0, %v2541
    %2543 = vmatmul.bf16.gmra.mxu0 %v2265
    %v2544 = vpop.f32.mrf.mxu0
    %v2545 = vadd.f32 0.0, %v2544
    %v2546 = vpop.f32.mrf.mxu0
    %v2547 = vadd.f32 0.0, %v2546
    %2548 = vmatmul.bf16.gmra.mxu0 %v2271
    %v2549 = vpop.f32.mrf.mxu0
    %v2550 = vadd.f32 0.0, %v2549
    %v2551 = vpop.f32.mrf.mxu0
    %2552 = vdwg.mxu0
    %2553 = vmatpush.bf16.msra.mxu0 0
    %2554 = vmatpush.bf16.msra.mxu0 0
    %2555 = vmatpush.bf16.msra.mxu0 0
    %2556 = vmatpush.bf16.msra.mxu0 0
    %2557 = vmatpush.bf16.msra.mxu0 %v2357
    %2558 = vmatpush.bf16.msra.mxu0 %v2356
    %2559 = vmatpush.bf16.msra.mxu0 %v2355
    %2560 = vmatpush.bf16.msra.mxu0 %v2354
    %2561 = vmatmul.bf16.gmra.mxu0 %v2370
    %v2562 = vpop.f32.mrf.mxu0
    %v2563 = vadd.f32 %v2430, %v2562
    %v2564 = vpop.f32.mrf.mxu0
    %v2565 = vadd.f32 %v2432, %v2564
    %2566 = vmatmul.bf16.gmra.mxu0 %v2372
    %v2567 = vpop.f32.mrf.mxu0
    %v2568 = vadd.f32 %v2435, %v2567
    %v2569 = vpop.f32.mrf.mxu0
    %v2570 = vadd.f32 %v2437, %v2569
    %2571 = vmatmul.bf16.gmra.mxu0 %v2374
    %v2572 = vpop.f32.mrf.mxu0
    %v2573 = vadd.f32 %v2440, %v2572
    %v2574 = vpop.f32.mrf.mxu0
    %v2575 = vadd.f32 %v2442, %v2574
    %2576 = vmatmul.bf16.gmra.mxu0 %v2376
    %v2577 = vpop.f32.mrf.mxu0
    %v2578 = vadd.f32 %v2445, %v2577
    %v2579 = vpop.f32.mrf.mxu0
    %v2580 = vadd.f32 %v2447, %v2579
    %2581 = vmatmul.bf16.gmra.mxu0 %v2378
    %v2582 = vpop.f32.mrf.mxu0
    %v2583 = vadd.f32 %v2450, %v2582
    %v2584 = vpop.f32.mrf.mxu0
    %v2585 = vadd.f32 %v2452, %v2584
    %2586 = vmatmul.bf16.gmra.mxu0 %v2380
    %v2587 = vpop.f32.mrf.mxu0
    %v2588 = vadd.f32 %v2455, %v2587
    %v2589 = vpop.f32.mrf.mxu0
    %v2590 = vadd.f32 %v2457, %v2589
    %2591 = vmatmul.bf16.gmra.mxu0 %v2382
    %v2592 = vpop.f32.mrf.mxu0
    %v2593 = vadd.f32 %v2460, %v2592
    %v2594 = vpop.f32.mrf.mxu0
    %v2595 = vadd.f32 %v2462, %v2594
    %2596 = vmatmul.bf16.gmra.mxu0 %v2384
    %v2597 = vpop.f32.mrf.mxu0
    %v2598 = vadd.f32 %v2465, %v2597
    %v2599 = vpop.f32.mrf.mxu0
    %v2600 = vadd.f32 %v2467, %v2599
    %2601 = vmatmul.bf16.gmra.mxu0 %v2386
    %v2602 = vpop.f32.mrf.mxu0
    %v2603 = vadd.f32 %v2470, %v2602
    %v2604 = vpop.f32.mrf.mxu0
    %v2605 = vadd.f32 %v2472, %v2604
    %2606 = vmatmul.bf16.gmra.mxu0 %v2388
    %v2607 = vpop.f32.mrf.mxu0
    %v2608 = vadd.f32 %v2475, %v2607
    %v2609 = vpop.f32.mrf.mxu0
    %v2610 = vadd.f32 %v2477, %v2609
    %2611 = vmatmul.bf16.gmra.mxu0 %v2390
    %v2612 = vpop.f32.mrf.mxu0
    %v2613 = vadd.f32 %v2480, %v2612
    %v2614 = vpop.f32.mrf.mxu0
    %v2615 = vadd.f32 %v2482, %v2614
    %2616 = vmatmul.bf16.gmra.mxu0 %v2392
    %v2617 = vpop.f32.mrf.mxu0
    %v2618 = vadd.f32 %v2485, %v2617
    %v2619 = vpop.f32.mrf.mxu0
    %v2620 = vadd.f32 %v2487, %v2619
    %2621 = vmatmul.bf16.gmra.mxu0 %v2394
    %v2622 = vpop.f32.mrf.mxu0
    %v2623 = vadd.f32 %v2490, %v2622
    %v2624 = vpop.f32.mrf.mxu0
    %v2625 = vadd.f32 %v2492, %v2624
    %2626 = vmatmul.bf16.gmra.mxu0 %v2396
    %v2627 = vpop.f32.mrf.mxu0
    %v2628 = vadd.f32 %v2495, %v2627
    %v2629 = vpop.f32.mrf.mxu0
    %v2630 = vadd.f32 %v2497, %v2629
    %2631 = vmatmul.bf16.gmra.mxu0 %v2398
    %v2632 = vpop.f32.mrf.mxu0
    %v2633 = vadd.f32 %v2500, %v2632
    %v2634 = vpop.f32.mrf.mxu0
    %v2635 = vadd.f32 %v2502, %v2634
    %2636 = vmatmul.bf16.gmra.mxu0 %v2400
    %v2637 = vpop.f32.mrf.mxu0
    %v2638 = vadd.f32 %v2505, %v2637
    %v2639 = vpop.f32.mrf.mxu0
    %v2640 = vadd.f32 %v2507, %v2639
    %2641 = vmatmul.bf16.gmra.mxu0 %v2402
    %v2642 = vpop.f32.mrf.mxu0
    %v2643 = vadd.f32 %v2510, %v2642
    %v2644 = vpop.f32.mrf.mxu0
    %v2645 = vadd.f32 %v2512, %v2644
    %2646 = vmatmul.bf16.gmra.mxu0 %v2404
    %v2647 = vpop.f32.mrf.mxu0
    %v2648 = vadd.f32 %v2515, %v2647
    %v2649 = vpop.f32.mrf.mxu0
    %v2650 = vadd.f32 %v2517, %v2649
    %2651 = vmatmul.bf16.gmra.mxu0 %v2406
    %v2652 = vpop.f32.mrf.mxu0
    %v2653 = vadd.f32 %v2520, %v2652
    %v2654 = vpop.f32.mrf.mxu0
    %v2655 = vadd.f32 %v2522, %v2654
    %2656 = vmatmul.bf16.gmra.mxu0 %v2408
    %v2657 = vpop.f32.mrf.mxu0
    %v2658 = vadd.f32 %v2525, %v2657
    %v2659 = vpop.f32.mrf.mxu0
    %v2660 = vadd.f32 %v2527, %v2659
    %2661 = vmatmul.bf16.gmra.mxu0 %v2410
    %v2662 = vpop.f32.mrf.mxu0
    %v2663 = vadd.f32 %v2530, %v2662
    %v2664 = vpop.f32.mrf.mxu0
    %v2665 = vadd.f32 %v2532, %v2664
    %2666 = vmatmul.bf16.gmra.mxu0 %v2412
    %v2667 = vpop.f32.mrf.mxu0
    %v2668 = vadd.f32 %v2535, %v2667
    %v2669 = vpop.f32.mrf.mxu0
    %v2670 = vadd.f32 %v2537, %v2669
    %2671 = vmatmul.bf16.gmra.mxu0 %v2414
    %v2672 = vpop.f32.mrf.mxu0
    %v2673 = vadd.f32 %v2540, %v2672
    %v2674 = vpop.f32.mrf.mxu0
    %v2675 = vadd.f32 %v2542, %v2674
    %2676 = vmatmul.bf16.gmra.mxu0 %v2416
    %v2677 = vpop.f32.mrf.mxu0
    %v2678 = vadd.f32 %v2545, %v2677
    %v2679 = vpop.f32.mrf.mxu0
    %v2680 = vadd.f32 %v2547, %v2679
    %2681 = vmatmul.bf16.gmra.mxu0 %v2418
    %v2682 = vpop.f32.mrf.mxu0
    %v2683 = vadd.f32 %v2550, %v2682
    %v2684 = vpop.f32.mrf.mxu0
    %2685 = vdwg.mxu0
    %2686 = vst [vmem:[#allocation1] ss:$9 sm:$0xff] %v1497
    %s2687 = scalar_lea.vmem [#allocation1], 1
    %2688 = vst [vmem:[%s2687] ss:$9 sm:$0xff] %v1497
    %s2689 = scalar_lea.vmem [#allocation1], 2
    %2690 = vst [vmem:[%s2689] ss:$9 sm:$0xff] %v1497
    %s2691 = scalar_lea.vmem [#allocation1], 3
    %2692 = vst [vmem:[%s2691] ss:$9 sm:$0xff] %v1497
    %s2693 = scalar_lea.vmem [#allocation1], 4
    %2694 = vst [vmem:[%s2693] ss:$9 sm:$0xff] %v1497
    %s2695 = scalar_lea.vmem [#allocation1], 5
    %2696 = vst [vmem:[%s2695] ss:$9 sm:$0xff] %v1497
    %s2697 = scalar_lea.vmem [#allocation1], 6
    %2698 = vst [vmem:[%s2697] ss:$9 sm:$0xff] %v1497
    %s2699 = scalar_lea.vmem [#allocation1], 7
    %2700 = vst [vmem:[%s2699] ss:$9 sm:$0xff] %v1497
    %v2701 = vld [vmem:[#allocation1] sm:$0xff]
    %v2702 = vld [vmem:[#allocation1 + $0x9] sm:$0xff]
    %2703 = vst [vmem:[#allocation1] ss:$9 sm:$0xff] %v1497
    %2704 = vst [vmem:[%s2687] ss:$9 sm:$0xff] %v1497
    %2705 = vst [vmem:[%s2689] ss:$9 sm:$0xff] %v1497
    %2706 = vst [vmem:[%s2691] ss:$9 sm:$0xff] %v1497
    %2707 = vst [vmem:[%s2693] ss:$9 sm:$0xff] %v1497
    %2708 = vst [vmem:[%s2695] ss:$9 sm:$0xff] %v1497
    %2709 = vst [vmem:[%s2697] ss:$9 sm:$0xff] %v1499
    %2710 = vst [vmem:[%s2699] ss:$9 sm:$0xff] %v1501
    %v2711 = vld [vmem:[#allocation1] sm:$0xff]
    %v2712 = vld [vmem:[#allocation1 + $0x9] sm:$0xff]
    %2713 = vst [vmem:[#allocation1] ss:$9 sm:$0xff] %v1503
    %2714 = vst [vmem:[%s2687] ss:$9 sm:$0xff] %v1505
    %2715 = vst [vmem:[%s2689] ss:$9 sm:$0xff] %v1507
    %2716 = vst [vmem:[%s2691] ss:$9 sm:$0xff] %v1509
    %2717 = vst [vmem:[%s2693] ss:$9 sm:$0xff] %v1511
    %2718 = vst [vmem:[%s2695] ss:$9 sm:$0xff] %v1513
    %2719 = vst [vmem:[%s2697] ss:$9 sm:$0xff] %v1515
    %2720 = vst [vmem:[%s2699] ss:$9 sm:$0xff] %v1517
    %v2721 = vld [vmem:[#allocation1] sm:$0xff]
    %v2722 = vld [vmem:[#allocation1 + $0x9] sm:$0xff]
    %2723 = vst [vmem:[#allocation1] ss:$9 sm:$0xff] %v1519
    %2724 = vst [vmem:[%s2687] ss:$9 sm:$0xff] %v1521
    %2725 = vst [vmem:[%s2689] ss:$9 sm:$0xff] %v1523
    %2726 = vst [vmem:[%s2691] ss:$9 sm:$0xff] %v1524
    %2727 = vst [vmem:[%s2693] ss:$9 sm:$0xff] %v1526
    %2728 = vst [vmem:[%s2695] ss:$9 sm:$0xff] %v1528
    %2729 = vst [vmem:[%s2697] ss:$9 sm:$0xff] %v1530
    %2730 = vst [vmem:[%s2699] ss:$9 sm:$0xff] %v1532
    %v2731 = vld [vmem:[#allocation1] sm:$0xff]
    %v2732 = vld [vmem:[#allocation1 + $0x9] sm:$0xff]
    %2733 = vst [vmem:[#allocation1] ss:$9 sm:$0xff] %v1534
    %2734 = vst [vmem:[%s2687] ss:$9 sm:$0xff] %v1536
    %2735 = vst [vmem:[%s2689] ss:$9 sm:$0xff] %v1538
    %2736 = vst [vmem:[%s2691] ss:$9 sm:$0xff] %v1540
    %2737 = vst [vmem:[%s2693] ss:$9 sm:$0xff] %v1542
    %2738 = vst [vmem:[%s2695] ss:$9 sm:$0xff] %v1544
    %2739 = vst [vmem:[%s2697] ss:$9 sm:$0xff] %v1546
    %2740 = vst [vmem:[%s2699] ss:$9 sm:$0xff] %v1548
    %v2741 = vld [vmem:[#allocation1] sm:$0xff]
    %v2742 = vld [vmem:[#allocation1 + $0x9] sm:$0xff]
    %2743 = vst [vmem:[#allocation1] ss:$9 sm:$0xff] %v1550
    %2744 = vst [vmem:[%s2687] ss:$9 sm:$0xff] %v1551
    %2745 = vst [vmem:[%s2689] ss:$9 sm:$0xff] %v1553
    %2746 = vst [vmem:[%s2691] ss:$9 sm:$0xff] %v1555
    %2747 = vst [vmem:[%s2693] ss:$9 sm:$0xff] %v1557
    %2748 = vst [vmem:[%s2695] ss:$9 sm:$0xff] %v1559
    %2749 = vst [vmem:[%s2697] ss:$9 sm:$0xff] %v1561
    %2750 = vst [vmem:[%s2699] ss:$9 sm:$0xff] %v1563
    %v2751 = vld [vmem:[#allocation1] sm:$0xff]
    %v2752 = vld [vmem:[#allocation1 + $0x9] sm:$0xff]
    %2753 = vst [vmem:[#allocation1] ss:$9 sm:$0xff] %v1565
    %2754 = vst [vmem:[%s2687] ss:$9 sm:$0xff] %v1567
    %2755 = vst [vmem:[%s2689] ss:$9 sm:$0xff] %v1569
    %2756 = vst [vmem:[%s2691] ss:$9 sm:$0xff] %v1571
    %2757 = vst [vmem:[%s2693] ss:$9 sm:$0xff] %v1573
    %2758 = vst [vmem:[%s2695] ss:$9 sm:$0xff] %v1575
    %2759 = vst [vmem:[%s2697] ss:$9 sm:$0xff] %v1577
    %2760 = vst [vmem:[%s2699] ss:$9 sm:$0xff] %v1578
    %v2761 = vld [vmem:[#allocation1] sm:$0xff]
    %v2762 = vld [vmem:[#allocation1 + $0x9] sm:$0xff]
    %2763 = vst [vmem:[#allocation1] ss:$9 sm:$0xff] %v1580
    %2764 = vst [vmem:[%s2687] ss:$9 sm:$0xff] %v1582
    %2765 = vst [vmem:[%s2689] ss:$9 sm:$0xff] %v1584
    %2766 = vst [vmem:[%s2691] ss:$9 sm:$0xff] %v1586
    %2767 = vst [vmem:[%s2693] ss:$9 sm:$0xff] %v1588
    %2768 = vst [vmem:[%s2695] ss:$9 sm:$0xff] %v1590
    %2769 = vst [vmem:[%s2697] ss:$9 sm:$0xff] %v1592
    %2770 = vst [vmem:[%s2699] ss:$9 sm:$0xff] %v1594
    %v2771 = vld [vmem:[#allocation1] sm:$0xff]
    %v2772 = vld [vmem:[#allocation1 + $0x9] sm:$0xff]
    %2773 = vst [vmem:[#allocation1] ss:$9 sm:$0xff] %v1596
    %2774 = vst [vmem:[%s2687] ss:$9 sm:$0xff] %v1598
    %2775 = vst [vmem:[%s2689] ss:$9 sm:$0xff] %v1600
    %2776 = vst [vmem:[%s2691] ss:$9 sm:$0xff] %v1602
    %2777 = vst [vmem:[%s2693] ss:$9 sm:$0xff] %v1604
    %2778 = vst [vmem:[%s2695] ss:$9 sm:$0xff] %v1605
    %2779 = vst [vmem:[%s2697] ss:$9 sm:$0xff] %v1607
    %2780 = vst [vmem:[%s2699] ss:$9 sm:$0xff] %v1609
    %v2781 = vld [vmem:[#allocation1] sm:$0xff]
    %v2782 = vld [vmem:[#allocation1 + $0x9] sm:$0xff]
    %2783 = vst [vmem:[#allocation1] ss:$9 sm:$0xff] %v1611
    %2784 = vst [vmem:[%s2687] ss:$9 sm:$0xff] %v1613
    %2785 = vst [vmem:[%s2689] ss:$9 sm:$0xff] %v1615
    %2786 = vst [vmem:[%s2691] ss:$9 sm:$0xff] %v1617
    %2787 = vst [vmem:[%s2693] ss:$9 sm:$0xff] %v1619
    %2788 = vst [vmem:[%s2695] ss:$9 sm:$0xff] %v1621
    %2789 = vst [vmem:[%s2697] ss:$9 sm:$0xff] %v1623
    %2790 = vst [vmem:[%s2699] ss:$9 sm:$0xff] %v1625
    %v2791 = vld [vmem:[#allocation1] sm:$0xff]
    %v2792 = vld [vmem:[#allocation1 + $0x9] sm:$0xff]
    %2793 = vst [vmem:[#allocation1] ss:$9 sm:$0xff] %v1627
    %2794 = vst [vmem:[%s2687] ss:$9 sm:$0xff] %v1629
    %2795 = vst [vmem:[%s2689] ss:$9 sm:$0xff] %v1631
    %2796 = vst [vmem:[%s2691] ss:$9 sm:$0xff] %v1632
    %2797 = vst [vmem:[%s2693] ss:$9 sm:$0xff] %v1634
    %2798 = vst [vmem:[%s2695] ss:$9 sm:$0xff] %v1636
    %2799 = vst [vmem:[%s2697] ss:$9 sm:$0xff] %v1638
    %2800 = vst [vmem:[%s2699] ss:$9 sm:$0xff] %v1640
    %v2801 = vld [vmem:[#allocation1] sm:$0xff]
    %v2802 = vld [vmem:[#allocation1 + $0x9] sm:$0xff]
    %2803 = vst [vmem:[#allocation1] ss:$9 sm:$0xff] %v1642
    %2804 = vst [vmem:[%s2687] ss:$9 sm:$0xff] %v1644
    %2805 = vst [vmem:[%s2689] ss:$9 sm:$0xff] %v1646
    %2806 = vst [vmem:[%s2691] ss:$9 sm:$0xff] %v1648
    %2807 = vst [vmem:[%s2693] ss:$9 sm:$0xff] %v1650
    %2808 = vst [vmem:[%s2695] ss:$9 sm:$0xff] %v1652
    %2809 = vst [vmem:[%s2697] ss:$9 sm:$0xff] %v1654
    %2810 = vst [vmem:[%s2699] ss:$9 sm:$0xff] %v1656
    %v2811 = vld [vmem:[#allocation1] sm:$0xff]
    %v2812 = vld [vmem:[#allocation1 + $0x9] sm:$0xff]
    %2813 = vst [vmem:[#allocation1] ss:$9 sm:$0xff] %v1658
    %2814 = vst [vmem:[%s2687] ss:$9 sm:$0xff] %v1659
    %2815 = vst [vmem:[%s2689] ss:$9 sm:$0xff] %v1661
    %2816 = vst [vmem:[%s2691] ss:$9 sm:$0xff] %v1663
    %2817 = vst [vmem:[%s2693] ss:$9 sm:$0xff] %v1665
    %2818 = vst [vmem:[%s2695] ss:$9 sm:$0xff] %v1667
    %2819 = vst [vmem:[%s2697] ss:$9 sm:$0xff] %v1669
    %2820 = vst [vmem:[%s2699] ss:$9 sm:$0xff] %v1671
    %v2821 = vld [vmem:[#allocation1] sm:$0xff]
    %v2822 = vld [vmem:[#allocation1 + $0x9] sm:$0xff]
    %2823 = vst [vmem:[#allocation1] ss:$9 sm:$0xff] %v1673
    %2824 = vst [vmem:[%s2687] ss:$9 sm:$0xff] %v1675
    %2825 = vst [vmem:[%s2689] ss:$9 sm:$0xff] %v1677
    %2826 = vst [vmem:[%s2691] ss:$9 sm:$0xff] %v1679
    %2827 = vst [vmem:[%s2693] ss:$9 sm:$0xff] %v1681
    %2828 = vst [vmem:[%s2695] ss:$9 sm:$0xff] %v1683
    %2829 = vst [vmem:[%s2697] ss:$9 sm:$0xff] %v1685
    %2830 = vst [vmem:[%s2699] ss:$9 sm:$0xff] %v1686
    %v2831 = vld [vmem:[#allocation1] sm:$0xff]
    %v2832 = vld [vmem:[#allocation1 + $0x9] sm:$0xff]
    %2833 = vst [vmem:[#allocation1] ss:$9 sm:$0xff] %v1688
    %2834 = vst [vmem:[%s2687] ss:$9 sm:$0xff] %v1690
    %2835 = vst [vmem:[%s2689] ss:$9 sm:$0xff] %v1692
    %2836 = vst [vmem:[%s2691] ss:$9 sm:$0xff] %v1694
    %2837 = vst [vmem:[%s2693] ss:$9 sm:$0xff] %v1696
    %2838 = vst [vmem:[%s2695] ss:$9 sm:$0xff] %v1698
    %2839 = vst [vmem:[%s2697] ss:$9 sm:$0xff] %v1700
    %2840 = vst [vmem:[%s2699] ss:$9 sm:$0xff] %v1702
    %v2841 = vld [vmem:[#allocation1] sm:$0xff]
    %v2842 = vld [vmem:[#allocation1 + $0x9] sm:$0xff]
    %2843 = vst [vmem:[#allocation1] ss:$9 sm:$0xff] %v1704
    %2844 = vst [vmem:[%s2687] ss:$9 sm:$0xff] %v1706
    %2845 = vst [vmem:[%s2689] ss:$9 sm:$0xff] %v1708
    %2846 = vst [vmem:[%s2691] ss:$9 sm:$0xff] %v1710
    %2847 = vst [vmem:[%s2693] ss:$9 sm:$0xff] %v1712
    %2848 = vst [vmem:[%s2695] ss:$9 sm:$0xff] %v1713
    %2849 = vst [vmem:[%s2697] ss:$9 sm:$0xff] %v1715
    %2850 = vst [vmem:[%s2699] ss:$9 sm:$0xff] %v1717
    %v2851 = vld [vmem:[#allocation1] sm:$0xff]
    %v2852 = vld [vmem:[#allocation1 + $0x9] sm:$0xff]
    %2853 = vst [vmem:[#allocation1] ss:$9 sm:$0xff] %v1719
    %2854 = vst [vmem:[%s2687] ss:$9 sm:$0xff] %v1721
    %2855 = vst [vmem:[%s2689] ss:$9 sm:$0xff] %v1723
    %2856 = vst [vmem:[%s2691] ss:$9 sm:$0xff] %v1725
    %2857 = vst [vmem:[%s2693] ss:$9 sm:$0xff] %v1727
    %2858 = vst [vmem:[%s2695] ss:$9 sm:$0xff] %v1729
    %2859 = vst [vmem:[%s2697] ss:$9 sm:$0xff] %v1731
    %2860 = vst [vmem:[%s2699] ss:$9 sm:$0xff] %v1733
    %v2861 = vld [vmem:[#allocation1] sm:$0xff]
    %v2862 = vld [vmem:[#allocation1 + $0x9] sm:$0xff]
    %2863 = vst [vmem:[#allocation1] ss:$9 sm:$0xff] %v1735
    %2864 = vst [vmem:[%s2687] ss:$9 sm:$0xff] %v1737
    %2865 = vst [vmem:[%s2689] ss:$9 sm:$0xff] %v1739
    %2866 = vst [vmem:[%s2691] ss:$9 sm:$0xff] %v1740
    %2867 = vst [vmem:[%s2693] ss:$9 sm:$0xff] %v1742
    %2868 = vst [vmem:[%s2695] ss:$9 sm:$0xff] %v1744
    %2869 = vst [vmem:[%s2697] ss:$9 sm:$0xff] %v1746
    %2870 = vst [vmem:[%s2699] ss:$9 sm:$0xff] %v1748
    %v2871 = vld [vmem:[#allocation1] sm:$0xff]
    %v2872 = vld [vmem:[#allocation1 + $0x9] sm:$0xff]
    %2873 = vst [vmem:[#allocation1] ss:$9 sm:$0xff] %v1750
    %2874 = vst [vmem:[%s2687] ss:$9 sm:$0xff] %v1752
    %2875 = vst [vmem:[%s2689] ss:$9 sm:$0xff] %v1754
    %2876 = vst [vmem:[%s2691] ss:$9 sm:$0xff] %v1756
    %2877 = vst [vmem:[%s2693] ss:$9 sm:$0xff] %v1758
    %2878 = vst [vmem:[%s2695] ss:$9 sm:$0xff] %v1760
    %2879 = vst [vmem:[%s2697] ss:$9 sm:$0xff] %v1762
    %2880 = vst [vmem:[%s2699] ss:$9 sm:$0xff] %v1764
    %v2881 = vld [vmem:[#allocation1] sm:$0xff]
    %v2882 = vld [vmem:[#allocation1 + $0x9] sm:$0xff]
    %2883 = vst [vmem:[#allocation1] ss:$9 sm:$0xff] %v1766
    %2884 = vst [vmem:[%s2687] ss:$9 sm:$0xff] %v1767
    %2885 = vst [vmem:[%s2689] ss:$9 sm:$0xff] %v1769
    %2886 = vst [vmem:[%s2691] ss:$9 sm:$0xff] %v1771
    %2887 = vst [vmem:[%s2693] ss:$9 sm:$0xff] %v1773
    %2888 = vst [vmem:[%s2695] ss:$9 sm:$0xff] %v1775
    %2889 = vst [vmem:[%s2697] ss:$9 sm:$0xff] %v1777
    %2890 = vst [vmem:[%s2699] ss:$9 sm:$0xff] %v1779
    %v2891 = vld [vmem:[#allocation1] sm:$0xff]
    %v2892 = vld [vmem:[#allocation1 + $0x9] sm:$0xff]
    %2893 = vst [vmem:[#allocation1] ss:$9 sm:$0xff] %v1781
    %2894 = vst [vmem:[%s2687] ss:$9 sm:$0xff] %v1783
    %2895 = vst [vmem:[%s2689] ss:$9 sm:$0xff] %v1785
    %2896 = vst [vmem:[%s2691] ss:$9 sm:$0xff] %v1787
    %2897 = vst [vmem:[%s2693] ss:$9 sm:$0xff] %v1789
    %2898 = vst [vmem:[%s2695] ss:$9 sm:$0xff] %v1791
    %2899 = vst [vmem:[%s2697] ss:$9 sm:$0xff] %v1793
    %2900 = vst [vmem:[%s2699] ss:$9 sm:$0xff] %v1794
    %v2901 = vld [vmem:[#allocation1] sm:$0xff]
    %v2902 = vld [vmem:[#allocation1 + $0x9] sm:$0xff]
    %2903 = vst [vmem:[#allocation1] ss:$9 sm:$0xff] %v1796
    %2904 = vst [vmem:[%s2687] ss:$9 sm:$0xff] %v1798
    %2905 = vst [vmem:[%s2689] ss:$9 sm:$0xff] %v1800
    %2906 = vst [vmem:[%s2691] ss:$9 sm:$0xff] %v1802
    %2907 = vst [vmem:[%s2693] ss:$9 sm:$0xff] %v1804
    %2908 = vst [vmem:[%s2695] ss:$9 sm:$0xff] %v1806
    %2909 = vst [vmem:[%s2697] ss:$9 sm:$0xff] %v1808
    %2910 = vst [vmem:[%s2699] ss:$9 sm:$0xff] %v1810
    %v2911 = vld [vmem:[#allocation1] sm:$0xff]
    %v2912 = vld [vmem:[#allocation1 + $0x9] sm:$0xff]
    %2913 = vst [vmem:[#allocation1] ss:$9 sm:$0xff] %v1812
    %2914 = vst [vmem:[%s2687] ss:$9 sm:$0xff] %v1814
    %2915 = vst [vmem:[%s2689] ss:$9 sm:$0xff] %v1816
    %2916 = vst [vmem:[%s2691] ss:$9 sm:$0xff] %v1818
    %2917 = vst [vmem:[%s2693] ss:$9 sm:$0xff] %v1820
    %2918 = vst [vmem:[%s2695] ss:$9 sm:$0xff] %v1821
    %2919 = vst [vmem:[%s2697] ss:$9 sm:$0xff] %v1823
    %2920 = vst [vmem:[%s2699] ss:$9 sm:$0xff] %v1825
    %v2921 = vld [vmem:[#allocation1] sm:$0xff]
    %v2922 = vld [vmem:[#allocation1 + $0x9] sm:$0xff]
    %2923 = vst [vmem:[#allocation1] ss:$9 sm:$0xff] %v1827
    %2924 = vst [vmem:[%s2687] ss:$9 sm:$0xff] %v1829
    %2925 = vst [vmem:[%s2689] ss:$9 sm:$0xff] %v1831
    %2926 = vst [vmem:[%s2691] ss:$9 sm:$0xff] %v1833
    %2927 = vst [vmem:[%s2693] ss:$9 sm:$0xff] %v1835
    %2928 = vst [vmem:[%s2695] ss:$9 sm:$0xff] %v1837
    %2929 = vst [vmem:[%s2697] ss:$9 sm:$0xff] %v1839
    %2930 = vst [vmem:[%s2699] ss:$9 sm:$0xff] %v1841
    %v2931 = vld [vmem:[#allocation1] sm:$0xff]
    %v2932 = vld [vmem:[#allocation1 + $0x9] sm:$0xff]
    %2933 = vst [vmem:[#allocation1] ss:$9 sm:$0xff] %v1843
    %2934 = vst [vmem:[%s2687] ss:$9 sm:$0xff] %v1845
    %2935 = vst [vmem:[%s2689] ss:$9 sm:$0xff] %v1847
    %2936 = vst [vmem:[%s2691] ss:$9 sm:$0xff] %v1848
    %v2937 = vld [vmem:[#allocation1] sm:$0xff]
    %v2938 = vld [vmem:[#allocation1 + $0x9] sm:$0xff]
    %v2988 = vunpack.c.l.b16 %v1849
    %v2989 = vunpack.c.l.b16 %v1850
    %v2990 = vunpack.c.l.b16 %v1851
    %v2991 = vunpack.c.l.b16 %v1852
    %v2992 = vunpack.c.l.b16 %v1853
    %v2993 = vunpack.c.l.b16 %v1854
    %v2994 = vunpack.c.l.b16 %v1855
    %v2995 = vunpack.c.l.b16 %v1856
    %v2996 = vunpack.c.l.b16 %v1857
    %v2997 = vunpack.c.l.b16 %v1858
    %v2998 = vunpack.c.l.b16 %v1859
    %v2999 = vunpack.c.l.b16 %v1860
    %v3000 = vunpack.c.l.b16 %v1861
    %v3001 = vunpack.c.l.b16 %v1862
    %v3002 = vunpack.c.l.b16 %v1863
    %v3003 = vunpack.c.l.b16 %v1864
    %v3004 = vunpack.c.l.b16 %v1865
    %v3005 = vunpack.c.l.b16 %v1866
    %v3006 = vunpack.c.l.b16 %v1867
    %v3007 = vunpack.c.l.b16 %v1868
    %v3008 = vunpack.c.l.b16 %v1869
    %v3009 = vunpack.c.l.b16 %v1870
    %v3010 = vunpack.c.l.b16 %v1871
    %v3011 = vunpack.c.l.b16 %v1872
    %v3012 = vpack.c.b16 %v2989, %v2988
    %v3013 = vpack.c.b16 %v2991, %v2990
    %v3014 = vpack.c.b16 %v2993, %v2992
    %v3015 = vpack.c.b16 %v2995, %v2994
    %v3016 = vpack.c.b16 %v2997, %v2996
    %v3017 = vpack.c.b16 %v2999, %v2998
    %v3018 = vpack.c.b16 %v3001, %v3000
    %v3019 = vpack.c.b16 %v3003, %v3002
    %v3020 = vpack.c.b16 %v3005, %v3004
    %v3021 = vpack.c.b16 %v3007, %v3006
    %v3022 = vpack.c.b16 %v3009, %v3008
    %v3023 = vpack.c.b16 %v3011, %v3010
    %v3036 = vsel %vm788, %v2702, 0
    %v3038 = vsel %vm788, %v2712, 0
    %v3040 = vsel %vm788, %v2722, 0
    %v3042 = vsel %vm788, %v2732, 0
    %v3044 = vsel %vm788, %v2742, 0
    %v3046 = vsel %vm788, %v2752, 0
    %v3048 = vsel %vm788, %v2762, 0
    %v3050 = vsel %vm788, %v2772, 0
    %v3052 = vsel %vm788, %v2782, 0
    %v3054 = vsel %vm788, %v2792, 0
    %v3056 = vsel %vm788, %v2802, 0
    %v3058 = vsel %vm788, %v2812, 0
    %v3060 = vsel %vm788, %v2822, 0
    %v3062 = vsel %vm788, %v2832, 0
    %v3064 = vsel %vm788, %v2842, 0
    %v3066 = vsel %vm788, %v2852, 0
    %v3068 = vsel %vm788, %v2862, 0
    %v3070 = vsel %vm788, %v2872, 0
    %v3072 = vsel %vm788, %v2882, 0
    %v3074 = vsel %vm788, %v2892, 0
    %v3076 = vsel %vm788, %v2902, 0
    %v3078 = vsel %vm788, %v2912, 0
    %v3080 = vsel %vm788, %v2922, 0
    %v3082 = vsel %vm788, %v2932, 0
    %v3084 = vsel %vm788, %v2938, 0
    %3086 = vmatpush.bf16.msra.mxu0 %v3019
    %3087 = vmatpush.bf16.msra.mxu0 %v3018
    %3088 = vmatpush.bf16.msra.mxu0 %v3017
    %3089 = vmatpush.bf16.msra.mxu0 %v3016
    %3090 = vmatpush.bf16.msra.mxu0 %v3015
    %3091 = vmatpush.bf16.msra.mxu0 %v3014
    %3092 = vmatpush.bf16.msra.mxu0 %v3013
    %3093 = vmatpush.bf16.msra.mxu0 %v3012
    %3094 = vmatmul.bf16.gmra.mxu0 %v2701
    %v3095 = vpop.f32.mrf.mxu0
    %v3096 = vadd.f32 %v2563, %v3095
    %v3097 = vpop.f32.mrf.mxu0
    %v3098 = vadd.f32 %v2565, %v3097
    %3099 = vmatmul.bf16.gmra.mxu0 %v2711
    %v3100 = vpop.f32.mrf.mxu0
    %v3101 = vadd.f32 %v2568, %v3100
    %v3102 = vpop.f32.mrf.mxu0
    %v3103 = vadd.f32 %v2570, %v3102
    %3104 = vmatmul.bf16.gmra.mxu0 %v2721
    %v3105 = vpop.f32.mrf.mxu0
    %v3106 = vadd.f32 %v2573, %v3105
    %v3107 = vpop.f32.mrf.mxu0
    %v3108 = vadd.f32 %v2575, %v3107
    %3109 = vmatmul.bf16.gmra.mxu0 %v2731
    %v3110 = vpop.f32.mrf.mxu0
    %v3111 = vadd.f32 %v2578, %v3110
    %v3112 = vpop.f32.mrf.mxu0
    %v3113 = vadd.f32 %v2580, %v3112
    %3114 = vmatmul.bf16.gmra.mxu0 %v2741
    %v3115 = vpop.f32.mrf.mxu0
    %v3116 = vadd.f32 %v2583, %v3115
    %v3117 = vpop.f32.mrf.mxu0
    %v3118 = vadd.f32 %v2585, %v3117
    %3119 = vmatmul.bf16.gmra.mxu0 %v2751
    %v3120 = vpop.f32.mrf.mxu0
    %v3121 = vadd.f32 %v2588, %v3120
    %v3122 = vpop.f32.mrf.mxu0
    %v3123 = vadd.f32 %v2590, %v3122
    %3124 = vmatmul.bf16.gmra.mxu0 %v2761
    %v3125 = vpop.f32.mrf.mxu0
    %v3126 = vadd.f32 %v2593, %v3125
    %v3127 = vpop.f32.mrf.mxu0
    %v3128 = vadd.f32 %v2595, %v3127
    %3129 = vmatmul.bf16.gmra.mxu0 %v2771
    %v3130 = vpop.f32.mrf.mxu0
    %v3131 = vadd.f32 %v2598, %v3130
    %v3132 = vpop.f32.mrf.mxu0
    %v3133 = vadd.f32 %v2600, %v3132
    %3134 = vmatmul.bf16.gmra.mxu0 %v2781
    %v3135 = vpop.f32.mrf.mxu0
    %v3136 = vadd.f32 %v2603, %v3135
    %v3137 = vpop.f32.mrf.mxu0
    %v3138 = vadd.f32 %v2605, %v3137
    %3139 = vmatmul.bf16.gmra.mxu0 %v2791
    %v3140 = vpop.f32.mrf.mxu0
    %v3141 = vadd.f32 %v2608, %v3140
    %v3142 = vpop.f32.mrf.mxu0
    %v3143 = vadd.f32 %v2610, %v3142
    %3144 = vmatmul.bf16.gmra.mxu0 %v2801
    %v3145 = vpop.f32.mrf.mxu0
    %v3146 = vadd.f32 %v2613, %v3145
    %v3147 = vpop.f32.mrf.mxu0
    %v3148 = vadd.f32 %v2615, %v3147
    %3149 = vmatmul.bf16.gmra.mxu0 %v2811
    %v3150 = vpop.f32.mrf.mxu0
    %v3151 = vadd.f32 %v2618, %v3150
    %v3152 = vpop.f32.mrf.mxu0
    %v3153 = vadd.f32 %v2620, %v3152
    %3154 = vmatmul.bf16.gmra.mxu0 %v2821
    %v3155 = vpop.f32.mrf.mxu0
    %v3156 = vadd.f32 %v2623, %v3155
    %v3157 = vpop.f32.mrf.mxu0
    %v3158 = vadd.f32 %v2625, %v3157
    %3159 = vmatmul.bf16.gmra.mxu0 %v2831
    %v3160 = vpop.f32.mrf.mxu0
    %v3161 = vadd.f32 %v2628, %v3160
    %v3162 = vpop.f32.mrf.mxu0
    %v3163 = vadd.f32 %v2630, %v3162
    %3164 = vmatmul.bf16.gmra.mxu0 %v2841
    %v3165 = vpop.f32.mrf.mxu0
    %v3166 = vadd.f32 %v2633, %v3165
    %v3167 = vpop.f32.mrf.mxu0
    %v3168 = vadd.f32 %v2635, %v3167
    %3169 = vmatmul.bf16.gmra.mxu0 %v2851
    %v3170 = vpop.f32.mrf.mxu0
    %v3171 = vadd.f32 %v2638, %v3170
    %v3172 = vpop.f32.mrf.mxu0
    %v3173 = vadd.f32 %v2640, %v3172
    %3174 = vmatmul.bf16.gmra.mxu0 %v2861
    %v3175 = vpop.f32.mrf.mxu0
    %v3176 = vadd.f32 %v2643, %v3175
    %v3177 = vpop.f32.mrf.mxu0
    %v3178 = vadd.f32 %v2645, %v3177
    %3179 = vmatmul.bf16.gmra.mxu0 %v2871
    %v3180 = vpop.f32.mrf.mxu0
    %v3181 = vadd.f32 %v2648, %v3180
    %v3182 = vpop.f32.mrf.mxu0
    %v3183 = vadd.f32 %v2650, %v3182
    %3184 = vmatmul.bf16.gmra.mxu0 %v2881
    %v3185 = vpop.f32.mrf.mxu0
    %v3186 = vadd.f32 %v2653, %v3185
    %v3187 = vpop.f32.mrf.mxu0
    %v3188 = vadd.f32 %v2655, %v3187
    %3189 = vmatmul.bf16.gmra.mxu0 %v2891
    %v3190 = vpop.f32.mrf.mxu0
    %v3191 = vadd.f32 %v2658, %v3190
    %v3192 = vpop.f32.mrf.mxu0
    %v3193 = vadd.f32 %v2660, %v3192
    %3194 = vmatmul.bf16.gmra.mxu0 %v2901
    %v3195 = vpop.f32.mrf.mxu0
    %v3196 = vadd.f32 %v2663, %v3195
    %v3197 = vpop.f32.mrf.mxu0
    %v3198 = vadd.f32 %v2665, %v3197
    %3199 = vmatmul.bf16.gmra.mxu0 %v2911
    %v3200 = vpop.f32.mrf.mxu0
    %v3201 = vadd.f32 %v2668, %v3200
    %v3202 = vpop.f32.mrf.mxu0
    %v3203 = vadd.f32 %v2670, %v3202
    %3204 = vmatmul.bf16.gmra.mxu0 %v2921
    %v3205 = vpop.f32.mrf.mxu0
    %v3206 = vadd.f32 %v2673, %v3205
    %v3207 = vpop.f32.mrf.mxu0
    %v3208 = vadd.f32 %v2675, %v3207
    %3209 = vmatmul.bf16.gmra.mxu0 %v2931
    %v3210 = vpop.f32.mrf.mxu0
    %v3211 = vadd.f32 %v2678, %v3210
    %v3212 = vpop.f32.mrf.mxu0
    %v3213 = vadd.f32 %v2680, %v3212
    %3214 = vmatmul.bf16.gmra.mxu0 %v2937
    %v3215 = vpop.f32.mrf.mxu0
    %v3216 = vadd.f32 %v2683, %v3215
    %v3217 = vpop.f32.mrf.mxu0
    %3218 = vdwg.mxu0
    %3219 = vmatpush.bf16.msra.mxu0 0
    %3220 = vmatpush.bf16.msra.mxu0 0
    %3221 = vmatpush.bf16.msra.mxu0 0
    %3222 = vmatpush.bf16.msra.mxu0 0
    %3223 = vmatpush.bf16.msra.mxu0 %v3023
    %3224 = vmatpush.bf16.msra.mxu0 %v3022
    %3225 = vmatpush.bf16.msra.mxu0 %v3021
    %3226 = vmatpush.bf16.msra.mxu0 %v3020
    %3227 = vmatmul.bf16.gmra.mxu0 %v3036
    %v3228 = vpop.f32.mrf.mxu0
    %v3229 = vadd.f32 %v3096, %v3228
    %v3230 = vpop.f32.mrf.mxu0
    %v3231 = vadd.f32 %v3098, %v3230
    %3232 = vmatmul.bf16.gmra.mxu0 %v3038
    %v3233 = vpop.f32.mrf.mxu0
    %v3234 = vadd.f32 %v3101, %v3233
    %v3235 = vpop.f32.mrf.mxu0
    %v3236 = vadd.f32 %v3103, %v3235
    %3237 = vmatmul.bf16.gmra.mxu0 %v3040
    %v3238 = vpop.f32.mrf.mxu0
    %v3239 = vadd.f32 %v3106, %v3238
    %v3240 = vpop.f32.mrf.mxu0
    %v3241 = vadd.f32 %v3108, %v3240
    %3242 = vmatmul.bf16.gmra.mxu0 %v3042
    %v3243 = vpop.f32.mrf.mxu0
    %v3244 = vadd.f32 %v3111, %v3243
    %v3245 = vpop.f32.mrf.mxu0
    %v3246 = vadd.f32 %v3113, %v3245
    %3247 = vmatmul.bf16.gmra.mxu0 %v3044
    %v3248 = vpop.f32.mrf.mxu0
    %v3249 = vadd.f32 %v3116, %v3248
    %v3250 = vpop.f32.mrf.mxu0
    %v3251 = vadd.f32 %v3118, %v3250
    %3252 = vmatmul.bf16.gmra.mxu0 %v3046
    %v3253 = vpop.f32.mrf.mxu0
    %v3254 = vadd.f32 %v3121, %v3253
    %v3255 = vpop.f32.mrf.mxu0
    %v3256 = vadd.f32 %v3123, %v3255
    %3257 = vmatmul.bf16.gmra.mxu0 %v3048
    %v3258 = vpop.f32.mrf.mxu0
    %v3259 = vadd.f32 %v3126, %v3258
    %v3260 = vpop.f32.mrf.mxu0
    %v3261 = vadd.f32 %v3128, %v3260
    %3262 = vmatmul.bf16.gmra.mxu0 %v3050
    %v3263 = vpop.f32.mrf.mxu0
    %v3264 = vadd.f32 %v3131, %v3263
    %v3265 = vpop.f32.mrf.mxu0
    %v3266 = vadd.f32 %v3133, %v3265
    %3267 = vmatmul.bf16.gmra.mxu0 %v3052
    %v3268 = vpop.f32.mrf.mxu0
    %v3269 = vadd.f32 %v3136, %v3268
    %v3270 = vpop.f32.mrf.mxu0
    %v3271 = vadd.f32 %v3138, %v3270
    %3272 = vmatmul.bf16.gmra.mxu0 %v3054
    %v3273 = vpop.f32.mrf.mxu0
    %v3274 = vadd.f32 %v3141, %v3273
    %v3275 = vpop.f32.mrf.mxu0
    %v3276 = vadd.f32 %v3143, %v3275
    %3277 = vmatmul.bf16.gmra.mxu0 %v3056
    %v3278 = vpop.f32.mrf.mxu0
    %v3279 = vadd.f32 %v3146, %v3278
    %v3280 = vpop.f32.mrf.mxu0
    %v3281 = vadd.f32 %v3148, %v3280
    %3282 = vmatmul.bf16.gmra.mxu0 %v3058
    %v3283 = vpop.f32.mrf.mxu0
    %v3284 = vadd.f32 %v3151, %v3283
    %v3285 = vpop.f32.mrf.mxu0
    %v3286 = vadd.f32 %v3153, %v3285
    %3287 = vmatmul.bf16.gmra.mxu0 %v3060
    %v3288 = vpop.f32.mrf.mxu0
    %v3289 = vadd.f32 %v3156, %v3288
    %v3290 = vpop.f32.mrf.mxu0
    %v3291 = vadd.f32 %v3158, %v3290
    %3292 = vmatmul.bf16.gmra.mxu0 %v3062
    %v3293 = vpop.f32.mrf.mxu0
    %v3294 = vadd.f32 %v3161, %v3293
    %v3295 = vpop.f32.mrf.mxu0
    %v3296 = vadd.f32 %v3163, %v3295
    %3297 = vmatmul.bf16.gmra.mxu0 %v3064
    %v3298 = vpop.f32.mrf.mxu0
    %v3299 = vadd.f32 %v3166, %v3298
    %v3300 = vpop.f32.mrf.mxu0
    %v3301 = vadd.f32 %v3168, %v3300
    %3302 = vmatmul.bf16.gmra.mxu0 %v3066
    %v3303 = vpop.f32.mrf.mxu0
    %v3304 = vadd.f32 %v3171, %v3303
    %v3305 = vpop.f32.mrf.mxu0
    %v3306 = vadd.f32 %v3173, %v3305
    %3307 = vmatmul.bf16.gmra.mxu0 %v3068
    %v3308 = vpop.f32.mrf.mxu0
    %v3309 = vadd.f32 %v3176, %v3308
    %v3310 = vpop.f32.mrf.mxu0
    %v3311 = vadd.f32 %v3178, %v3310
    %3312 = vmatmul.bf16.gmra.mxu0 %v3070
    %v3313 = vpop.f32.mrf.mxu0
    %v3314 = vadd.f32 %v3181, %v3313
    %v3315 = vpop.f32.mrf.mxu0
    %v3316 = vadd.f32 %v3183, %v3315
    %3317 = vmatmul.bf16.gmra.mxu0 %v3072
    %v3318 = vpop.f32.mrf.mxu0
    %v3319 = vadd.f32 %v3186, %v3318
    %v3320 = vpop.f32.mrf.mxu0
    %v3321 = vadd.f32 %v3188, %v3320
    %3322 = vmatmul.bf16.gmra.mxu0 %v3074
    %v3323 = vpop.f32.mrf.mxu0
    %v3324 = vadd.f32 %v3191, %v3323
    %v3325 = vpop.f32.mrf.mxu0
    %v3326 = vadd.f32 %v3193, %v3325
    %3327 = vmatmul.bf16.gmra.mxu0 %v3076
    %v3328 = vpop.f32.mrf.mxu0
    %v3329 = vadd.f32 %v3196, %v3328
    %v3330 = vpop.f32.mrf.mxu0
    %v3331 = vadd.f32 %v3198, %v3330
    %3332 = vmatmul.bf16.gmra.mxu0 %v3078
    %v3333 = vpop.f32.mrf.mxu0
    %v3334 = vadd.f32 %v3201, %v3333
    %v3335 = vpop.f32.mrf.mxu0
    %v3336 = vadd.f32 %v3203, %v3335
    %3337 = vmatmul.bf16.gmra.mxu0 %v3080
    %v3338 = vpop.f32.mrf.mxu0
    %v3339 = vadd.f32 %v3206, %v3338
    %v3340 = vpop.f32.mrf.mxu0
    %v3341 = vadd.f32 %v3208, %v3340
    %3342 = vmatmul.bf16.gmra.mxu0 %v3082
    %v3343 = vpop.f32.mrf.mxu0
    %v3344 = vadd.f32 %v3211, %v3343
    %v3345 = vpop.f32.mrf.mxu0
    %v3346 = vadd.f32 %v3213, %v3345
    %3347 = vmatmul.bf16.gmra.mxu0 %v3084
    %v3348 = vpop.f32.mrf.mxu0
    %v3349 = vadd.f32 %v3216, %v3348
    %v3350 = vpop.f32.mrf.mxu0
    %3351 = vdwg.mxu0
    %v3352 = vld [vmem:[%s1 + $0xc0] sm:$0xf]
    %v3353 = vld [vmem:[%s1 + $0xc4] sm:$0xf]
    %v3354 = vld [vmem:[%s1 + $0xc8] sm:$0xf]
    %v3355 = vld [vmem:[%s1 + $0xcc] sm:$0xf]
    %v3356 = vld [vmem:[%s1 + $0xd0] sm:$0xf]
    %v3357 = vld [vmem:[%s1 + $0xd4] sm:$0xf]
    %v3358 = vld [vmem:[%s1 + $0xd8] sm:$0xf]
    %v3359 = vld [vmem:[%s1 + $0xdc] sm:$0xf]
    %v3360 = vld [vmem:[%s1 + $0xe0] sm:$0xf]
    %v3361 = vld [vmem:[%s1 + $0xe4] sm:$0xf]
    %v3362 = vld [vmem:[%s1 + $0xe8] sm:$0xf]
    %v3363 = vld [vmem:[%s1 + $0xec] sm:$0xf]
    %v3364 = vld [vmem:[%s1 + $0xf0] sm:$0xf]
    %v3365 = vld [vmem:[%s1 + $0xf4] sm:$0xf]
    %v3366 = vld [vmem:[%s1 + $0xf8] sm:$0xf]
    %v3367 = vld [vmem:[%s1 + $0xfc] sm:$0xf]
    %v3368 = vld [vmem:[%s1 + $0x100] sm:$0xf]
    %v3369 = vld [vmem:[%s1 + $0x104] sm:$0xf]
    %v3370 = vld [vmem:[%s1 + $0x108] sm:$0xf]
    %v3371 = vld [vmem:[%s1 + $0x10c] sm:$0xf]
    %v3372 = vld [vmem:[%s1 + $0x110] sm:$0xf]
    %v3373 = vld [vmem:[%s1 + $0x114] sm:$0xf]
    %v3374 = vld [vmem:[%s1 + $0x118] sm:$0xf]
    %v3375 = vld [vmem:[%s1 + $0x11c] sm:$0xf]
    %3376 = vst [vmem:[#allocation1] ss:$9 sm:$0xff] %v1526
    %s3377 = scalar_lea.vmem [#allocation1], 1
    %3378 = vst [vmem:[%s3377] ss:$9 sm:$0xff] %v1528
    %s3379 = scalar_lea.vmem [#allocation1], 2
    %3380 = vst [vmem:[%s3379] ss:$9 sm:$0xff] %v1530
    %s3381 = scalar_lea.vmem [#allocation1], 3
    %3382 = vst [vmem:[%s3381] ss:$9 sm:$0xff] %v1532
    %s3383 = scalar_lea.vmem [#allocation1], 4
    %3384 = vst [vmem:[%s3383] ss:$9 sm:$0xff] %v1534
    %s3385 = scalar_lea.vmem [#allocation1], 5
    %3386 = vst [vmem:[%s3385] ss:$9 sm:$0xff] %v1536
    %s3387 = scalar_lea.vmem [#allocation1], 6
    %3388 = vst [vmem:[%s3387] ss:$9 sm:$0xff] %v1538
    %s3389 = scalar_lea.vmem [#allocation1], 7
    %3390 = vst [vmem:[%s3389] ss:$9 sm:$0xff] %v1540
    %v3391 = vld [vmem:[#allocation1] sm:$0xff]
    %v3392 = vld [vmem:[#allocation1 + $0x9] sm:$0xff]
    %3393 = vst [vmem:[#allocation1] ss:$9 sm:$0xff] %v1542
    %3394 = vst [vmem:[%s3377] ss:$9 sm:$0xff] %v1544
    %3395 = vst [vmem:[%s3379] ss:$9 sm:$0xff] %v1546
    %3396 = vst [vmem:[%s3381] ss:$9 sm:$0xff] %v1548
    %3397 = vst [vmem:[%s3383] ss:$9 sm:$0xff] %v1550
    %3398 = vst [vmem:[%s3385] ss:$9 sm:$0xff] %v1551
    %3399 = vst [vmem:[%s3387] ss:$9 sm:$0xff] %v1553
    %3400 = vst [vmem:[%s3389] ss:$9 sm:$0xff] %v1555
    %v3401 = vld [vmem:[#allocation1] sm:$0xff]
    %v3402 = vld [vmem:[#allocation1 + $0x9] sm:$0xff]
    %3403 = vst [vmem:[#allocation1] ss:$9 sm:$0xff] %v1557
    %3404 = vst [vmem:[%s3377] ss:$9 sm:$0xff] %v1559
    %3405 = vst [vmem:[%s3379] ss:$9 sm:$0xff] %v1561
    %3406 = vst [vmem:[%s3381] ss:$9 sm:$0xff] %v1563
    %3407 = vst [vmem:[%s3383] ss:$9 sm:$0xff] %v1565
    %3408 = vst [vmem:[%s3385] ss:$9 sm:$0xff] %v1567
    %3409 = vst [vmem:[%s3387] ss:$9 sm:$0xff] %v1569
    %3410 = vst [vmem:[%s3389] ss:$9 sm:$0xff] %v1571
    %v3411 = vld [vmem:[#allocation1] sm:$0xff]
    %v3412 = vld [vmem:[#allocation1 + $0x9] sm:$0xff]
    %3413 = vst [vmem:[#allocation1] ss:$9 sm:$0xff] %v1573
    %3414 = vst [vmem:[%s3377] ss:$9 sm:$0xff] %v1575
    %3415 = vst [vmem:[%s3379] ss:$9 sm:$0xff] %v1577
    %3416 = vst [vmem:[%s3381] ss:$9 sm:$0xff] %v1578
    %3417 = vst [vmem:[%s3383] ss:$9 sm:$0xff] %v1580
    %3418 = vst [vmem:[%s3385] ss:$9 sm:$0xff] %v1582
    %3419 = vst [vmem:[%s3387] ss:$9 sm:$0xff] %v1584
    %3420 = vst [vmem:[%s3389] ss:$9 sm:$0xff] %v1586
    %v3421 = vld [vmem:[#allocation1] sm:$0xff]
    %v3422 = vld [vmem:[#allocation1 + $0x9] sm:$0xff]
    %3423 = vst [vmem:[#allocation1] ss:$9 sm:$0xff] %v1588
    %3424 = vst [vmem:[%s3377] ss:$9 sm:$0xff] %v1590
    %3425 = vst [vmem:[%s3379] ss:$9 sm:$0xff] %v1592
    %3426 = vst [vmem:[%s3381] ss:$9 sm:$0xff] %v1594
    %3427 = vst [vmem:[%s3383] ss:$9 sm:$0xff] %v1596
    %3428 = vst [vmem:[%s3385] ss:$9 sm:$0xff] %v1598
    %3429 = vst [vmem:[%s3387] ss:$9 sm:$0xff] %v1600
    %3430 = vst [vmem:[%s3389] ss:$9 sm:$0xff] %v1602
    %v3431 = vld [vmem:[#allocation1] sm:$0xff]
    %v3432 = vld [vmem:[#allocation1 + $0x9] sm:$0xff]
    %3433 = vst [vmem:[#allocation1] ss:$9 sm:$0xff] %v1604
    %3434 = vst [vmem:[%s3377] ss:$9 sm:$0xff] %v1605
    %3435 = vst [vmem:[%s3379] ss:$9 sm:$0xff] %v1607
    %3436 = vst [vmem:[%s3381] ss:$9 sm:$0xff] %v1609
    %3437 = vst [vmem:[%s3383] ss:$9 sm:$0xff] %v1611
    %3438 = vst [vmem:[%s3385] ss:$9 sm:$0xff] %v1613
    %3439 = vst [vmem:[%s3387] ss:$9 sm:$0xff] %v1615
    %3440 = vst [vmem:[%s3389] ss:$9 sm:$0xff] %v1617
    %v3441 = vld [vmem:[#allocation1] sm:$0xff]
    %v3442 = vld [vmem:[#allocation1 + $0x9] sm:$0xff]
    %3443 = vst [vmem:[#allocation1] ss:$9 sm:$0xff] %v1619
    %3444 = vst [vmem:[%s3377] ss:$9 sm:$0xff] %v1621
    %3445 = vst [vmem:[%s3379] ss:$9 sm:$0xff] %v1623
    %3446 = vst [vmem:[%s3381] ss:$9 sm:$0xff] %v1625
    %3447 = vst [vmem:[%s3383] ss:$9 sm:$0xff] %v1627
    %3448 = vst [vmem:[%s3385] ss:$9 sm:$0xff] %v1629
    %3449 = vst [vmem:[%s3387] ss:$9 sm:$0xff] %v1631
    %3450 = vst [vmem:[%s3389] ss:$9 sm:$0xff] %v1632
    %v3451 = vld [vmem:[#allocation1] sm:$0xff]
    %v3452 = vld [vmem:[#allocation1 + $0x9] sm:$0xff]
    %3453 = vst [vmem:[#allocation1] ss:$9 sm:$0xff] %v1634
    %3454 = vst [vmem:[%s3377] ss:$9 sm:$0xff] %v1636
    %3455 = vst [vmem:[%s3379] ss:$9 sm:$0xff] %v1638
    %3456 = vst [vmem:[%s3381] ss:$9 sm:$0xff] %v1640
    %3457 = vst [vmem:[%s3383] ss:$9 sm:$0xff] %v1642
    %3458 = vst [vmem:[%s3385] ss:$9 sm:$0xff] %v1644
    %3459 = vst [vmem:[%s3387] ss:$9 sm:$0xff] %v1646
    %3460 = vst [vmem:[%s3389] ss:$9 sm:$0xff] %v1648
    %v3461 = vld [vmem:[#allocation1] sm:$0xff]
    %v3462 = vld [vmem:[#allocation1 + $0x9] sm:$0xff]
    %3463 = vst [vmem:[#allocation1] ss:$9 sm:$0xff] %v1650
    %3464 = vst [vmem:[%s3377] ss:$9 sm:$0xff] %v1652
    %3465 = vst [vmem:[%s3379] ss:$9 sm:$0xff] %v1654
    %3466 = vst [vmem:[%s3381] ss:$9 sm:$0xff] %v1656
    %3467 = vst [vmem:[%s3383] ss:$9 sm:$0xff] %v1658
    %3468 = vst [vmem:[%s3385] ss:$9 sm:$0xff] %v1659
    %3469 = vst [vmem:[%s3387] ss:$9 sm:$0xff] %v1661
    %3470 = vst [vmem:[%s3389] ss:$9 sm:$0xff] %v1663
    %v3471 = vld [vmem:[#allocation1] sm:$0xff]
    %v3472 = vld [vmem:[#allocation1 + $0x9] sm:$0xff]
    %3473 = vst [vmem:[#allocation1] ss:$9 sm:$0xff] %v1665
    %3474 = vst [vmem:[%s3377] ss:$9 sm:$0xff] %v1667
    %3475 = vst [vmem:[%s3379] ss:$9 sm:$0xff] %v1669
    %3476 = vst [vmem:[%s3381] ss:$9 sm:$0xff] %v1671
    %3477 = vst [vmem:[%s3383] ss:$9 sm:$0xff] %v1673
    %3478 = vst [vmem:[%s3385] ss:$9 sm:$0xff] %v1675
    %3479 = vst [vmem:[%s3387] ss:$9 sm:$0xff] %v1677
    %3480 = vst [vmem:[%s3389] ss:$9 sm:$0xff] %v1679
    %v3481 = vld [vmem:[#allocation1] sm:$0xff]
    %v3482 = vld [vmem:[#allocation1 + $0x9] sm:$0xff]
    %3483 = vst [vmem:[#allocation1] ss:$9 sm:$0xff] %v1681
    %3484 = vst [vmem:[%s3377] ss:$9 sm:$0xff] %v1683
    %3485 = vst [vmem:[%s3379] ss:$9 sm:$0xff] %v1685
    %3486 = vst [vmem:[%s3381] ss:$9 sm:$0xff] %v1686
    %3487 = vst [vmem:[%s3383] ss:$9 sm:$0xff] %v1688
    %3488 = vst [vmem:[%s3385] ss:$9 sm:$0xff] %v1690
    %3489 = vst [vmem:[%s3387] ss:$9 sm:$0xff] %v1692
    %3490 = vst [vmem:[%s3389] ss:$9 sm:$0xff] %v1694
    %v3491 = vld [vmem:[#allocation1] sm:$0xff]
    %v3492 = vld [vmem:[#allocation1 + $0x9] sm:$0xff]
    %3493 = vst [vmem:[#allocation1] ss:$9 sm:$0xff] %v1696
    %3494 = vst [vmem:[%s3377] ss:$9 sm:$0xff] %v1698
    %3495 = vst [vmem:[%s3379] ss:$9 sm:$0xff] %v1700
    %3496 = vst [vmem:[%s3381] ss:$9 sm:$0xff] %v1702
    %3497 = vst [vmem:[%s3383] ss:$9 sm:$0xff] %v1704
    %3498 = vst [vmem:[%s3385] ss:$9 sm:$0xff] %v1706
    %3499 = vst [vmem:[%s3387] ss:$9 sm:$0xff] %v1708
    %3500 = vst [vmem:[%s3389] ss:$9 sm:$0xff] %v1710
    %v3501 = vld [vmem:[#allocation1] sm:$0xff]
    %v3502 = vld [vmem:[#allocation1 + $0x9] sm:$0xff]
    %3503 = vst [vmem:[#allocation1] ss:$9 sm:$0xff] %v1712
    %3504 = vst [vmem:[%s3377] ss:$9 sm:$0xff] %v1713
    %3505 = vst [vmem:[%s3379] ss:$9 sm:$0xff] %v1715
    %3506 = vst [vmem:[%s3381] ss:$9 sm:$0xff] %v1717
    %3507 = vst [vmem:[%s3383] ss:$9 sm:$0xff] %v1719
    %3508 = vst [vmem:[%s3385] ss:$9 sm:$0xff] %v1721
    %3509 = vst [vmem:[%s3387] ss:$9 sm:$0xff] %v1723
    %3510 = vst [vmem:[%s3389] ss:$9 sm:$0xff] %v1725
    %v3511 = vld [vmem:[#allocation1] sm:$0xff]
    %v3512 = vld [vmem:[#allocation1 + $0x9] sm:$0xff]
    %3513 = vst [vmem:[#allocation1] ss:$9 sm:$0xff] %v1727
    %3514 = vst [vmem:[%s3377] ss:$9 sm:$0xff] %v1729
    %3515 = vst [vmem:[%s3379] ss:$9 sm:$0xff] %v1731
    %3516 = vst [vmem:[%s3381] ss:$9 sm:$0xff] %v1733
    %3517 = vst [vmem:[%s3383] ss:$9 sm:$0xff] %v1735
    %3518 = vst [vmem:[%s3385] ss:$9 sm:$0xff] %v1737
    %3519 = vst [vmem:[%s3387] ss:$9 sm:$0xff] %v1739
    %3520 = vst [vmem:[%s3389] ss:$9 sm:$0xff] %v1740
    %v3521 = vld [vmem:[#allocation1] sm:$0xff]
    %v3522 = vld [vmem:[#allocation1 + $0x9] sm:$0xff]
    %3523 = vst [vmem:[#allocation1] ss:$9 sm:$0xff] %v1742
    %3524 = vst [vmem:[%s3377] ss:$9 sm:$0xff] %v1744
    %3525 = vst [vmem:[%s3379] ss:$9 sm:$0xff] %v1746
    %3526 = vst [vmem:[%s3381] ss:$9 sm:$0xff] %v1748
    %3527 = vst [vmem:[%s3383] ss:$9 sm:$0xff] %v1750
    %3528 = vst [vmem:[%s3385] ss:$9 sm:$0xff] %v1752
    %3529 = vst [vmem:[%s3387] ss:$9 sm:$0xff] %v1754
    %3530 = vst [vmem:[%s3389] ss:$9 sm:$0xff] %v1756
    %v3531 = vld [vmem:[#allocation1] sm:$0xff]
    %v3532 = vld [vmem:[#allocation1 + $0x9] sm:$0xff]
    %3533 = vst [vmem:[#allocation1] ss:$9 sm:$0xff] %v1758
    %3534 = vst [vmem:[%s3377] ss:$9 sm:$0xff] %v1760
    %3535 = vst [vmem:[%s3379] ss:$9 sm:$0xff] %v1762
    %3536 = vst [vmem:[%s3381] ss:$9 sm:$0xff] %v1764
    %3537 = vst [vmem:[%s3383] ss:$9 sm:$0xff] %v1766
    %3538 = vst [vmem:[%s3385] ss:$9 sm:$0xff] %v1767
    %3539 = vst [vmem:[%s3387] ss:$9 sm:$0xff] %v1769
    %3540 = vst [vmem:[%s3389] ss:$9 sm:$0xff] %v1771
    %v3541 = vld [vmem:[#allocation1] sm:$0xff]
    %v3542 = vld [vmem:[#allocation1 + $0x9] sm:$0xff]
    %3543 = vst [vmem:[#allocation1] ss:$9 sm:$0xff] %v1773
    %3544 = vst [vmem:[%s3377] ss:$9 sm:$0xff] %v1775
    %3545 = vst [vmem:[%s3379] ss:$9 sm:$0xff] %v1777
    %3546 = vst [vmem:[%s3381] ss:$9 sm:$0xff] %v1779
    %3547 = vst [vmem:[%s3383] ss:$9 sm:$0xff] %v1781
    %3548 = vst [vmem:[%s3385] ss:$9 sm:$0xff] %v1783
    %3549 = vst [vmem:[%s3387] ss:$9 sm:$0xff] %v1785
    %3550 = vst [vmem:[%s3389] ss:$9 sm:$0xff] %v1787
    %v3551 = vld [vmem:[#allocation1] sm:$0xff]
    %v3552 = vld [vmem:[#allocation1 + $0x9] sm:$0xff]
    %3553 = vst [vmem:[#allocation1] ss:$9 sm:$0xff] %v1789
    %3554 = vst [vmem:[%s3377] ss:$9 sm:$0xff] %v1791
    %3555 = vst [vmem:[%s3379] ss:$9 sm:$0xff] %v1793
    %3556 = vst [vmem:[%s3381] ss:$9 sm:$0xff] %v1794
    %3557 = vst [vmem:[%s3383] ss:$9 sm:$0xff] %v1796
    %3558 = vst [vmem:[%s3385] ss:$9 sm:$0xff] %v1798
    %3559 = vst [vmem:[%s3387] ss:$9 sm:$0xff] %v1800
    %3560 = vst [vmem:[%s3389] ss:$9 sm:$0xff] %v1802
    %v3561 = vld [vmem:[#allocation1] sm:$0xff]
    %v3562 = vld [vmem:[#allocation1 + $0x9] sm:$0xff]
    %3563 = vst [vmem:[#allocation1] ss:$9 sm:$0xff] %v1804
    %3564 = vst [vmem:[%s3377] ss:$9 sm:$0xff] %v1806
    %3565 = vst [vmem:[%s3379] ss:$9 sm:$0xff] %v1808
    %3566 = vst [vmem:[%s3381] ss:$9 sm:$0xff] %v1810
    %3567 = vst [vmem:[%s3383] ss:$9 sm:$0xff] %v1812
    %3568 = vst [vmem:[%s3385] ss:$9 sm:$0xff] %v1814
    %3569 = vst [vmem:[%s3387] ss:$9 sm:$0xff] %v1816
    %3570 = vst [vmem:[%s3389] ss:$9 sm:$0xff] %v1818
    %v3571 = vld [vmem:[#allocation1] sm:$0xff]
    %v3572 = vld [vmem:[#allocation1 + $0x9] sm:$0xff]
    %3573 = vst [vmem:[#allocation1] ss:$9 sm:$0xff] %v1820
    %3574 = vst [vmem:[%s3377] ss:$9 sm:$0xff] %v1821
    %3575 = vst [vmem:[%s3379] ss:$9 sm:$0xff] %v1823
    %3576 = vst [vmem:[%s3381] ss:$9 sm:$0xff] %v1825
    %3577 = vst [vmem:[%s3383] ss:$9 sm:$0xff] %v1827
    %3578 = vst [vmem:[%s3385] ss:$9 sm:$0xff] %v1829
    %3579 = vst [vmem:[%s3387] ss:$9 sm:$0xff] %v1831
    %3580 = vst [vmem:[%s3389] ss:$9 sm:$0xff] %v1833
    %v3581 = vld [vmem:[#allocation1] sm:$0xff]
    %v3582 = vld [vmem:[#allocation1 + $0x9] sm:$0xff]
    %3583 = vst [vmem:[#allocation1] ss:$9 sm:$0xff] %v1835
    %3584 = vst [vmem:[%s3377] ss:$9 sm:$0xff] %v1837
    %3585 = vst [vmem:[%s3379] ss:$9 sm:$0xff] %v1839
    %3586 = vst [vmem:[%s3381] ss:$9 sm:$0xff] %v1841
    %3587 = vst [vmem:[%s3383] ss:$9 sm:$0xff] %v1843
    %3588 = vst [vmem:[%s3385] ss:$9 sm:$0xff] %v1845
    %3589 = vst [vmem:[%s3387] ss:$9 sm:$0xff] %v1847
    %3590 = vst [vmem:[%s3389] ss:$9 sm:$0xff] %v1848
    %v3591 = vld [vmem:[#allocation1] sm:$0xff]
    %v3592 = vld [vmem:[#allocation1 + $0x9] sm:$0xff]
    %3593 = vst [vmem:[#allocation1] ss:$9 sm:$0xff] %v1970
    %3594 = vst [vmem:[%s3377] ss:$9 sm:$0xff] %v1972
    %3595 = vst [vmem:[%s3379] ss:$9 sm:$0xff] %v1974
    %3596 = vst [vmem:[%s3381] ss:$9 sm:$0xff] %v1976
    %3597 = vst [vmem:[%s3383] ss:$9 sm:$0xff] %v1978
    %3598 = vst [vmem:[%s3385] ss:$9 sm:$0xff] %v1980
    %3599 = vst [vmem:[%s3387] ss:$9 sm:$0xff] %v1982
    %3600 = vst [vmem:[%s3389] ss:$9 sm:$0xff] %v1984
    %v3601 = vld [vmem:[#allocation1] sm:$0xff]
    %v3602 = vld [vmem:[#allocation1 + $0x9] sm:$0xff]
    %3603 = vst [vmem:[#allocation1] ss:$9 sm:$0xff] %v1986
    %3604 = vst [vmem:[%s3377] ss:$9 sm:$0xff] %v1988
    %3605 = vst [vmem:[%s3379] ss:$9 sm:$0xff] %v1990
    %3606 = vst [vmem:[%s3381] ss:$9 sm:$0xff] %v1992
    %3607 = vst [vmem:[%s3383] ss:$9 sm:$0xff] %v1994
    %3608 = vst [vmem:[%s3385] ss:$9 sm:$0xff] %v1995
    %3609 = vst [vmem:[%s3387] ss:$9 sm:$0xff] %v1497
    %3610 = vst [vmem:[%s3389] ss:$9 sm:$0xff] %v1497
    %v3611 = vld [vmem:[#allocation1] sm:$0xff]
    %v3612 = vld [vmem:[#allocation1 + $0x9] sm:$0xff]
    %3613 = vst [vmem:[#allocation1] ss:$9 sm:$0xff] %v1497
    %3614 = vst [vmem:[%s3377] ss:$9 sm:$0xff] %v1497
    %3615 = vst [vmem:[%s3379] ss:$9 sm:$0xff] %v1497
    %3616 = vst [vmem:[%s3381] ss:$9 sm:$0xff] %v1497
    %3617 = vst [vmem:[%s3383] ss:$9 sm:$0xff] %v1497
    %3618 = vst [vmem:[%s3385] ss:$9 sm:$0xff] %v1497
    %3619 = vst [vmem:[%s3387] ss:$9 sm:$0xff] %v1497
    %3620 = vst [vmem:[%s3389] ss:$9 sm:$0xff] %v1497
    %v3621 = vld [vmem:[#allocation1] sm:$0xff]
    %v3622 = vld [vmem:[#allocation1 + $0x9] sm:$0xff]
    %3623 = vst [vmem:[#allocation1] ss:$9 sm:$0xff] %v1497
    %3624 = vst [vmem:[%s3377] ss:$9 sm:$0xff] %v1497
    %3625 = vst [vmem:[%s3379] ss:$9 sm:$0xff] %v1497
    %3626 = vst [vmem:[%s3381] ss:$9 sm:$0xff] %v1497
    %v3627 = vld [vmem:[#allocation1] sm:$0xff]
    %v3628 = vld [vmem:[#allocation1 + $0x9] sm:$0xff]
    %v3678 = vunpack.c.l.b16 %v3352
    %v3679 = vunpack.c.l.b16 %v3353
    %v3680 = vunpack.c.l.b16 %v3354
    %v3681 = vunpack.c.l.b16 %v3355
    %v3682 = vunpack.c.l.b16 %v3356
    %v3683 = vunpack.c.l.b16 %v3357
    %v3684 = vunpack.c.l.b16 %v3358
    %v3685 = vunpack.c.l.b16 %v3359
    %v3686 = vunpack.c.l.b16 %v3360
    %v3687 = vunpack.c.l.b16 %v3361
    %v3688 = vunpack.c.l.b16 %v3362
    %v3689 = vunpack.c.l.b16 %v3363
    %v3690 = vunpack.c.l.b16 %v3364
    %v3691 = vunpack.c.l.b16 %v3365
    %v3692 = vunpack.c.l.b16 %v3366
    %v3693 = vunpack.c.l.b16 %v3367
    %v3694 = vunpack.c.l.b16 %v3368
    %v3695 = vunpack.c.l.b16 %v3369
    %v3696 = vunpack.c.l.b16 %v3370
    %v3697 = vunpack.c.l.b16 %v3371
    %v3698 = vunpack.c.l.b16 %v3372
    %v3699 = vunpack.c.l.b16 %v3373
    %v3700 = vunpack.c.l.b16 %v3374
    %v3701 = vunpack.c.l.b16 %v3375
    %v3702 = vpack.c.b16 %v3679, %v3678
    %v3703 = vpack.c.b16 %v3681, %v3680
    %v3704 = vpack.c.b16 %v3683, %v3682
    %v3705 = vpack.c.b16 %v3685, %v3684
    %v3706 = vpack.c.b16 %v3687, %v3686
    %v3707 = vpack.c.b16 %v3689, %v3688
    %v3708 = vpack.c.b16 %v3691, %v3690
    %v3709 = vpack.c.b16 %v3693, %v3692
    %v3710 = vpack.c.b16 %v3695, %v3694
    %v3711 = vpack.c.b16 %v3697, %v3696
    %v3712 = vpack.c.b16 %v3699, %v3698
    %v3713 = vpack.c.b16 %v3701, %v3700
    %v3726 = vsel %vm788, %v3392, 0
    %v3728 = vsel %vm788, %v3402, 0
    %v3730 = vsel %vm788, %v3412, 0
    %v3732 = vsel %vm788, %v3422, 0
    %v3734 = vsel %vm788, %v3432, 0
    %v3736 = vsel %vm788, %v3442, 0
    %v3738 = vsel %vm788, %v3452, 0
    %v3740 = vsel %vm788, %v3462, 0
    %v3742 = vsel %vm788, %v3472, 0
    %v3744 = vsel %vm788, %v3482, 0
    %v3746 = vsel %vm788, %v3492, 0
    %v3748 = vsel %vm788, %v3502, 0
    %v3750 = vsel %vm788, %v3512, 0
    %v3752 = vsel %vm788, %v3522, 0
    %v3754 = vsel %vm788, %v3532, 0
    %v3756 = vsel %vm788, %v3542, 0
    %v3758 = vsel %vm788, %v3552, 0
    %v3760 = vsel %vm788, %v3562, 0
    %v3762 = vsel %vm788, %v3572, 0
    %v3764 = vsel %vm788, %v3582, 0
    %v3766 = vsel %vm788, %v3592, 0
    %v3768 = vsel %vm788, %v3602, 0
    %v3770 = vsel %vm788, %v3612, 0
    %v3772 = vsel %vm788, %v3622, 0
    %v3774 = vsel %vm788, %v3628, 0
    %3776 = vmatpush.bf16.msra.mxu0 %v3709
    %3777 = vmatpush.bf16.msra.mxu0 %v3708
    %3778 = vmatpush.bf16.msra.mxu0 %v3707
    %3779 = vmatpush.bf16.msra.mxu0 %v3706
    %3780 = vmatpush.bf16.msra.mxu0 %v3705
    %3781 = vmatpush.bf16.msra.mxu0 %v3704
    %3782 = vmatpush.bf16.msra.mxu0 %v3703
    %3783 = vmatpush.bf16.msra.mxu0 %v3702
    %3784 = vmatmul.bf16.gmra.mxu0 %v3391
    %v3785 = vpop.f32.mrf.mxu0
    %v3786 = vadd.f32 0.0, %v3785
    %v3787 = vpop.f32.mrf.mxu0
    %v3788 = vadd.f32 0.0, %v3787
    %3789 = vmatmul.bf16.gmra.mxu0 %v3401
    %v3790 = vpop.f32.mrf.mxu0
    %v3791 = vadd.f32 0.0, %v3790
    %v3792 = vpop.f32.mrf.mxu0
    %v3793 = vadd.f32 0.0, %v3792
    %3794 = vmatmul.bf16.gmra.mxu0 %v3411
    %v3795 = vpop.f32.mrf.mxu0
    %v3796 = vadd.f32 0.0, %v3795
    %v3797 = vpop.f32.mrf.mxu0
    %v3798 = vadd.f32 0.0, %v3797
    %3799 = vmatmul.bf16.gmra.mxu0 %v3421
    %v3800 = vpop.f32.mrf.mxu0
    %v3801 = vadd.f32 0.0, %v3800
    %v3802 = vpop.f32.mrf.mxu0
    %v3803 = vadd.f32 0.0, %v3802
    %3804 = vmatmul.bf16.gmra.mxu0 %v3431
    %v3805 = vpop.f32.mrf.mxu0
    %v3806 = vadd.f32 0.0, %v3805
    %v3807 = vpop.f32.mrf.mxu0
    %v3808 = vadd.f32 0.0, %v3807
    %3809 = vmatmul.bf16.gmra.mxu0 %v3441
    %v3810 = vpop.f32.mrf.mxu0
    %v3811 = vadd.f32 0.0, %v3810
    %v3812 = vpop.f32.mrf.mxu0
    %v3813 = vadd.f32 0.0, %v3812
    %3814 = vmatmul.bf16.gmra.mxu0 %v3451
    %v3815 = vpop.f32.mrf.mxu0
    %v3816 = vadd.f32 0.0, %v3815
    %v3817 = vpop.f32.mrf.mxu0
    %v3818 = vadd.f32 0.0, %v3817
    %3819 = vmatmul.bf16.gmra.mxu0 %v3461
    %v3820 = vpop.f32.mrf.mxu0
    %v3821 = vadd.f32 0.0, %v3820
    %v3822 = vpop.f32.mrf.mxu0
    %v3823 = vadd.f32 0.0, %v3822
    %3824 = vmatmul.bf16.gmra.mxu0 %v3471
    %v3825 = vpop.f32.mrf.mxu0
    %v3826 = vadd.f32 0.0, %v3825
    %v3827 = vpop.f32.mrf.mxu0
    %v3828 = vadd.f32 0.0, %v3827
    %3829 = vmatmul.bf16.gmra.mxu0 %v3481
    %v3830 = vpop.f32.mrf.mxu0
    %v3831 = vadd.f32 0.0, %v3830
    %v3832 = vpop.f32.mrf.mxu0
    %v3833 = vadd.f32 0.0, %v3832
    %3834 = vmatmul.bf16.gmra.mxu0 %v3491
    %v3835 = vpop.f32.mrf.mxu0
    %v3836 = vadd.f32 0.0, %v3835
    %v3837 = vpop.f32.mrf.mxu0
    %v3838 = vadd.f32 0.0, %v3837
    %3839 = vmatmul.bf16.gmra.mxu0 %v3501
    %v3840 = vpop.f32.mrf.mxu0
    %v3841 = vadd.f32 0.0, %v3840
    %v3842 = vpop.f32.mrf.mxu0
    %v3843 = vadd.f32 0.0, %v3842
    %3844 = vmatmul.bf16.gmra.mxu0 %v3511
    %v3845 = vpop.f32.mrf.mxu0
    %v3846 = vadd.f32 0.0, %v3845
    %v3847 = vpop.f32.mrf.mxu0
    %v3848 = vadd.f32 0.0, %v3847
    %3849 = vmatmul.bf16.gmra.mxu0 %v3521
    %v3850 = vpop.f32.mrf.mxu0
    %v3851 = vadd.f32 0.0, %v3850
    %v3852 = vpop.f32.mrf.mxu0
    %v3853 = vadd.f32 0.0, %v3852
    %3854 = vmatmul.bf16.gmra.mxu0 %v3531
    %v3855 = vpop.f32.mrf.mxu0
    %v3856 = vadd.f32 0.0, %v3855
    %v3857 = vpop.f32.mrf.mxu0
    %v3858 = vadd.f32 0.0, %v3857
    %3859 = vmatmul.bf16.gmra.mxu0 %v3541
    %v3860 = vpop.f32.mrf.mxu0
    %v3861 = vadd.f32 0.0, %v3860
    %v3862 = vpop.f32.mrf.mxu0
    %v3863 = vadd.f32 0.0, %v3862
    %3864 = vmatmul.bf16.gmra.mxu0 %v3551
    %v3865 = vpop.f32.mrf.mxu0
    %v3866 = vadd.f32 0.0, %v3865
    %v3867 = vpop.f32.mrf.mxu0
    %v3868 = vadd.f32 0.0, %v3867
    %3869 = vmatmul.bf16.gmra.mxu0 %v3561
    %v3870 = vpop.f32.mrf.mxu0
    %v3871 = vadd.f32 0.0, %v3870
    %v3872 = vpop.f32.mrf.mxu0
    %v3873 = vadd.f32 0.0, %v3872
    %3874 = vmatmul.bf16.gmra.mxu0 %v3571
    %v3875 = vpop.f32.mrf.mxu0
    %v3876 = vadd.f32 0.0, %v3875
    %v3877 = vpop.f32.mrf.mxu0
    %v3878 = vadd.f32 0.0, %v3877
    %3879 = vmatmul.bf16.gmra.mxu0 %v3581
    %v3880 = vpop.f32.mrf.mxu0
    %v3881 = vadd.f32 0.0, %v3880
    %v3882 = vpop.f32.mrf.mxu0
    %v3883 = vadd.f32 0.0, %v3882
    %3884 = vmatmul.bf16.gmra.mxu0 %v3591
    %v3885 = vpop.f32.mrf.mxu0
    %v3886 = vadd.f32 0.0, %v3885
    %v3887 = vpop.f32.mrf.mxu0
    %v3888 = vadd.f32 0.0, %v3887
    %3889 = vmatmul.bf16.gmra.mxu0 %v3601
    %v3890 = vpop.f32.mrf.mxu0
    %v3891 = vadd.f32 0.0, %v3890
    %v3892 = vpop.f32.mrf.mxu0
    %v3893 = vadd.f32 0.0, %v3892
    %3894 = vmatmul.bf16.gmra.mxu0 %v3611
    %v3895 = vpop.f32.mrf.mxu0
    %v3896 = vadd.f32 0.0, %v3895
    %v3897 = vpop.f32.mrf.mxu0
    %v3898 = vadd.f32 0.0, %v3897
    %3899 = vmatmul.bf16.gmra.mxu0 %v3621
    %v3900 = vpop.f32.mrf.mxu0
    %v3901 = vadd.f32 0.0, %v3900
    %v3902 = vpop.f32.mrf.mxu0
    %v3903 = vadd.f32 0.0, %v3902
    %3904 = vmatmul.bf16.gmra.mxu0 %v3627
    %v3905 = vpop.f32.mrf.mxu0
    %v3906 = vadd.f32 0.0, %v3905
    %v3907 = vpop.f32.mrf.mxu0
    %3908 = vdwg.mxu0
    %3909 = vmatpush.bf16.msra.mxu0 0
    %3910 = vmatpush.bf16.msra.mxu0 0
    %3911 = vmatpush.bf16.msra.mxu0 0
    %3912 = vmatpush.bf16.msra.mxu0 0
    %3913 = vmatpush.bf16.msra.mxu0 %v3713
    %3914 = vmatpush.bf16.msra.mxu0 %v3712
    %3915 = vmatpush.bf16.msra.mxu0 %v3711
    %3916 = vmatpush.bf16.msra.mxu0 %v3710
    %3917 = vmatmul.bf16.gmra.mxu0 %v3726
    %v3918 = vpop.f32.mrf.mxu0
    %v3919 = vadd.f32 %v3786, %v3918
    %v3920 = vpop.f32.mrf.mxu0
    %v3921 = vadd.f32 %v3788, %v3920
    %3922 = vmatmul.bf16.gmra.mxu0 %v3728
    %v3923 = vpop.f32.mrf.mxu0
    %v3924 = vadd.f32 %v3791, %v3923
    %v3925 = vpop.f32.mrf.mxu0
    %v3926 = vadd.f32 %v3793, %v3925
    %3927 = vmatmul.bf16.gmra.mxu0 %v3730
    %v3928 = vpop.f32.mrf.mxu0
    %v3929 = vadd.f32 %v3796, %v3928
    %v3930 = vpop.f32.mrf.mxu0
    %v3931 = vadd.f32 %v3798, %v3930
    %3932 = vmatmul.bf16.gmra.mxu0 %v3732
    %v3933 = vpop.f32.mrf.mxu0
    %v3934 = vadd.f32 %v3801, %v3933
    %v3935 = vpop.f32.mrf.mxu0
    %v3936 = vadd.f32 %v3803, %v3935
    %3937 = vmatmul.bf16.gmra.mxu0 %v3734
    %v3938 = vpop.f32.mrf.mxu0
    %v3939 = vadd.f32 %v3806, %v3938
    %v3940 = vpop.f32.mrf.mxu0
    %v3941 = vadd.f32 %v3808, %v3940
    %3942 = vmatmul.bf16.gmra.mxu0 %v3736
    %v3943 = vpop.f32.mrf.mxu0
    %v3944 = vadd.f32 %v3811, %v3943
    %v3945 = vpop.f32.mrf.mxu0
    %v3946 = vadd.f32 %v3813, %v3945
    %3947 = vmatmul.bf16.gmra.mxu0 %v3738
    %v3948 = vpop.f32.mrf.mxu0
    %v3949 = vadd.f32 %v3816, %v3948
    %v3950 = vpop.f32.mrf.mxu0
    %v3951 = vadd.f32 %v3818, %v3950
    %3952 = vmatmul.bf16.gmra.mxu0 %v3740
    %v3953 = vpop.f32.mrf.mxu0
    %v3954 = vadd.f32 %v3821, %v3953
    %v3955 = vpop.f32.mrf.mxu0
    %v3956 = vadd.f32 %v3823, %v3955
    %3957 = vmatmul.bf16.gmra.mxu0 %v3742
    %v3958 = vpop.f32.mrf.mxu0
    %v3959 = vadd.f32 %v3826, %v3958
    %v3960 = vpop.f32.mrf.mxu0
    %v3961 = vadd.f32 %v3828, %v3960
    %3962 = vmatmul.bf16.gmra.mxu0 %v3744
    %v3963 = vpop.f32.mrf.mxu0
    %v3964 = vadd.f32 %v3831, %v3963
    %v3965 = vpop.f32.mrf.mxu0
    %v3966 = vadd.f32 %v3833, %v3965
    %3967 = vmatmul.bf16.gmra.mxu0 %v3746
    %v3968 = vpop.f32.mrf.mxu0
    %v3969 = vadd.f32 %v3836, %v3968
    %v3970 = vpop.f32.mrf.mxu0
    %v3971 = vadd.f32 %v3838, %v3970
    %3972 = vmatmul.bf16.gmra.mxu0 %v3748
    %v3973 = vpop.f32.mrf.mxu0
    %v3974 = vadd.f32 %v3841, %v3973
    %v3975 = vpop.f32.mrf.mxu0
    %v3976 = vadd.f32 %v3843, %v3975
    %3977 = vmatmul.bf16.gmra.mxu0 %v3750
    %v3978 = vpop.f32.mrf.mxu0
    %v3979 = vadd.f32 %v3846, %v3978
    %v3980 = vpop.f32.mrf.mxu0
    %v3981 = vadd.f32 %v3848, %v3980
    %3982 = vmatmul.bf16.gmra.mxu0 %v3752
    %v3983 = vpop.f32.mrf.mxu0
    %v3984 = vadd.f32 %v3851, %v3983
    %v3985 = vpop.f32.mrf.mxu0
    %v3986 = vadd.f32 %v3853, %v3985
    %3987 = vmatmul.bf16.gmra.mxu0 %v3754
    %v3988 = vpop.f32.mrf.mxu0
    %v3989 = vadd.f32 %v3856, %v3988
    %v3990 = vpop.f32.mrf.mxu0
    %v3991 = vadd.f32 %v3858, %v3990
    %3992 = vmatmul.bf16.gmra.mxu0 %v3756
    %v3993 = vpop.f32.mrf.mxu0
    %v3994 = vadd.f32 %v3861, %v3993
    %v3995 = vpop.f32.mrf.mxu0
    %v3996 = vadd.f32 %v3863, %v3995
    %3997 = vmatmul.bf16.gmra.mxu0 %v3758
    %v3998 = vpop.f32.mrf.mxu0
    %v3999 = vadd.f32 %v3866, %v3998
    %v4000 = vpop.f32.mrf.mxu0
    %v4001 = vadd.f32 %v3868, %v4000
    %4002 = vmatmul.bf16.gmra.mxu0 %v3760
    %v4003 = vpop.f32.mrf.mxu0
    %v4004 = vadd.f32 %v3871, %v4003
    %v4005 = vpop.f32.mrf.mxu0
    %v4006 = vadd.f32 %v3873, %v4005
    %4007 = vmatmul.bf16.gmra.mxu0 %v3762
    %v4008 = vpop.f32.mrf.mxu0
    %v4009 = vadd.f32 %v3876, %v4008
    %v4010 = vpop.f32.mrf.mxu0
    %v4011 = vadd.f32 %v3878, %v4010
    %4012 = vmatmul.bf16.gmra.mxu0 %v3764
    %v4013 = vpop.f32.mrf.mxu0
    %v4014 = vadd.f32 %v3881, %v4013
    %v4015 = vpop.f32.mrf.mxu0
    %v4016 = vadd.f32 %v3883, %v4015
    %4017 = vmatmul.bf16.gmra.mxu0 %v3766
    %v4018 = vpop.f32.mrf.mxu0
    %v4019 = vadd.f32 %v3886, %v4018
    %v4020 = vpop.f32.mrf.mxu0
    %v4021 = vadd.f32 %v3888, %v4020
    %4022 = vmatmul.bf16.gmra.mxu0 %v3768
    %v4023 = vpop.f32.mrf.mxu0
    %v4024 = vadd.f32 %v3891, %v4023
    %v4025 = vpop.f32.mrf.mxu0
    %v4026 = vadd.f32 %v3893, %v4025
    %4027 = vmatmul.bf16.gmra.mxu0 %v3770
    %v4028 = vpop.f32.mrf.mxu0
    %v4029 = vadd.f32 %v3896, %v4028
    %v4030 = vpop.f32.mrf.mxu0
    %v4031 = vadd.f32 %v3898, %v4030
    %4032 = vmatmul.bf16.gmra.mxu0 %v3772
    %v4033 = vpop.f32.mrf.mxu0
    %v4034 = vadd.f32 %v3901, %v4033
    %v4035 = vpop.f32.mrf.mxu0
    %v4036 = vadd.f32 %v3903, %v4035
    %4037 = vmatmul.bf16.gmra.mxu0 %v3774
    %v4038 = vpop.f32.mrf.mxu0
    %v4039 = vadd.f32 %v3906, %v4038
    %v4040 = vpop.f32.mrf.mxu0
    %4041 = vdwg.mxu0
    %v4042 = vadd.f32 %v3229, %v3919
    %v4043 = vadd.f32 %v3231, %v3921
    %v4044 = vadd.f32 %v3234, %v3924
    %v4045 = vadd.f32 %v3236, %v3926
    %v4046 = vadd.f32 %v3239, %v3929
    %v4047 = vadd.f32 %v3241, %v3931
    %v4048 = vadd.f32 %v3244, %v3934
    %v4049 = vadd.f32 %v3246, %v3936
    %v4050 = vadd.f32 %v3249, %v3939
    %v4051 = vadd.f32 %v3251, %v3941
    %v4052 = vadd.f32 %v3254, %v3944
    %v4053 = vadd.f32 %v3256, %v3946
    %v4054 = vadd.f32 %v3259, %v3949
    %v4055 = vadd.f32 %v3261, %v3951
    %v4056 = vadd.f32 %v3264, %v3954
    %v4057 = vadd.f32 %v3266, %v3956
    %v4058 = vadd.f32 %v3269, %v3959
    %v4059 = vadd.f32 %v3271, %v3961
    %v4060 = vadd.f32 %v3274, %v3964
    %v4061 = vadd.f32 %v3276, %v3966
    %v4062 = vadd.f32 %v3279, %v3969
    %v4063 = vadd.f32 %v3281, %v3971
    %v4064 = vadd.f32 %v3284, %v3974
    %v4065 = vadd.f32 %v3286, %v3976
    %v4066 = vadd.f32 %v3289, %v3979
    %v4067 = vadd.f32 %v3291, %v3981
    %v4068 = vadd.f32 %v3294, %v3984
    %v4069 = vadd.f32 %v3296, %v3986
    %v4070 = vadd.f32 %v3299, %v3989
    %v4071 = vadd.f32 %v3301, %v3991
    %v4072 = vadd.f32 %v3304, %v3994
    %v4073 = vadd.f32 %v3306, %v3996
    %v4074 = vadd.f32 %v3309, %v3999
    %v4075 = vadd.f32 %v3311, %v4001
    %v4076 = vadd.f32 %v3314, %v4004
    %v4077 = vadd.f32 %v3316, %v4006
    %v4078 = vadd.f32 %v3319, %v4009
    %v4079 = vadd.f32 %v3321, %v4011
    %v4080 = vadd.f32 %v3324, %v4014
    %v4081 = vadd.f32 %v3326, %v4016
    %v4082 = vadd.f32 %v3329, %v4019
    %v4083 = vadd.f32 %v3331, %v4021
    %v4084 = vadd.f32 %v3334, %v4024
    %v4085 = vadd.f32 %v3336, %v4026
    %v4086 = vadd.f32 %v3339, %v4029
    %v4087 = vadd.f32 %v3341, %v4031
    %v4088 = vadd.f32 %v3344, %v4034
    %v4089 = vadd.f32 %v3346, %v4036
    %v4090 = vadd.f32 %v3349, %v4039
    %v4091 = vld [vmem:[%s2] sm:$0x1]
    %v4093 = vperm.slane %v4091, 0
    %v4095 = vadd.f32 %v4042, %v4093
    %v4096 = vadd.f32 %v4043, %v4093
    %v4097 = vadd.f32 %v4044, %v4093
    %v4098 = vadd.f32 %v4045, %v4093
    %v4099 = vadd.f32 %v4046, %v4093
    %v4100 = vadd.f32 %v4047, %v4093
    %v4101 = vadd.f32 %v4048, %v4093
    %v4102 = vadd.f32 %v4049, %v4093
    %v4103 = vadd.f32 %v4050, %v4093
    %v4104 = vadd.f32 %v4051, %v4093
    %v4105 = vadd.f32 %v4052, %v4093
    %v4106 = vadd.f32 %v4053, %v4093
    %v4107 = vadd.f32 %v4054, %v4093
    %v4108 = vadd.f32 %v4055, %v4093
    %v4109 = vadd.f32 %v4056, %v4093
    %v4110 = vadd.f32 %v4057, %v4093
    %v4111 = vadd.f32 %v4058, %v4093
    %v4112 = vadd.f32 %v4059, %v4093
    %v4113 = vadd.f32 %v4060, %v4093
    %v4114 = vadd.f32 %v4061, %v4093
    %v4115 = vadd.f32 %v4062, %v4093
    %v4116 = vadd.f32 %v4063, %v4093
    %v4117 = vadd.f32 %v4064, %v4093
    %v4118 = vadd.f32 %v4065, %v4093
    %v4119 = vadd.f32 %v4066, %v4093
    %v4120 = vadd.f32 %v4067, %v4093
    %v4121 = vadd.f32 %v4068, %v4093
    %v4122 = vadd.f32 %v4069, %v4093
    %v4123 = vadd.f32 %v4070, %v4093
    %v4124 = vadd.f32 %v4071, %v4093
    %v4125 = vadd.f32 %v4072, %v4093
    %v4126 = vadd.f32 %v4073, %v4093
    %v4127 = vadd.f32 %v4074, %v4093
    %v4128 = vadd.f32 %v4075, %v4093
    %v4129 = vadd.f32 %v4076, %v4093
    %v4130 = vadd.f32 %v4077, %v4093
    %v4131 = vadd.f32 %v4078, %v4093
    %v4132 = vadd.f32 %v4079, %v4093
    %v4133 = vadd.f32 %v4080, %v4093
    %v4134 = vadd.f32 %v4081, %v4093
    %v4135 = vadd.f32 %v4082, %v4093
    %v4136 = vadd.f32 %v4083, %v4093
    %v4137 = vadd.f32 %v4084, %v4093
    %v4138 = vadd.f32 %v4085, %v4093
    %v4139 = vadd.f32 %v4086, %v4093
    %v4140 = vadd.f32 %v4087, %v4093
    %v4141 = vadd.f32 %v4088, %v4093
    %v4142 = vadd.f32 %v4089, %v4093
    %v4143 = vadd.f32 %v4090, %v4093
    %v4144 = vpack.c.bf16 %v4095, %v4095
    %v4145 = vpack.c.bf16 %v4096, %v4096
    %v4146 = vpack.c.bf16 %v4097, %v4097
    %v4147 = vpack.c.bf16 %v4098, %v4098
    %v4148 = vpack.c.bf16 %v4099, %v4099
    %v4149 = vpack.c.bf16 %v4100, %v4100
    %v4150 = vpack.c.bf16 %v4101, %v4101
    %v4151 = vpack.c.bf16 %v4102, %v4102
    %v4152 = vpack.c.bf16 %v4103, %v4103
    %v4153 = vpack.c.bf16 %v4104, %v4104
    %v4154 = vpack.c.bf16 %v4105, %v4105
    %v4155 = vpack.c.bf16 %v4106, %v4106
    %v4156 = vpack.c.bf16 %v4107, %v4107
    %v4157 = vpack.c.bf16 %v4108, %v4108
    %v4158 = vpack.c.bf16 %v4109, %v4109
    %v4159 = vpack.c.bf16 %v4110, %v4110
    %v4160 = vpack.c.bf16 %v4111, %v4111
    %v4161 = vpack.c.bf16 %v4112, %v4112
    %v4162 = vpack.c.bf16 %v4113, %v4113
    %v4163 = vpack.c.bf16 %v4114, %v4114
    %v4164 = vpack.c.bf16 %v4115, %v4115
    %v4165 = vpack.c.bf16 %v4116, %v4116
    %v4166 = vpack.c.bf16 %v4117, %v4117
    %v4167 = vpack.c.bf16 %v4118, %v4118
    %v4168 = vpack.c.bf16 %v4119, %v4119
    %v4169 = vpack.c.bf16 %v4120, %v4120
    %v4170 = vpack.c.bf16 %v4121, %v4121
    %v4171 = vpack.c.bf16 %v4122, %v4122
    %v4172 = vpack.c.bf16 %v4123, %v4123
    %v4173 = vpack.c.bf16 %v4124, %v4124
    %v4174 = vpack.c.bf16 %v4125, %v4125
    %v4175 = vpack.c.bf16 %v4126, %v4126
    %v4176 = vpack.c.bf16 %v4127, %v4127
    %v4177 = vpack.c.bf16 %v4128, %v4128
    %v4178 = vpack.c.bf16 %v4129, %v4129
    %v4179 = vpack.c.bf16 %v4130, %v4130
    %v4180 = vpack.c.bf16 %v4131, %v4131
    %v4181 = vpack.c.bf16 %v4132, %v4132
    %v4182 = vpack.c.bf16 %v4133, %v4133
    %v4183 = vpack.c.bf16 %v4134, %v4134
    %v4184 = vpack.c.bf16 %v4135, %v4135
    %v4185 = vpack.c.bf16 %v4136, %v4136
    %v4186 = vpack.c.bf16 %v4137, %v4137
    %v4187 = vpack.c.bf16 %v4138, %v4138
    %v4188 = vpack.c.bf16 %v4139, %v4139
    %v4189 = vpack.c.bf16 %v4140, %v4140
    %v4190 = vpack.c.bf16 %v4141, %v4141
    %v4191 = vpack.c.bf16 %v4142, %v4142
    %v4192 = vpack.c.bf16 %v4143, %v4143
    %v4242 = vrot.slane %v4144, 3
    %v4243 = vrot.slane %v4145, 3
    %v4244 = vrot.slane %v4146, 3
    %v4245 = vrot.slane %v4147, 3
    %v4246 = vrot.slane %v4148, 3
    %v4247 = vrot.slane %v4149, 3
    %v4248 = vrot.slane %v4150, 3
    %v4249 = vrot.slane %v4151, 3
    %v4250 = vrot.slane %v4152, 3
    %v4251 = vrot.slane %v4153, 3
    %v4252 = vrot.slane %v4154, 3
    %v4253 = vrot.slane %v4155, 3
    %v4254 = vrot.slane %v4156, 3
    %v4255 = vrot.slane %v4157, 3
    %v4256 = vrot.slane %v4158, 3
    %v4257 = vrot.slane %v4159, 3
    %v4258 = vrot.slane %v4160, 3
    %v4259 = vrot.slane %v4161, 3
    %v4260 = vrot.slane %v4162, 3
    %v4261 = vrot.slane %v4163, 3
    %v4262 = vrot.slane %v4164, 3
    %v4263 = vrot.slane %v4165, 3
    %v4264 = vrot.slane %v4166, 3
    %v4265 = vrot.slane %v4167, 3
    %v4266 = vrot.slane %v4168, 3
    %v4267 = vrot.slane %v4169, 3
    %v4268 = vrot.slane %v4170, 3
    %v4269 = vrot.slane %v4171, 3
    %v4270 = vrot.slane %v4172, 3
    %v4271 = vrot.slane %v4173, 3
    %v4272 = vrot.slane %v4174, 3
    %v4273 = vrot.slane %v4175, 3
    %v4274 = vrot.slane %v4176, 3
    %v4275 = vrot.slane %v4177, 3
    %v4276 = vrot.slane %v4178, 3
    %v4277 = vrot.slane %v4179, 3
    %v4278 = vrot.slane %v4180, 3
    %v4279 = vrot.slane %v4181, 3
    %v4280 = vrot.slane %v4182, 3
    %v4281 = vrot.slane %v4183, 3
    %v4282 = vrot.slane %v4184, 3
    %v4283 = vrot.slane %v4185, 3
    %v4284 = vrot.slane %v4186, 3
    %v4285 = vrot.slane %v4187, 3
    %v4286 = vrot.slane %v4188, 3
    %v4287 = vrot.slane %v4189, 3
    %v4288 = vrot.slane %v4190, 3
    %v4289 = vrot.slane %v4191, 3
    %v4290 = vrot.slane %v4192, 3
    %v4293 = vsel %vm1495, %v4144, %v4242
    %vm4294 = vcmask 1041409
    %v4295 = vsel %vm4294, %v4144, %v4242
    %v4297 = vrot.slane %v4295, 1
    %vm4298 = vcmask 1042434
    %v4299 = vsel %vm4298, %v4144, %v4242
    %v4301 = vrot.slane %v4299, 2
    %vm4302 = vcmask 1043459
    %v4303 = vsel %vm4302, %v4144, %v4242
    %v4305 = vrot.slane %v4303, 3
    %v4308 = vsel %vm1495, %v4145, %v4243
    %v4309 = vsel %vm4294, %v4145, %v4243
    %v4311 = vrot.slane %v4309, 1
    %v4312 = vsel %vm4298, %v4145, %v4243
    %v4314 = vrot.slane %v4312, 2
    %v4315 = vsel %vm4302, %v4145, %v4243
    %v4317 = vrot.slane %v4315, 3
    %v4320 = vsel %vm1495, %v4146, %v4244
    %v4321 = vsel %vm4294, %v4146, %v4244
    %v4323 = vrot.slane %v4321, 1
    %v4324 = vsel %vm4298, %v4146, %v4244
    %v4326 = vrot.slane %v4324, 2
    %v4327 = vsel %vm4302, %v4146, %v4244
    %v4329 = vrot.slane %v4327, 3
    %v4332 = vsel %vm1495, %v4147, %v4245
    %v4333 = vsel %vm4294, %v4147, %v4245
    %v4335 = vrot.slane %v4333, 1
    %v4336 = vsel %vm4298, %v4147, %v4245
    %v4338 = vrot.slane %v4336, 2
    %v4339 = vsel %vm4302, %v4147, %v4245
    %v4341 = vrot.slane %v4339, 3
    %v4344 = vsel %vm1495, %v4148, %v4246
    %v4345 = vsel %vm4294, %v4148, %v4246
    %v4347 = vrot.slane %v4345, 1
    %v4348 = vsel %vm4298, %v4148, %v4246
    %v4350 = vrot.slane %v4348, 2
    %v4351 = vsel %vm4302, %v4148, %v4246
    %v4353 = vrot.slane %v4351, 3
    %v4356 = vsel %vm1495, %v4149, %v4247
    %v4357 = vsel %vm4294, %v4149, %v4247
    %v4359 = vrot.slane %v4357, 1
    %v4360 = vsel %vm4298, %v4149, %v4247
    %v4362 = vrot.slane %v4360, 2
    %v4363 = vsel %vm4302, %v4149, %v4247
    %v4365 = vrot.slane %v4363, 3
    %v4368 = vsel %vm1495, %v4150, %v4248
    %v4369 = vsel %vm4294, %v4150, %v4248
    %v4371 = vrot.slane %v4369, 1
    %v4372 = vsel %vm4298, %v4150, %v4248
    %v4374 = vrot.slane %v4372, 2
    %v4375 = vsel %vm4302, %v4150, %v4248
    %v4377 = vrot.slane %v4375, 3
    %v4380 = vsel %vm1495, %v4151, %v4249
    %v4381 = vsel %vm4294, %v4151, %v4249
    %v4383 = vrot.slane %v4381, 1
    %v4384 = vsel %vm4298, %v4151, %v4249
    %v4386 = vrot.slane %v4384, 2
    %v4387 = vsel %vm4302, %v4151, %v4249
    %v4389 = vrot.slane %v4387, 3
    %v4392 = vsel %vm1495, %v4152, %v4250
    %v4393 = vsel %vm4294, %v4152, %v4250
    %v4395 = vrot.slane %v4393, 1
    %v4396 = vsel %vm4298, %v4152, %v4250
    %v4398 = vrot.slane %v4396, 2
    %v4399 = vsel %vm4302, %v4152, %v4250
    %v4401 = vrot.slane %v4399, 3
    %v4404 = vsel %vm1495, %v4153, %v4251
    %v4405 = vsel %vm4294, %v4153, %v4251
    %v4407 = vrot.slane %v4405, 1
    %v4408 = vsel %vm4298, %v4153, %v4251
    %v4410 = vrot.slane %v4408, 2
    %v4411 = vsel %vm4302, %v4153, %v4251
    %v4413 = vrot.slane %v4411, 3
    %v4416 = vsel %vm1495, %v4154, %v4252
    %v4417 = vsel %vm4294, %v4154, %v4252
    %v4419 = vrot.slane %v4417, 1
    %v4420 = vsel %vm4298, %v4154, %v4252
    %v4422 = vrot.slane %v4420, 2
    %v4423 = vsel %vm4302, %v4154, %v4252
    %v4425 = vrot.slane %v4423, 3
    %v4428 = vsel %vm1495, %v4155, %v4253
    %v4429 = vsel %vm4294, %v4155, %v4253
    %v4431 = vrot.slane %v4429, 1
    %v4432 = vsel %vm4298, %v4155, %v4253
    %v4434 = vrot.slane %v4432, 2
    %v4435 = vsel %vm4302, %v4155, %v4253
    %v4437 = vrot.slane %v4435, 3
    %v4440 = vsel %vm1495, %v4156, %v4254
    %v4441 = vsel %vm4294, %v4156, %v4254
    %v4443 = vrot.slane %v4441, 1
    %v4444 = vsel %vm4298, %v4156, %v4254
    %v4446 = vrot.slane %v4444, 2
    %v4447 = vsel %vm4302, %v4156, %v4254
    %v4449 = vrot.slane %v4447, 3
    %v4452 = vsel %vm1495, %v4157, %v4255
    %v4453 = vsel %vm4294, %v4157, %v4255
    %v4455 = vrot.slane %v4453, 1
    %v4456 = vsel %vm4298, %v4157, %v4255
    %v4458 = vrot.slane %v4456, 2
    %v4459 = vsel %vm4302, %v4157, %v4255
    %v4461 = vrot.slane %v4459, 3
    %v4464 = vsel %vm1495, %v4158, %v4256
    %v4465 = vsel %vm4294, %v4158, %v4256
    %v4467 = vrot.slane %v4465, 1
    %v4468 = vsel %vm4298, %v4158, %v4256
    %v4470 = vrot.slane %v4468, 2
    %v4471 = vsel %vm4302, %v4158, %v4256
    %v4473 = vrot.slane %v4471, 3
    %v4476 = vsel %vm1495, %v4159, %v4257
    %v4477 = vsel %vm4294, %v4159, %v4257
    %v4479 = vrot.slane %v4477, 1
    %v4480 = vsel %vm4298, %v4159, %v4257
    %v4482 = vrot.slane %v4480, 2
    %v4483 = vsel %vm4302, %v4159, %v4257
    %v4485 = vrot.slane %v4483, 3
    %v4488 = vsel %vm1495, %v4160, %v4258
    %v4489 = vsel %vm4294, %v4160, %v4258
    %v4491 = vrot.slane %v4489, 1
    %v4492 = vsel %vm4298, %v4160, %v4258
    %v4494 = vrot.slane %v4492, 2
    %v4495 = vsel %vm4302, %v4160, %v4258
    %v4497 = vrot.slane %v4495, 3
    %v4500 = vsel %vm1495, %v4161, %v4259
    %v4501 = vsel %vm4294, %v4161, %v4259
    %v4503 = vrot.slane %v4501, 1
    %v4504 = vsel %vm4298, %v4161, %v4259
    %v4506 = vrot.slane %v4504, 2
    %v4507 = vsel %vm4302, %v4161, %v4259
    %v4509 = vrot.slane %v4507, 3
    %v4512 = vsel %vm1495, %v4162, %v4260
    %v4513 = vsel %vm4294, %v4162, %v4260
    %v4515 = vrot.slane %v4513, 1
    %v4516 = vsel %vm4298, %v4162, %v4260
    %v4518 = vrot.slane %v4516, 2
    %v4519 = vsel %vm4302, %v4162, %v4260
    %v4521 = vrot.slane %v4519, 3
    %v4524 = vsel %vm1495, %v4163, %v4261
    %v4525 = vsel %vm4294, %v4163, %v4261
    %v4527 = vrot.slane %v4525, 1
    %v4528 = vsel %vm4298, %v4163, %v4261
    %v4530 = vrot.slane %v4528, 2
    %v4531 = vsel %vm4302, %v4163, %v4261
    %v4533 = vrot.slane %v4531, 3
    %v4536 = vsel %vm1495, %v4164, %v4262
    %v4537 = vsel %vm4294, %v4164, %v4262
    %v4539 = vrot.slane %v4537, 1
    %v4540 = vsel %vm4298, %v4164, %v4262
    %v4542 = vrot.slane %v4540, 2
    %v4543 = vsel %vm4302, %v4164, %v4262
    %v4545 = vrot.slane %v4543, 3
    %v4548 = vsel %vm1495, %v4165, %v4263
    %v4549 = vsel %vm4294, %v4165, %v4263
    %v4551 = vrot.slane %v4549, 1
    %v4552 = vsel %vm4298, %v4165, %v4263
    %v4554 = vrot.slane %v4552, 2
    %v4555 = vsel %vm4302, %v4165, %v4263
    %v4557 = vrot.slane %v4555, 3
    %v4560 = vsel %vm1495, %v4166, %v4264
    %v4561 = vsel %vm4294, %v4166, %v4264
    %v4563 = vrot.slane %v4561, 1
    %v4564 = vsel %vm4298, %v4166, %v4264
    %v4566 = vrot.slane %v4564, 2
    %v4567 = vsel %vm4302, %v4166, %v4264
    %v4569 = vrot.slane %v4567, 3
    %v4572 = vsel %vm1495, %v4167, %v4265
    %v4573 = vsel %vm4294, %v4167, %v4265
    %v4575 = vrot.slane %v4573, 1
    %v4576 = vsel %vm4298, %v4167, %v4265
    %v4578 = vrot.slane %v4576, 2
    %v4579 = vsel %vm4302, %v4167, %v4265
    %v4581 = vrot.slane %v4579, 3
    %v4584 = vsel %vm1495, %v4168, %v4266
    %v4585 = vsel %vm4294, %v4168, %v4266
    %v4587 = vrot.slane %v4585, 1
    %v4588 = vsel %vm4298, %v4168, %v4266
    %v4590 = vrot.slane %v4588, 2
    %v4591 = vsel %vm4302, %v4168, %v4266
    %v4593 = vrot.slane %v4591, 3
    %v4596 = vsel %vm1495, %v4169, %v4267
    %v4597 = vsel %vm4294, %v4169, %v4267
    %v4599 = vrot.slane %v4597, 1
    %v4600 = vsel %vm4298, %v4169, %v4267
    %v4602 = vrot.slane %v4600, 2
    %v4603 = vsel %vm4302, %v4169, %v4267
    %v4605 = vrot.slane %v4603, 3
    %v4608 = vsel %vm1495, %v4170, %v4268
    %v4609 = vsel %vm4294, %v4170, %v4268
    %v4611 = vrot.slane %v4609, 1
    %v4612 = vsel %vm4298, %v4170, %v4268
    %v4614 = vrot.slane %v4612, 2
    %v4615 = vsel %vm4302, %v4170, %v4268
    %v4617 = vrot.slane %v4615, 3
    %v4620 = vsel %vm1495, %v4171, %v4269
    %v4621 = vsel %vm4294, %v4171, %v4269
    %v4623 = vrot.slane %v4621, 1
    %v4624 = vsel %vm4298, %v4171, %v4269
    %v4626 = vrot.slane %v4624, 2
    %v4627 = vsel %vm4302, %v4171, %v4269
    %v4629 = vrot.slane %v4627, 3
    %v4632 = vsel %vm1495, %v4172, %v4270
    %v4633 = vsel %vm4294, %v4172, %v4270
    %v4635 = vrot.slane %v4633, 1
    %v4636 = vsel %vm4298, %v4172, %v4270
    %v4638 = vrot.slane %v4636, 2
    %v4639 = vsel %vm4302, %v4172, %v4270
    %v4641 = vrot.slane %v4639, 3
    %v4644 = vsel %vm1495, %v4173, %v4271
    %v4645 = vsel %vm4294, %v4173, %v4271
    %v4647 = vrot.slane %v4645, 1
    %v4648 = vsel %vm4298, %v4173, %v4271
    %v4650 = vrot.slane %v4648, 2
    %v4651 = vsel %vm4302, %v4173, %v4271
    %v4653 = vrot.slane %v4651, 3
    %v4656 = vsel %vm1495, %v4174, %v4272
    %v4657 = vsel %vm4294, %v4174, %v4272
    %v4659 = vrot.slane %v4657, 1
    %v4660 = vsel %vm4298, %v4174, %v4272
    %v4662 = vrot.slane %v4660, 2
    %v4663 = vsel %vm4302, %v4174, %v4272
    %v4665 = vrot.slane %v4663, 3
    %v4668 = vsel %vm1495, %v4175, %v4273
    %v4669 = vsel %vm4294, %v4175, %v4273
    %v4671 = vrot.slane %v4669, 1
    %v4672 = vsel %vm4298, %v4175, %v4273
    %v4674 = vrot.slane %v4672, 2
    %v4675 = vsel %vm4302, %v4175, %v4273
    %v4677 = vrot.slane %v4675, 3
    %v4680 = vsel %vm1495, %v4176, %v4274
    %v4681 = vsel %vm4294, %v4176, %v4274
    %v4683 = vrot.slane %v4681, 1
    %v4684 = vsel %vm4298, %v4176, %v4274
    %v4686 = vrot.slane %v4684, 2
    %v4687 = vsel %vm4302, %v4176, %v4274
    %v4689 = vrot.slane %v4687, 3
    %v4692 = vsel %vm1495, %v4177, %v4275
    %v4693 = vsel %vm4294, %v4177, %v4275
    %v4695 = vrot.slane %v4693, 1
    %v4696 = vsel %vm4298, %v4177, %v4275
    %v4698 = vrot.slane %v4696, 2
    %v4699 = vsel %vm4302, %v4177, %v4275
    %v4701 = vrot.slane %v4699, 3
    %v4704 = vsel %vm1495, %v4178, %v4276
    %v4705 = vsel %vm4294, %v4178, %v4276
    %v4707 = vrot.slane %v4705, 1
    %v4708 = vsel %vm4298, %v4178, %v4276
    %v4710 = vrot.slane %v4708, 2
    %v4711 = vsel %vm4302, %v4178, %v4276
    %v4713 = vrot.slane %v4711, 3
    %v4716 = vsel %vm1495, %v4179, %v4277
    %v4717 = vsel %vm4294, %v4179, %v4277
    %v4719 = vrot.slane %v4717, 1
    %v4720 = vsel %vm4298, %v4179, %v4277
    %v4722 = vrot.slane %v4720, 2
    %v4723 = vsel %vm4302, %v4179, %v4277
    %v4725 = vrot.slane %v4723, 3
    %v4728 = vsel %vm1495, %v4180, %v4278
    %v4729 = vsel %vm4294, %v4180, %v4278
    %v4731 = vrot.slane %v4729, 1
    %v4732 = vsel %vm4298, %v4180, %v4278
    %v4734 = vrot.slane %v4732, 2
    %v4735 = vsel %vm4302, %v4180, %v4278
    %v4737 = vrot.slane %v4735, 3
    %v4740 = vsel %vm1495, %v4181, %v4279
    %v4741 = vsel %vm4294, %v4181, %v4279
    %v4743 = vrot.slane %v4741, 1
    %v4744 = vsel %vm4298, %v4181, %v4279
    %v4746 = vrot.slane %v4744, 2
    %v4747 = vsel %vm4302, %v4181, %v4279
    %v4749 = vrot.slane %v4747, 3
    %v4752 = vsel %vm1495, %v4182, %v4280
    %v4753 = vsel %vm4294, %v4182, %v4280
    %v4755 = vrot.slane %v4753, 1
    %v4756 = vsel %vm4298, %v4182, %v4280
    %v4758 = vrot.slane %v4756, 2
    %v4759 = vsel %vm4302, %v4182, %v4280
    %v4761 = vrot.slane %v4759, 3
    %v4764 = vsel %vm1495, %v4183, %v4281
    %v4765 = vsel %vm4294, %v4183, %v4281
    %v4767 = vrot.slane %v4765, 1
    %v4768 = vsel %vm4298, %v4183, %v4281
    %v4770 = vrot.slane %v4768, 2
    %v4771 = vsel %vm4302, %v4183, %v4281
    %v4773 = vrot.slane %v4771, 3
    %v4776 = vsel %vm1495, %v4184, %v4282
    %v4777 = vsel %vm4294, %v4184, %v4282
    %v4779 = vrot.slane %v4777, 1
    %v4780 = vsel %vm4298, %v4184, %v4282
    %v4782 = vrot.slane %v4780, 2
    %v4783 = vsel %vm4302, %v4184, %v4282
    %v4785 = vrot.slane %v4783, 3
    %v4788 = vsel %vm1495, %v4185, %v4283
    %v4789 = vsel %vm4294, %v4185, %v4283
    %v4791 = vrot.slane %v4789, 1
    %v4792 = vsel %vm4298, %v4185, %v4283
    %v4794 = vrot.slane %v4792, 2
    %v4795 = vsel %vm4302, %v4185, %v4283
    %v4797 = vrot.slane %v4795, 3
    %v4800 = vsel %vm1495, %v4186, %v4284
    %v4801 = vsel %vm4294, %v4186, %v4284
    %v4803 = vrot.slane %v4801, 1
    %v4804 = vsel %vm4298, %v4186, %v4284
    %v4806 = vrot.slane %v4804, 2
    %v4807 = vsel %vm4302, %v4186, %v4284
    %v4809 = vrot.slane %v4807, 3
    %v4812 = vsel %vm1495, %v4187, %v4285
    %v4813 = vsel %vm4294, %v4187, %v4285
    %v4815 = vrot.slane %v4813, 1
    %v4816 = vsel %vm4298, %v4187, %v4285
    %v4818 = vrot.slane %v4816, 2
    %v4819 = vsel %vm4302, %v4187, %v4285
    %v4821 = vrot.slane %v4819, 3
    %v4824 = vsel %vm1495, %v4188, %v4286
    %v4825 = vsel %vm4294, %v4188, %v4286
    %v4827 = vrot.slane %v4825, 1
    %v4828 = vsel %vm4298, %v4188, %v4286
    %v4830 = vrot.slane %v4828, 2
    %v4831 = vsel %vm4302, %v4188, %v4286
    %v4833 = vrot.slane %v4831, 3
    %v4836 = vsel %vm1495, %v4189, %v4287
    %v4837 = vsel %vm4294, %v4189, %v4287
    %v4839 = vrot.slane %v4837, 1
    %v4840 = vsel %vm4298, %v4189, %v4287
    %v4842 = vrot.slane %v4840, 2
    %v4843 = vsel %vm4302, %v4189, %v4287
    %v4845 = vrot.slane %v4843, 3
    %v4848 = vsel %vm1495, %v4190, %v4288
    %v4849 = vsel %vm4294, %v4190, %v4288
    %v4851 = vrot.slane %v4849, 1
    %v4852 = vsel %vm4298, %v4190, %v4288
    %v4854 = vrot.slane %v4852, 2
    %v4855 = vsel %vm4302, %v4190, %v4288
    %v4857 = vrot.slane %v4855, 3
    %v4860 = vsel %vm1495, %v4191, %v4289
    %v4861 = vsel %vm4294, %v4191, %v4289
    %v4863 = vrot.slane %v4861, 1
    %v4864 = vsel %vm4298, %v4191, %v4289
    %v4866 = vrot.slane %v4864, 2
    %v4867 = vsel %vm4302, %v4191, %v4289
    %v4869 = vrot.slane %v4867, 3
    %v4872 = vsel %vm1495, %v4192, %v4290
    %v4873 = vsel %vm4294, %v4192, %v4290
    %v4875 = vrot.slane %v4873, 1
    %v4876 = vsel %vm4298, %v4192, %v4290
    %v4878 = vrot.slane %v4876, 2
    %v4879 = vsel %vm4302, %v4192, %v4290
    %v4881 = vrot.slane %v4879, 3
    %vm5078 = vcmask 516096
    %5079 = vst.msk [vmem:[%s12] sm:$0x1] %vm5078, %v4293
    %5080 = vst.msk [vmem:[%s12 + $0x1] sm:$0x1] %vm5078, %v4297
    %5081 = vst.msk [vmem:[%s12 + $0x2] sm:$0x1] %vm5078, %v4301
    %5082 = vst.msk [vmem:[%s12 + $0x3] sm:$0x1] %vm5078, %v4305
    %5083 = vst.msk [vmem:[%s12 + $0x4] sm:$0x1] %vm5078, %v4308
    %5084 = vst.msk [vmem:[%s12 + $0x5] sm:$0x1] %vm5078, %v4311
    %5085 = vst.msk [vmem:[%s12 + $0x6] sm:$0x1] %vm5078, %v4314
    %5086 = vst.msk [vmem:[%s12 + $0x7] sm:$0x1] %vm5078, %v4317
    %5087 = vst.msk [vmem:[%s12 + $0x8] sm:$0x1] %vm5078, %v4320
    %5088 = vst.msk [vmem:[%s12 + $0x9] sm:$0x1] %vm5078, %v4323
    %5089 = vst.msk [vmem:[%s12 + $0xa] sm:$0x1] %vm5078, %v4326
    %5090 = vst.msk [vmem:[%s12 + $0xb] sm:$0x1] %vm5078, %v4329
    %5091 = vst.msk [vmem:[%s12 + $0xc] sm:$0x1] %vm5078, %v4332
    %5092 = vst.msk [vmem:[%s12 + $0xd] sm:$0x1] %vm5078, %v4335
    %5093 = vst.msk [vmem:[%s12 + $0xe] sm:$0x1] %vm5078, %v4338
    %5094 = vst.msk [vmem:[%s12 + $0xf] sm:$0x1] %vm5078, %v4341
    %5095 = vst.msk [vmem:[%s12 + $0x10] sm:$0x1] %vm5078, %v4344
    %5096 = vst.msk [vmem:[%s12 + $0x11] sm:$0x1] %vm5078, %v4347
    %5097 = vst.msk [vmem:[%s12 + $0x12] sm:$0x1] %vm5078, %v4350
    %5098 = vst.msk [vmem:[%s12 + $0x13] sm:$0x1] %vm5078, %v4353
    %5099 = vst.msk [vmem:[%s12 + $0x14] sm:$0x1] %vm5078, %v4356
    %5100 = vst.msk [vmem:[%s12 + $0x15] sm:$0x1] %vm5078, %v4359
    %5101 = vst.msk [vmem:[%s12 + $0x16] sm:$0x1] %vm5078, %v4362
    %5102 = vst.msk [vmem:[%s12 + $0x17] sm:$0x1] %vm5078, %v4365
    %5103 = vst.msk [vmem:[%s12 + $0x18] sm:$0x1] %vm5078, %v4368
    %5104 = vst.msk [vmem:[%s12 + $0x19] sm:$0x1] %vm5078, %v4371
    %5105 = vst.msk [vmem:[%s12 + $0x1a] sm:$0x1] %vm5078, %v4374
    %5106 = vst.msk [vmem:[%s12 + $0x1b] sm:$0x1] %vm5078, %v4377
    %5107 = vst.msk [vmem:[%s12 + $0x1c] sm:$0x1] %vm5078, %v4380
    %5108 = vst.msk [vmem:[%s12 + $0x1d] sm:$0x1] %vm5078, %v4383
    %5109 = vst.msk [vmem:[%s12 + $0x1e] sm:$0x1] %vm5078, %v4386
    %5110 = vst.msk [vmem:[%s12 + $0x1f] sm:$0x1] %vm5078, %v4389
    %5111 = vst.msk [vmem:[%s12 + $0x20] sm:$0x1] %vm5078, %v4392
    %5112 = vst.msk [vmem:[%s12 + $0x21] sm:$0x1] %vm5078, %v4395
    %5113 = vst.msk [vmem:[%s12 + $0x22] sm:$0x1] %vm5078, %v4398
    %5114 = vst.msk [vmem:[%s12 + $0x23] sm:$0x1] %vm5078, %v4401
    %5115 = vst.msk [vmem:[%s12 + $0x24] sm:$0x1] %vm5078, %v4404
    %5116 = vst.msk [vmem:[%s12 + $0x25] sm:$0x1] %vm5078, %v4407
    %5117 = vst.msk [vmem:[%s12 + $0x26] sm:$0x1] %vm5078, %v4410
    %5118 = vst.msk [vmem:[%s12 + $0x27] sm:$0x1] %vm5078, %v4413
    %5119 = vst.msk [vmem:[%s12 + $0x28] sm:$0x1] %vm5078, %v4416
    %5120 = vst.msk [vmem:[%s12 + $0x29] sm:$0x1] %vm5078, %v4419
    %5121 = vst.msk [vmem:[%s12 + $0x2a] sm:$0x1] %vm5078, %v4422
    %5122 = vst.msk [vmem:[%s12 + $0x2b] sm:$0x1] %vm5078, %v4425
    %5123 = vst.msk [vmem:[%s12 + $0x2c] sm:$0x1] %vm5078, %v4428
    %5124 = vst.msk [vmem:[%s12 + $0x2d] sm:$0x1] %vm5078, %v4431
    %5125 = vst.msk [vmem:[%s12 + $0x2e] sm:$0x1] %vm5078, %v4434
    %5126 = vst.msk [vmem:[%s12 + $0x2f] sm:$0x1] %vm5078, %v4437
    %5127 = vst.msk [vmem:[%s12 + $0x30] sm:$0x1] %vm5078, %v4440
    %5128 = vst.msk [vmem:[%s12 + $0x31] sm:$0x1] %vm5078, %v4443
    %5129 = vst.msk [vmem:[%s12 + $0x32] sm:$0x1] %vm5078, %v4446
    %5130 = vst.msk [vmem:[%s12 + $0x33] sm:$0x1] %vm5078, %v4449
    %5131 = vst.msk [vmem:[%s12 + $0x34] sm:$0x1] %vm5078, %v4452
    %5132 = vst.msk [vmem:[%s12 + $0x35] sm:$0x1] %vm5078, %v4455
    %5133 = vst.msk [vmem:[%s12 + $0x36] sm:$0x1] %vm5078, %v4458
    %5134 = vst.msk [vmem:[%s12 + $0x37] sm:$0x1] %vm5078, %v4461
    %5135 = vst.msk [vmem:[%s12 + $0x38] sm:$0x1] %vm5078, %v4464
    %5136 = vst.msk [vmem:[%s12 + $0x39] sm:$0x1] %vm5078, %v4467
    %5137 = vst.msk [vmem:[%s12 + $0x3a] sm:$0x1] %vm5078, %v4470
    %5138 = vst.msk [vmem:[%s12 + $0x3b] sm:$0x1] %vm5078, %v4473
    %5139 = vst.msk [vmem:[%s12 + $0x3c] sm:$0x1] %vm5078, %v4476
    %5140 = vst.msk [vmem:[%s12 + $0x3d] sm:$0x1] %vm5078, %v4479
    %5141 = vst.msk [vmem:[%s12 + $0x3e] sm:$0x1] %vm5078, %v4482
    %5142 = vst.msk [vmem:[%s12 + $0x3f] sm:$0x1] %vm5078, %v4485
    %5143 = vst.msk [vmem:[%s12 + $0x40] sm:$0x1] %vm5078, %v4488
    %5144 = vst.msk [vmem:[%s12 + $0x41] sm:$0x1] %vm5078, %v4491
    %5145 = vst.msk [vmem:[%s12 + $0x42] sm:$0x1] %vm5078, %v4494
    %5146 = vst.msk [vmem:[%s12 + $0x43] sm:$0x1] %vm5078, %v4497
    %5147 = vst.msk [vmem:[%s12 + $0x44] sm:$0x1] %vm5078, %v4500
    %5148 = vst.msk [vmem:[%s12 + $0x45] sm:$0x1] %vm5078, %v4503
    %5149 = vst.msk [vmem:[%s12 + $0x46] sm:$0x1] %vm5078, %v4506
    %5150 = vst.msk [vmem:[%s12 + $0x47] sm:$0x1] %vm5078, %v4509
    %5151 = vst.msk [vmem:[%s12 + $0x48] sm:$0x1] %vm5078, %v4512
    %5152 = vst.msk [vmem:[%s12 + $0x49] sm:$0x1] %vm5078, %v4515
    %5153 = vst.msk [vmem:[%s12 + $0x4a] sm:$0x1] %vm5078, %v4518
    %5154 = vst.msk [vmem:[%s12 + $0x4b] sm:$0x1] %vm5078, %v4521
    %5155 = vst.msk [vmem:[%s12 + $0x4c] sm:$0x1] %vm5078, %v4524
    %5156 = vst.msk [vmem:[%s12 + $0x4d] sm:$0x1] %vm5078, %v4527
    %5157 = vst.msk [vmem:[%s12 + $0x4e] sm:$0x1] %vm5078, %v4530
    %5158 = vst.msk [vmem:[%s12 + $0x4f] sm:$0x1] %vm5078, %v4533
    %5159 = vst.msk [vmem:[%s12 + $0x50] sm:$0x1] %vm5078, %v4536
    %5160 = vst.msk [vmem:[%s12 + $0x51] sm:$0x1] %vm5078, %v4539
    %5161 = vst.msk [vmem:[%s12 + $0x52] sm:$0x1] %vm5078, %v4542
    %5162 = vst.msk [vmem:[%s12 + $0x53] sm:$0x1] %vm5078, %v4545
    %5163 = vst.msk [vmem:[%s12 + $0x54] sm:$0x1] %vm5078, %v4548
    %5164 = vst.msk [vmem:[%s12 + $0x55] sm:$0x1] %vm5078, %v4551
    %5165 = vst.msk [vmem:[%s12 + $0x56] sm:$0x1] %vm5078, %v4554
    %5166 = vst.msk [vmem:[%s12 + $0x57] sm:$0x1] %vm5078, %v4557
    %5167 = vst.msk [vmem:[%s12 + $0x58] sm:$0x1] %vm5078, %v4560
    %5168 = vst.msk [vmem:[%s12 + $0x59] sm:$0x1] %vm5078, %v4563
    %5169 = vst.msk [vmem:[%s12 + $0x5a] sm:$0x1] %vm5078, %v4566
    %5170 = vst.msk [vmem:[%s12 + $0x5b] sm:$0x1] %vm5078, %v4569
    %5171 = vst.msk [vmem:[%s12 + $0x5c] sm:$0x1] %vm5078, %v4572
    %5172 = vst.msk [vmem:[%s12 + $0x5d] sm:$0x1] %vm5078, %v4575
    %5173 = vst.msk [vmem:[%s12 + $0x5e] sm:$0x1] %vm5078, %v4578
    %5174 = vst.msk [vmem:[%s12 + $0x5f] sm:$0x1] %vm5078, %v4581
    %5175 = vst.msk [vmem:[%s12 + $0x60] sm:$0x1] %vm5078, %v4584
    %5176 = vst.msk [vmem:[%s12 + $0x61] sm:$0x1] %vm5078, %v4587
    %5177 = vst.msk [vmem:[%s12 + $0x62] sm:$0x1] %vm5078, %v4590
    %5178 = vst.msk [vmem:[%s12 + $0x63] sm:$0x1] %vm5078, %v4593
    %5179 = vst.msk [vmem:[%s12 + $0x64] sm:$0x1] %vm5078, %v4596
    %5180 = vst.msk [vmem:[%s12 + $0x65] sm:$0x1] %vm5078, %v4599
    %5181 = vst.msk [vmem:[%s12 + $0x66] sm:$0x1] %vm5078, %v4602
    %5182 = vst.msk [vmem:[%s12 + $0x67] sm:$0x1] %vm5078, %v4605
    %5183 = vst.msk [vmem:[%s12 + $0x68] sm:$0x1] %vm5078, %v4608
    %5184 = vst.msk [vmem:[%s12 + $0x69] sm:$0x1] %vm5078, %v4611
    %5185 = vst.msk [vmem:[%s12 + $0x6a] sm:$0x1] %vm5078, %v4614
    %5186 = vst.msk [vmem:[%s12 + $0x6b] sm:$0x1] %vm5078, %v4617
    %5187 = vst.msk [vmem:[%s12 + $0x6c] sm:$0x1] %vm5078, %v4620
    %5188 = vst.msk [vmem:[%s12 + $0x6d] sm:$0x1] %vm5078, %v4623
    %5189 = vst.msk [vmem:[%s12 + $0x6e] sm:$0x1] %vm5078, %v4626
    %5190 = vst.msk [vmem:[%s12 + $0x6f] sm:$0x1] %vm5078, %v4629
    %5191 = vst.msk [vmem:[%s12 + $0x70] sm:$0x1] %vm5078, %v4632
    %5192 = vst.msk [vmem:[%s12 + $0x71] sm:$0x1] %vm5078, %v4635
    %5193 = vst.msk [vmem:[%s12 + $0x72] sm:$0x1] %vm5078, %v4638
    %5194 = vst.msk [vmem:[%s12 + $0x73] sm:$0x1] %vm5078, %v4641
    %5195 = vst.msk [vmem:[%s12 + $0x74] sm:$0x1] %vm5078, %v4644
    %5196 = vst.msk [vmem:[%s12 + $0x75] sm:$0x1] %vm5078, %v4647
    %5197 = vst.msk [vmem:[%s12 + $0x76] sm:$0x1] %vm5078, %v4650
    %5198 = vst.msk [vmem:[%s12 + $0x77] sm:$0x1] %vm5078, %v4653
    %5199 = vst.msk [vmem:[%s12 + $0x78] sm:$0x1] %vm5078, %v4656
    %5200 = vst.msk [vmem:[%s12 + $0x79] sm:$0x1] %vm5078, %v4659
    %5201 = vst.msk [vmem:[%s12 + $0x7a] sm:$0x1] %vm5078, %v4662
    %5202 = vst.msk [vmem:[%s12 + $0x7b] sm:$0x1] %vm5078, %v4665
    %5203 = vst.msk [vmem:[%s12 + $0x7c] sm:$0x1] %vm5078, %v4668
    %5204 = vst.msk [vmem:[%s12 + $0x7d] sm:$0x1] %vm5078, %v4671
    %5205 = vst.msk [vmem:[%s12 + $0x7e] sm:$0x1] %vm5078, %v4674
    %5206 = vst.msk [vmem:[%s12 + $0x7f] sm:$0x1] %vm5078, %v4677
    %5207 = vst.msk [vmem:[%s12 + $0x80] sm:$0x1] %vm5078, %v4680
    %5208 = vst.msk [vmem:[%s12 + $0x81] sm:$0x1] %vm5078, %v4683
    %5209 = vst.msk [vmem:[%s12 + $0x82] sm:$0x1] %vm5078, %v4686
    %5210 = vst.msk [vmem:[%s12 + $0x83] sm:$0x1] %vm5078, %v4689
    %5211 = vst.msk [vmem:[%s12 + $0x84] sm:$0x1] %vm5078, %v4692
    %5212 = vst.msk [vmem:[%s12 + $0x85] sm:$0x1] %vm5078, %v4695
    %5213 = vst.msk [vmem:[%s12 + $0x86] sm:$0x1] %vm5078, %v4698
    %5214 = vst.msk [vmem:[%s12 + $0x87] sm:$0x1] %vm5078, %v4701
    %5215 = vst.msk [vmem:[%s12 + $0x88] sm:$0x1] %vm5078, %v4704
    %5216 = vst.msk [vmem:[%s12 + $0x89] sm:$0x1] %vm5078, %v4707
    %5217 = vst.msk [vmem:[%s12 + $0x8a] sm:$0x1] %vm5078, %v4710
    %5218 = vst.msk [vmem:[%s12 + $0x8b] sm:$0x1] %vm5078, %v4713
    %5219 = vst.msk [vmem:[%s12 + $0x8c] sm:$0x1] %vm5078, %v4716
    %5220 = vst.msk [vmem:[%s12 + $0x8d] sm:$0x1] %vm5078, %v4719
    %5221 = vst.msk [vmem:[%s12 + $0x8e] sm:$0x1] %vm5078, %v4722
    %5222 = vst.msk [vmem:[%s12 + $0x8f] sm:$0x1] %vm5078, %v4725
    %5223 = vst.msk [vmem:[%s12 + $0x90] sm:$0x1] %vm5078, %v4728
    %5224 = vst.msk [vmem:[%s12 + $0x91] sm:$0x1] %vm5078, %v4731
    %5225 = vst.msk [vmem:[%s12 + $0x92] sm:$0x1] %vm5078, %v4734
    %5226 = vst.msk [vmem:[%s12 + $0x93] sm:$0x1] %vm5078, %v4737
    %5227 = vst.msk [vmem:[%s12 + $0x94] sm:$0x1] %vm5078, %v4740
    %5228 = vst.msk [vmem:[%s12 + $0x95] sm:$0x1] %vm5078, %v4743
    %5229 = vst.msk [vmem:[%s12 + $0x96] sm:$0x1] %vm5078, %v4746
    %5230 = vst.msk [vmem:[%s12 + $0x97] sm:$0x1] %vm5078, %v4749
    %5231 = vst.msk [vmem:[%s12 + $0x98] sm:$0x1] %vm5078, %v4752
    %5232 = vst.msk [vmem:[%s12 + $0x99] sm:$0x1] %vm5078, %v4755
    %5233 = vst.msk [vmem:[%s12 + $0x9a] sm:$0x1] %vm5078, %v4758
    %5234 = vst.msk [vmem:[%s12 + $0x9b] sm:$0x1] %vm5078, %v4761
    %5235 = vst.msk [vmem:[%s12 + $0x9c] sm:$0x1] %vm5078, %v4764
    %5236 = vst.msk [vmem:[%s12 + $0x9d] sm:$0x1] %vm5078, %v4767
    %5237 = vst.msk [vmem:[%s12 + $0x9e] sm:$0x1] %vm5078, %v4770
    %5238 = vst.msk [vmem:[%s12 + $0x9f] sm:$0x1] %vm5078, %v4773
    %5239 = vst.msk [vmem:[%s12 + $0xa0] sm:$0x1] %vm5078, %v4776
    %5240 = vst.msk [vmem:[%s12 + $0xa1] sm:$0x1] %vm5078, %v4779
    %5241 = vst.msk [vmem:[%s12 + $0xa2] sm:$0x1] %vm5078, %v4782
    %5242 = vst.msk [vmem:[%s12 + $0xa3] sm:$0x1] %vm5078, %v4785
    %5243 = vst.msk [vmem:[%s12 + $0xa4] sm:$0x1] %vm5078, %v4788
    %5244 = vst.msk [vmem:[%s12 + $0xa5] sm:$0x1] %vm5078, %v4791
    %5245 = vst.msk [vmem:[%s12 + $0xa6] sm:$0x1] %vm5078, %v4794
    %5246 = vst.msk [vmem:[%s12 + $0xa7] sm:$0x1] %vm5078, %v4797
    %5247 = vst.msk [vmem:[%s12 + $0xa8] sm:$0x1] %vm5078, %v4800
    %5248 = vst.msk [vmem:[%s12 + $0xa9] sm:$0x1] %vm5078, %v4803
    %5249 = vst.msk [vmem:[%s12 + $0xaa] sm:$0x1] %vm5078, %v4806
    %5250 = vst.msk [vmem:[%s12 + $0xab] sm:$0x1] %vm5078, %v4809
    %5251 = vst.msk [vmem:[%s12 + $0xac] sm:$0x1] %vm5078, %v4812
    %5252 = vst.msk [vmem:[%s12 + $0xad] sm:$0x1] %vm5078, %v4815
    %5253 = vst.msk [vmem:[%s12 + $0xae] sm:$0x1] %vm5078, %v4818
    %5254 = vst.msk [vmem:[%s12 + $0xaf] sm:$0x1] %vm5078, %v4821
    %5255 = vst.msk [vmem:[%s12 + $0xb0] sm:$0x1] %vm5078, %v4824
    %5256 = vst.msk [vmem:[%s12 + $0xb1] sm:$0x1] %vm5078, %v4827
    %5257 = vst.msk [vmem:[%s12 + $0xb2] sm:$0x1] %vm5078, %v4830
    %5258 = vst.msk [vmem:[%s12 + $0xb3] sm:$0x1] %vm5078, %v4833
    %5259 = vst.msk [vmem:[%s12 + $0xb4] sm:$0x1] %vm5078, %v4836
    %5260 = vst.msk [vmem:[%s12 + $0xb5] sm:$0x1] %vm5078, %v4839
    %5261 = vst.msk [vmem:[%s12 + $0xb6] sm:$0x1] %vm5078, %v4842
    %5262 = vst.msk [vmem:[%s12 + $0xb7] sm:$0x1] %vm5078, %v4845
    %5263 = vst.msk [vmem:[%s12 + $0xb8] sm:$0x1] %vm5078, %v4848
    %5264 = vst.msk [vmem:[%s12 + $0xb9] sm:$0x1] %vm5078, %v4851
    %5265 = vst.msk [vmem:[%s12 + $0xba] sm:$0x1] %vm5078, %v4854
    %5266 = vst.msk [vmem:[%s12 + $0xbb] sm:$0x1] %vm5078, %v4857
    %5267 = vst.msk [vmem:[%s12 + $0xbc] sm:$0x1] %vm5078, %v4860
    %5268 = vst.msk [vmem:[%s12 + $0xbd] sm:$0x1] %vm5078, %v4863
    %5269 = vst.msk [vmem:[%s12 + $0xbe] sm:$0x1] %vm5078, %v4866
    %5270 = vst.msk [vmem:[%s12 + $0xbf] sm:$0x1] %vm5078, %v4869
    %5271 = vst.msk [vmem:[%s12 + $0xc0] sm:$0x1] %vm5078, %v4872
    %5272 = vst.msk [vmem:[%s12 + $0xc1] sm:$0x1] %vm5078, %v4875
    %5273 = vst.msk [vmem:[%s12 + $0xc2] sm:$0x1] %vm5078, %v4878
    %5274 = vst.msk [vmem:[%s12 + $0xc3] sm:$0x1] %vm5078, %v4881
    %v5275 = vmax.f32 %v4095, 0.0
    %v5276 = vmax.f32 %v4096, 0.0
    %v5277 = vmax.f32 %v4097, 0.0
    %v5278 = vmax.f32 %v4098, 0.0
    %v5279 = vmax.f32 %v4099, 0.0
    %v5280 = vmax.f32 %v4100, 0.0
    %v5281 = vmax.f32 %v4101, 0.0
    %v5282 = vmax.f32 %v4102, 0.0
    %v5283 = vmax.f32 %v4103, 0.0
    %v5284 = vmax.f32 %v4104, 0.0
    %v5285 = vmax.f32 %v4105, 0.0
    %v5286 = vmax.f32 %v4106, 0.0
    %v5287 = vmax.f32 %v4107, 0.0
    %v5288 = vmax.f32 %v4108, 0.0
    %v5289 = vmax.f32 %v4109, 0.0
    %v5290 = vmax.f32 %v4110, 0.0
    %v5291 = vmax.f32 %v4111, 0.0
    %v5292 = vmax.f32 %v4112, 0.0
    %v5293 = vmax.f32 %v4113, 0.0
    %v5294 = vmax.f32 %v4114, 0.0
    %v5295 = vmax.f32 %v4115, 0.0
    %v5296 = vmax.f32 %v4116, 0.0
    %v5297 = vmax.f32 %v4117, 0.0
    %v5298 = vmax.f32 %v4118, 0.0
    %v5299 = vmax.f32 %v4119, 0.0
    %v5300 = vmax.f32 %v4120, 0.0
    %v5301 = vmax.f32 %v4121, 0.0
    %v5302 = vmax.f32 %v4122, 0.0
    %v5303 = vmax.f32 %v4123, 0.0
    %v5304 = vmax.f32 %v4124, 0.0
    %v5305 = vmax.f32 %v4125, 0.0
    %v5306 = vmax.f32 %v4126, 0.0
    %v5307 = vmax.f32 %v4127, 0.0
    %v5308 = vmax.f32 %v4128, 0.0
    %v5309 = vmax.f32 %v4129, 0.0
    %v5310 = vmax.f32 %v4130, 0.0
    %v5311 = vmax.f32 %v4131, 0.0
    %v5312 = vmax.f32 %v4132, 0.0
    %v5313 = vmax.f32 %v4133, 0.0
    %v5314 = vmax.f32 %v4134, 0.0
    %v5315 = vmax.f32 %v4135, 0.0
    %v5316 = vmax.f32 %v4136, 0.0
    %v5317 = vmax.f32 %v4137, 0.0
    %v5318 = vmax.f32 %v4138, 0.0
    %v5319 = vmax.f32 %v4139, 0.0
    %v5320 = vmax.f32 %v4140, 0.0
    %v5321 = vmax.f32 %v4141, 0.0
    %v5322 = vmax.f32 %v4142, 0.0
    %v5323 = vmax.f32 %v4143, 0.0
    %v5373 = vrot.slane %v5275, 2
    %v5374 = vrot.slane %v5275, 4
    %v5375 = vrot.slane %v5275, 6
    %v5376 = vrot.slane %v5276, 2
    %v5377 = vrot.slane %v5276, 4
    %v5378 = vrot.slane %v5276, 6
    %v5379 = vrot.slane %v5277, 2
    %v5380 = vrot.slane %v5277, 4
    %v5381 = vrot.slane %v5277, 6
    %v5382 = vrot.slane %v5278, 2
    %v5383 = vrot.slane %v5278, 4
    %v5384 = vrot.slane %v5278, 6
    %v5385 = vrot.slane %v5279, 2
    %v5386 = vrot.slane %v5279, 4
    %v5387 = vrot.slane %v5279, 6
    %v5388 = vrot.slane %v5280, 2
    %v5389 = vrot.slane %v5280, 4
    %v5390 = vrot.slane %v5280, 6
    %v5391 = vrot.slane %v5281, 2
    %v5392 = vrot.slane %v5281, 4
    %v5393 = vrot.slane %v5281, 6
    %v5394 = vrot.slane %v5282, 2
    %v5395 = vrot.slane %v5282, 4
    %v5396 = vrot.slane %v5282, 6
    %v5397 = vrot.slane %v5283, 2
    %v5398 = vrot.slane %v5283, 4
    %v5399 = vrot.slane %v5283, 6
    %v5400 = vrot.slane %v5284, 2
    %v5401 = vrot.slane %v5284, 4
    %v5402 = vrot.slane %v5284, 6
    %v5403 = vrot.slane %v5285, 2
    %v5404 = vrot.slane %v5285, 4
    %v5405 = vrot.slane %v5285, 6
    %v5406 = vrot.slane %v5286, 2
    %v5407 = vrot.slane %v5286, 4
    %v5408 = vrot.slane %v5286, 6
    %v5409 = vrot.slane %v5287, 2
    %v5410 = vrot.slane %v5287, 4
    %v5411 = vrot.slane %v5287, 6
    %v5412 = vrot.slane %v5288, 2
    %v5413 = vrot.slane %v5288, 4
    %v5414 = vrot.slane %v5288, 6
    %v5415 = vrot.slane %v5289, 2
    %v5416 = vrot.slane %v5289, 4
    %v5417 = vrot.slane %v5289, 6
    %v5418 = vrot.slane %v5290, 2
    %v5419 = vrot.slane %v5290, 4
    %v5420 = vrot.slane %v5290, 6
    %v5421 = vrot.slane %v5291, 2
    %v5422 = vrot.slane %v5291, 4
    %v5423 = vrot.slane %v5291, 6
    %v5424 = vrot.slane %v5292, 2
    %v5425 = vrot.slane %v5292, 4
    %v5426 = vrot.slane %v5292, 6
    %v5427 = vrot.slane %v5293, 2
    %v5428 = vrot.slane %v5293, 4
    %v5429 = vrot.slane %v5293, 6
    %v5430 = vrot.slane %v5294, 2
    %v5431 = vrot.slane %v5294, 4
    %v5432 = vrot.slane %v5294, 6
    %v5433 = vrot.slane %v5295, 2
    %v5434 = vrot.slane %v5295, 4
    %v5435 = vrot.slane %v5295, 6
    %v5436 = vrot.slane %v5296, 2
    %v5437 = vrot.slane %v5296, 4
    %v5438 = vrot.slane %v5296, 6
    %v5439 = vrot.slane %v5297, 2
    %v5440 = vrot.slane %v5297, 4
    %v5441 = vrot.slane %v5297, 6
    %v5442 = vrot.slane %v5298, 2
    %v5443 = vrot.slane %v5298, 4
    %v5444 = vrot.slane %v5298, 6
    %v5445 = vrot.slane %v5299, 2
    %v5446 = vrot.slane %v5299, 4
    %v5447 = vrot.slane %v5299, 6
    %v5448 = vrot.slane %v5300, 2
    %v5449 = vrot.slane %v5300, 4
    %v5450 = vrot.slane %v5300, 6
    %v5451 = vrot.slane %v5301, 2
    %v5452 = vrot.slane %v5301, 4
    %v5453 = vrot.slane %v5301, 6
    %v5454 = vrot.slane %v5302, 2
    %v5455 = vrot.slane %v5302, 4
    %v5456 = vrot.slane %v5302, 6
    %v5457 = vrot.slane %v5303, 2
    %v5458 = vrot.slane %v5303, 4
    %v5459 = vrot.slane %v5303, 6
    %v5460 = vrot.slane %v5304, 2
    %v5461 = vrot.slane %v5304, 4
    %v5462 = vrot.slane %v5304, 6
    %v5463 = vrot.slane %v5305, 2
    %v5464 = vrot.slane %v5305, 4
    %v5465 = vrot.slane %v5305, 6
    %v5466 = vrot.slane %v5306, 2
    %v5467 = vrot.slane %v5306, 4
    %v5468 = vrot.slane %v5306, 6
    %v5469 = vrot.slane %v5307, 2
    %v5470 = vrot.slane %v5307, 4
    %v5471 = vrot.slane %v5307, 6
    %v5472 = vrot.slane %v5308, 2
    %v5473 = vrot.slane %v5308, 4
    %v5474 = vrot.slane %v5308, 6
    %v5475 = vrot.slane %v5309, 2
    %v5476 = vrot.slane %v5309, 4
    %v5477 = vrot.slane %v5309, 6
    %v5478 = vrot.slane %v5310, 2
    %v5479 = vrot.slane %v5310, 4
    %v5480 = vrot.slane %v5310, 6
    %v5481 = vrot.slane %v5311, 2
    %v5482 = vrot.slane %v5311, 4
    %v5483 = vrot.slane %v5311, 6
    %v5484 = vrot.slane %v5312, 2
    %v5485 = vrot.slane %v5312, 4
    %v5486 = vrot.slane %v5312, 6
    %v5487 = vrot.slane %v5313, 2
    %v5488 = vrot.slane %v5313, 4
    %v5489 = vrot.slane %v5313, 6
    %v5490 = vrot.slane %v5314, 2
    %v5491 = vrot.slane %v5314, 4
    %v5492 = vrot.slane %v5314, 6
    %v5493 = vrot.slane %v5315, 2
    %v5494 = vrot.slane %v5315, 4
    %v5495 = vrot.slane %v5315, 6
    %v5496 = vrot.slane %v5316, 2
    %v5497 = vrot.slane %v5316, 4
    %v5498 = vrot.slane %v5316, 6
    %v5499 = vrot.slane %v5317, 2
    %v5500 = vrot.slane %v5317, 4
    %v5501 = vrot.slane %v5317, 6
    %v5502 = vrot.slane %v5318, 2
    %v5503 = vrot.slane %v5318, 4
    %v5504 = vrot.slane %v5318, 6
    %v5505 = vrot.slane %v5319, 2
    %v5506 = vrot.slane %v5319, 4
    %v5507 = vrot.slane %v5319, 6
    %v5508 = vrot.slane %v5320, 2
    %v5509 = vrot.slane %v5320, 4
    %v5510 = vrot.slane %v5320, 6
    %v5511 = vrot.slane %v5321, 2
    %v5512 = vrot.slane %v5321, 4
    %v5513 = vrot.slane %v5321, 6
    %v5514 = vrot.slane %v5322, 2
    %v5515 = vrot.slane %v5322, 4
    %v5516 = vrot.slane %v5322, 6
    %v5517 = vrot.slane %v5323, 2
    %v5518 = vrot.slane %v5323, 4
    %v5519 = vrot.slane %v5323, 6
    %vm5667 = vcmask 517120
    %v5668 = vsel %vm5667, %v5275, -inf
    %v5669 = vsel %vm5667, %v5373, -inf
    %v5670 = vmax.f32 %v5668, %v5669
    %v5671 = vsel %vm5667, %v5374, -inf
    %v5672 = vsel %vm5667, %v5375, -inf
    %v5673 = vmax.f32 %v5671, %v5672
    %v5674 = vsel %vm5667, %v5276, -inf
    %v5675 = vsel %vm5667, %v5376, -inf
    %v5676 = vmax.f32 %v5674, %v5675
    %v5677 = vsel %vm5667, %v5377, -inf
    %v5678 = vsel %vm5667, %v5378, -inf
    %v5679 = vmax.f32 %v5677, %v5678
    %v5680 = vsel %vm5667, %v5277, -inf
    %v5681 = vsel %vm5667, %v5379, -inf
    %v5682 = vmax.f32 %v5680, %v5681
    %v5683 = vsel %vm5667, %v5380, -inf
    %v5684 = vsel %vm5667, %v5381, -inf
    %v5685 = vmax.f32 %v5683, %v5684
    %v5686 = vsel %vm5667, %v5278, -inf
    %v5687 = vsel %vm5667, %v5382, -inf
    %v5688 = vmax.f32 %v5686, %v5687
    %v5689 = vsel %vm5667, %v5383, -inf
    %v5690 = vsel %vm5667, %v5384, -inf
    %v5691 = vmax.f32 %v5689, %v5690
    %v5692 = vsel %vm5667, %v5279, -inf
    %v5693 = vsel %vm5667, %v5385, -inf
    %v5694 = vmax.f32 %v5692, %v5693
    %v5695 = vsel %vm5667, %v5386, -inf
    %v5696 = vsel %vm5667, %v5387, -inf
    %v5697 = vmax.f32 %v5695, %v5696
    %v5698 = vsel %vm5667, %v5280, -inf
    %v5699 = vsel %vm5667, %v5388, -inf
    %v5700 = vmax.f32 %v5698, %v5699
    %v5701 = vsel %vm5667, %v5389, -inf
    %v5702 = vsel %vm5667, %v5390, -inf
    %v5703 = vmax.f32 %v5701, %v5702
    %v5704 = vsel %vm5667, %v5281, -inf
    %v5705 = vsel %vm5667, %v5391, -inf
    %v5706 = vmax.f32 %v5704, %v5705
    %v5707 = vsel %vm5667, %v5392, -inf
    %v5708 = vsel %vm5667, %v5393, -inf
    %v5709 = vmax.f32 %v5707, %v5708
    %v5710 = vsel %vm5667, %v5282, -inf
    %v5711 = vsel %vm5667, %v5394, -inf
    %v5712 = vmax.f32 %v5710, %v5711
    %v5713 = vsel %vm5667, %v5395, -inf
    %v5714 = vsel %vm5667, %v5396, -inf
    %v5715 = vmax.f32 %v5713, %v5714
    %v5716 = vsel %vm5667, %v5283, -inf
    %v5717 = vsel %vm5667, %v5397, -inf
    %v5718 = vmax.f32 %v5716, %v5717
    %v5719 = vsel %vm5667, %v5398, -inf
    %v5720 = vsel %vm5667, %v5399, -inf
    %v5721 = vmax.f32 %v5719, %v5720
    %v5722 = vsel %vm5667, %v5284, -inf
    %v5723 = vsel %vm5667, %v5400, -inf
    %v5724 = vmax.f32 %v5722, %v5723
    %v5725 = vsel %vm5667, %v5401, -inf
    %v5726 = vsel %vm5667, %v5402, -inf
    %v5727 = vmax.f32 %v5725, %v5726
    %v5728 = vsel %vm5667, %v5285, -inf
    %v5729 = vsel %vm5667, %v5403, -inf
    %v5730 = vmax.f32 %v5728, %v5729
    %v5731 = vsel %vm5667, %v5404, -inf
    %v5732 = vsel %vm5667, %v5405, -inf
    %v5733 = vmax.f32 %v5731, %v5732
    %v5734 = vsel %vm5667, %v5286, -inf
    %v5735 = vsel %vm5667, %v5406, -inf
    %v5736 = vmax.f32 %v5734, %v5735
    %v5737 = vsel %vm5667, %v5407, -inf
    %v5738 = vsel %vm5667, %v5408, -inf
    %v5739 = vmax.f32 %v5737, %v5738
    %v5740 = vsel %vm5667, %v5287, -inf
    %v5741 = vsel %vm5667, %v5409, -inf
    %v5742 = vmax.f32 %v5740, %v5741
    %v5743 = vsel %vm5667, %v5410, -inf
    %v5744 = vsel %vm5667, %v5411, -inf
    %v5745 = vmax.f32 %v5743, %v5744
    %v5746 = vsel %vm5667, %v5288, -inf
    %v5747 = vsel %vm5667, %v5412, -inf
    %v5748 = vmax.f32 %v5746, %v5747
    %v5749 = vsel %vm5667, %v5413, -inf
    %v5750 = vsel %vm5667, %v5414, -inf
    %v5751 = vmax.f32 %v5749, %v5750
    %v5752 = vsel %vm5667, %v5289, -inf
    %v5753 = vsel %vm5667, %v5415, -inf
    %v5754 = vmax.f32 %v5752, %v5753
    %v5755 = vsel %vm5667, %v5416, -inf
    %v5756 = vsel %vm5667, %v5417, -inf
    %v5757 = vmax.f32 %v5755, %v5756
    %v5758 = vsel %vm5667, %v5290, -inf
    %v5759 = vsel %vm5667, %v5418, -inf
    %v5760 = vmax.f32 %v5758, %v5759
    %v5761 = vsel %vm5667, %v5419, -inf
    %v5762 = vsel %vm5667, %v5420, -inf
    %v5763 = vmax.f32 %v5761, %v5762
    %v5764 = vsel %vm5667, %v5291, -inf
    %v5765 = vsel %vm5667, %v5421, -inf
    %v5766 = vmax.f32 %v5764, %v5765
    %v5767 = vsel %vm5667, %v5422, -inf
    %v5768 = vsel %vm5667, %v5423, -inf
    %v5769 = vmax.f32 %v5767, %v5768
    %v5770 = vsel %vm5667, %v5292, -inf
    %v5771 = vsel %vm5667, %v5424, -inf
    %v5772 = vmax.f32 %v5770, %v5771
    %v5773 = vsel %vm5667, %v5425, -inf
    %v5774 = vsel %vm5667, %v5426, -inf
    %v5775 = vmax.f32 %v5773, %v5774
    %v5776 = vsel %vm5667, %v5293, -inf
    %v5777 = vsel %vm5667, %v5427, -inf
    %v5778 = vmax.f32 %v5776, %v5777
    %v5779 = vsel %vm5667, %v5428, -inf
    %v5780 = vsel %vm5667, %v5429, -inf
    %v5781 = vmax.f32 %v5779, %v5780
    %v5782 = vsel %vm5667, %v5294, -inf
    %v5783 = vsel %vm5667, %v5430, -inf
    %v5784 = vmax.f32 %v5782, %v5783
    %v5785 = vsel %vm5667, %v5431, -inf
    %v5786 = vsel %vm5667, %v5432, -inf
    %v5787 = vmax.f32 %v5785, %v5786
    %v5788 = vsel %vm5667, %v5295, -inf
    %v5789 = vsel %vm5667, %v5433, -inf
    %v5790 = vmax.f32 %v5788, %v5789
    %v5791 = vsel %vm5667, %v5434, -inf
    %v5792 = vsel %vm5667, %v5435, -inf
    %v5793 = vmax.f32 %v5791, %v5792
    %v5794 = vsel %vm5667, %v5296, -inf
    %v5795 = vsel %vm5667, %v5436, -inf
    %v5796 = vmax.f32 %v5794, %v5795
    %v5797 = vsel %vm5667, %v5437, -inf
    %v5798 = vsel %vm5667, %v5438, -inf
    %v5799 = vmax.f32 %v5797, %v5798
    %v5800 = vsel %vm5667, %v5297, -inf
    %v5801 = vsel %vm5667, %v5439, -inf
    %v5802 = vmax.f32 %v5800, %v5801
    %v5803 = vsel %vm5667, %v5440, -inf
    %v5804 = vsel %vm5667, %v5441, -inf
    %v5805 = vmax.f32 %v5803, %v5804
    %v5806 = vsel %vm5667, %v5298, -inf
    %v5807 = vsel %vm5667, %v5442, -inf
    %v5808 = vmax.f32 %v5806, %v5807
    %v5809 = vsel %vm5667, %v5443, -inf
    %v5810 = vsel %vm5667, %v5444, -inf
    %v5811 = vmax.f32 %v5809, %v5810
    %v5812 = vsel %vm5667, %v5299, -inf
    %v5813 = vsel %vm5667, %v5445, -inf
    %v5814 = vmax.f32 %v5812, %v5813
    %v5815 = vsel %vm5667, %v5446, -inf
    %v5816 = vsel %vm5667, %v5447, -inf
    %v5817 = vmax.f32 %v5815, %v5816
    %v5818 = vsel %vm5667, %v5300, -inf
    %v5819 = vsel %vm5667, %v5448, -inf
    %v5820 = vmax.f32 %v5818, %v5819
    %v5821 = vsel %vm5667, %v5449, -inf
    %v5822 = vsel %vm5667, %v5450, -inf
    %v5823 = vmax.f32 %v5821, %v5822
    %v5824 = vsel %vm5667, %v5301, -inf
    %v5825 = vsel %vm5667, %v5451, -inf
    %v5826 = vmax.f32 %v5824, %v5825
    %v5827 = vsel %vm5667, %v5452, -inf
    %v5828 = vsel %vm5667, %v5453, -inf
    %v5829 = vmax.f32 %v5827, %v5828
    %v5830 = vsel %vm5667, %v5302, -inf
    %v5831 = vsel %vm5667, %v5454, -inf
    %v5832 = vmax.f32 %v5830, %v5831
    %v5833 = vsel %vm5667, %v5455, -inf
    %v5834 = vsel %vm5667, %v5456, -inf
    %v5835 = vmax.f32 %v5833, %v5834
    %v5836 = vsel %vm5667, %v5303, -inf
    %v5837 = vsel %vm5667, %v5457, -inf
    %v5838 = vmax.f32 %v5836, %v5837
    %v5839 = vsel %vm5667, %v5458, -inf
    %v5840 = vsel %vm5667, %v5459, -inf
    %v5841 = vmax.f32 %v5839, %v5840
    %v5842 = vsel %vm5667, %v5304, -inf
    %v5843 = vsel %vm5667, %v5460, -inf
    %v5844 = vmax.f32 %v5842, %v5843
    %v5845 = vsel %vm5667, %v5461, -inf
    %v5846 = vsel %vm5667, %v5462, -inf
    %v5847 = vmax.f32 %v5845, %v5846
    %v5848 = vsel %vm5667, %v5305, -inf
    %v5849 = vsel %vm5667, %v5463, -inf
    %v5850 = vmax.f32 %v5848, %v5849
    %v5851 = vsel %vm5667, %v5464, -inf
    %v5852 = vsel %vm5667, %v5465, -inf
    %v5853 = vmax.f32 %v5851, %v5852
    %v5854 = vsel %vm5667, %v5306, -inf
    %v5855 = vsel %vm5667, %v5466, -inf
    %v5856 = vmax.f32 %v5854, %v5855
    %v5857 = vsel %vm5667, %v5467, -inf
    %v5858 = vsel %vm5667, %v5468, -inf
    %v5859 = vmax.f32 %v5857, %v5858
    %v5860 = vsel %vm5667, %v5307, -inf
    %v5861 = vsel %vm5667, %v5469, -inf
    %v5862 = vmax.f32 %v5860, %v5861
    %v5863 = vsel %vm5667, %v5470, -inf
    %v5864 = vsel %vm5667, %v5471, -inf
    %v5865 = vmax.f32 %v5863, %v5864
    %v5866 = vsel %vm5667, %v5308, -inf
    %v5867 = vsel %vm5667, %v5472, -inf
    %v5868 = vmax.f32 %v5866, %v5867
    %v5869 = vsel %vm5667, %v5473, -inf
    %v5870 = vsel %vm5667, %v5474, -inf
    %v5871 = vmax.f32 %v5869, %v5870
    %v5872 = vsel %vm5667, %v5309, -inf
    %v5873 = vsel %vm5667, %v5475, -inf
    %v5874 = vmax.f32 %v5872, %v5873
    %v5875 = vsel %vm5667, %v5476, -inf
    %v5876 = vsel %vm5667, %v5477, -inf
    %v5877 = vmax.f32 %v5875, %v5876
    %v5878 = vsel %vm5667, %v5310, -inf
    %v5879 = vsel %vm5667, %v5478, -inf
    %v5880 = vmax.f32 %v5878, %v5879
    %v5881 = vsel %vm5667, %v5479, -inf
    %v5882 = vsel %vm5667, %v5480, -inf
    %v5883 = vmax.f32 %v5881, %v5882
    %v5884 = vsel %vm5667, %v5311, -inf
    %v5885 = vsel %vm5667, %v5481, -inf
    %v5886 = vmax.f32 %v5884, %v5885
    %v5887 = vsel %vm5667, %v5482, -inf
    %v5888 = vsel %vm5667, %v5483, -inf
    %v5889 = vmax.f32 %v5887, %v5888
    %v5890 = vsel %vm5667, %v5312, -inf
    %v5891 = vsel %vm5667, %v5484, -inf
    %v5892 = vmax.f32 %v5890, %v5891
    %v5893 = vsel %vm5667, %v5485, -inf
    %v5894 = vsel %vm5667, %v5486, -inf
    %v5895 = vmax.f32 %v5893, %v5894
    %v5896 = vsel %vm5667, %v5313, -inf
    %v5897 = vsel %vm5667, %v5487, -inf
    %v5898 = vmax.f32 %v5896, %v5897
    %v5899 = vsel %vm5667, %v5488, -inf
    %v5900 = vsel %vm5667, %v5489, -inf
    %v5901 = vmax.f32 %v5899, %v5900
    %v5902 = vsel %vm5667, %v5314, -inf
    %v5903 = vsel %vm5667, %v5490, -inf
    %v5904 = vmax.f32 %v5902, %v5903
    %v5905 = vsel %vm5667, %v5491, -inf
    %v5906 = vsel %vm5667, %v5492, -inf
    %v5907 = vmax.f32 %v5905, %v5906
    %v5908 = vsel %vm5667, %v5315, -inf
    %v5909 = vsel %vm5667, %v5493, -inf
    %v5910 = vmax.f32 %v5908, %v5909
    %v5911 = vsel %vm5667, %v5494, -inf
    %v5912 = vsel %vm5667, %v5495, -inf
    %v5913 = vmax.f32 %v5911, %v5912
    %v5914 = vsel %vm5667, %v5316, -inf
    %v5915 = vsel %vm5667, %v5496, -inf
    %v5916 = vmax.f32 %v5914, %v5915
    %v5917 = vsel %vm5667, %v5497, -inf
    %v5918 = vsel %vm5667, %v5498, -inf
    %v5919 = vmax.f32 %v5917, %v5918
    %v5920 = vsel %vm5667, %v5317, -inf
    %v5921 = vsel %vm5667, %v5499, -inf
    %v5922 = vmax.f32 %v5920, %v5921
    %v5923 = vsel %vm5667, %v5500, -inf
    %v5924 = vsel %vm5667, %v5501, -inf
    %v5925 = vmax.f32 %v5923, %v5924
    %v5926 = vsel %vm5667, %v5318, -inf
    %v5927 = vsel %vm5667, %v5502, -inf
    %v5928 = vmax.f32 %v5926, %v5927
    %v5929 = vsel %vm5667, %v5503, -inf
    %v5930 = vsel %vm5667, %v5504, -inf
    %v5931 = vmax.f32 %v5929, %v5930
    %v5932 = vsel %vm5667, %v5319, -inf
    %v5933 = vsel %vm5667, %v5505, -inf
    %v5934 = vmax.f32 %v5932, %v5933
    %v5935 = vsel %vm5667, %v5506, -inf
    %v5936 = vsel %vm5667, %v5507, -inf
    %v5937 = vmax.f32 %v5935, %v5936
    %v5938 = vsel %vm5667, %v5320, -inf
    %v5939 = vsel %vm5667, %v5508, -inf
    %v5940 = vmax.f32 %v5938, %v5939
    %v5941 = vsel %vm5667, %v5509, -inf
    %v5942 = vsel %vm5667, %v5510, -inf
    %v5943 = vmax.f32 %v5941, %v5942
    %v5944 = vsel %vm5667, %v5321, -inf
    %v5945 = vsel %vm5667, %v5511, -inf
    %v5946 = vmax.f32 %v5944, %v5945
    %v5947 = vsel %vm5667, %v5512, -inf
    %v5948 = vsel %vm5667, %v5513, -inf
    %v5949 = vmax.f32 %v5947, %v5948
    %v5950 = vsel %vm5667, %v5322, -inf
    %v5951 = vsel %vm5667, %v5514, -inf
    %v5952 = vmax.f32 %v5950, %v5951
    %v5953 = vsel %vm5667, %v5515, -inf
    %v5954 = vsel %vm5667, %v5516, -inf
    %v5955 = vmax.f32 %v5953, %v5954
    %v5956 = vsel %vm5667, %v5323, -inf
    %v5957 = vsel %vm5667, %v5517, -inf
    %v5958 = vmax.f32 %v5956, %v5957
    %v5959 = vsel %vm5667, %v5518, -inf
    %v5960 = vsel %vm5667, %v5519, -inf
    %v5961 = vmax.f32 %v5959, %v5960
    %v5962 = vsel %vm5667, %v5670, -inf
    %v5963 = vsel %vm5667, %v5691, -inf
    %v5964 = vmax.f32 %v5962, %v5963
    %v5965 = vsel %vm5667, %v5673, -inf
    %v5966 = vsel %vm5667, %v5694, -inf
    %v5967 = vmax.f32 %v5965, %v5966
    %v5968 = vsel %vm5667, %v5676, -inf
    %v5969 = vsel %vm5667, %v5697, -inf
    %v5970 = vmax.f32 %v5968, %v5969
    %v5971 = vsel %vm5667, %v5679, -inf
    %v5972 = vsel %vm5667, %v5700, -inf
    %v5973 = vmax.f32 %v5971, %v5972
    %v5974 = vsel %vm5667, %v5682, -inf
    %v5975 = vsel %vm5667, %v5703, -inf
    %v5976 = vmax.f32 %v5974, %v5975
    %v5977 = vsel %vm5667, %v5685, -inf
    %v5978 = vsel %vm5667, %v5706, -inf
    %v5979 = vmax.f32 %v5977, %v5978
    %v5980 = vsel %vm5667, %v5688, -inf
    %v5981 = vsel %vm5667, %v5709, -inf
    %v5982 = vmax.f32 %v5980, %v5981
    %v5983 = vsel %vm5667, %v5712, -inf
    %v5984 = vsel %vm5667, %v5733, -inf
    %v5985 = vmax.f32 %v5983, %v5984
    %v5986 = vsel %vm5667, %v5715, -inf
    %v5987 = vsel %vm5667, %v5736, -inf
    %v5988 = vmax.f32 %v5986, %v5987
    %v5989 = vsel %vm5667, %v5718, -inf
    %v5990 = vsel %vm5667, %v5739, -inf
    %v5991 = vmax.f32 %v5989, %v5990
    %v5992 = vsel %vm5667, %v5721, -inf
    %v5993 = vsel %vm5667, %v5742, -inf
    %v5994 = vmax.f32 %v5992, %v5993
    %v5995 = vsel %vm5667, %v5724, -inf
    %v5996 = vsel %vm5667, %v5745, -inf
    %v5997 = vmax.f32 %v5995, %v5996
    %v5998 = vsel %vm5667, %v5727, -inf
    %v5999 = vsel %vm5667, %v5748, -inf
    %v6000 = vmax.f32 %v5998, %v5999
    %v6001 = vsel %vm5667, %v5730, -inf
    %v6002 = vsel %vm5667, %v5751, -inf
    %v6003 = vmax.f32 %v6001, %v6002
    %v6004 = vsel %vm5667, %v5754, -inf
    %v6005 = vsel %vm5667, %v5775, -inf
    %v6006 = vmax.f32 %v6004, %v6005
    %v6007 = vsel %vm5667, %v5757, -inf
    %v6008 = vsel %vm5667, %v5778, -inf
    %v6009 = vmax.f32 %v6007, %v6008
    %v6010 = vsel %vm5667, %v5760, -inf
    %v6011 = vsel %vm5667, %v5781, -inf
    %v6012 = vmax.f32 %v6010, %v6011
    %v6013 = vsel %vm5667, %v5763, -inf
    %v6014 = vsel %vm5667, %v5784, -inf
    %v6015 = vmax.f32 %v6013, %v6014
    %v6016 = vsel %vm5667, %v5766, -inf
    %v6017 = vsel %vm5667, %v5787, -inf
    %v6018 = vmax.f32 %v6016, %v6017
    %v6019 = vsel %vm5667, %v5769, -inf
    %v6020 = vsel %vm5667, %v5790, -inf
    %v6021 = vmax.f32 %v6019, %v6020
    %v6022 = vsel %vm5667, %v5772, -inf
    %v6023 = vsel %vm5667, %v5793, -inf
    %v6024 = vmax.f32 %v6022, %v6023
    %v6025 = vsel %vm5667, %v5796, -inf
    %v6026 = vsel %vm5667, %v5817, -inf
    %v6027 = vmax.f32 %v6025, %v6026
    %v6028 = vsel %vm5667, %v5799, -inf
    %v6029 = vsel %vm5667, %v5820, -inf
    %v6030 = vmax.f32 %v6028, %v6029
    %v6031 = vsel %vm5667, %v5802, -inf
    %v6032 = vsel %vm5667, %v5823, -inf
    %v6033 = vmax.f32 %v6031, %v6032
    %v6034 = vsel %vm5667, %v5805, -inf
    %v6035 = vsel %vm5667, %v5826, -inf
    %v6036 = vmax.f32 %v6034, %v6035
    %v6037 = vsel %vm5667, %v5808, -inf
    %v6038 = vsel %vm5667, %v5829, -inf
    %v6039 = vmax.f32 %v6037, %v6038
    %v6040 = vsel %vm5667, %v5811, -inf
    %v6041 = vsel %vm5667, %v5832, -inf
    %v6042 = vmax.f32 %v6040, %v6041
    %v6043 = vsel %vm5667, %v5814, -inf
    %v6044 = vsel %vm5667, %v5835, -inf
    %v6045 = vmax.f32 %v6043, %v6044
    %v6046 = vsel %vm5667, %v5838, -inf
    %v6047 = vsel %vm5667, %v5859, -inf
    %v6048 = vmax.f32 %v6046, %v6047
    %v6049 = vsel %vm5667, %v5841, -inf
    %v6050 = vsel %vm5667, %v5862, -inf
    %v6051 = vmax.f32 %v6049, %v6050
    %v6052 = vsel %vm5667, %v5844, -inf
    %v6053 = vsel %vm5667, %v5865, -inf
    %v6054 = vmax.f32 %v6052, %v6053
    %v6055 = vsel %vm5667, %v5847, -inf
    %v6056 = vsel %vm5667, %v5868, -inf
    %v6057 = vmax.f32 %v6055, %v6056
    %v6058 = vsel %vm5667, %v5850, -inf
    %v6059 = vsel %vm5667, %v5871, -inf
    %v6060 = vmax.f32 %v6058, %v6059
    %v6061 = vsel %vm5667, %v5853, -inf
    %v6062 = vsel %vm5667, %v5874, -inf
    %v6063 = vmax.f32 %v6061, %v6062
    %v6064 = vsel %vm5667, %v5856, -inf
    %v6065 = vsel %vm5667, %v5877, -inf
    %v6066 = vmax.f32 %v6064, %v6065
    %v6067 = vsel %vm5667, %v5880, -inf
    %v6068 = vsel %vm5667, %v5901, -inf
    %v6069 = vmax.f32 %v6067, %v6068
    %v6070 = vsel %vm5667, %v5883, -inf
    %v6071 = vsel %vm5667, %v5904, -inf
    %v6072 = vmax.f32 %v6070, %v6071
    %v6073 = vsel %vm5667, %v5886, -inf
    %v6074 = vsel %vm5667, %v5907, -inf
    %v6075 = vmax.f32 %v6073, %v6074
    %v6076 = vsel %vm5667, %v5889, -inf
    %v6077 = vsel %vm5667, %v5910, -inf
    %v6078 = vmax.f32 %v6076, %v6077
    %v6079 = vsel %vm5667, %v5892, -inf
    %v6080 = vsel %vm5667, %v5913, -inf
    %v6081 = vmax.f32 %v6079, %v6080
    %v6082 = vsel %vm5667, %v5895, -inf
    %v6083 = vsel %vm5667, %v5916, -inf
    %v6084 = vmax.f32 %v6082, %v6083
    %v6085 = vsel %vm5667, %v5898, -inf
    %v6086 = vsel %vm5667, %v5919, -inf
    %v6087 = vmax.f32 %v6085, %v6086
    %v6088 = vsel %vm5667, %v5922, -inf
    %v6089 = vsel %vm5667, %v5943, -inf
    %v6090 = vmax.f32 %v6088, %v6089
    %v6091 = vsel %vm5667, %v5925, -inf
    %v6092 = vsel %vm5667, %v5946, -inf
    %v6093 = vmax.f32 %v6091, %v6092
    %v6094 = vsel %vm5667, %v5928, -inf
    %v6095 = vsel %vm5667, %v5949, -inf
    %v6096 = vmax.f32 %v6094, %v6095
    %v6097 = vsel %vm5667, %v5931, -inf
    %v6098 = vsel %vm5667, %v5952, -inf
    %v6099 = vmax.f32 %v6097, %v6098
    %v6100 = vsel %vm5667, %v5934, -inf
    %v6101 = vsel %vm5667, %v5955, -inf
    %v6102 = vmax.f32 %v6100, %v6101
    %v6103 = vsel %vm5667, %v5937, -inf
    %v6104 = vsel %vm5667, %v5958, -inf
    %v6105 = vmax.f32 %v6103, %v6104
    %v6106 = vsel %vm5667, %v5940, -inf
    %v6107 = vsel %vm5667, %v5961, -inf
    %v6108 = vmax.f32 %v6106, %v6107
    %v6109 = vpack.c.bf16 %v5964, %v5964
    %v6110 = vpack.c.bf16 %v5967, %v5967
    %v6111 = vpack.c.bf16 %v5970, %v5970
    %v6112 = vpack.c.bf16 %v5973, %v5973
    %v6113 = vpack.c.bf16 %v5976, %v5976
    %v6114 = vpack.c.bf16 %v5979, %v5979
    %v6115 = vpack.c.bf16 %v5982, %v5982
    %v6116 = vpack.c.bf16 %v5985, %v5985
    %v6117 = vpack.c.bf16 %v5988, %v5988
    %v6118 = vpack.c.bf16 %v5991, %v5991
    %v6119 = vpack.c.bf16 %v5994, %v5994
    %v6120 = vpack.c.bf16 %v5997, %v5997
    %v6121 = vpack.c.bf16 %v6000, %v6000
    %v6122 = vpack.c.bf16 %v6003, %v6003
    %v6123 = vpack.c.bf16 %v6006, %v6006
    %v6124 = vpack.c.bf16 %v6009, %v6009
    %v6125 = vpack.c.bf16 %v6012, %v6012
    %v6126 = vpack.c.bf16 %v6015, %v6015
    %v6127 = vpack.c.bf16 %v6018, %v6018
    %v6128 = vpack.c.bf16 %v6021, %v6021
    %v6129 = vpack.c.bf16 %v6024, %v6024
    %v6130 = vpack.c.bf16 %v6027, %v6027
    %v6131 = vpack.c.bf16 %v6030, %v6030
    %v6132 = vpack.c.bf16 %v6033, %v6033
    %v6133 = vpack.c.bf16 %v6036, %v6036
    %v6134 = vpack.c.bf16 %v6039, %v6039
    %v6135 = vpack.c.bf16 %v6042, %v6042
    %v6136 = vpack.c.bf16 %v6045, %v6045
    %v6137 = vpack.c.bf16 %v6048, %v6048
    %v6138 = vpack.c.bf16 %v6051, %v6051
    %v6139 = vpack.c.bf16 %v6054, %v6054
    %v6140 = vpack.c.bf16 %v6057, %v6057
    %v6141 = vpack.c.bf16 %v6060, %v6060
    %v6142 = vpack.c.bf16 %v6063, %v6063
    %v6143 = vpack.c.bf16 %v6066, %v6066
    %v6144 = vpack.c.bf16 %v6069, %v6069
    %v6145 = vpack.c.bf16 %v6072, %v6072
    %v6146 = vpack.c.bf16 %v6075, %v6075
    %v6147 = vpack.c.bf16 %v6078, %v6078
    %v6148 = vpack.c.bf16 %v6081, %v6081
    %v6149 = vpack.c.bf16 %v6084, %v6084
    %v6150 = vpack.c.bf16 %v6087, %v6087
    %v6151 = vpack.c.bf16 %v6090, %v6090
    %v6152 = vpack.c.bf16 %v6093, %v6093
    %v6153 = vpack.c.bf16 %v6096, %v6096
    %v6154 = vpack.c.bf16 %v6099, %v6099
    %v6155 = vpack.c.bf16 %v6102, %v6102
    %v6156 = vpack.c.bf16 %v6105, %v6105
    %v6157 = vpack.c.bf16 %v6108, %v6108
    %6200 = vrot.lane.b32.xlu0 %v6109, 64
    %v6201 = vpop.permute.xlu0 %6200
    %6202 = vrot.lane.b32.xlu0 %v6110, 64
    %v6203 = vpop.permute.xlu0 %6202
    %6204 = vrot.lane.b32.xlu0 %v6111, 64
    %v6205 = vpop.permute.xlu0 %6204
    %6206 = vrot.lane.b32.xlu0 %v6112, 64
    %v6207 = vpop.permute.xlu0 %6206
    %6208 = vrot.lane.b32.xlu0 %v6113, 64
    %v6209 = vpop.permute.xlu0 %6208
    %6210 = vrot.lane.b32.xlu0 %v6114, 64
    %v6211 = vpop.permute.xlu0 %6210
    %6212 = vrot.lane.b32.xlu0 %v6115, 64
    %v6213 = vpop.permute.xlu0 %6212
    %6214 = vrot.lane.b32.xlu0 %v6116, 64
    %v6215 = vpop.permute.xlu0 %6214
    %6216 = vrot.lane.b32.xlu0 %v6117, 64
    %v6217 = vpop.permute.xlu0 %6216
    %6218 = vrot.lane.b32.xlu0 %v6118, 64
    %v6219 = vpop.permute.xlu0 %6218
    %6220 = vrot.lane.b32.xlu0 %v6119, 64
    %v6221 = vpop.permute.xlu0 %6220
    %6222 = vrot.lane.b32.xlu0 %v6120, 64
    %v6223 = vpop.permute.xlu0 %6222
    %6224 = vrot.lane.b32.xlu0 %v6121, 64
    %v6225 = vpop.permute.xlu0 %6224
    %6226 = vrot.lane.b32.xlu0 %v6122, 64
    %v6227 = vpop.permute.xlu0 %6226
    %6228 = vrot.lane.b32.xlu0 %v6123, 64
    %v6229 = vpop.permute.xlu0 %6228
    %6230 = vrot.lane.b32.xlu0 %v6124, 64
    %v6231 = vpop.permute.xlu0 %6230
    %6232 = vrot.lane.b32.xlu0 %v6125, 64
    %v6233 = vpop.permute.xlu0 %6232
    %6234 = vrot.lane.b32.xlu0 %v6126, 64
    %v6235 = vpop.permute.xlu0 %6234
    %6236 = vrot.lane.b32.xlu0 %v6127, 64
    %v6237 = vpop.permute.xlu0 %6236
    %6238 = vrot.lane.b32.xlu0 %v6128, 64
    %v6239 = vpop.permute.xlu0 %6238
    %6240 = vrot.lane.b32.xlu0 %v6129, 64
    %v6241 = vpop.permute.xlu0 %6240
    %6242 = vrot.lane.b32.xlu0 %v6130, 64
    %v6243 = vpop.permute.xlu0 %6242
    %6244 = vrot.lane.b32.xlu0 %v6131, 64
    %v6245 = vpop.permute.xlu0 %6244
    %6246 = vrot.lane.b32.xlu0 %v6132, 64
    %v6247 = vpop.permute.xlu0 %6246
    %6248 = vrot.lane.b32.xlu0 %v6133, 64
    %v6249 = vpop.permute.xlu0 %6248
    %6250 = vrot.lane.b32.xlu0 %v6134, 64
    %v6251 = vpop.permute.xlu0 %6250
    %6252 = vrot.lane.b32.xlu0 %v6135, 64
    %v6253 = vpop.permute.xlu0 %6252
    %6254 = vrot.lane.b32.xlu0 %v6136, 64
    %v6255 = vpop.permute.xlu0 %6254
    %6256 = vrot.lane.b32.xlu0 %v6137, 64
    %v6257 = vpop.permute.xlu0 %6256
    %6258 = vrot.lane.b32.xlu0 %v6138, 64
    %v6259 = vpop.permute.xlu0 %6258
    %6260 = vrot.lane.b32.xlu0 %v6139, 64
    %v6261 = vpop.permute.xlu0 %6260
    %6262 = vrot.lane.b32.xlu0 %v6140, 64
    %v6263 = vpop.permute.xlu0 %6262
    %6264 = vrot.lane.b32.xlu0 %v6141, 64
    %v6265 = vpop.permute.xlu0 %6264
    %6266 = vrot.lane.b32.xlu0 %v6142, 64
    %v6267 = vpop.permute.xlu0 %6266
    %6268 = vrot.lane.b32.xlu0 %v6143, 64
    %v6269 = vpop.permute.xlu0 %6268
    %6270 = vrot.lane.b32.xlu0 %v6144, 64
    %v6271 = vpop.permute.xlu0 %6270
    %6272 = vrot.lane.b32.xlu0 %v6145, 64
    %v6273 = vpop.permute.xlu0 %6272
    %6274 = vrot.lane.b32.xlu0 %v6146, 64
    %v6275 = vpop.permute.xlu0 %6274
    %6276 = vrot.lane.b32.xlu0 %v6147, 64
    %v6277 = vpop.permute.xlu0 %6276
    %6278 = vrot.lane.b32.xlu0 %v6148, 64
    %v6279 = vpop.permute.xlu0 %6278
    %6280 = vrot.lane.b32.xlu0 %v6149, 64
    %v6281 = vpop.permute.xlu0 %6280
    %6282 = vrot.lane.b32.xlu0 %v6150, 64
    %v6283 = vpop.permute.xlu0 %6282
    %v6285 = vsel %vm788, 0, %v6201
    %v6288 = vsel %vm788, %v6109, %v6203
    %v6291 = vsel %vm788, %v6110, %v6205
    %v6294 = vsel %vm788, %v6111, %v6207
    %v6297 = vsel %vm788, %v6112, %v6209
    %v6300 = vsel %vm788, %v6113, %v6211
    %v6303 = vsel %vm788, %v6114, %v6213
    %v6305 = vsel %vm788, 0, %v6215
    %v6308 = vsel %vm788, %v6116, %v6217
    %v6311 = vsel %vm788, %v6117, %v6219
    %v6314 = vsel %vm788, %v6118, %v6221
    %v6317 = vsel %vm788, %v6119, %v6223
    %v6320 = vsel %vm788, %v6120, %v6225
    %v6323 = vsel %vm788, %v6121, %v6227
    %v6325 = vsel %vm788, 0, %v6229
    %v6328 = vsel %vm788, %v6123, %v6231
    %v6331 = vsel %vm788, %v6124, %v6233
    %v6334 = vsel %vm788, %v6125, %v6235
    %v6337 = vsel %vm788, %v6126, %v6237
    %v6340 = vsel %vm788, %v6127, %v6239
    %v6343 = vsel %vm788, %v6128, %v6241
    %v6345 = vsel %vm788, 0, %v6243
    %v6348 = vsel %vm788, %v6130, %v6245
    %v6351 = vsel %vm788, %v6131, %v6247
    %v6354 = vsel %vm788, %v6132, %v6249
    %v6357 = vsel %vm788, %v6133, %v6251
    %v6360 = vsel %vm788, %v6134, %v6253
    %v6363 = vsel %vm788, %v6135, %v6255
    %v6365 = vsel %vm788, 0, %v6257
    %v6368 = vsel %vm788, %v6137, %v6259
    %v6371 = vsel %vm788, %v6138, %v6261
    %v6374 = vsel %vm788, %v6139, %v6263
    %v6377 = vsel %vm788, %v6140, %v6265
    %v6380 = vsel %vm788, %v6141, %v6267
    %v6383 = vsel %vm788, %v6142, %v6269
    %v6385 = vsel %vm788, 0, %v6271
    %v6388 = vsel %vm788, %v6144, %v6273
    %v6391 = vsel %vm788, %v6145, %v6275
    %v6394 = vsel %vm788, %v6146, %v6277
    %v6397 = vsel %vm788, %v6147, %v6279
    %v6400 = vsel %vm788, %v6148, %v6281
    %v6403 = vsel %vm788, %v6149, %v6283
    %v6404 = vrot.slane %v6110, 7
    %v6405 = vrot.slane %v6111, 7
    %v6406 = vrot.slane %v6112, 7
    %v6407 = vrot.slane %v6113, 7
    %v6408 = vrot.slane %v6114, 7
    %v6409 = vrot.slane %v6115, 7
    %v6410 = vrot.slane %v6117, 7
    %v6411 = vrot.slane %v6118, 7
    %v6412 = vrot.slane %v6119, 7
    %v6413 = vrot.slane %v6120, 7
    %v6414 = vrot.slane %v6121, 7
    %v6415 = vrot.slane %v6122, 7
    %v6416 = vrot.slane %v6124, 7
    %v6417 = vrot.slane %v6125, 7
    %v6418 = vrot.slane %v6126, 7
    %v6419 = vrot.slane %v6127, 7
    %v6420 = vrot.slane %v6128, 7
    %v6421 = vrot.slane %v6129, 7
    %v6422 = vrot.slane %v6131, 7
    %v6423 = vrot.slane %v6132, 7
    %v6424 = vrot.slane %v6133, 7
    %v6425 = vrot.slane %v6134, 7
    %v6426 = vrot.slane %v6135, 7
    %v6427 = vrot.slane %v6136, 7
    %v6428 = vrot.slane %v6138, 7
    %v6429 = vrot.slane %v6139, 7
    %v6430 = vrot.slane %v6140, 7
    %v6431 = vrot.slane %v6141, 7
    %v6432 = vrot.slane %v6142, 7
    %v6433 = vrot.slane %v6143, 7
    %v6434 = vrot.slane %v6145, 7
    %v6435 = vrot.slane %v6146, 7
    %v6436 = vrot.slane %v6147, 7
    %v6437 = vrot.slane %v6148, 7
    %v6438 = vrot.slane %v6149, 7
    %v6439 = vrot.slane %v6150, 7
    %v6441 = vsel %vm1495, %v6285, %v6404
    %v6443 = vsel %vm1495, %v6288, %v6405
    %v6445 = vsel %vm1495, %v6291, %v6406
    %v6447 = vsel %vm1495, %v6294, %v6407
    %v6449 = vsel %vm1495, %v6297, %v6408
    %v6451 = vsel %vm1495, %v6300, %v6409
    %v6452 = vsel %vm1495, %v6303, %v1325
    %v6454 = vsel %vm1495, %v6305, %v6410
    %v6456 = vsel %vm1495, %v6308, %v6411
    %v6458 = vsel %vm1495, %v6311, %v6412
    %v6460 = vsel %vm1495, %v6314, %v6413
    %v6462 = vsel %vm1495, %v6317, %v6414
    %v6464 = vsel %vm1495, %v6320, %v6415
    %v6465 = vsel %vm1495, %v6323, %v1325
    %v6467 = vsel %vm1495, %v6325, %v6416
    %v6469 = vsel %vm1495, %v6328, %v6417
    %v6471 = vsel %vm1495, %v6331, %v6418
    %v6473 = vsel %vm1495, %v6334, %v6419
    %v6475 = vsel %vm1495, %v6337, %v6420
    %v6477 = vsel %vm1495, %v6340, %v6421
    %v6478 = vsel %vm1495, %v6343, %v1325
    %v6480 = vsel %vm1495, %v6345, %v6422
    %v6482 = vsel %vm1495, %v6348, %v6423
    %v6484 = vsel %vm1495, %v6351, %v6424
    %v6486 = vsel %vm1495, %v6354, %v6425
    %v6488 = vsel %vm1495, %v6357, %v6426
    %v6490 = vsel %vm1495, %v6360, %v6427
    %v6491 = vsel %vm1495, %v6363, %v1325
    %v6493 = vsel %vm1495, %v6365, %v6428
    %v6495 = vsel %vm1495, %v6368, %v6429
    %v6497 = vsel %vm1495, %v6371, %v6430
    %v6499 = vsel %vm1495, %v6374, %v6431
    %v6501 = vsel %vm1495, %v6377, %v6432
    %v6503 = vsel %vm1495, %v6380, %v6433
    %v6504 = vsel %vm1495, %v6383, %v1325
    %v6506 = vsel %vm1495, %v6385, %v6434
    %v6508 = vsel %vm1495, %v6388, %v6435
    %v6510 = vsel %vm1495, %v6391, %v6436
    %v6512 = vsel %vm1495, %v6394, %v6437
    %v6514 = vsel %vm1495, %v6397, %v6438
    %v6516 = vsel %vm1495, %v6400, %v6439
    %v6517 = vsel %vm1495, %v6403, %v1325
    %v6518 = vld [vmem:[%s3] sm:$0xf]
    %v6519 = vld [vmem:[%s3 + $0x4] sm:$0xf]
    %v6520 = vld [vmem:[%s3 + $0x8] sm:$0xf]
    %v6521 = vld [vmem:[%s3 + $0xc] sm:$0xf]
    %v6522 = vld [vmem:[%s3 + $0x10] sm:$0xf]
    %v6523 = vld [vmem:[%s3 + $0x14] sm:$0xf]
    %v6524 = vld [vmem:[%s3 + $0x18] sm:$0xf]
    %v6525 = vld [vmem:[%s3 + $0x1c] sm:$0xf]
    %v6526 = vld [vmem:[%s3 + $0x20] sm:$0xf]
    %v6527 = vld [vmem:[%s3 + $0x24] sm:$0xf]
    %v6528 = vld [vmem:[%s3 + $0x28] sm:$0xf]
    %v6529 = vld [vmem:[%s3 + $0x2c] sm:$0xf]
    %v6530 = vld [vmem:[%s3 + $0x30] sm:$0xf]
    %v6531 = vld [vmem:[%s3 + $0x34] sm:$0xf]
    %v6532 = vld [vmem:[%s3 + $0x38] sm:$0xf]
    %v6533 = vld [vmem:[%s3 + $0x3c] sm:$0xf]
    %v6534 = vld [vmem:[%s3 + $0x40] sm:$0xf]
    %v6535 = vld [vmem:[%s3 + $0x44] sm:$0xf]
    %v6536 = vld [vmem:[%s3 + $0x48] sm:$0xf]
    %v6537 = vld [vmem:[%s3 + $0x4c] sm:$0xf]
    %v6538 = vld [vmem:[%s3 + $0x50] sm:$0xf]
    %v6539 = vld [vmem:[%s3 + $0x54] sm:$0xf]
    %v6540 = vld [vmem:[%s3 + $0x58] sm:$0xf]
    %v6541 = vld [vmem:[%s3 + $0x5c] sm:$0xf]
    %6549 = vrot.lane.b32.xlu0 %v6151, 64
    %v6550 = vpop.permute.xlu0 %6549
    %6551 = vrot.lane.b32.xlu0 %v6152, 64
    %v6552 = vpop.permute.xlu0 %6551
    %6553 = vrot.lane.b32.xlu0 %v6153, 64
    %v6554 = vpop.permute.xlu0 %6553
    %6555 = vrot.lane.b32.xlu0 %v6154, 64
    %v6556 = vpop.permute.xlu0 %6555
    %6557 = vrot.lane.b32.xlu0 %v6155, 64
    %v6558 = vpop.permute.xlu0 %6557
    %6559 = vrot.lane.b32.xlu0 %v6156, 64
    %v6560 = vpop.permute.xlu0 %6559
    %6561 = vrot.lane.b32.xlu0 %v6157, 64
    %v6562 = vpop.permute.xlu0 %6561
    %v6564 = vsel %vm788, 0, %v6550
    %v6567 = vsel %vm788, %v6151, %v6552
    %v6570 = vsel %vm788, %v6152, %v6554
    %v6573 = vsel %vm788, %v6153, %v6556
    %v6576 = vsel %vm788, %v6154, %v6558
    %v6579 = vsel %vm788, %v6155, %v6560
    %v6582 = vsel %vm788, %v6156, %v6562
    %v6583 = vrot.slane %v6152, 7
    %v6584 = vrot.slane %v6153, 7
    %v6585 = vrot.slane %v6154, 7
    %v6586 = vrot.slane %v6155, 7
    %v6587 = vrot.slane %v6156, 7
    %v6588 = vrot.slane %v6157, 7
    %v6590 = vsel %vm1495, %v6564, %v6583
    %v6592 = vsel %vm1495, %v6567, %v6584
    %v6594 = vsel %vm1495, %v6570, %v6585
    %v6596 = vsel %vm1495, %v6573, %v6586
    %v6598 = vsel %vm1495, %v6576, %v6587
    %v6600 = vsel %vm1495, %v6579, %v6588
    %v6601 = vsel %vm1495, %v6582, %v1325
    %v6602 = vld [vmem:[%s3 + $0x60] sm:$0xf]
    %v6603 = vld [vmem:[%s3 + $0x64] sm:$0xf]
    %v6604 = vld [vmem:[%s3 + $0x68] sm:$0xf]
    %v6605 = vld [vmem:[%s3 + $0x6c] sm:$0xf]
    %v6606 = vld [vmem:[%s3 + $0x70] sm:$0xf]
    %v6607 = vld [vmem:[%s3 + $0x74] sm:$0xf]
    %v6608 = vld [vmem:[%s3 + $0x78] sm:$0xf]
    %v6609 = vld [vmem:[%s3 + $0x7c] sm:$0xf]
    %v6610 = vld [vmem:[%s3 + $0x80] sm:$0xf]
    %v6611 = vld [vmem:[%s3 + $0x84] sm:$0xf]
    %v6612 = vld [vmem:[%s3 + $0x88] sm:$0xf]
    %v6613 = vld [vmem:[%s3 + $0x8c] sm:$0xf]
    %v6614 = vld [vmem:[%s3 + $0x90] sm:$0xf]
    %v6615 = vld [vmem:[%s3 + $0x94] sm:$0xf]
    %v6616 = vld [vmem:[%s3 + $0x98] sm:$0xf]
    %v6617 = vld [vmem:[%s3 + $0x9c] sm:$0xf]
    %v6618 = vld [vmem:[%s3 + $0xa0] sm:$0xf]
    %v6619 = vld [vmem:[%s3 + $0xa4] sm:$0xf]
    %v6620 = vld [vmem:[%s3 + $0xa8] sm:$0xf]
    %v6621 = vld [vmem:[%s3 + $0xac] sm:$0xf]
    %v6622 = vld [vmem:[%s3 + $0xb0] sm:$0xf]
    %v6623 = vld [vmem:[%s3 + $0xb4] sm:$0xf]
    %v6624 = vld [vmem:[%s3 + $0xb8] sm:$0xf]
    %v6625 = vld [vmem:[%s3 + $0xbc] sm:$0xf]
    %6626 = vst [vmem:[#allocation1] ss:$9 sm:$0xff] %v6441
    %s6627 = scalar_lea.vmem [#allocation1], 1
    %6628 = vst [vmem:[%s6627] ss:$9 sm:$0xff] %v6443
    %s6629 = scalar_lea.vmem [#allocation1], 2
    %6630 = vst [vmem:[%s6629] ss:$9 sm:$0xff] %v6445
    %s6631 = scalar_lea.vmem [#allocation1], 3
    %6632 = vst [vmem:[%s6631] ss:$9 sm:$0xff] %v6447
    %s6633 = scalar_lea.vmem [#allocation1], 4
    %6634 = vst [vmem:[%s6633] ss:$9 sm:$0xff] %v6449
    %s6635 = scalar_lea.vmem [#allocation1], 5
    %6636 = vst [vmem:[%s6635] ss:$9 sm:$0xff] %v6451
    %s6637 = scalar_lea.vmem [#allocation1], 6
    %6638 = vst [vmem:[%s6637] ss:$9 sm:$0xff] %v6452
    %s6639 = scalar_lea.vmem [#allocation1], 7
    %6640 = vst [vmem:[%s6639] ss:$9 sm:$0xff] %v6454
    %v6641 = vld [vmem:[#allocation1] sm:$0xff]
    %v6642 = vld [vmem:[#allocation1 + $0x9] sm:$0xff]
    %6643 = vst [vmem:[#allocation1] ss:$9 sm:$0xff] %v6456
    %6644 = vst [vmem:[%s6627] ss:$9 sm:$0xff] %v6458
    %6645 = vst [vmem:[%s6629] ss:$9 sm:$0xff] %v6460
    %6646 = vst [vmem:[%s6631] ss:$9 sm:$0xff] %v6462
    %6647 = vst [vmem:[%s6633] ss:$9 sm:$0xff] %v6464
    %6648 = vst [vmem:[%s6635] ss:$9 sm:$0xff] %v6465
    %6649 = vst [vmem:[%s6637] ss:$9 sm:$0xff] %v6467
    %6650 = vst [vmem:[%s6639] ss:$9 sm:$0xff] %v6469
    %v6651 = vld [vmem:[#allocation1] sm:$0xff]
    %v6652 = vld [vmem:[#allocation1 + $0x9] sm:$0xff]
    %6653 = vst [vmem:[#allocation1] ss:$9 sm:$0xff] %v6471
    %6654 = vst [vmem:[%s6627] ss:$9 sm:$0xff] %v6473
    %6655 = vst [vmem:[%s6629] ss:$9 sm:$0xff] %v6475
    %6656 = vst [vmem:[%s6631] ss:$9 sm:$0xff] %v6477
    %6657 = vst [vmem:[%s6633] ss:$9 sm:$0xff] %v6478
    %6658 = vst [vmem:[%s6635] ss:$9 sm:$0xff] %v6480
    %6659 = vst [vmem:[%s6637] ss:$9 sm:$0xff] %v6482
    %6660 = vst [vmem:[%s6639] ss:$9 sm:$0xff] %v6484
    %v6661 = vld [vmem:[#allocation1] sm:$0xff]
    %v6662 = vld [vmem:[#allocation1 + $0x9] sm:$0xff]
    %6663 = vst [vmem:[#allocation1] ss:$9 sm:$0xff] %v6486
    %6664 = vst [vmem:[%s6627] ss:$9 sm:$0xff] %v6488
    %6665 = vst [vmem:[%s6629] ss:$9 sm:$0xff] %v6490
    %6666 = vst [vmem:[%s6631] ss:$9 sm:$0xff] %v6491
    %6667 = vst [vmem:[%s6633] ss:$9 sm:$0xff] %v6493
    %6668 = vst [vmem:[%s6635] ss:$9 sm:$0xff] %v6495
    %6669 = vst [vmem:[%s6637] ss:$9 sm:$0xff] %v6497
    %6670 = vst [vmem:[%s6639] ss:$9 sm:$0xff] %v6499
    %v6671 = vld [vmem:[#allocation1] sm:$0xff]
    %v6672 = vld [vmem:[#allocation1 + $0x9] sm:$0xff]
    %6673 = vst [vmem:[#allocation1] ss:$9 sm:$0xff] %v6501
    %6674 = vst [vmem:[%s6627] ss:$9 sm:$0xff] %v6503
    %6675 = vst [vmem:[%s6629] ss:$9 sm:$0xff] %v6504
    %6676 = vst [vmem:[%s6631] ss:$9 sm:$0xff] %v6506
    %6677 = vst [vmem:[%s6633] ss:$9 sm:$0xff] %v6508
    %6678 = vst [vmem:[%s6635] ss:$9 sm:$0xff] %v6510
    %6679 = vst [vmem:[%s6637] ss:$9 sm:$0xff] %v6512
    %6680 = vst [vmem:[%s6639] ss:$9 sm:$0xff] %v6514
    %v6681 = vld [vmem:[#allocation1] sm:$0xff]
    %v6682 = vld [vmem:[#allocation1 + $0x9] sm:$0xff]
    %6683 = vst [vmem:[#allocation1] ss:$9 sm:$0xff] %v6516
    %6684 = vst [vmem:[%s6627] ss:$9 sm:$0xff] %v6517
    %6685 = vst [vmem:[%s6629] ss:$9 sm:$0xff] %v6590
    %6686 = vst [vmem:[%s6631] ss:$9 sm:$0xff] %v6592
    %6687 = vst [vmem:[%s6633] ss:$9 sm:$0xff] %v6594
    %6688 = vst [vmem:[%s6635] ss:$9 sm:$0xff] %v6596
    %6689 = vst [vmem:[%s6637] ss:$9 sm:$0xff] %v6598
    %6690 = vst [vmem:[%s6639] ss:$9 sm:$0xff] %v6600
    %v6691 = vld [vmem:[#allocation1] sm:$0xff]
    %v6692 = vld [vmem:[#allocation1 + $0x9] sm:$0xff]
    %6693 = vst [vmem:[#allocation1] ss:$9 sm:$0xff] %v6601
    %v6694 = vld [vmem:[#allocation1] sm:$0xff]
    %v6695 = vld [vmem:[#allocation1 + $0x9] sm:$0xff]
    %v6727 = vunpack.c.l.b16 %v6602
    %v6728 = vunpack.c.l.b16 %v6603
    %v6729 = vunpack.c.l.b16 %v6604
    %v6730 = vunpack.c.l.b16 %v6605
    %v6731 = vunpack.c.l.b16 %v6606
    %v6732 = vunpack.c.l.b16 %v6607
    %v6733 = vunpack.c.l.b16 %v6608
    %v6734 = vunpack.c.l.b16 %v6609
    %v6735 = vunpack.c.l.b16 %v6610
    %v6736 = vunpack.c.l.b16 %v6611
    %v6737 = vunpack.c.l.b16 %v6612
    %v6738 = vunpack.c.l.b16 %v6613
    %v6739 = vunpack.c.l.b16 %v6614
    %v6740 = vunpack.c.l.b16 %v6615
    %v6741 = vunpack.c.l.b16 %v6616
    %v6742 = vunpack.c.l.b16 %v6617
    %v6743 = vunpack.c.l.b16 %v6618
    %v6744 = vunpack.c.l.b16 %v6619
    %v6745 = vunpack.c.l.b16 %v6620
    %v6746 = vunpack.c.l.b16 %v6621
    %v6747 = vunpack.c.l.b16 %v6622
    %v6748 = vunpack.c.l.b16 %v6623
    %v6749 = vunpack.c.l.b16 %v6624
    %v6750 = vunpack.c.l.b16 %v6625
    %v6751 = vpack.c.b16 %v6728, %v6727
    %v6752 = vpack.c.b16 %v6730, %v6729
    %v6753 = vpack.c.b16 %v6732, %v6731
    %v6754 = vpack.c.b16 %v6734, %v6733
    %v6755 = vpack.c.b16 %v6736, %v6735
    %v6756 = vpack.c.b16 %v6738, %v6737
    %v6757 = vpack.c.b16 %v6740, %v6739
    %v6758 = vpack.c.b16 %v6742, %v6741
    %v6759 = vpack.c.b16 %v6744, %v6743
    %v6760 = vpack.c.b16 %v6746, %v6745
    %v6761 = vpack.c.b16 %v6748, %v6747
    %v6762 = vpack.c.b16 %v6750, %v6749
    %v6775 = vsel %vm788, %v6642, 0
    %v6777 = vsel %vm788, %v6652, 0
    %v6779 = vsel %vm788, %v6662, 0
    %v6781 = vsel %vm788, %v6672, 0
    %v6783 = vsel %vm788, %v6682, 0
    %v6785 = vsel %vm788, %v6692, 0
    %v6787 = vsel %vm788, %v6695, 0
    %6789 = vmatpush.bf16.msra.mxu0 %v6758
    %6790 = vmatpush.bf16.msra.mxu0 %v6757
    %6791 = vmatpush.bf16.msra.mxu0 %v6756
    %6792 = vmatpush.bf16.msra.mxu0 %v6755
    %6793 = vmatpush.bf16.msra.mxu0 %v6754
    %6794 = vmatpush.bf16.msra.mxu0 %v6753
    %6795 = vmatpush.bf16.msra.mxu0 %v6752
    %6796 = vmatpush.bf16.msra.mxu0 %v6751
    %6797 = vmatmul.bf16.gmra.mxu0 %v6641
    %v6798 = vpop.f32.mrf.mxu0
    %v6799 = vadd.f32 0.0, %v6798
    %v6800 = vpop.f32.mrf.mxu0
    %v6801 = vadd.f32 0.0, %v6800
    %6802 = vmatmul.bf16.gmra.mxu0 %v6651
    %v6803 = vpop.f32.mrf.mxu0
    %v6804 = vadd.f32 0.0, %v6803
    %v6805 = vpop.f32.mrf.mxu0
    %v6806 = vadd.f32 0.0, %v6805
    %6807 = vmatmul.bf16.gmra.mxu0 %v6661
    %v6808 = vpop.f32.mrf.mxu0
    %v6809 = vadd.f32 0.0, %v6808
    %v6810 = vpop.f32.mrf.mxu0
    %v6811 = vadd.f32 0.0, %v6810
    %6812 = vmatmul.bf16.gmra.mxu0 %v6671
    %v6813 = vpop.f32.mrf.mxu0
    %v6814 = vadd.f32 0.0, %v6813
    %v6815 = vpop.f32.mrf.mxu0
    %v6816 = vadd.f32 0.0, %v6815
    %6817 = vmatmul.bf16.gmra.mxu0 %v6681
    %v6818 = vpop.f32.mrf.mxu0
    %v6819 = vadd.f32 0.0, %v6818
    %v6820 = vpop.f32.mrf.mxu0
    %v6821 = vadd.f32 0.0, %v6820
    %6822 = vmatmul.bf16.gmra.mxu0 %v6691
    %v6823 = vpop.f32.mrf.mxu0
    %v6824 = vadd.f32 0.0, %v6823
    %v6825 = vpop.f32.mrf.mxu0
    %v6826 = vadd.f32 0.0, %v6825
    %6827 = vmatmul.bf16.gmra.mxu0 %v6694
    %v6828 = vpop.f32.mrf.mxu0
    %v6829 = vadd.f32 0.0, %v6828
    %v6830 = vpop.f32.mrf.mxu0
    %6831 = vdwg.mxu0
    %6832 = vmatpush.bf16.msra.mxu0 0
    %6833 = vmatpush.bf16.msra.mxu0 0
    %6834 = vmatpush.bf16.msra.mxu0 0
    %6835 = vmatpush.bf16.msra.mxu0 0
    %6836 = vmatpush.bf16.msra.mxu0 %v6762
    %6837 = vmatpush.bf16.msra.mxu0 %v6761
    %6838 = vmatpush.bf16.msra.mxu0 %v6760
    %6839 = vmatpush.bf16.msra.mxu0 %v6759
    %6840 = vmatmul.bf16.gmra.mxu0 %v6775
    %v6841 = vpop.f32.mrf.mxu0
    %v6842 = vadd.f32 %v6799, %v6841
    %v6843 = vpop.f32.mrf.mxu0
    %v6844 = vadd.f32 %v6801, %v6843
    %6845 = vmatmul.bf16.gmra.mxu0 %v6777
    %v6846 = vpop.f32.mrf.mxu0
    %v6847 = vadd.f32 %v6804, %v6846
    %v6848 = vpop.f32.mrf.mxu0
    %v6849 = vadd.f32 %v6806, %v6848
    %6850 = vmatmul.bf16.gmra.mxu0 %v6779
    %v6851 = vpop.f32.mrf.mxu0
    %v6852 = vadd.f32 %v6809, %v6851
    %v6853 = vpop.f32.mrf.mxu0
    %v6854 = vadd.f32 %v6811, %v6853
    %6855 = vmatmul.bf16.gmra.mxu0 %v6781
    %v6856 = vpop.f32.mrf.mxu0
    %v6857 = vadd.f32 %v6814, %v6856
    %v6858 = vpop.f32.mrf.mxu0
    %v6859 = vadd.f32 %v6816, %v6858
    %6860 = vmatmul.bf16.gmra.mxu0 %v6783
    %v6861 = vpop.f32.mrf.mxu0
    %v6862 = vadd.f32 %v6819, %v6861
    %v6863 = vpop.f32.mrf.mxu0
    %v6864 = vadd.f32 %v6821, %v6863
    %6865 = vmatmul.bf16.gmra.mxu0 %v6785
    %v6866 = vpop.f32.mrf.mxu0
    %v6867 = vadd.f32 %v6824, %v6866
    %v6868 = vpop.f32.mrf.mxu0
    %v6869 = vadd.f32 %v6826, %v6868
    %6870 = vmatmul.bf16.gmra.mxu0 %v6787
    %v6871 = vpop.f32.mrf.mxu0
    %v6872 = vadd.f32 %v6829, %v6871
    %v6873 = vpop.f32.mrf.mxu0
    %6874 = vdwg.mxu0
    %6875 = vst [vmem:[#allocation1] ss:$9 sm:$0xff] %v1497
    %s6876 = scalar_lea.vmem [#allocation1], 1
    %6877 = vst [vmem:[%s6876] ss:$9 sm:$0xff] %v1497
    %s6878 = scalar_lea.vmem [#allocation1], 2
    %6879 = vst [vmem:[%s6878] ss:$9 sm:$0xff] %v1497
    %s6880 = scalar_lea.vmem [#allocation1], 3
    %6881 = vst [vmem:[%s6880] ss:$9 sm:$0xff] %v1497
    %s6882 = scalar_lea.vmem [#allocation1], 4
    %6883 = vst [vmem:[%s6882] ss:$9 sm:$0xff] %v1497
    %s6884 = scalar_lea.vmem [#allocation1], 5
    %6885 = vst [vmem:[%s6884] ss:$9 sm:$0xff] %v1497
    %s6886 = scalar_lea.vmem [#allocation1], 6
    %6887 = vst [vmem:[%s6886] ss:$9 sm:$0xff] %v1497
    %s6888 = scalar_lea.vmem [#allocation1], 7
    %6889 = vst [vmem:[%s6888] ss:$9 sm:$0xff] %v6441
    %v6890 = vld [vmem:[#allocation1] sm:$0xff]
    %v6891 = vld [vmem:[#allocation1 + $0x9] sm:$0xff]
    %6892 = vst [vmem:[#allocation1] ss:$9 sm:$0xff] %v6443
    %6893 = vst [vmem:[%s6876] ss:$9 sm:$0xff] %v6445
    %6894 = vst [vmem:[%s6878] ss:$9 sm:$0xff] %v6447
    %6895 = vst [vmem:[%s6880] ss:$9 sm:$0xff] %v6449
    %6896 = vst [vmem:[%s6882] ss:$9 sm:$0xff] %v6451
    %6897 = vst [vmem:[%s6884] ss:$9 sm:$0xff] %v6452
    %6898 = vst [vmem:[%s6886] ss:$9 sm:$0xff] %v6454
    %6899 = vst [vmem:[%s6888] ss:$9 sm:$0xff] %v6456
    %v6900 = vld [vmem:[#allocation1] sm:$0xff]
    %v6901 = vld [vmem:[#allocation1 + $0x9] sm:$0xff]
    %6902 = vst [vmem:[#allocation1] ss:$9 sm:$0xff] %v6458
    %6903 = vst [vmem:[%s6876] ss:$9 sm:$0xff] %v6460
    %6904 = vst [vmem:[%s6878] ss:$9 sm:$0xff] %v6462
    %6905 = vst [vmem:[%s6880] ss:$9 sm:$0xff] %v6464
    %6906 = vst [vmem:[%s6882] ss:$9 sm:$0xff] %v6465
    %6907 = vst [vmem:[%s6884] ss:$9 sm:$0xff] %v6467
    %6908 = vst [vmem:[%s6886] ss:$9 sm:$0xff] %v6469
    %6909 = vst [vmem:[%s6888] ss:$9 sm:$0xff] %v6471
    %v6910 = vld [vmem:[#allocation1] sm:$0xff]
    %v6911 = vld [vmem:[#allocation1 + $0x9] sm:$0xff]
    %6912 = vst [vmem:[#allocation1] ss:$9 sm:$0xff] %v6473
    %6913 = vst [vmem:[%s6876] ss:$9 sm:$0xff] %v6475
    %6914 = vst [vmem:[%s6878] ss:$9 sm:$0xff] %v6477
    %6915 = vst [vmem:[%s6880] ss:$9 sm:$0xff] %v6478
    %6916 = vst [vmem:[%s6882] ss:$9 sm:$0xff] %v6480
    %6917 = vst [vmem:[%s6884] ss:$9 sm:$0xff] %v6482
    %6918 = vst [vmem:[%s6886] ss:$9 sm:$0xff] %v6484
    %6919 = vst [vmem:[%s6888] ss:$9 sm:$0xff] %v6486
    %v6920 = vld [vmem:[#allocation1] sm:$0xff]
    %v6921 = vld [vmem:[#allocation1 + $0x9] sm:$0xff]
    %6922 = vst [vmem:[#allocation1] ss:$9 sm:$0xff] %v6488
    %6923 = vst [vmem:[%s6876] ss:$9 sm:$0xff] %v6490
    %6924 = vst [vmem:[%s6878] ss:$9 sm:$0xff] %v6491
    %6925 = vst [vmem:[%s6880] ss:$9 sm:$0xff] %v6493
    %6926 = vst [vmem:[%s6882] ss:$9 sm:$0xff] %v6495
    %6927 = vst [vmem:[%s6884] ss:$9 sm:$0xff] %v6497
    %6928 = vst [vmem:[%s6886] ss:$9 sm:$0xff] %v6499
    %6929 = vst [vmem:[%s6888] ss:$9 sm:$0xff] %v6501
    %v6930 = vld [vmem:[#allocation1] sm:$0xff]
    %v6931 = vld [vmem:[#allocation1 + $0x9] sm:$0xff]
    %6932 = vst [vmem:[#allocation1] ss:$9 sm:$0xff] %v6503
    %6933 = vst [vmem:[%s6876] ss:$9 sm:$0xff] %v6504
    %6934 = vst [vmem:[%s6878] ss:$9 sm:$0xff] %v6506
    %6935 = vst [vmem:[%s6880] ss:$9 sm:$0xff] %v6508
    %6936 = vst [vmem:[%s6882] ss:$9 sm:$0xff] %v6510
    %6937 = vst [vmem:[%s6884] ss:$9 sm:$0xff] %v6512
    %6938 = vst [vmem:[%s6886] ss:$9 sm:$0xff] %v6514
    %6939 = vst [vmem:[%s6888] ss:$9 sm:$0xff] %v6516
    %v6940 = vld [vmem:[#allocation1] sm:$0xff]
    %v6941 = vld [vmem:[#allocation1 + $0x9] sm:$0xff]
    %6942 = vst [vmem:[#allocation1] ss:$9 sm:$0xff] %v6517
    %v6943 = vld [vmem:[#allocation1] sm:$0xff]
    %v6944 = vld [vmem:[#allocation1 + $0x9] sm:$0xff]
    %v6976 = vunpack.c.l.b16 %v6518
    %v6977 = vunpack.c.l.b16 %v6519
    %v6978 = vunpack.c.l.b16 %v6520
    %v6979 = vunpack.c.l.b16 %v6521
    %v6980 = vunpack.c.l.b16 %v6522
    %v6981 = vunpack.c.l.b16 %v6523
    %v6982 = vunpack.c.l.b16 %v6524
    %v6983 = vunpack.c.l.b16 %v6525
    %v6984 = vunpack.c.l.b16 %v6526
    %v6985 = vunpack.c.l.b16 %v6527
    %v6986 = vunpack.c.l.b16 %v6528
    %v6987 = vunpack.c.l.b16 %v6529
    %v6988 = vunpack.c.l.b16 %v6530
    %v6989 = vunpack.c.l.b16 %v6531
    %v6990 = vunpack.c.l.b16 %v6532
    %v6991 = vunpack.c.l.b16 %v6533
    %v6992 = vunpack.c.l.b16 %v6534
    %v6993 = vunpack.c.l.b16 %v6535
    %v6994 = vunpack.c.l.b16 %v6536
    %v6995 = vunpack.c.l.b16 %v6537
    %v6996 = vunpack.c.l.b16 %v6538
    %v6997 = vunpack.c.l.b16 %v6539
    %v6998 = vunpack.c.l.b16 %v6540
    %v6999 = vunpack.c.l.b16 %v6541
    %v7000 = vpack.c.b16 %v6977, %v6976
    %v7001 = vpack.c.b16 %v6979, %v6978
    %v7002 = vpack.c.b16 %v6981, %v6980
    %v7003 = vpack.c.b16 %v6983, %v6982
    %v7004 = vpack.c.b16 %v6985, %v6984
    %v7005 = vpack.c.b16 %v6987, %v6986
    %v7006 = vpack.c.b16 %v6989, %v6988
    %v7007 = vpack.c.b16 %v6991, %v6990
    %v7008 = vpack.c.b16 %v6993, %v6992
    %v7009 = vpack.c.b16 %v6995, %v6994
    %v7010 = vpack.c.b16 %v6997, %v6996
    %v7011 = vpack.c.b16 %v6999, %v6998
    %v7024 = vsel %vm788, %v6891, 0
    %v7026 = vsel %vm788, %v6901, 0
    %v7028 = vsel %vm788, %v6911, 0
    %v7030 = vsel %vm788, %v6921, 0
    %v7032 = vsel %vm788, %v6931, 0
    %v7034 = vsel %vm788, %v6941, 0
    %v7036 = vsel %vm788, %v6944, 0
    %7038 = vmatpush.bf16.msra.mxu0 %v7007
    %7039 = vmatpush.bf16.msra.mxu0 %v7006
    %7040 = vmatpush.bf16.msra.mxu0 %v7005
    %7041 = vmatpush.bf16.msra.mxu0 %v7004
    %7042 = vmatpush.bf16.msra.mxu0 %v7003
    %7043 = vmatpush.bf16.msra.mxu0 %v7002
    %7044 = vmatpush.bf16.msra.mxu0 %v7001
    %7045 = vmatpush.bf16.msra.mxu0 %v7000
    %7046 = vmatmul.bf16.gmra.mxu0 %v6890
    %v7047 = vpop.f32.mrf.mxu0
    %v7048 = vadd.f32 %v6842, %v7047
    %v7049 = vpop.f32.mrf.mxu0
    %v7050 = vadd.f32 %v6844, %v7049
    %7051 = vmatmul.bf16.gmra.mxu0 %v6900
    %v7052 = vpop.f32.mrf.mxu0
    %v7053 = vadd.f32 %v6847, %v7052
    %v7054 = vpop.f32.mrf.mxu0
    %v7055 = vadd.f32 %v6849, %v7054
    %7056 = vmatmul.bf16.gmra.mxu0 %v6910
    %v7057 = vpop.f32.mrf.mxu0
    %v7058 = vadd.f32 %v6852, %v7057
    %v7059 = vpop.f32.mrf.mxu0
    %v7060 = vadd.f32 %v6854, %v7059
    %7061 = vmatmul.bf16.gmra.mxu0 %v6920
    %v7062 = vpop.f32.mrf.mxu0
    %v7063 = vadd.f32 %v6857, %v7062
    %v7064 = vpop.f32.mrf.mxu0
    %v7065 = vadd.f32 %v6859, %v7064
    %7066 = vmatmul.bf16.gmra.mxu0 %v6930
    %v7067 = vpop.f32.mrf.mxu0
    %v7068 = vadd.f32 %v6862, %v7067
    %v7069 = vpop.f32.mrf.mxu0
    %v7070 = vadd.f32 %v6864, %v7069
    %7071 = vmatmul.bf16.gmra.mxu0 %v6940
    %v7072 = vpop.f32.mrf.mxu0
    %v7073 = vadd.f32 %v6867, %v7072
    %v7074 = vpop.f32.mrf.mxu0
    %v7075 = vadd.f32 %v6869, %v7074
    %7076 = vmatmul.bf16.gmra.mxu0 %v6943
    %v7077 = vpop.f32.mrf.mxu0
    %v7078 = vadd.f32 %v6872, %v7077
    %v7079 = vpop.f32.mrf.mxu0
    %7080 = vdwg.mxu0
    %7081 = vmatpush.bf16.msra.mxu0 0
    %7082 = vmatpush.bf16.msra.mxu0 0
    %7083 = vmatpush.bf16.msra.mxu0 0
    %7084 = vmatpush.bf16.msra.mxu0 0
    %7085 = vmatpush.bf16.msra.mxu0 %v7011
    %7086 = vmatpush.bf16.msra.mxu0 %v7010
    %7087 = vmatpush.bf16.msra.mxu0 %v7009
    %7088 = vmatpush.bf16.msra.mxu0 %v7008
    %7089 = vmatmul.bf16.gmra.mxu0 %v7024
    %v7090 = vpop.f32.mrf.mxu0
    %v7091 = vadd.f32 %v7048, %v7090
    %v7092 = vpop.f32.mrf.mxu0
    %v7093 = vadd.f32 %v7050, %v7092
    %7094 = vmatmul.bf16.gmra.mxu0 %v7026
    %v7095 = vpop.f32.mrf.mxu0
    %v7096 = vadd.f32 %v7053, %v7095
    %v7097 = vpop.f32.mrf.mxu0
    %v7098 = vadd.f32 %v7055, %v7097
    %7099 = vmatmul.bf16.gmra.mxu0 %v7028
    %v7100 = vpop.f32.mrf.mxu0
    %v7101 = vadd.f32 %v7058, %v7100
    %v7102 = vpop.f32.mrf.mxu0
    %v7103 = vadd.f32 %v7060, %v7102
    %7104 = vmatmul.bf16.gmra.mxu0 %v7030
    %v7105 = vpop.f32.mrf.mxu0
    %v7106 = vadd.f32 %v7063, %v7105
    %v7107 = vpop.f32.mrf.mxu0
    %v7108 = vadd.f32 %v7065, %v7107
    %7109 = vmatmul.bf16.gmra.mxu0 %v7032
    %v7110 = vpop.f32.mrf.mxu0
    %v7111 = vadd.f32 %v7068, %v7110
    %v7112 = vpop.f32.mrf.mxu0
    %v7113 = vadd.f32 %v7070, %v7112
    %7114 = vmatmul.bf16.gmra.mxu0 %v7034
    %v7115 = vpop.f32.mrf.mxu0
    %v7116 = vadd.f32 %v7073, %v7115
    %v7117 = vpop.f32.mrf.mxu0
    %v7118 = vadd.f32 %v7075, %v7117
    %7119 = vmatmul.bf16.gmra.mxu0 %v7036
    %v7120 = vpop.f32.mrf.mxu0
    %v7121 = vadd.f32 %v7078, %v7120
    %v7122 = vpop.f32.mrf.mxu0
    %7123 = vdwg.mxu0
    %v7124 = vld [vmem:[%s3 + $0xc0] sm:$0xf]
    %v7125 = vld [vmem:[%s3 + $0xc4] sm:$0xf]
    %v7126 = vld [vmem:[%s3 + $0xc8] sm:$0xf]
    %v7127 = vld [vmem:[%s3 + $0xcc] sm:$0xf]
    %v7128 = vld [vmem:[%s3 + $0xd0] sm:$0xf]
    %v7129 = vld [vmem:[%s3 + $0xd4] sm:$0xf]
    %v7130 = vld [vmem:[%s3 + $0xd8] sm:$0xf]
    %v7131 = vld [vmem:[%s3 + $0xdc] sm:$0xf]
    %v7132 = vld [vmem:[%s3 + $0xe0] sm:$0xf]
    %v7133 = vld [vmem:[%s3 + $0xe4] sm:$0xf]
    %v7134 = vld [vmem:[%s3 + $0xe8] sm:$0xf]
    %v7135 = vld [vmem:[%s3 + $0xec] sm:$0xf]
    %v7136 = vld [vmem:[%s3 + $0xf0] sm:$0xf]
    %v7137 = vld [vmem:[%s3 + $0xf4] sm:$0xf]
    %v7138 = vld [vmem:[%s3 + $0xf8] sm:$0xf]
    %v7139 = vld [vmem:[%s3 + $0xfc] sm:$0xf]
    %v7140 = vld [vmem:[%s3 + $0x100] sm:$0xf]
    %v7141 = vld [vmem:[%s3 + $0x104] sm:$0xf]
    %v7142 = vld [vmem:[%s3 + $0x108] sm:$0xf]
    %v7143 = vld [vmem:[%s3 + $0x10c] sm:$0xf]
    %v7144 = vld [vmem:[%s3 + $0x110] sm:$0xf]
    %v7145 = vld [vmem:[%s3 + $0x114] sm:$0xf]
    %v7146 = vld [vmem:[%s3 + $0x118] sm:$0xf]
    %v7147 = vld [vmem:[%s3 + $0x11c] sm:$0xf]
    %7148 = vst [vmem:[#allocation1] ss:$9 sm:$0xff] %v6454
    %s7149 = scalar_lea.vmem [#allocation1], 1
    %7150 = vst [vmem:[%s7149] ss:$9 sm:$0xff] %v6456
    %s7151 = scalar_lea.vmem [#allocation1], 2
    %7152 = vst [vmem:[%s7151] ss:$9 sm:$0xff] %v6458
    %s7153 = scalar_lea.vmem [#allocation1], 3
    %7154 = vst [vmem:[%s7153] ss:$9 sm:$0xff] %v6460
    %s7155 = scalar_lea.vmem [#allocation1], 4
    %7156 = vst [vmem:[%s7155] ss:$9 sm:$0xff] %v6462
    %s7157 = scalar_lea.vmem [#allocation1], 5
    %7158 = vst [vmem:[%s7157] ss:$9 sm:$0xff] %v6464
    %s7159 = scalar_lea.vmem [#allocation1], 6
    %7160 = vst [vmem:[%s7159] ss:$9 sm:$0xff] %v6465
    %s7161 = scalar_lea.vmem [#allocation1], 7
    %7162 = vst [vmem:[%s7161] ss:$9 sm:$0xff] %v6467
    %v7163 = vld [vmem:[#allocation1] sm:$0xff]
    %v7164 = vld [vmem:[#allocation1 + $0x9] sm:$0xff]
    %7165 = vst [vmem:[#allocation1] ss:$9 sm:$0xff] %v6469
    %7166 = vst [vmem:[%s7149] ss:$9 sm:$0xff] %v6471
    %7167 = vst [vmem:[%s7151] ss:$9 sm:$0xff] %v6473
    %7168 = vst [vmem:[%s7153] ss:$9 sm:$0xff] %v6475
    %7169 = vst [vmem:[%s7155] ss:$9 sm:$0xff] %v6477
    %7170 = vst [vmem:[%s7157] ss:$9 sm:$0xff] %v6478
    %7171 = vst [vmem:[%s7159] ss:$9 sm:$0xff] %v6480
    %7172 = vst [vmem:[%s7161] ss:$9 sm:$0xff] %v6482
    %v7173 = vld [vmem:[#allocation1] sm:$0xff]
    %v7174 = vld [vmem:[#allocation1 + $0x9] sm:$0xff]
    %7175 = vst [vmem:[#allocation1] ss:$9 sm:$0xff] %v6484
    %7176 = vst [vmem:[%s7149] ss:$9 sm:$0xff] %v6486
    %7177 = vst [vmem:[%s7151] ss:$9 sm:$0xff] %v6488
    %7178 = vst [vmem:[%s7153] ss:$9 sm:$0xff] %v6490
    %7179 = vst [vmem:[%s7155] ss:$9 sm:$0xff] %v6491
    %7180 = vst [vmem:[%s7157] ss:$9 sm:$0xff] %v6493
    %7181 = vst [vmem:[%s7159] ss:$9 sm:$0xff] %v6495
    %7182 = vst [vmem:[%s7161] ss:$9 sm:$0xff] %v6497
    %v7183 = vld [vmem:[#allocation1] sm:$0xff]
    %v7184 = vld [vmem:[#allocation1 + $0x9] sm:$0xff]
    %7185 = vst [vmem:[#allocation1] ss:$9 sm:$0xff] %v6499
    %7186 = vst [vmem:[%s7149] ss:$9 sm:$0xff] %v6501
    %7187 = vst [vmem:[%s7151] ss:$9 sm:$0xff] %v6503
    %7188 = vst [vmem:[%s7153] ss:$9 sm:$0xff] %v6504
    %7189 = vst [vmem:[%s7155] ss:$9 sm:$0xff] %v6506
    %7190 = vst [vmem:[%s7157] ss:$9 sm:$0xff] %v6508
    %7191 = vst [vmem:[%s7159] ss:$9 sm:$0xff] %v6510
    %7192 = vst [vmem:[%s7161] ss:$9 sm:$0xff] %v6512
    %v7193 = vld [vmem:[#allocation1] sm:$0xff]
    %v7194 = vld [vmem:[#allocation1 + $0x9] sm:$0xff]
    %7195 = vst [vmem:[#allocation1] ss:$9 sm:$0xff] %v6514
    %7196 = vst [vmem:[%s7149] ss:$9 sm:$0xff] %v6516
    %7197 = vst [vmem:[%s7151] ss:$9 sm:$0xff] %v6517
    %7198 = vst [vmem:[%s7153] ss:$9 sm:$0xff] %v6590
    %7199 = vst [vmem:[%s7155] ss:$9 sm:$0xff] %v6592
    %7200 = vst [vmem:[%s7157] ss:$9 sm:$0xff] %v6594
    %7201 = vst [vmem:[%s7159] ss:$9 sm:$0xff] %v6596
    %7202 = vst [vmem:[%s7161] ss:$9 sm:$0xff] %v6598
    %v7203 = vld [vmem:[#allocation1] sm:$0xff]
    %v7204 = vld [vmem:[#allocation1 + $0x9] sm:$0xff]
    %7205 = vst [vmem:[#allocation1] ss:$9 sm:$0xff] %v6600
    %7206 = vst [vmem:[%s7149] ss:$9 sm:$0xff] %v6601
    %7207 = vst [vmem:[%s7151] ss:$9 sm:$0xff] %v1497
    %7208 = vst [vmem:[%s7153] ss:$9 sm:$0xff] %v1497
    %7209 = vst [vmem:[%s7155] ss:$9 sm:$0xff] %v1497
    %7210 = vst [vmem:[%s7157] ss:$9 sm:$0xff] %v1497
    %7211 = vst [vmem:[%s7159] ss:$9 sm:$0xff] %v1497
    %7212 = vst [vmem:[%s7161] ss:$9 sm:$0xff] %v1497
    %v7213 = vld [vmem:[#allocation1] sm:$0xff]
    %v7214 = vld [vmem:[#allocation1 + $0x9] sm:$0xff]
    %7215 = vst [vmem:[#allocation1] ss:$9 sm:$0xff] %v1497
    %v7216 = vld [vmem:[#allocation1] sm:$0xff]
    %v7217 = vld [vmem:[#allocation1 + $0x9] sm:$0xff]
    %v7249 = vunpack.c.l.b16 %v7124
    %v7250 = vunpack.c.l.b16 %v7125
    %v7251 = vunpack.c.l.b16 %v7126
    %v7252 = vunpack.c.l.b16 %v7127
    %v7253 = vunpack.c.l.b16 %v7128
    %v7254 = vunpack.c.l.b16 %v7129
    %v7255 = vunpack.c.l.b16 %v7130
    %v7256 = vunpack.c.l.b16 %v7131
    %v7257 = vunpack.c.l.b16 %v7132
    %v7258 = vunpack.c.l.b16 %v7133
    %v7259 = vunpack.c.l.b16 %v7134
    %v7260 = vunpack.c.l.b16 %v7135
    %v7261 = vunpack.c.l.b16 %v7136
    %v7262 = vunpack.c.l.b16 %v7137
    %v7263 = vunpack.c.l.b16 %v7138
    %v7264 = vunpack.c.l.b16 %v7139
    %v7265 = vunpack.c.l.b16 %v7140
    %v7266 = vunpack.c.l.b16 %v7141
    %v7267 = vunpack.c.l.b16 %v7142
    %v7268 = vunpack.c.l.b16 %v7143
    %v7269 = vunpack.c.l.b16 %v7144
    %v7270 = vunpack.c.l.b16 %v7145
    %v7271 = vunpack.c.l.b16 %v7146
    %v7272 = vunpack.c.l.b16 %v7147
    %v7273 = vpack.c.b16 %v7250, %v7249
    %v7274 = vpack.c.b16 %v7252, %v7251
    %v7275 = vpack.c.b16 %v7254, %v7253
    %v7276 = vpack.c.b16 %v7256, %v7255
    %v7277 = vpack.c.b16 %v7258, %v7257
    %v7278 = vpack.c.b16 %v7260, %v7259
    %v7279 = vpack.c.b16 %v7262, %v7261
    %v7280 = vpack.c.b16 %v7264, %v7263
    %v7281 = vpack.c.b16 %v7266, %v7265
    %v7282 = vpack.c.b16 %v7268, %v7267
    %v7283 = vpack.c.b16 %v7270, %v7269
    %v7284 = vpack.c.b16 %v7272, %v7271
    %v7297 = vsel %vm788, %v7164, 0
    %v7299 = vsel %vm788, %v7174, 0
    %v7301 = vsel %vm788, %v7184, 0
    %v7303 = vsel %vm788, %v7194, 0
    %v7305 = vsel %vm788, %v7204, 0
    %v7307 = vsel %vm788, %v7214, 0
    %v7309 = vsel %vm788, %v7217, 0
    %7311 = vmatpush.bf16.msra.mxu0 %v7280
    %7312 = vmatpush.bf16.msra.mxu0 %v7279
    %7313 = vmatpush.bf16.msra.mxu0 %v7278
    %7314 = vmatpush.bf16.msra.mxu0 %v7277
    %7315 = vmatpush.bf16.msra.mxu0 %v7276
    %7316 = vmatpush.bf16.msra.mxu0 %v7275
    %7317 = vmatpush.bf16.msra.mxu0 %v7274
    %7318 = vmatpush.bf16.msra.mxu0 %v7273
    %7319 = vmatmul.bf16.gmra.mxu0 %v7163
    %v7320 = vpop.f32.mrf.mxu0
    %v7321 = vadd.f32 0.0, %v7320
    %v7322 = vpop.f32.mrf.mxu0
    %v7323 = vadd.f32 0.0, %v7322
    %7324 = vmatmul.bf16.gmra.mxu0 %v7173
    %v7325 = vpop.f32.mrf.mxu0
    %v7326 = vadd.f32 0.0, %v7325
    %v7327 = vpop.f32.mrf.mxu0
    %v7328 = vadd.f32 0.0, %v7327
    %7329 = vmatmul.bf16.gmra.mxu0 %v7183
    %v7330 = vpop.f32.mrf.mxu0
    %v7331 = vadd.f32 0.0, %v7330
    %v7332 = vpop.f32.mrf.mxu0
    %v7333 = vadd.f32 0.0, %v7332
    %7334 = vmatmul.bf16.gmra.mxu0 %v7193
    %v7335 = vpop.f32.mrf.mxu0
    %v7336 = vadd.f32 0.0, %v7335
    %v7337 = vpop.f32.mrf.mxu0
    %v7338 = vadd.f32 0.0, %v7337
    %7339 = vmatmul.bf16.gmra.mxu0 %v7203
    %v7340 = vpop.f32.mrf.mxu0
    %v7341 = vadd.f32 0.0, %v7340
    %v7342 = vpop.f32.mrf.mxu0
    %v7343 = vadd.f32 0.0, %v7342
    %7344 = vmatmul.bf16.gmra.mxu0 %v7213
    %v7345 = vpop.f32.mrf.mxu0
    %v7346 = vadd.f32 0.0, %v7345
    %v7347 = vpop.f32.mrf.mxu0
    %v7348 = vadd.f32 0.0, %v7347
    %7349 = vmatmul.bf16.gmra.mxu0 %v7216
    %v7350 = vpop.f32.mrf.mxu0
    %v7351 = vadd.f32 0.0, %v7350
    %v7352 = vpop.f32.mrf.mxu0
    %7353 = vdwg.mxu0
    %7354 = vmatpush.bf16.msra.mxu0 0
    %7355 = vmatpush.bf16.msra.mxu0 0
    %7356 = vmatpush.bf16.msra.mxu0 0
    %7357 = vmatpush.bf16.msra.mxu0 0
    %7358 = vmatpush.bf16.msra.mxu0 %v7284
    %7359 = vmatpush.bf16.msra.mxu0 %v7283
    %7360 = vmatpush.bf16.msra.mxu0 %v7282
    %7361 = vmatpush.bf16.msra.mxu0 %v7281
    %7362 = vmatmul.bf16.gmra.mxu0 %v7297
    %v7363 = vpop.f32.mrf.mxu0
    %v7364 = vadd.f32 %v7321, %v7363
    %v7365 = vpop.f32.mrf.mxu0
    %v7366 = vadd.f32 %v7323, %v7365
    %7367 = vmatmul.bf16.gmra.mxu0 %v7299
    %v7368 = vpop.f32.mrf.mxu0
    %v7369 = vadd.f32 %v7326, %v7368
    %v7370 = vpop.f32.mrf.mxu0
    %v7371 = vadd.f32 %v7328, %v7370
    %7372 = vmatmul.bf16.gmra.mxu0 %v7301
    %v7373 = vpop.f32.mrf.mxu0
    %v7374 = vadd.f32 %v7331, %v7373
    %v7375 = vpop.f32.mrf.mxu0
    %v7376 = vadd.f32 %v7333, %v7375
    %7377 = vmatmul.bf16.gmra.mxu0 %v7303
    %v7378 = vpop.f32.mrf.mxu0
    %v7379 = vadd.f32 %v7336, %v7378
    %v7380 = vpop.f32.mrf.mxu0
    %v7381 = vadd.f32 %v7338, %v7380
    %7382 = vmatmul.bf16.gmra.mxu0 %v7305
    %v7383 = vpop.f32.mrf.mxu0
    %v7384 = vadd.f32 %v7341, %v7383
    %v7385 = vpop.f32.mrf.mxu0
    %v7386 = vadd.f32 %v7343, %v7385
    %7387 = vmatmul.bf16.gmra.mxu0 %v7307
    %v7388 = vpop.f32.mrf.mxu0
    %v7389 = vadd.f32 %v7346, %v7388
    %v7390 = vpop.f32.mrf.mxu0
    %v7391 = vadd.f32 %v7348, %v7390
    %7392 = vmatmul.bf16.gmra.mxu0 %v7309
    %v7393 = vpop.f32.mrf.mxu0
    %v7394 = vadd.f32 %v7351, %v7393
    %v7395 = vpop.f32.mrf.mxu0
    %7396 = vdwg.mxu0
    %v7397 = vadd.f32 %v7091, %v7364
    %v7398 = vadd.f32 %v7093, %v7366
    %v7399 = vadd.f32 %v7096, %v7369
    %v7400 = vadd.f32 %v7098, %v7371
    %v7401 = vadd.f32 %v7101, %v7374
    %v7402 = vadd.f32 %v7103, %v7376
    %v7403 = vadd.f32 %v7106, %v7379
    %v7404 = vadd.f32 %v7108, %v7381
    %v7405 = vadd.f32 %v7111, %v7384
    %v7406 = vadd.f32 %v7113, %v7386
    %v7407 = vadd.f32 %v7116, %v7389
    %v7408 = vadd.f32 %v7118, %v7391
    %v7409 = vadd.f32 %v7121, %v7394
    %v7410 = vld [vmem:[%s4] sm:$0x1]
    %v7412 = vperm.slane %v7410, 0
    %v7414 = vadd.f32 %v7397, %v7412
    %v7415 = vadd.f32 %v7398, %v7412
    %v7416 = vadd.f32 %v7399, %v7412
    %v7417 = vadd.f32 %v7400, %v7412
    %v7418 = vadd.f32 %v7401, %v7412
    %v7419 = vadd.f32 %v7402, %v7412
    %v7420 = vadd.f32 %v7403, %v7412
    %v7421 = vadd.f32 %v7404, %v7412
    %v7422 = vadd.f32 %v7405, %v7412
    %v7423 = vadd.f32 %v7406, %v7412
    %v7424 = vadd.f32 %v7407, %v7412
    %v7425 = vadd.f32 %v7408, %v7412
    %v7426 = vadd.f32 %v7409, %v7412
    %v7427 = vmax.f32 %v7414, 0.0
    %v7428 = vmax.f32 %v7415, 0.0
    %v7429 = vmax.f32 %v7416, 0.0
    %v7430 = vmax.f32 %v7417, 0.0
    %v7431 = vmax.f32 %v7418, 0.0
    %v7432 = vmax.f32 %v7419, 0.0
    %v7433 = vmax.f32 %v7420, 0.0
    %v7434 = vmax.f32 %v7421, 0.0
    %v7435 = vmax.f32 %v7422, 0.0
    %v7436 = vmax.f32 %v7423, 0.0
    %v7437 = vmax.f32 %v7424, 0.0
    %v7438 = vmax.f32 %v7425, 0.0
    %v7439 = vmax.f32 %v7426, 0.0
    %v7452 = vrot.slane %v7427, 2
    %v7453 = vrot.slane %v7427, 4
    %v7454 = vrot.slane %v7427, 6
    %v7455 = vrot.slane %v7428, 2
    %v7456 = vrot.slane %v7428, 4
    %v7457 = vrot.slane %v7428, 6
    %v7458 = vrot.slane %v7429, 2
    %v7459 = vrot.slane %v7429, 4
    %v7460 = vrot.slane %v7429, 6
    %v7461 = vrot.slane %v7430, 2
    %v7462 = vrot.slane %v7430, 4
    %v7463 = vrot.slane %v7430, 6
    %v7464 = vrot.slane %v7431, 2
    %v7465 = vrot.slane %v7431, 4
    %v7466 = vrot.slane %v7431, 6
    %v7467 = vrot.slane %v7432, 2
    %v7468 = vrot.slane %v7432, 4
    %v7469 = vrot.slane %v7432, 6
    %v7470 = vrot.slane %v7433, 2
    %v7471 = vrot.slane %v7433, 4
    %v7472 = vrot.slane %v7433, 6
    %v7473 = vrot.slane %v7434, 2
    %v7474 = vrot.slane %v7434, 4
    %v7475 = vrot.slane %v7434, 6
    %v7476 = vrot.slane %v7435, 2
    %v7477 = vrot.slane %v7435, 4
    %v7478 = vrot.slane %v7435, 6
    %v7479 = vrot.slane %v7436, 2
    %v7480 = vrot.slane %v7436, 4
    %v7481 = vrot.slane %v7436, 6
    %v7482 = vrot.slane %v7437, 2
    %v7483 = vrot.slane %v7437, 4
    %v7484 = vrot.slane %v7437, 6
    %v7485 = vrot.slane %v7438, 2
    %v7486 = vrot.slane %v7438, 4
    %v7487 = vrot.slane %v7438, 6
    %v7524 = vpack.c.bf16 %v7427, %v7427
    %v7525 = vpack.c.bf16 %v7452, %v7452
    %v7526 = vpack.c.bf16 %v7453, %v7453
    %v7527 = vpack.c.bf16 %v7454, %v7454
    %v7528 = vpack.c.bf16 %v7428, %v7428
    %v7529 = vpack.c.bf16 %v7455, %v7455
    %v7530 = vpack.c.bf16 %v7456, %v7456
    %v7531 = vpack.c.bf16 %v7457, %v7457
    %v7532 = vpack.c.bf16 %v7429, %v7429
    %v7533 = vpack.c.bf16 %v7458, %v7458
    %v7534 = vpack.c.bf16 %v7459, %v7459
    %v7535 = vpack.c.bf16 %v7460, %v7460
    %v7536 = vpack.c.bf16 %v7430, %v7430
    %v7537 = vpack.c.bf16 %v7461, %v7461
    %v7538 = vpack.c.bf16 %v7462, %v7462
    %v7539 = vpack.c.bf16 %v7463, %v7463
    %v7540 = vpack.c.bf16 %v7431, %v7431
    %v7541 = vpack.c.bf16 %v7464, %v7464
    %v7542 = vpack.c.bf16 %v7465, %v7465
    %v7543 = vpack.c.bf16 %v7466, %v7466
    %v7544 = vpack.c.bf16 %v7432, %v7432
    %v7545 = vpack.c.bf16 %v7467, %v7467
    %v7546 = vpack.c.bf16 %v7468, %v7468
    %v7547 = vpack.c.bf16 %v7469, %v7469
    %v7548 = vpack.c.bf16 %v7433, %v7433
    %v7549 = vpack.c.bf16 %v7470, %v7470
    %v7550 = vpack.c.bf16 %v7471, %v7471
    %v7551 = vpack.c.bf16 %v7472, %v7472
    %v7552 = vpack.c.bf16 %v7434, %v7434
    %v7553 = vpack.c.bf16 %v7473, %v7473
    %v7554 = vpack.c.bf16 %v7474, %v7474
    %v7555 = vpack.c.bf16 %v7475, %v7475
    %v7556 = vpack.c.bf16 %v7435, %v7435
    %v7557 = vpack.c.bf16 %v7476, %v7476
    %v7558 = vpack.c.bf16 %v7477, %v7477
    %v7559 = vpack.c.bf16 %v7478, %v7478
    %v7560 = vpack.c.bf16 %v7436, %v7436
    %v7561 = vpack.c.bf16 %v7479, %v7479
    %v7562 = vpack.c.bf16 %v7480, %v7480
    %v7563 = vpack.c.bf16 %v7481, %v7481
    %v7564 = vpack.c.bf16 %v7437, %v7437
    %v7565 = vpack.c.bf16 %v7482, %v7482
    %v7566 = vpack.c.bf16 %v7483, %v7483
    %v7567 = vpack.c.bf16 %v7484, %v7484
    %v7568 = vpack.c.bf16 %v7438, %v7438
    %v7569 = vpack.c.bf16 %v7485, %v7485
    %v7570 = vpack.c.bf16 %v7486, %v7486
    %v7571 = vpack.c.bf16 %v7487, %v7487
    %v7572 = vpack.c.bf16 %v7439, %v7439
    %7615 = vrot.lane.b32.xlu0 %v7524, 64
    %v7616 = vpop.permute.xlu0 %7615
    %7617 = vrot.lane.b32.xlu0 %v7525, 64
    %v7618 = vpop.permute.xlu0 %7617
    %7619 = vrot.lane.b32.xlu0 %v7526, 64
    %v7620 = vpop.permute.xlu0 %7619
    %7621 = vrot.lane.b32.xlu0 %v7527, 64
    %v7622 = vpop.permute.xlu0 %7621
    %7623 = vrot.lane.b32.xlu0 %v7528, 64
    %v7624 = vpop.permute.xlu0 %7623
    %7625 = vrot.lane.b32.xlu0 %v7529, 64
    %v7626 = vpop.permute.xlu0 %7625
    %7627 = vrot.lane.b32.xlu0 %v7530, 64
    %v7628 = vpop.permute.xlu0 %7627
    %7629 = vrot.lane.b32.xlu0 %v7531, 64
    %v7630 = vpop.permute.xlu0 %7629
    %7631 = vrot.lane.b32.xlu0 %v7532, 64
    %v7632 = vpop.permute.xlu0 %7631
    %7633 = vrot.lane.b32.xlu0 %v7533, 64
    %v7634 = vpop.permute.xlu0 %7633
    %7635 = vrot.lane.b32.xlu0 %v7534, 64
    %v7636 = vpop.permute.xlu0 %7635
    %7637 = vrot.lane.b32.xlu0 %v7535, 64
    %v7638 = vpop.permute.xlu0 %7637
    %7639 = vrot.lane.b32.xlu0 %v7536, 64
    %v7640 = vpop.permute.xlu0 %7639
    %7641 = vrot.lane.b32.xlu0 %v7537, 64
    %v7642 = vpop.permute.xlu0 %7641
    %7643 = vrot.lane.b32.xlu0 %v7538, 64
    %v7644 = vpop.permute.xlu0 %7643
    %7645 = vrot.lane.b32.xlu0 %v7539, 64
    %v7646 = vpop.permute.xlu0 %7645
    %7647 = vrot.lane.b32.xlu0 %v7540, 64
    %v7648 = vpop.permute.xlu0 %7647
    %7649 = vrot.lane.b32.xlu0 %v7541, 64
    %v7650 = vpop.permute.xlu0 %7649
    %7651 = vrot.lane.b32.xlu0 %v7542, 64
    %v7652 = vpop.permute.xlu0 %7651
    %7653 = vrot.lane.b32.xlu0 %v7543, 64
    %v7654 = vpop.permute.xlu0 %7653
    %7655 = vrot.lane.b32.xlu0 %v7544, 64
    %v7656 = vpop.permute.xlu0 %7655
    %7657 = vrot.lane.b32.xlu0 %v7545, 64
    %v7658 = vpop.permute.xlu0 %7657
    %7659 = vrot.lane.b32.xlu0 %v7546, 64
    %v7660 = vpop.permute.xlu0 %7659
    %7661 = vrot.lane.b32.xlu0 %v7547, 64
    %v7662 = vpop.permute.xlu0 %7661
    %7663 = vrot.lane.b32.xlu0 %v7548, 64
    %v7664 = vpop.permute.xlu0 %7663
    %7665 = vrot.lane.b32.xlu0 %v7549, 64
    %v7666 = vpop.permute.xlu0 %7665
    %7667 = vrot.lane.b32.xlu0 %v7550, 64
    %v7668 = vpop.permute.xlu0 %7667
    %7669 = vrot.lane.b32.xlu0 %v7551, 64
    %v7670 = vpop.permute.xlu0 %7669
    %7671 = vrot.lane.b32.xlu0 %v7552, 64
    %v7672 = vpop.permute.xlu0 %7671
    %7673 = vrot.lane.b32.xlu0 %v7553, 64
    %v7674 = vpop.permute.xlu0 %7673
    %7675 = vrot.lane.b32.xlu0 %v7554, 64
    %v7676 = vpop.permute.xlu0 %7675
    %7677 = vrot.lane.b32.xlu0 %v7555, 64
    %v7678 = vpop.permute.xlu0 %7677
    %7679 = vrot.lane.b32.xlu0 %v7556, 64
    %v7680 = vpop.permute.xlu0 %7679
    %7681 = vrot.lane.b32.xlu0 %v7557, 64
    %v7682 = vpop.permute.xlu0 %7681
    %7683 = vrot.lane.b32.xlu0 %v7558, 64
    %v7684 = vpop.permute.xlu0 %7683
    %7685 = vrot.lane.b32.xlu0 %v7559, 64
    %v7686 = vpop.permute.xlu0 %7685
    %7687 = vrot.lane.b32.xlu0 %v7560, 64
    %v7688 = vpop.permute.xlu0 %7687
    %7689 = vrot.lane.b32.xlu0 %v7561, 64
    %v7690 = vpop.permute.xlu0 %7689
    %7691 = vrot.lane.b32.xlu0 %v7562, 64
    %v7692 = vpop.permute.xlu0 %7691
    %7693 = vrot.lane.b32.xlu0 %v7563, 64
    %v7694 = vpop.permute.xlu0 %7693
    %7695 = vrot.lane.b32.xlu0 %v7564, 64
    %v7696 = vpop.permute.xlu0 %7695
    %7697 = vrot.lane.b32.xlu0 %v7565, 64
    %v7698 = vpop.permute.xlu0 %7697
    %v7700 = vsel %vm788, 0, %v7616
    %v7703 = vsel %vm788, %v7524, %v7618
    %v7706 = vsel %vm788, %v7525, %v7620
    %v7709 = vsel %vm788, %v7526, %v7622
    %v7712 = vsel %vm788, %v7527, %v7624
    %v7715 = vsel %vm788, %v7528, %v7626
    %v7718 = vsel %vm788, %v7529, %v7628
    %v7720 = vsel %vm788, 0, %v7630
    %v7723 = vsel %vm788, %v7531, %v7632
    %v7726 = vsel %vm788, %v7532, %v7634
    %v7729 = vsel %vm788, %v7533, %v7636
    %v7732 = vsel %vm788, %v7534, %v7638
    %v7735 = vsel %vm788, %v7535, %v7640
    %v7738 = vsel %vm788, %v7536, %v7642
    %v7740 = vsel %vm788, 0, %v7644
    %v7743 = vsel %vm788, %v7538, %v7646
    %v7746 = vsel %vm788, %v7539, %v7648
    %v7749 = vsel %vm788, %v7540, %v7650
    %v7752 = vsel %vm788, %v7541, %v7652
    %v7755 = vsel %vm788, %v7542, %v7654
    %v7758 = vsel %vm788, %v7543, %v7656
    %v7760 = vsel %vm788, 0, %v7658
    %v7763 = vsel %vm788, %v7545, %v7660
    %v7766 = vsel %vm788, %v7546, %v7662
    %v7769 = vsel %vm788, %v7547, %v7664
    %v7772 = vsel %vm788, %v7548, %v7666
    %v7775 = vsel %vm788, %v7549, %v7668
    %v7778 = vsel %vm788, %v7550, %v7670
    %v7780 = vsel %vm788, 0, %v7672
    %v7783 = vsel %vm788, %v7552, %v7674
    %v7786 = vsel %vm788, %v7553, %v7676
    %v7789 = vsel %vm788, %v7554, %v7678
    %v7792 = vsel %vm788, %v7555, %v7680
    %v7795 = vsel %vm788, %v7556, %v7682
    %v7798 = vsel %vm788, %v7557, %v7684
    %v7800 = vsel %vm788, 0, %v7686
    %v7803 = vsel %vm788, %v7559, %v7688
    %v7806 = vsel %vm788, %v7560, %v7690
    %v7809 = vsel %vm788, %v7561, %v7692
    %v7812 = vsel %vm788, %v7562, %v7694
    %v7815 = vsel %vm788, %v7563, %v7696
    %v7818 = vsel %vm788, %v7564, %v7698
    %v7819 = vrot.slane %v7525, 7
    %v7820 = vrot.slane %v7526, 7
    %v7821 = vrot.slane %v7527, 7
    %v7822 = vrot.slane %v7528, 7
    %v7823 = vrot.slane %v7529, 7
    %v7824 = vrot.slane %v7530, 7
    %v7825 = vrot.slane %v7532, 7
    %v7826 = vrot.slane %v7533, 7
    %v7827 = vrot.slane %v7534, 7
    %v7828 = vrot.slane %v7535, 7
    %v7829 = vrot.slane %v7536, 7
    %v7830 = vrot.slane %v7537, 7
    %v7831 = vrot.slane %v7539, 7
    %v7832 = vrot.slane %v7540, 7
    %v7833 = vrot.slane %v7541, 7
    %v7834 = vrot.slane %v7542, 7
    %v7835 = vrot.slane %v7543, 7
    %v7836 = vrot.slane %v7544, 7
    %v7837 = vrot.slane %v7546, 7
    %v7838 = vrot.slane %v7547, 7
    %v7839 = vrot.slane %v7548, 7
    %v7840 = vrot.slane %v7549, 7
    %v7841 = vrot.slane %v7550, 7
    %v7842 = vrot.slane %v7551, 7
    %v7843 = vrot.slane %v7553, 7
    %v7844 = vrot.slane %v7554, 7
    %v7845 = vrot.slane %v7555, 7
    %v7846 = vrot.slane %v7556, 7
    %v7847 = vrot.slane %v7557, 7
    %v7848 = vrot.slane %v7558, 7
    %v7849 = vrot.slane %v7560, 7
    %v7850 = vrot.slane %v7561, 7
    %v7851 = vrot.slane %v7562, 7
    %v7852 = vrot.slane %v7563, 7
    %v7853 = vrot.slane %v7564, 7
    %v7854 = vrot.slane %v7565, 7
    %v7856 = vsel %vm1495, %v7700, %v7819
    %v7858 = vsel %vm1495, %v7703, %v7820
    %v7860 = vsel %vm1495, %v7706, %v7821
    %v7862 = vsel %vm1495, %v7709, %v7822
    %v7864 = vsel %vm1495, %v7712, %v7823
    %v7866 = vsel %vm1495, %v7715, %v7824
    %v7867 = vsel %vm1495, %v7718, %v1325
    %v7869 = vsel %vm1495, %v7720, %v7825
    %v7871 = vsel %vm1495, %v7723, %v7826
    %v7873 = vsel %vm1495, %v7726, %v7827
    %v7875 = vsel %vm1495, %v7729, %v7828
    %v7877 = vsel %vm1495, %v7732, %v7829
    %v7879 = vsel %vm1495, %v7735, %v7830
    %v7880 = vsel %vm1495, %v7738, %v1325
    %v7882 = vsel %vm1495, %v7740, %v7831
    %v7884 = vsel %vm1495, %v7743, %v7832
    %v7886 = vsel %vm1495, %v7746, %v7833
    %v7888 = vsel %vm1495, %v7749, %v7834
    %v7890 = vsel %vm1495, %v7752, %v7835
    %v7892 = vsel %vm1495, %v7755, %v7836
    %v7893 = vsel %vm1495, %v7758, %v1325
    %v7895 = vsel %vm1495, %v7760, %v7837
    %v7897 = vsel %vm1495, %v7763, %v7838
    %v7899 = vsel %vm1495, %v7766, %v7839
    %v7901 = vsel %vm1495, %v7769, %v7840
    %v7903 = vsel %vm1495, %v7772, %v7841
    %v7905 = vsel %vm1495, %v7775, %v7842
    %v7906 = vsel %vm1495, %v7778, %v1325
    %v7908 = vsel %vm1495, %v7780, %v7843
    %v7910 = vsel %vm1495, %v7783, %v7844
    %v7912 = vsel %vm1495, %v7786, %v7845
    %v7914 = vsel %vm1495, %v7789, %v7846
    %v7916 = vsel %vm1495, %v7792, %v7847
    %v7918 = vsel %vm1495, %v7795, %v7848
    %v7919 = vsel %vm1495, %v7798, %v1325
    %v7921 = vsel %vm1495, %v7800, %v7849
    %v7923 = vsel %vm1495, %v7803, %v7850
    %v7925 = vsel %vm1495, %v7806, %v7851
    %v7927 = vsel %vm1495, %v7809, %v7852
    %v7929 = vsel %vm1495, %v7812, %v7853
    %v7931 = vsel %vm1495, %v7815, %v7854
    %v7932 = vsel %vm1495, %v7818, %v1325
    %v7933 = vld [vmem:[%s5] sm:$0xf]
    %v7934 = vld [vmem:[%s5 + $0x4] sm:$0xf]
    %v7935 = vld [vmem:[%s5 + $0x8] sm:$0xf]
    %v7936 = vld [vmem:[%s5 + $0xc] sm:$0xf]
    %v7937 = vld [vmem:[%s5 + $0x10] sm:$0xf]
    %v7938 = vld [vmem:[%s5 + $0x14] sm:$0xf]
    %v7939 = vld [vmem:[%s5 + $0x18] sm:$0xf]
    %v7940 = vld [vmem:[%s5 + $0x1c] sm:$0xf]
    %v7941 = vld [vmem:[%s5 + $0x20] sm:$0xf]
    %v7942 = vld [vmem:[%s5 + $0x24] sm:$0xf]
    %v7943 = vld [vmem:[%s5 + $0x28] sm:$0xf]
    %v7944 = vld [vmem:[%s5 + $0x2c] sm:$0xf]
    %v7945 = vld [vmem:[%s5 + $0x30] sm:$0xf]
    %v7946 = vld [vmem:[%s5 + $0x34] sm:$0xf]
    %v7947 = vld [vmem:[%s5 + $0x38] sm:$0xf]
    %v7948 = vld [vmem:[%s5 + $0x3c] sm:$0xf]
    %v7949 = vld [vmem:[%s5 + $0x40] sm:$0xf]
    %v7950 = vld [vmem:[%s5 + $0x44] sm:$0xf]
    %v7951 = vld [vmem:[%s5 + $0x48] sm:$0xf]
    %v7952 = vld [vmem:[%s5 + $0x4c] sm:$0xf]
    %v7953 = vld [vmem:[%s5 + $0x50] sm:$0xf]
    %v7954 = vld [vmem:[%s5 + $0x54] sm:$0xf]
    %v7955 = vld [vmem:[%s5 + $0x58] sm:$0xf]
    %v7956 = vld [vmem:[%s5 + $0x5c] sm:$0xf]
    %7964 = vrot.lane.b32.xlu0 %v7566, 64
    %v7965 = vpop.permute.xlu0 %7964
    %7966 = vrot.lane.b32.xlu0 %v7567, 64
    %v7967 = vpop.permute.xlu0 %7966
    %7968 = vrot.lane.b32.xlu0 %v7568, 64
    %v7969 = vpop.permute.xlu0 %7968
    %7970 = vrot.lane.b32.xlu0 %v7569, 64
    %v7971 = vpop.permute.xlu0 %7970
    %7972 = vrot.lane.b32.xlu0 %v7570, 64
    %v7973 = vpop.permute.xlu0 %7972
    %7974 = vrot.lane.b32.xlu0 %v7571, 64
    %v7975 = vpop.permute.xlu0 %7974
    %7976 = vrot.lane.b32.xlu0 %v7572, 64
    %v7977 = vpop.permute.xlu0 %7976
    %v7979 = vsel %vm788, 0, %v7965
    %v7982 = vsel %vm788, %v7566, %v7967
    %v7985 = vsel %vm788, %v7567, %v7969
    %v7988 = vsel %vm788, %v7568, %v7971
    %v7991 = vsel %vm788, %v7569, %v7973
    %v7994 = vsel %vm788, %v7570, %v7975
    %v7997 = vsel %vm788, %v7571, %v7977
    %v7998 = vrot.slane %v7567, 7
    %v7999 = vrot.slane %v7568, 7
    %v8000 = vrot.slane %v7569, 7
    %v8001 = vrot.slane %v7570, 7
    %v8002 = vrot.slane %v7571, 7
    %v8003 = vrot.slane %v7572, 7
    %v8005 = vsel %vm1495, %v7979, %v7998
    %v8007 = vsel %vm1495, %v7982, %v7999
    %v8009 = vsel %vm1495, %v7985, %v8000
    %v8011 = vsel %vm1495, %v7988, %v8001
    %v8013 = vsel %vm1495, %v7991, %v8002
    %v8015 = vsel %vm1495, %v7994, %v8003
    %v8016 = vsel %vm1495, %v7997, %v1325
    %v8017 = vld [vmem:[%s5 + $0x60] sm:$0xf]
    %v8018 = vld [vmem:[%s5 + $0x64] sm:$0xf]
    %v8019 = vld [vmem:[%s5 + $0x68] sm:$0xf]
    %v8020 = vld [vmem:[%s5 + $0x6c] sm:$0xf]
    %v8021 = vld [vmem:[%s5 + $0x70] sm:$0xf]
    %v8022 = vld [vmem:[%s5 + $0x74] sm:$0xf]
    %v8023 = vld [vmem:[%s5 + $0x78] sm:$0xf]
    %v8024 = vld [vmem:[%s5 + $0x7c] sm:$0xf]
    %v8025 = vld [vmem:[%s5 + $0x80] sm:$0xf]
    %v8026 = vld [vmem:[%s5 + $0x84] sm:$0xf]
    %v8027 = vld [vmem:[%s5 + $0x88] sm:$0xf]
    %v8028 = vld [vmem:[%s5 + $0x8c] sm:$0xf]
    %v8029 = vld [vmem:[%s5 + $0x90] sm:$0xf]
    %v8030 = vld [vmem:[%s5 + $0x94] sm:$0xf]
    %v8031 = vld [vmem:[%s5 + $0x98] sm:$0xf]
    %v8032 = vld [vmem:[%s5 + $0x9c] sm:$0xf]
    %v8033 = vld [vmem:[%s5 + $0xa0] sm:$0xf]
    %v8034 = vld [vmem:[%s5 + $0xa4] sm:$0xf]
    %v8035 = vld [vmem:[%s5 + $0xa8] sm:$0xf]
    %v8036 = vld [vmem:[%s5 + $0xac] sm:$0xf]
    %v8037 = vld [vmem:[%s5 + $0xb0] sm:$0xf]
    %v8038 = vld [vmem:[%s5 + $0xb4] sm:$0xf]
    %v8039 = vld [vmem:[%s5 + $0xb8] sm:$0xf]
    %v8040 = vld [vmem:[%s5 + $0xbc] sm:$0xf]
    %8041 = vst [vmem:[#allocation1] ss:$9 sm:$0xff] %v7856
    %s8042 = scalar_lea.vmem [#allocation1], 1
    %8043 = vst [vmem:[%s8042] ss:$9 sm:$0xff] %v7858
    %s8044 = scalar_lea.vmem [#allocation1], 2
    %8045 = vst [vmem:[%s8044] ss:$9 sm:$0xff] %v7860
    %s8046 = scalar_lea.vmem [#allocation1], 3
    %8047 = vst [vmem:[%s8046] ss:$9 sm:$0xff] %v7862
    %s8048 = scalar_lea.vmem [#allocation1], 4
    %8049 = vst [vmem:[%s8048] ss:$9 sm:$0xff] %v7864
    %s8050 = scalar_lea.vmem [#allocation1], 5
    %8051 = vst [vmem:[%s8050] ss:$9 sm:$0xff] %v7866
    %s8052 = scalar_lea.vmem [#allocation1], 6
    %8053 = vst [vmem:[%s8052] ss:$9 sm:$0xff] %v7867
    %s8054 = scalar_lea.vmem [#allocation1], 7
    %8055 = vst [vmem:[%s8054] ss:$9 sm:$0xff] %v7869
    %v8056 = vld [vmem:[#allocation1] sm:$0xff]
    %v8057 = vld [vmem:[#allocation1 + $0x9] sm:$0xff]
    %8058 = vst [vmem:[#allocation1] ss:$9 sm:$0xff] %v7871
    %8059 = vst [vmem:[%s8042] ss:$9 sm:$0xff] %v7873
    %8060 = vst [vmem:[%s8044] ss:$9 sm:$0xff] %v7875
    %8061 = vst [vmem:[%s8046] ss:$9 sm:$0xff] %v7877
    %8062 = vst [vmem:[%s8048] ss:$9 sm:$0xff] %v7879
    %8063 = vst [vmem:[%s8050] ss:$9 sm:$0xff] %v7880
    %8064 = vst [vmem:[%s8052] ss:$9 sm:$0xff] %v7882
    %8065 = vst [vmem:[%s8054] ss:$9 sm:$0xff] %v7884
    %v8066 = vld [vmem:[#allocation1] sm:$0xff]
    %v8067 = vld [vmem:[#allocation1 + $0x9] sm:$0xff]
    %8068 = vst [vmem:[#allocation1] ss:$9 sm:$0xff] %v7886
    %8069 = vst [vmem:[%s8042] ss:$9 sm:$0xff] %v7888
    %8070 = vst [vmem:[%s8044] ss:$9 sm:$0xff] %v7890
    %8071 = vst [vmem:[%s8046] ss:$9 sm:$0xff] %v7892
    %8072 = vst [vmem:[%s8048] ss:$9 sm:$0xff] %v7893
    %8073 = vst [vmem:[%s8050] ss:$9 sm:$0xff] %v7895
    %8074 = vst [vmem:[%s8052] ss:$9 sm:$0xff] %v7897
    %8075 = vst [vmem:[%s8054] ss:$9 sm:$0xff] %v7899
    %v8076 = vld [vmem:[#allocation1] sm:$0xff]
    %v8077 = vld [vmem:[#allocation1 + $0x9] sm:$0xff]
    %8078 = vst [vmem:[#allocation1] ss:$9 sm:$0xff] %v7901
    %8079 = vst [vmem:[%s8042] ss:$9 sm:$0xff] %v7903
    %8080 = vst [vmem:[%s8044] ss:$9 sm:$0xff] %v7905
    %8081 = vst [vmem:[%s8046] ss:$9 sm:$0xff] %v7906
    %8082 = vst [vmem:[%s8048] ss:$9 sm:$0xff] %v7908
    %8083 = vst [vmem:[%s8050] ss:$9 sm:$0xff] %v7910
    %8084 = vst [vmem:[%s8052] ss:$9 sm:$0xff] %v7912
    %8085 = vst [vmem:[%s8054] ss:$9 sm:$0xff] %v7914
    %v8086 = vld [vmem:[#allocation1] sm:$0xff]
    %v8087 = vld [vmem:[#allocation1 + $0x9] sm:$0xff]
    %8088 = vst [vmem:[#allocation1] ss:$9 sm:$0xff] %v7916
    %8089 = vst [vmem:[%s8042] ss:$9 sm:$0xff] %v7918
    %8090 = vst [vmem:[%s8044] ss:$9 sm:$0xff] %v7919
    %8091 = vst [vmem:[%s8046] ss:$9 sm:$0xff] %v7921
    %8092 = vst [vmem:[%s8048] ss:$9 sm:$0xff] %v7923
    %8093 = vst [vmem:[%s8050] ss:$9 sm:$0xff] %v7925
    %8094 = vst [vmem:[%s8052] ss:$9 sm:$0xff] %v7927
    %8095 = vst [vmem:[%s8054] ss:$9 sm:$0xff] %v7929
    %v8096 = vld [vmem:[#allocation1] sm:$0xff]
    %v8097 = vld [vmem:[#allocation1 + $0x9] sm:$0xff]
    %8098 = vst [vmem:[#allocation1] ss:$9 sm:$0xff] %v7931
    %8099 = vst [vmem:[%s8042] ss:$9 sm:$0xff] %v7932
    %8100 = vst [vmem:[%s8044] ss:$9 sm:$0xff] %v8005
    %8101 = vst [vmem:[%s8046] ss:$9 sm:$0xff] %v8007
    %8102 = vst [vmem:[%s8048] ss:$9 sm:$0xff] %v8009
    %8103 = vst [vmem:[%s8050] ss:$9 sm:$0xff] %v8011
    %8104 = vst [vmem:[%s8052] ss:$9 sm:$0xff] %v8013
    %8105 = vst [vmem:[%s8054] ss:$9 sm:$0xff] %v8015
    %v8106 = vld [vmem:[#allocation1] sm:$0xff]
    %v8107 = vld [vmem:[#allocation1 + $0x9] sm:$0xff]
    %8108 = vst [vmem:[#allocation1] ss:$9 sm:$0xff] %v8016
    %v8109 = vld [vmem:[#allocation1] sm:$0xff]
    %v8110 = vld [vmem:[#allocation1 + $0x9] sm:$0xff]
    %v8142 = vunpack.c.l.b16 %v8017
    %v8143 = vunpack.c.l.b16 %v8018
    %v8144 = vunpack.c.l.b16 %v8019
    %v8145 = vunpack.c.l.b16 %v8020
    %v8146 = vunpack.c.l.b16 %v8021
    %v8147 = vunpack.c.l.b16 %v8022
    %v8148 = vunpack.c.l.b16 %v8023
    %v8149 = vunpack.c.l.b16 %v8024
    %v8150 = vunpack.c.l.b16 %v8025
    %v8151 = vunpack.c.l.b16 %v8026
    %v8152 = vunpack.c.l.b16 %v8027
    %v8153 = vunpack.c.l.b16 %v8028
    %v8154 = vunpack.c.l.b16 %v8029
    %v8155 = vunpack.c.l.b16 %v8030
    %v8156 = vunpack.c.l.b16 %v8031
    %v8157 = vunpack.c.l.b16 %v8032
    %v8158 = vunpack.c.l.b16 %v8033
    %v8159 = vunpack.c.l.b16 %v8034
    %v8160 = vunpack.c.l.b16 %v8035
    %v8161 = vunpack.c.l.b16 %v8036
    %v8162 = vunpack.c.l.b16 %v8037
    %v8163 = vunpack.c.l.b16 %v8038
    %v8164 = vunpack.c.l.b16 %v8039
    %v8165 = vunpack.c.l.b16 %v8040
    %v8166 = vpack.c.b16 %v8143, %v8142
    %v8167 = vpack.c.b16 %v8145, %v8144
    %v8168 = vpack.c.b16 %v8147, %v8146
    %v8169 = vpack.c.b16 %v8149, %v8148
    %v8170 = vpack.c.b16 %v8151, %v8150
    %v8171 = vpack.c.b16 %v8153, %v8152
    %v8172 = vpack.c.b16 %v8155, %v8154
    %v8173 = vpack.c.b16 %v8157, %v8156
    %v8174 = vpack.c.b16 %v8159, %v8158
    %v8175 = vpack.c.b16 %v8161, %v8160
    %v8176 = vpack.c.b16 %v8163, %v8162
    %v8177 = vpack.c.b16 %v8165, %v8164
    %v8190 = vsel %vm788, %v8057, 0
    %v8192 = vsel %vm788, %v8067, 0
    %v8194 = vsel %vm788, %v8077, 0
    %v8196 = vsel %vm788, %v8087, 0
    %v8198 = vsel %vm788, %v8097, 0
    %v8200 = vsel %vm788, %v8107, 0
    %v8202 = vsel %vm788, %v8110, 0
    %8204 = vmatpush.bf16.msra.mxu0 %v8173
    %8205 = vmatpush.bf16.msra.mxu0 %v8172
    %8206 = vmatpush.bf16.msra.mxu0 %v8171
    %8207 = vmatpush.bf16.msra.mxu0 %v8170
    %8208 = vmatpush.bf16.msra.mxu0 %v8169
    %8209 = vmatpush.bf16.msra.mxu0 %v8168
    %8210 = vmatpush.bf16.msra.mxu0 %v8167
    %8211 = vmatpush.bf16.msra.mxu0 %v8166
    %8212 = vmatmul.bf16.gmra.mxu0 %v8056
    %v8213 = vpop.f32.mrf.mxu0
    %v8214 = vadd.f32 0.0, %v8213
    %v8215 = vpop.f32.mrf.mxu0
    %v8216 = vadd.f32 0.0, %v8215
    %8217 = vmatmul.bf16.gmra.mxu0 %v8066
    %v8218 = vpop.f32.mrf.mxu0
    %v8219 = vadd.f32 0.0, %v8218
    %v8220 = vpop.f32.mrf.mxu0
    %v8221 = vadd.f32 0.0, %v8220
    %8222 = vmatmul.bf16.gmra.mxu0 %v8076
    %v8223 = vpop.f32.mrf.mxu0
    %v8224 = vadd.f32 0.0, %v8223
    %v8225 = vpop.f32.mrf.mxu0
    %v8226 = vadd.f32 0.0, %v8225
    %8227 = vmatmul.bf16.gmra.mxu0 %v8086
    %v8228 = vpop.f32.mrf.mxu0
    %v8229 = vadd.f32 0.0, %v8228
    %v8230 = vpop.f32.mrf.mxu0
    %v8231 = vadd.f32 0.0, %v8230
    %8232 = vmatmul.bf16.gmra.mxu0 %v8096
    %v8233 = vpop.f32.mrf.mxu0
    %v8234 = vadd.f32 0.0, %v8233
    %v8235 = vpop.f32.mrf.mxu0
    %v8236 = vadd.f32 0.0, %v8235
    %8237 = vmatmul.bf16.gmra.mxu0 %v8106
    %v8238 = vpop.f32.mrf.mxu0
    %v8239 = vadd.f32 0.0, %v8238
    %v8240 = vpop.f32.mrf.mxu0
    %v8241 = vadd.f32 0.0, %v8240
    %8242 = vmatmul.bf16.gmra.mxu0 %v8109
    %v8243 = vpop.f32.mrf.mxu0
    %v8244 = vadd.f32 0.0, %v8243
    %v8245 = vpop.f32.mrf.mxu0
    %8246 = vdwg.mxu0
    %8247 = vmatpush.bf16.msra.mxu0 0
    %8248 = vmatpush.bf16.msra.mxu0 0
    %8249 = vmatpush.bf16.msra.mxu0 0
    %8250 = vmatpush.bf16.msra.mxu0 0
    %8251 = vmatpush.bf16.msra.mxu0 %v8177
    %8252 = vmatpush.bf16.msra.mxu0 %v8176
    %8253 = vmatpush.bf16.msra.mxu0 %v8175
    %8254 = vmatpush.bf16.msra.mxu0 %v8174
    %8255 = vmatmul.bf16.gmra.mxu0 %v8190
    %v8256 = vpop.f32.mrf.mxu0
    %v8257 = vadd.f32 %v8214, %v8256
    %v8258 = vpop.f32.mrf.mxu0
    %v8259 = vadd.f32 %v8216, %v8258
    %8260 = vmatmul.bf16.gmra.mxu0 %v8192
    %v8261 = vpop.f32.mrf.mxu0
    %v8262 = vadd.f32 %v8219, %v8261
    %v8263 = vpop.f32.mrf.mxu0
    %v8264 = vadd.f32 %v8221, %v8263
    %8265 = vmatmul.bf16.gmra.mxu0 %v8194
    %v8266 = vpop.f32.mrf.mxu0
    %v8267 = vadd.f32 %v8224, %v8266
    %v8268 = vpop.f32.mrf.mxu0
    %v8269 = vadd.f32 %v8226, %v8268
    %8270 = vmatmul.bf16.gmra.mxu0 %v8196
    %v8271 = vpop.f32.mrf.mxu0
    %v8272 = vadd.f32 %v8229, %v8271
    %v8273 = vpop.f32.mrf.mxu0
    %v8274 = vadd.f32 %v8231, %v8273
    %8275 = vmatmul.bf16.gmra.mxu0 %v8198
    %v8276 = vpop.f32.mrf.mxu0
    %v8277 = vadd.f32 %v8234, %v8276
    %v8278 = vpop.f32.mrf.mxu0
    %v8279 = vadd.f32 %v8236, %v8278
    %8280 = vmatmul.bf16.gmra.mxu0 %v8200
    %v8281 = vpop.f32.mrf.mxu0
    %v8282 = vadd.f32 %v8239, %v8281
    %v8283 = vpop.f32.mrf.mxu0
    %v8284 = vadd.f32 %v8241, %v8283
    %8285 = vmatmul.bf16.gmra.mxu0 %v8202
    %v8286 = vpop.f32.mrf.mxu0
    %v8287 = vadd.f32 %v8244, %v8286
    %v8288 = vpop.f32.mrf.mxu0
    %8289 = vdwg.mxu0
    %8290 = vst [vmem:[#allocation1] ss:$9 sm:$0xff] %v1497
    %s8291 = scalar_lea.vmem [#allocation1], 1
    %8292 = vst [vmem:[%s8291] ss:$9 sm:$0xff] %v1497
    %s8293 = scalar_lea.vmem [#allocation1], 2
    %8294 = vst [vmem:[%s8293] ss:$9 sm:$0xff] %v1497
    %s8295 = scalar_lea.vmem [#allocation1], 3
    %8296 = vst [vmem:[%s8295] ss:$9 sm:$0xff] %v1497
    %s8297 = scalar_lea.vmem [#allocation1], 4
    %8298 = vst [vmem:[%s8297] ss:$9 sm:$0xff] %v1497
    %s8299 = scalar_lea.vmem [#allocation1], 5
    %8300 = vst [vmem:[%s8299] ss:$9 sm:$0xff] %v1497
    %s8301 = scalar_lea.vmem [#allocation1], 6
    %8302 = vst [vmem:[%s8301] ss:$9 sm:$0xff] %v1497
    %s8303 = scalar_lea.vmem [#allocation1], 7
    %8304 = vst [vmem:[%s8303] ss:$9 sm:$0xff] %v7856
    %v8305 = vld [vmem:[#allocation1] sm:$0xff]
    %v8306 = vld [vmem:[#allocation1 + $0x9] sm:$0xff]
    %8307 = vst [vmem:[#allocation1] ss:$9 sm:$0xff] %v7858
    %8308 = vst [vmem:[%s8291] ss:$9 sm:$0xff] %v7860
    %8309 = vst [vmem:[%s8293] ss:$9 sm:$0xff] %v7862
    %8310 = vst [vmem:[%s8295] ss:$9 sm:$0xff] %v7864
    %8311 = vst [vmem:[%s8297] ss:$9 sm:$0xff] %v7866
    %8312 = vst [vmem:[%s8299] ss:$9 sm:$0xff] %v7867
    %8313 = vst [vmem:[%s8301] ss:$9 sm:$0xff] %v7869
    %8314 = vst [vmem:[%s8303] ss:$9 sm:$0xff] %v7871
    %v8315 = vld [vmem:[#allocation1] sm:$0xff]
    %v8316 = vld [vmem:[#allocation1 + $0x9] sm:$0xff]
    %8317 = vst [vmem:[#allocation1] ss:$9 sm:$0xff] %v7873
    %8318 = vst [vmem:[%s8291] ss:$9 sm:$0xff] %v7875
    %8319 = vst [vmem:[%s8293] ss:$9 sm:$0xff] %v7877
    %8320 = vst [vmem:[%s8295] ss:$9 sm:$0xff] %v7879
    %8321 = vst [vmem:[%s8297] ss:$9 sm:$0xff] %v7880
    %8322 = vst [vmem:[%s8299] ss:$9 sm:$0xff] %v7882
    %8323 = vst [vmem:[%s8301] ss:$9 sm:$0xff] %v7884
    %8324 = vst [vmem:[%s8303] ss:$9 sm:$0xff] %v7886
    %v8325 = vld [vmem:[#allocation1] sm:$0xff]
    %v8326 = vld [vmem:[#allocation1 + $0x9] sm:$0xff]
    %8327 = vst [vmem:[#allocation1] ss:$9 sm:$0xff] %v7888
    %8328 = vst [vmem:[%s8291] ss:$9 sm:$0xff] %v7890
    %8329 = vst [vmem:[%s8293] ss:$9 sm:$0xff] %v7892
    %8330 = vst [vmem:[%s8295] ss:$9 sm:$0xff] %v7893
    %8331 = vst [vmem:[%s8297] ss:$9 sm:$0xff] %v7895
    %8332 = vst [vmem:[%s8299] ss:$9 sm:$0xff] %v7897
    %8333 = vst [vmem:[%s8301] ss:$9 sm:$0xff] %v7899
    %8334 = vst [vmem:[%s8303] ss:$9 sm:$0xff] %v7901
    %v8335 = vld [vmem:[#allocation1] sm:$0xff]
    %v8336 = vld [vmem:[#allocation1 + $0x9] sm:$0xff]
    %8337 = vst [vmem:[#allocation1] ss:$9 sm:$0xff] %v7903
    %8338 = vst [vmem:[%s8291] ss:$9 sm:$0xff] %v7905
    %8339 = vst [vmem:[%s8293] ss:$9 sm:$0xff] %v7906
    %8340 = vst [vmem:[%s8295] ss:$9 sm:$0xff] %v7908
    %8341 = vst [vmem:[%s8297] ss:$9 sm:$0xff] %v7910
    %8342 = vst [vmem:[%s8299] ss:$9 sm:$0xff] %v7912
    %8343 = vst [vmem:[%s8301] ss:$9 sm:$0xff] %v7914
    %8344 = vst [vmem:[%s8303] ss:$9 sm:$0xff] %v7916
    %v8345 = vld [vmem:[#allocation1] sm:$0xff]
    %v8346 = vld [vmem:[#allocation1 + $0x9] sm:$0xff]
    %8347 = vst [vmem:[#allocation1] ss:$9 sm:$0xff] %v7918
    %8348 = vst [vmem:[%s8291] ss:$9 sm:$0xff] %v7919
    %8349 = vst [vmem:[%s8293] ss:$9 sm:$0xff] %v7921
    %8350 = vst [vmem:[%s8295] ss:$9 sm:$0xff] %v7923
    %8351 = vst [vmem:[%s8297] ss:$9 sm:$0xff] %v7925
    %8352 = vst [vmem:[%s8299] ss:$9 sm:$0xff] %v7927
    %8353 = vst [vmem:[%s8301] ss:$9 sm:$0xff] %v7929
    %8354 = vst [vmem:[%s8303] ss:$9 sm:$0xff] %v7931
    %v8355 = vld [vmem:[#allocation1] sm:$0xff]
    %v8356 = vld [vmem:[#allocation1 + $0x9] sm:$0xff]
    %8357 = vst [vmem:[#allocation1] ss:$9 sm:$0xff] %v7932
    %v8358 = vld [vmem:[#allocation1] sm:$0xff]
    %v8359 = vld [vmem:[#allocation1 + $0x9] sm:$0xff]
    %v8391 = vunpack.c.l.b16 %v7933
    %v8392 = vunpack.c.l.b16 %v7934
    %v8393 = vunpack.c.l.b16 %v7935
    %v8394 = vunpack.c.l.b16 %v7936
    %v8395 = vunpack.c.l.b16 %v7937
    %v8396 = vunpack.c.l.b16 %v7938
    %v8397 = vunpack.c.l.b16 %v7939
    %v8398 = vunpack.c.l.b16 %v7940
    %v8399 = vunpack.c.l.b16 %v7941
    %v8400 = vunpack.c.l.b16 %v7942
    %v8401 = vunpack.c.l.b16 %v7943
    %v8402 = vunpack.c.l.b16 %v7944
    %v8403 = vunpack.c.l.b16 %v7945
    %v8404 = vunpack.c.l.b16 %v7946
    %v8405 = vunpack.c.l.b16 %v7947
    %v8406 = vunpack.c.l.b16 %v7948
    %v8407 = vunpack.c.l.b16 %v7949
    %v8408 = vunpack.c.l.b16 %v7950
    %v8409 = vunpack.c.l.b16 %v7951
    %v8410 = vunpack.c.l.b16 %v7952
    %v8411 = vunpack.c.l.b16 %v7953
    %v8412 = vunpack.c.l.b16 %v7954
    %v8413 = vunpack.c.l.b16 %v7955
    %v8414 = vunpack.c.l.b16 %v7956
    %v8415 = vpack.c.b16 %v8392, %v8391
    %v8416 = vpack.c.b16 %v8394, %v8393
    %v8417 = vpack.c.b16 %v8396, %v8395
    %v8418 = vpack.c.b16 %v8398, %v8397
    %v8419 = vpack.c.b16 %v8400, %v8399
    %v8420 = vpack.c.b16 %v8402, %v8401
    %v8421 = vpack.c.b16 %v8404, %v8403
    %v8422 = vpack.c.b16 %v8406, %v8405
    %v8423 = vpack.c.b16 %v8408, %v8407
    %v8424 = vpack.c.b16 %v8410, %v8409
    %v8425 = vpack.c.b16 %v8412, %v8411
    %v8426 = vpack.c.b16 %v8414, %v8413
    %v8439 = vsel %vm788, %v8306, 0
    %v8441 = vsel %vm788, %v8316, 0
    %v8443 = vsel %vm788, %v8326, 0
    %v8445 = vsel %vm788, %v8336, 0
    %v8447 = vsel %vm788, %v8346, 0
    %v8449 = vsel %vm788, %v8356, 0
    %v8451 = vsel %vm788, %v8359, 0
    %8453 = vmatpush.bf16.msra.mxu0 %v8422
    %8454 = vmatpush.bf16.msra.mxu0 %v8421
    %8455 = vmatpush.bf16.msra.mxu0 %v8420
    %8456 = vmatpush.bf16.msra.mxu0 %v8419
    %8457 = vmatpush.bf16.msra.mxu0 %v8418
    %8458 = vmatpush.bf16.msra.mxu0 %v8417
    %8459 = vmatpush.bf16.msra.mxu0 %v8416
    %8460 = vmatpush.bf16.msra.mxu0 %v8415
    %8461 = vmatmul.bf16.gmra.mxu0 %v8305
    %v8462 = vpop.f32.mrf.mxu0
    %v8463 = vadd.f32 %v8257, %v8462
    %v8464 = vpop.f32.mrf.mxu0
    %v8465 = vadd.f32 %v8259, %v8464
    %8466 = vmatmul.bf16.gmra.mxu0 %v8315
    %v8467 = vpop.f32.mrf.mxu0
    %v8468 = vadd.f32 %v8262, %v8467
    %v8469 = vpop.f32.mrf.mxu0
    %v8470 = vadd.f32 %v8264, %v8469
    %8471 = vmatmul.bf16.gmra.mxu0 %v8325
    %v8472 = vpop.f32.mrf.mxu0
    %v8473 = vadd.f32 %v8267, %v8472
    %v8474 = vpop.f32.mrf.mxu0
    %v8475 = vadd.f32 %v8269, %v8474
    %8476 = vmatmul.bf16.gmra.mxu0 %v8335
    %v8477 = vpop.f32.mrf.mxu0
    %v8478 = vadd.f32 %v8272, %v8477
    %v8479 = vpop.f32.mrf.mxu0
    %v8480 = vadd.f32 %v8274, %v8479
    %8481 = vmatmul.bf16.gmra.mxu0 %v8345
    %v8482 = vpop.f32.mrf.mxu0
    %v8483 = vadd.f32 %v8277, %v8482
    %v8484 = vpop.f32.mrf.mxu0
    %v8485 = vadd.f32 %v8279, %v8484
    %8486 = vmatmul.bf16.gmra.mxu0 %v8355
    %v8487 = vpop.f32.mrf.mxu0
    %v8488 = vadd.f32 %v8282, %v8487
    %v8489 = vpop.f32.mrf.mxu0
    %v8490 = vadd.f32 %v8284, %v8489
    %8491 = vmatmul.bf16.gmra.mxu0 %v8358
    %v8492 = vpop.f32.mrf.mxu0
    %v8493 = vadd.f32 %v8287, %v8492
    %v8494 = vpop.f32.mrf.mxu0
    %8495 = vdwg.mxu0
    %8496 = vmatpush.bf16.msra.mxu0 0
    %8497 = vmatpush.bf16.msra.mxu0 0
    %8498 = vmatpush.bf16.msra.mxu0 0
    %8499 = vmatpush.bf16.msra.mxu0 0
    %8500 = vmatpush.bf16.msra.mxu0 %v8426
    %8501 = vmatpush.bf16.msra.mxu0 %v8425
    %8502 = vmatpush.bf16.msra.mxu0 %v8424
    %8503 = vmatpush.bf16.msra.mxu0 %v8423
    %8504 = vmatmul.bf16.gmra.mxu0 %v8439
    %v8505 = vpop.f32.mrf.mxu0
    %v8506 = vadd.f32 %v8463, %v8505
    %v8507 = vpop.f32.mrf.mxu0
    %v8508 = vadd.f32 %v8465, %v8507
    %8509 = vmatmul.bf16.gmra.mxu0 %v8441
    %v8510 = vpop.f32.mrf.mxu0
    %v8511 = vadd.f32 %v8468, %v8510
    %v8512 = vpop.f32.mrf.mxu0
    %v8513 = vadd.f32 %v8470, %v8512
    %8514 = vmatmul.bf16.gmra.mxu0 %v8443
    %v8515 = vpop.f32.mrf.mxu0
    %v8516 = vadd.f32 %v8473, %v8515
    %v8517 = vpop.f32.mrf.mxu0
    %v8518 = vadd.f32 %v8475, %v8517
    %8519 = vmatmul.bf16.gmra.mxu0 %v8445
    %v8520 = vpop.f32.mrf.mxu0
    %v8521 = vadd.f32 %v8478, %v8520
    %v8522 = vpop.f32.mrf.mxu0
    %v8523 = vadd.f32 %v8480, %v8522
    %8524 = vmatmul.bf16.gmra.mxu0 %v8447
    %v8525 = vpop.f32.mrf.mxu0
    %v8526 = vadd.f32 %v8483, %v8525
    %v8527 = vpop.f32.mrf.mxu0
    %v8528 = vadd.f32 %v8485, %v8527
    %8529 = vmatmul.bf16.gmra.mxu0 %v8449
    %v8530 = vpop.f32.mrf.mxu0
    %v8531 = vadd.f32 %v8488, %v8530
    %v8532 = vpop.f32.mrf.mxu0
    %v8533 = vadd.f32 %v8490, %v8532
    %8534 = vmatmul.bf16.gmra.mxu0 %v8451
    %v8535 = vpop.f32.mrf.mxu0
    %v8536 = vadd.f32 %v8493, %v8535
    %v8537 = vpop.f32.mrf.mxu0
    %8538 = vdwg.mxu0
    %v8539 = vld [vmem:[%s5 + $0xc0] sm:$0xf]
    %v8540 = vld [vmem:[%s5 + $0xc4] sm:$0xf]
    %v8541 = vld [vmem:[%s5 + $0xc8] sm:$0xf]
    %v8542 = vld [vmem:[%s5 + $0xcc] sm:$0xf]
    %v8543 = vld [vmem:[%s5 + $0xd0] sm:$0xf]
    %v8544 = vld [vmem:[%s5 + $0xd4] sm:$0xf]
    %v8545 = vld [vmem:[%s5 + $0xd8] sm:$0xf]
    %v8546 = vld [vmem:[%s5 + $0xdc] sm:$0xf]
    %v8547 = vld [vmem:[%s5 + $0xe0] sm:$0xf]
    %v8548 = vld [vmem:[%s5 + $0xe4] sm:$0xf]
    %v8549 = vld [vmem:[%s5 + $0xe8] sm:$0xf]
    %v8550 = vld [vmem:[%s5 + $0xec] sm:$0xf]
    %v8551 = vld [vmem:[%s5 + $0xf0] sm:$0xf]
    %v8552 = vld [vmem:[%s5 + $0xf4] sm:$0xf]
    %v8553 = vld [vmem:[%s5 + $0xf8] sm:$0xf]
    %v8554 = vld [vmem:[%s5 + $0xfc] sm:$0xf]
    %v8555 = vld [vmem:[%s5 + $0x100] sm:$0xf]
    %v8556 = vld [vmem:[%s5 + $0x104] sm:$0xf]
    %v8557 = vld [vmem:[%s5 + $0x108] sm:$0xf]
    %v8558 = vld [vmem:[%s5 + $0x10c] sm:$0xf]
    %v8559 = vld [vmem:[%s5 + $0x110] sm:$0xf]
    %v8560 = vld [vmem:[%s5 + $0x114] sm:$0xf]
    %v8561 = vld [vmem:[%s5 + $0x118] sm:$0xf]
    %v8562 = vld [vmem:[%s5 + $0x11c] sm:$0xf]
    %8563 = vst [vmem:[#allocation1] ss:$9 sm:$0xff] %v7869
    %s8564 = scalar_lea.vmem [#allocation1], 1
    %8565 = vst [vmem:[%s8564] ss:$9 sm:$0xff] %v7871
    %s8566 = scalar_lea.vmem [#allocation1], 2
    %8567 = vst [vmem:[%s8566] ss:$9 sm:$0xff] %v7873
    %s8568 = scalar_lea.vmem [#allocation1], 3
    %8569 = vst [vmem:[%s8568] ss:$9 sm:$0xff] %v7875
    %s8570 = scalar_lea.vmem [#allocation1], 4
    %8571 = vst [vmem:[%s8570] ss:$9 sm:$0xff] %v7877
    %s8572 = scalar_lea.vmem [#allocation1], 5
    %8573 = vst [vmem:[%s8572] ss:$9 sm:$0xff] %v7879
    %s8574 = scalar_lea.vmem [#allocation1], 6
    %8575 = vst [vmem:[%s8574] ss:$9 sm:$0xff] %v7880
    %s8576 = scalar_lea.vmem [#allocation1], 7
    %8577 = vst [vmem:[%s8576] ss:$9 sm:$0xff] %v7882
    %v8578 = vld [vmem:[#allocation1] sm:$0xff]
    %v8579 = vld [vmem:[#allocation1 + $0x9] sm:$0xff]
    %8580 = vst [vmem:[#allocation1] ss:$9 sm:$0xff] %v7884
    %8581 = vst [vmem:[%s8564] ss:$9 sm:$0xff] %v7886
    %8582 = vst [vmem:[%s8566] ss:$9 sm:$0xff] %v7888
    %8583 = vst [vmem:[%s8568] ss:$9 sm:$0xff] %v7890
    %8584 = vst [vmem:[%s8570] ss:$9 sm:$0xff] %v7892
    %8585 = vst [vmem:[%s8572] ss:$9 sm:$0xff] %v7893
    %8586 = vst [vmem:[%s8574] ss:$9 sm:$0xff] %v7895
    %8587 = vst [vmem:[%s8576] ss:$9 sm:$0xff] %v7897
    %v8588 = vld [vmem:[#allocation1] sm:$0xff]
    %v8589 = vld [vmem:[#allocation1 + $0x9] sm:$0xff]
    %8590 = vst [vmem:[#allocation1] ss:$9 sm:$0xff] %v7899
    %8591 = vst [vmem:[%s8564] ss:$9 sm:$0xff] %v7901
    %8592 = vst [vmem:[%s8566] ss:$9 sm:$0xff] %v7903
    %8593 = vst [vmem:[%s8568] ss:$9 sm:$0xff] %v7905
    %8594 = vst [vmem:[%s8570] ss:$9 sm:$0xff] %v7906
    %8595 = vst [vmem:[%s8572] ss:$9 sm:$0xff] %v7908
    %8596 = vst [vmem:[%s8574] ss:$9 sm:$0xff] %v7910
    %8597 = vst [vmem:[%s8576] ss:$9 sm:$0xff] %v7912
    %v8598 = vld [vmem:[#allocation1] sm:$0xff]
    %v8599 = vld [vmem:[#allocation1 + $0x9] sm:$0xff]
    %8600 = vst [vmem:[#allocation1] ss:$9 sm:$0xff] %v7914
    %8601 = vst [vmem:[%s8564] ss:$9 sm:$0xff] %v7916
    %8602 = vst [vmem:[%s8566] ss:$9 sm:$0xff] %v7918
    %8603 = vst [vmem:[%s8568] ss:$9 sm:$0xff] %v7919
    %8604 = vst [vmem:[%s8570] ss:$9 sm:$0xff] %v7921
    %8605 = vst [vmem:[%s8572] ss:$9 sm:$0xff] %v7923
    %8606 = vst [vmem:[%s8574] ss:$9 sm:$0xff] %v7925
    %8607 = vst [vmem:[%s8576] ss:$9 sm:$0xff] %v7927
    %v8608 = vld [vmem:[#allocation1] sm:$0xff]
    %v8609 = vld [vmem:[#allocation1 + $0x9] sm:$0xff]
    %8610 = vst [vmem:[#allocation1] ss:$9 sm:$0xff] %v7929
    %8611 = vst [vmem:[%s8564] ss:$9 sm:$0xff] %v7931
    %8612 = vst [vmem:[%s8566] ss:$9 sm:$0xff] %v7932
    %8613 = vst [vmem:[%s8568] ss:$9 sm:$0xff] %v8005
    %8614 = vst [vmem:[%s8570] ss:$9 sm:$0xff] %v8007
    %8615 = vst [vmem:[%s8572] ss:$9 sm:$0xff] %v8009
    %8616 = vst [vmem:[%s8574] ss:$9 sm:$0xff] %v8011
    %8617 = vst [vmem:[%s8576] ss:$9 sm:$0xff] %v8013
    %v8618 = vld [vmem:[#allocation1] sm:$0xff]
    %v8619 = vld [vmem:[#allocation1 + $0x9] sm:$0xff]
    %8620 = vst [vmem:[#allocation1] ss:$9 sm:$0xff] %v8015
    %8621 = vst [vmem:[%s8564] ss:$9 sm:$0xff] %v8016
    %8622 = vst [vmem:[%s8566] ss:$9 sm:$0xff] %v1497
    %8623 = vst [vmem:[%s8568] ss:$9 sm:$0xff] %v1497
    %8624 = vst [vmem:[%s8570] ss:$9 sm:$0xff] %v1497
    %8625 = vst [vmem:[%s8572] ss:$9 sm:$0xff] %v1497
    %8626 = vst [vmem:[%s8574] ss:$9 sm:$0xff] %v1497
    %8627 = vst [vmem:[%s8576] ss:$9 sm:$0xff] %v1497
    %v8628 = vld [vmem:[#allocation1] sm:$0xff]
    %v8629 = vld [vmem:[#allocation1 + $0x9] sm:$0xff]
    %8630 = vst [vmem:[#allocation1] ss:$9 sm:$0xff] %v1497
    %v8631 = vld [vmem:[#allocation1] sm:$0xff]
    %v8632 = vld [vmem:[#allocation1 + $0x9] sm:$0xff]
    %v8664 = vunpack.c.l.b16 %v8539
    %v8665 = vunpack.c.l.b16 %v8540
    %v8666 = vunpack.c.l.b16 %v8541
    %v8667 = vunpack.c.l.b16 %v8542
    %v8668 = vunpack.c.l.b16 %v8543
    %v8669 = vunpack.c.l.b16 %v8544
    %v8670 = vunpack.c.l.b16 %v8545
    %v8671 = vunpack.c.l.b16 %v8546
    %v8672 = vunpack.c.l.b16 %v8547
    %v8673 = vunpack.c.l.b16 %v8548
    %v8674 = vunpack.c.l.b16 %v8549
    %v8675 = vunpack.c.l.b16 %v8550
    %v8676 = vunpack.c.l.b16 %v8551
    %v8677 = vunpack.c.l.b16 %v8552
    %v8678 = vunpack.c.l.b16 %v8553
    %v8679 = vunpack.c.l.b16 %v8554
    %v8680 = vunpack.c.l.b16 %v8555
    %v8681 = vunpack.c.l.b16 %v8556
    %v8682 = vunpack.c.l.b16 %v8557
    %v8683 = vunpack.c.l.b16 %v8558
    %v8684 = vunpack.c.l.b16 %v8559
    %v8685 = vunpack.c.l.b16 %v8560
    %v8686 = vunpack.c.l.b16 %v8561
    %v8687 = vunpack.c.l.b16 %v8562
    %v8688 = vpack.c.b16 %v8665, %v8664
    %v8689 = vpack.c.b16 %v8667, %v8666
    %v8690 = vpack.c.b16 %v8669, %v8668
    %v8691 = vpack.c.b16 %v8671, %v8670
    %v8692 = vpack.c.b16 %v8673, %v8672
    %v8693 = vpack.c.b16 %v8675, %v8674
    %v8694 = vpack.c.b16 %v8677, %v8676
    %v8695 = vpack.c.b16 %v8679, %v8678
    %v8696 = vpack.c.b16 %v8681, %v8680
    %v8697 = vpack.c.b16 %v8683, %v8682
    %v8698 = vpack.c.b16 %v8685, %v8684
    %v8699 = vpack.c.b16 %v8687, %v8686
    %v8712 = vsel %vm788, %v8579, 0
    %v8714 = vsel %vm788, %v8589, 0
    %v8716 = vsel %vm788, %v8599, 0
    %v8718 = vsel %vm788, %v8609, 0
    %v8720 = vsel %vm788, %v8619, 0
    %v8722 = vsel %vm788, %v8629, 0
    %v8724 = vsel %vm788, %v8632, 0
    %8726 = vmatpush.bf16.msra.mxu0 %v8695
    %8727 = vmatpush.bf16.msra.mxu0 %v8694
    %8728 = vmatpush.bf16.msra.mxu0 %v8693
    %8729 = vmatpush.bf16.msra.mxu0 %v8692
    %8730 = vmatpush.bf16.msra.mxu0 %v8691
    %8731 = vmatpush.bf16.msra.mxu0 %v8690
    %8732 = vmatpush.bf16.msra.mxu0 %v8689
    %8733 = vmatpush.bf16.msra.mxu0 %v8688
    %8734 = vmatmul.bf16.gmra.mxu0 %v8578
    %v8735 = vpop.f32.mrf.mxu0
    %v8736 = vadd.f32 0.0, %v8735
    %v8737 = vpop.f32.mrf.mxu0
    %v8738 = vadd.f32 0.0, %v8737
    %8739 = vmatmul.bf16.gmra.mxu0 %v8588
    %v8740 = vpop.f32.mrf.mxu0
    %v8741 = vadd.f32 0.0, %v8740
    %v8742 = vpop.f32.mrf.mxu0
    %v8743 = vadd.f32 0.0, %v8742
    %8744 = vmatmul.bf16.gmra.mxu0 %v8598
    %v8745 = vpop.f32.mrf.mxu0
    %v8746 = vadd.f32 0.0, %v8745
    %v8747 = vpop.f32.mrf.mxu0
    %v8748 = vadd.f32 0.0, %v8747
    %8749 = vmatmul.bf16.gmra.mxu0 %v8608
    %v8750 = vpop.f32.mrf.mxu0
    %v8751 = vadd.f32 0.0, %v8750
    %v8752 = vpop.f32.mrf.mxu0
    %v8753 = vadd.f32 0.0, %v8752
    %8754 = vmatmul.bf16.gmra.mxu0 %v8618
    %v8755 = vpop.f32.mrf.mxu0
    %v8756 = vadd.f32 0.0, %v8755
    %v8757 = vpop.f32.mrf.mxu0
    %v8758 = vadd.f32 0.0, %v8757
    %8759 = vmatmul.bf16.gmra.mxu0 %v8628
    %v8760 = vpop.f32.mrf.mxu0
    %v8761 = vadd.f32 0.0, %v8760
    %v8762 = vpop.f32.mrf.mxu0
    %v8763 = vadd.f32 0.0, %v8762
    %8764 = vmatmul.bf16.gmra.mxu0 %v8631
    %v8765 = vpop.f32.mrf.mxu0
    %v8766 = vadd.f32 0.0, %v8765
    %v8767 = vpop.f32.mrf.mxu0
    %8768 = vdwg.mxu0
    %8769 = vmatpush.bf16.msra.mxu0 0
    %8770 = vmatpush.bf16.msra.mxu0 0
    %8771 = vmatpush.bf16.msra.mxu0 0
    %8772 = vmatpush.bf16.msra.mxu0 0
    %8773 = vmatpush.bf16.msra.mxu0 %v8699
    %8774 = vmatpush.bf16.msra.mxu0 %v8698
    %8775 = vmatpush.bf16.msra.mxu0 %v8697
    %8776 = vmatpush.bf16.msra.mxu0 %v8696
    %8777 = vmatmul.bf16.gmra.mxu0 %v8712
    %v8778 = vpop.f32.mrf.mxu0
    %v8779 = vadd.f32 %v8736, %v8778
    %v8780 = vpop.f32.mrf.mxu0
    %v8781 = vadd.f32 %v8738, %v8780
    %8782 = vmatmul.bf16.gmra.mxu0 %v8714
    %v8783 = vpop.f32.mrf.mxu0
    %v8784 = vadd.f32 %v8741, %v8783
    %v8785 = vpop.f32.mrf.mxu0
    %v8786 = vadd.f32 %v8743, %v8785
    %8787 = vmatmul.bf16.gmra.mxu0 %v8716
    %v8788 = vpop.f32.mrf.mxu0
    %v8789 = vadd.f32 %v8746, %v8788
    %v8790 = vpop.f32.mrf.mxu0
    %v8791 = vadd.f32 %v8748, %v8790
    %8792 = vmatmul.bf16.gmra.mxu0 %v8718
    %v8793 = vpop.f32.mrf.mxu0
    %v8794 = vadd.f32 %v8751, %v8793
    %v8795 = vpop.f32.mrf.mxu0
    %v8796 = vadd.f32 %v8753, %v8795
    %8797 = vmatmul.bf16.gmra.mxu0 %v8720
    %v8798 = vpop.f32.mrf.mxu0
    %v8799 = vadd.f32 %v8756, %v8798
    %v8800 = vpop.f32.mrf.mxu0
    %v8801 = vadd.f32 %v8758, %v8800
    %8802 = vmatmul.bf16.gmra.mxu0 %v8722
    %v8803 = vpop.f32.mrf.mxu0
    %v8804 = vadd.f32 %v8761, %v8803
    %v8805 = vpop.f32.mrf.mxu0
    %v8806 = vadd.f32 %v8763, %v8805
    %8807 = vmatmul.bf16.gmra.mxu0 %v8724
    %v8808 = vpop.f32.mrf.mxu0
    %v8809 = vadd.f32 %v8766, %v8808
    %v8810 = vpop.f32.mrf.mxu0
    %8811 = vdwg.mxu0
    %v8812 = vadd.f32 %v8506, %v8779
    %v8813 = vadd.f32 %v8508, %v8781
    %v8814 = vadd.f32 %v8511, %v8784
    %v8815 = vadd.f32 %v8513, %v8786
    %v8816 = vadd.f32 %v8516, %v8789
    %v8817 = vadd.f32 %v8518, %v8791
    %v8818 = vadd.f32 %v8521, %v8794
    %v8819 = vadd.f32 %v8523, %v8796
    %v8820 = vadd.f32 %v8526, %v8799
    %v8821 = vadd.f32 %v8528, %v8801
    %v8822 = vadd.f32 %v8531, %v8804
    %v8823 = vadd.f32 %v8533, %v8806
    %v8824 = vadd.f32 %v8536, %v8809
    %v8825 = vld [vmem:[%s6] sm:$0x1]
    %v8827 = vperm.slane %v8825, 0
    %v8829 = vadd.f32 %v8812, %v8827
    %v8830 = vadd.f32 %v8813, %v8827
    %v8831 = vadd.f32 %v8814, %v8827
    %v8832 = vadd.f32 %v8815, %v8827
    %v8833 = vadd.f32 %v8816, %v8827
    %v8834 = vadd.f32 %v8817, %v8827
    %v8835 = vadd.f32 %v8818, %v8827
    %v8836 = vadd.f32 %v8819, %v8827
    %v8837 = vadd.f32 %v8820, %v8827
    %v8838 = vadd.f32 %v8821, %v8827
    %v8839 = vadd.f32 %v8822, %v8827
    %v8840 = vadd.f32 %v8823, %v8827
    %v8841 = vadd.f32 %v8824, %v8827
    %v8842 = vpack.c.bf16 %v8829, %v8829
    %v8843 = vpack.c.bf16 %v8830, %v8830
    %v8844 = vpack.c.bf16 %v8831, %v8831
    %v8845 = vpack.c.bf16 %v8832, %v8832
    %v8846 = vpack.c.bf16 %v8833, %v8833
    %v8847 = vpack.c.bf16 %v8834, %v8834
    %v8848 = vpack.c.bf16 %v8835, %v8835
    %v8849 = vpack.c.bf16 %v8836, %v8836
    %v8850 = vpack.c.bf16 %v8837, %v8837
    %v8851 = vpack.c.bf16 %v8838, %v8838
    %v8852 = vpack.c.bf16 %v8839, %v8839
    %v8853 = vpack.c.bf16 %v8840, %v8840
    %v8854 = vpack.c.bf16 %v8841, %v8841
    %v8868 = vrot.slane %v8842, 3
    %v8869 = vrot.slane %v8843, 3
    %v8870 = vrot.slane %v8844, 3
    %v8871 = vrot.slane %v8845, 3
    %v8872 = vrot.slane %v8846, 3
    %v8873 = vrot.slane %v8847, 3
    %v8874 = vrot.slane %v8848, 3
    %v8875 = vrot.slane %v8849, 3
    %v8876 = vrot.slane %v8850, 3
    %v8877 = vrot.slane %v8851, 3
    %v8878 = vrot.slane %v8852, 3
    %v8879 = vrot.slane %v8853, 3
    %v8880 = vrot.slane %v8854, 3
    %v8883 = vsel %vm1495, %v8842, %v8868
    %v8884 = vsel %vm4294, %v8842, %v8868
    %v8886 = vrot.slane %v8884, 1
    %v8887 = vsel %vm4298, %v8842, %v8868
    %v8889 = vrot.slane %v8887, 2
    %v8890 = vsel %vm4302, %v8842, %v8868
    %v8892 = vrot.slane %v8890, 3
    %v8895 = vsel %vm1495, %v8843, %v8869
    %v8896 = vsel %vm4294, %v8843, %v8869
    %v8898 = vrot.slane %v8896, 1
    %v8899 = vsel %vm4298, %v8843, %v8869
    %v8901 = vrot.slane %v8899, 2
    %v8902 = vsel %vm4302, %v8843, %v8869
    %v8904 = vrot.slane %v8902, 3
    %v8907 = vsel %vm1495, %v8844, %v8870
    %v8908 = vsel %vm4294, %v8844, %v8870
    %v8910 = vrot.slane %v8908, 1
    %v8911 = vsel %vm4298, %v8844, %v8870
    %v8913 = vrot.slane %v8911, 2
    %v8914 = vsel %vm4302, %v8844, %v8870
    %v8916 = vrot.slane %v8914, 3
    %v8919 = vsel %vm1495, %v8845, %v8871
    %v8920 = vsel %vm4294, %v8845, %v8871
    %v8922 = vrot.slane %v8920, 1
    %v8923 = vsel %vm4298, %v8845, %v8871
    %v8925 = vrot.slane %v8923, 2
    %v8926 = vsel %vm4302, %v8845, %v8871
    %v8928 = vrot.slane %v8926, 3
    %v8931 = vsel %vm1495, %v8846, %v8872
    %v8932 = vsel %vm4294, %v8846, %v8872
    %v8934 = vrot.slane %v8932, 1
    %v8935 = vsel %vm4298, %v8846, %v8872
    %v8937 = vrot.slane %v8935, 2
    %v8938 = vsel %vm4302, %v8846, %v8872
    %v8940 = vrot.slane %v8938, 3
    %v8943 = vsel %vm1495, %v8847, %v8873
    %v8944 = vsel %vm4294, %v8847, %v8873
    %v8946 = vrot.slane %v8944, 1
    %v8947 = vsel %vm4298, %v8847, %v8873
    %v8949 = vrot.slane %v8947, 2
    %v8950 = vsel %vm4302, %v8847, %v8873
    %v8952 = vrot.slane %v8950, 3
    %v8955 = vsel %vm1495, %v8848, %v8874
    %v8956 = vsel %vm4294, %v8848, %v8874
    %v8958 = vrot.slane %v8956, 1
    %v8959 = vsel %vm4298, %v8848, %v8874
    %v8961 = vrot.slane %v8959, 2
    %v8962 = vsel %vm4302, %v8848, %v8874
    %v8964 = vrot.slane %v8962, 3
    %v8967 = vsel %vm1495, %v8849, %v8875
    %v8968 = vsel %vm4294, %v8849, %v8875
    %v8970 = vrot.slane %v8968, 1
    %v8971 = vsel %vm4298, %v8849, %v8875
    %v8973 = vrot.slane %v8971, 2
    %v8974 = vsel %vm4302, %v8849, %v8875
    %v8976 = vrot.slane %v8974, 3
    %v8979 = vsel %vm1495, %v8850, %v8876
    %v8980 = vsel %vm4294, %v8850, %v8876
    %v8982 = vrot.slane %v8980, 1
    %v8983 = vsel %vm4298, %v8850, %v8876
    %v8985 = vrot.slane %v8983, 2
    %v8986 = vsel %vm4302, %v8850, %v8876
    %v8988 = vrot.slane %v8986, 3
    %v8991 = vsel %vm1495, %v8851, %v8877
    %v8992 = vsel %vm4294, %v8851, %v8877
    %v8994 = vrot.slane %v8992, 1
    %v8995 = vsel %vm4298, %v8851, %v8877
    %v8997 = vrot.slane %v8995, 2
    %v8998 = vsel %vm4302, %v8851, %v8877
    %v9000 = vrot.slane %v8998, 3
    %v9003 = vsel %vm1495, %v8852, %v8878
    %v9004 = vsel %vm4294, %v8852, %v8878
    %v9006 = vrot.slane %v9004, 1
    %v9007 = vsel %vm4298, %v8852, %v8878
    %v9009 = vrot.slane %v9007, 2
    %v9010 = vsel %vm4302, %v8852, %v8878
    %v9012 = vrot.slane %v9010, 3
    %v9015 = vsel %vm1495, %v8853, %v8879
    %v9016 = vsel %vm4294, %v8853, %v8879
    %v9018 = vrot.slane %v9016, 1
    %v9019 = vsel %vm4298, %v8853, %v8879
    %v9021 = vrot.slane %v9019, 2
    %v9022 = vsel %vm4302, %v8853, %v8879
    %v9024 = vrot.slane %v9022, 3
    %v9027 = vsel %vm1495, %v8854, %v8880
    %9077 = vst.msk [vmem:[%s13] sm:$0x1] %vm5078, %v8883
    %9078 = vst.msk [vmem:[%s13 + $0x1] sm:$0x1] %vm5078, %v8886
    %9079 = vst.msk [vmem:[%s13 + $0x2] sm:$0x1] %vm5078, %v8889
    %9080 = vst.msk [vmem:[%s13 + $0x3] sm:$0x1] %vm5078, %v8892
    %9081 = vst.msk [vmem:[%s13 + $0x4] sm:$0x1] %vm5078, %v8895
    %9082 = vst.msk [vmem:[%s13 + $0x5] sm:$0x1] %vm5078, %v8898
    %9083 = vst.msk [vmem:[%s13 + $0x6] sm:$0x1] %vm5078, %v8901
    %9084 = vst.msk [vmem:[%s13 + $0x7] sm:$0x1] %vm5078, %v8904
    %9085 = vst.msk [vmem:[%s13 + $0x8] sm:$0x1] %vm5078, %v8907
    %9086 = vst.msk [vmem:[%s13 + $0x9] sm:$0x1] %vm5078, %v8910
    %9087 = vst.msk [vmem:[%s13 + $0xa] sm:$0x1] %vm5078, %v8913
    %9088 = vst.msk [vmem:[%s13 + $0xb] sm:$0x1] %vm5078, %v8916
    %9089 = vst.msk [vmem:[%s13 + $0xc] sm:$0x1] %vm5078, %v8919
    %9090 = vst.msk [vmem:[%s13 + $0xd] sm:$0x1] %vm5078, %v8922
    %9091 = vst.msk [vmem:[%s13 + $0xe] sm:$0x1] %vm5078, %v8925
    %9092 = vst.msk [vmem:[%s13 + $0xf] sm:$0x1] %vm5078, %v8928
    %9093 = vst.msk [vmem:[%s13 + $0x10] sm:$0x1] %vm5078, %v8931
    %9094 = vst.msk [vmem:[%s13 + $0x11] sm:$0x1] %vm5078, %v8934
    %9095 = vst.msk [vmem:[%s13 + $0x12] sm:$0x1] %vm5078, %v8937
    %9096 = vst.msk [vmem:[%s13 + $0x13] sm:$0x1] %vm5078, %v8940
    %9097 = vst.msk [vmem:[%s13 + $0x14] sm:$0x1] %vm5078, %v8943
    %9098 = vst.msk [vmem:[%s13 + $0x15] sm:$0x1] %vm5078, %v8946
    %9099 = vst.msk [vmem:[%s13 + $0x16] sm:$0x1] %vm5078, %v8949
    %9100 = vst.msk [vmem:[%s13 + $0x17] sm:$0x1] %vm5078, %v8952
    %9101 = vst.msk [vmem:[%s13 + $0x18] sm:$0x1] %vm5078, %v8955
    %9102 = vst.msk [vmem:[%s13 + $0x19] sm:$0x1] %vm5078, %v8958
    %9103 = vst.msk [vmem:[%s13 + $0x1a] sm:$0x1] %vm5078, %v8961
    %9104 = vst.msk [vmem:[%s13 + $0x1b] sm:$0x1] %vm5078, %v8964
    %9105 = vst.msk [vmem:[%s13 + $0x1c] sm:$0x1] %vm5078, %v8967
    %9106 = vst.msk [vmem:[%s13 + $0x1d] sm:$0x1] %vm5078, %v8970
    %9107 = vst.msk [vmem:[%s13 + $0x1e] sm:$0x1] %vm5078, %v8973
    %9108 = vst.msk [vmem:[%s13 + $0x1f] sm:$0x1] %vm5078, %v8976
    %9109 = vst.msk [vmem:[%s13 + $0x20] sm:$0x1] %vm5078, %v8979
    %9110 = vst.msk [vmem:[%s13 + $0x21] sm:$0x1] %vm5078, %v8982
    %9111 = vst.msk [vmem:[%s13 + $0x22] sm:$0x1] %vm5078, %v8985
    %9112 = vst.msk [vmem:[%s13 + $0x23] sm:$0x1] %vm5078, %v8988
    %9113 = vst.msk [vmem:[%s13 + $0x24] sm:$0x1] %vm5078, %v8991
    %9114 = vst.msk [vmem:[%s13 + $0x25] sm:$0x1] %vm5078, %v8994
    %9115 = vst.msk [vmem:[%s13 + $0x26] sm:$0x1] %vm5078, %v8997
    %9116 = vst.msk [vmem:[%s13 + $0x27] sm:$0x1] %vm5078, %v9000
    %9117 = vst.msk [vmem:[%s13 + $0x28] sm:$0x1] %vm5078, %v9003
    %9118 = vst.msk [vmem:[%s13 + $0x29] sm:$0x1] %vm5078, %v9006
    %9119 = vst.msk [vmem:[%s13 + $0x2a] sm:$0x1] %vm5078, %v9009
    %9120 = vst.msk [vmem:[%s13 + $0x2b] sm:$0x1] %vm5078, %v9012
    %9121 = vst.msk [vmem:[%s13 + $0x2c] sm:$0x1] %vm5078, %v9015
    %9122 = vst.msk [vmem:[%s13 + $0x2d] sm:$0x1] %vm5078, %v9018
    %9123 = vst.msk [vmem:[%s13 + $0x2e] sm:$0x1] %vm5078, %v9021
    %9124 = vst.msk [vmem:[%s13 + $0x2f] sm:$0x1] %vm5078, %v9024
    %9125 = vst.msk [vmem:[%s13 + $0x30] sm:$0x1] %vm5078, %v9027
    %v9126 = vmax.f32 %v8829, 0.0
    %v9127 = vmax.f32 %v8830, 0.0
    %v9128 = vmax.f32 %v8831, 0.0
    %v9129 = vmax.f32 %v8832, 0.0
    %v9130 = vmax.f32 %v8833, 0.0
    %v9131 = vmax.f32 %v8834, 0.0
    %v9132 = vmax.f32 %v8835, 0.0
    %v9133 = vmax.f32 %v8836, 0.0
    %v9134 = vmax.f32 %v8837, 0.0
    %v9135 = vmax.f32 %v8838, 0.0
    %v9136 = vmax.f32 %v8839, 0.0
    %v9137 = vmax.f32 %v8840, 0.0
    %v9138 = vmax.f32 %v8841, 0.0
    %v9151 = vrot.slane %v9126, 2
    %v9152 = vrot.slane %v9126, 4
    %v9153 = vrot.slane %v9126, 6
    %v9154 = vrot.slane %v9127, 2
    %v9155 = vrot.slane %v9127, 4
    %v9156 = vrot.slane %v9127, 6
    %v9157 = vrot.slane %v9128, 2
    %v9158 = vrot.slane %v9128, 4
    %v9159 = vrot.slane %v9128, 6
    %v9160 = vrot.slane %v9129, 2
    %v9161 = vrot.slane %v9129, 4
    %v9162 = vrot.slane %v9129, 6
    %v9163 = vrot.slane %v9130, 2
    %v9164 = vrot.slane %v9130, 4
    %v9165 = vrot.slane %v9130, 6
    %v9166 = vrot.slane %v9131, 2
    %v9167 = vrot.slane %v9131, 4
    %v9168 = vrot.slane %v9131, 6
    %v9169 = vrot.slane %v9132, 2
    %v9170 = vrot.slane %v9132, 4
    %v9171 = vrot.slane %v9132, 6
    %v9172 = vrot.slane %v9133, 2
    %v9173 = vrot.slane %v9133, 4
    %v9174 = vrot.slane %v9133, 6
    %v9175 = vrot.slane %v9134, 2
    %v9176 = vrot.slane %v9134, 4
    %v9177 = vrot.slane %v9134, 6
    %v9178 = vrot.slane %v9135, 2
    %v9179 = vrot.slane %v9135, 4
    %v9180 = vrot.slane %v9135, 6
    %v9181 = vrot.slane %v9136, 2
    %v9182 = vrot.slane %v9136, 4
    %v9183 = vrot.slane %v9136, 6
    %v9184 = vrot.slane %v9137, 2
    %v9185 = vrot.slane %v9137, 4
    %v9186 = vrot.slane %v9137, 6
    %v9223 = vpack.c.bf16 %v9126, %v9126
    %v9224 = vpack.c.bf16 %v9151, %v9151
    %v9225 = vpack.c.bf16 %v9152, %v9152
    %v9226 = vpack.c.bf16 %v9153, %v9153
    %v9227 = vpack.c.bf16 %v9127, %v9127
    %v9228 = vpack.c.bf16 %v9154, %v9154
    %v9229 = vpack.c.bf16 %v9155, %v9155
    %v9230 = vpack.c.bf16 %v9156, %v9156
    %v9231 = vpack.c.bf16 %v9128, %v9128
    %v9232 = vpack.c.bf16 %v9157, %v9157
    %v9233 = vpack.c.bf16 %v9158, %v9158
    %v9234 = vpack.c.bf16 %v9159, %v9159
    %v9235 = vpack.c.bf16 %v9129, %v9129
    %v9236 = vpack.c.bf16 %v9160, %v9160
    %v9237 = vpack.c.bf16 %v9161, %v9161
    %v9238 = vpack.c.bf16 %v9162, %v9162
    %v9239 = vpack.c.bf16 %v9130, %v9130
    %v9240 = vpack.c.bf16 %v9163, %v9163
    %v9241 = vpack.c.bf16 %v9164, %v9164
    %v9242 = vpack.c.bf16 %v9165, %v9165
    %v9243 = vpack.c.bf16 %v9131, %v9131
    %v9244 = vpack.c.bf16 %v9166, %v9166
    %v9245 = vpack.c.bf16 %v9167, %v9167
    %v9246 = vpack.c.bf16 %v9168, %v9168
    %v9247 = vpack.c.bf16 %v9132, %v9132
    %v9248 = vpack.c.bf16 %v9169, %v9169
    %v9249 = vpack.c.bf16 %v9170, %v9170
    %v9250 = vpack.c.bf16 %v9171, %v9171
    %v9251 = vpack.c.bf16 %v9133, %v9133
    %v9252 = vpack.c.bf16 %v9172, %v9172
    %v9253 = vpack.c.bf16 %v9173, %v9173
    %v9254 = vpack.c.bf16 %v9174, %v9174
    %v9255 = vpack.c.bf16 %v9134, %v9134
    %v9256 = vpack.c.bf16 %v9175, %v9175
    %v9257 = vpack.c.bf16 %v9176, %v9176
    %v9258 = vpack.c.bf16 %v9177, %v9177
    %v9259 = vpack.c.bf16 %v9135, %v9135
    %v9260 = vpack.c.bf16 %v9178, %v9178
    %v9261 = vpack.c.bf16 %v9179, %v9179
    %v9262 = vpack.c.bf16 %v9180, %v9180
    %v9263 = vpack.c.bf16 %v9136, %v9136
    %v9264 = vpack.c.bf16 %v9181, %v9181
    %v9265 = vpack.c.bf16 %v9182, %v9182
    %v9266 = vpack.c.bf16 %v9183, %v9183
    %v9267 = vpack.c.bf16 %v9137, %v9137
    %v9268 = vpack.c.bf16 %v9184, %v9184
    %v9269 = vpack.c.bf16 %v9185, %v9185
    %v9270 = vpack.c.bf16 %v9186, %v9186
    %v9271 = vpack.c.bf16 %v9138, %v9138
    %v9272 = vld [vmem:[%s7] sm:$0xf]
    %v9273 = vld [vmem:[%s7 + $0x4] sm:$0xf]
    %v9274 = vld [vmem:[%s7 + $0x8] sm:$0xf]
    %v9275 = vld [vmem:[%s7 + $0xc] sm:$0xf]
    %v9276 = vld [vmem:[%s7 + $0x10] sm:$0xf]
    %v9277 = vld [vmem:[%s7 + $0x14] sm:$0xf]
    %v9278 = vld [vmem:[%s7 + $0x18] sm:$0xf]
    %v9279 = vld [vmem:[%s7 + $0x1c] sm:$0xf]
    %v9280 = vld [vmem:[%s7 + $0x20] sm:$0xf]
    %v9281 = vld [vmem:[%s7 + $0x24] sm:$0xf]
    %v9282 = vld [vmem:[%s7 + $0x28] sm:$0xf]
    %v9283 = vld [vmem:[%s7 + $0x2c] sm:$0xf]
    %v9284 = vld [vmem:[%s7 + $0x30] sm:$0xf]
    %v9285 = vld [vmem:[%s7 + $0x34] sm:$0xf]
    %v9286 = vld [vmem:[%s7 + $0x38] sm:$0xf]
    %v9287 = vld [vmem:[%s7 + $0x3c] sm:$0xf]
    %v9288 = vld [vmem:[%s7 + $0x40] sm:$0xf]
    %v9289 = vld [vmem:[%s7 + $0x44] sm:$0xf]
    %v9290 = vld [vmem:[%s7 + $0x48] sm:$0xf]
    %v9291 = vld [vmem:[%s7 + $0x4c] sm:$0xf]
    %v9292 = vld [vmem:[%s7 + $0x50] sm:$0xf]
    %v9293 = vld [vmem:[%s7 + $0x54] sm:$0xf]
    %v9294 = vld [vmem:[%s7 + $0x58] sm:$0xf]
    %v9295 = vld [vmem:[%s7 + $0x5c] sm:$0xf]
    %v9296 = vld [vmem:[%s7 + $0x60] sm:$0xf]
    %v9297 = vld [vmem:[%s7 + $0x64] sm:$0xf]
    %v9298 = vld [vmem:[%s7 + $0x68] sm:$0xf]
    %v9299 = vld [vmem:[%s7 + $0x6c] sm:$0xf]
    %v9300 = vld [vmem:[%s7 + $0x70] sm:$0xf]
    %v9301 = vld [vmem:[%s7 + $0x74] sm:$0xf]
    %v9302 = vld [vmem:[%s7 + $0x78] sm:$0xf]
    %v9303 = vld [vmem:[%s7 + $0x7c] sm:$0xf]
    %v9304 = vld [vmem:[%s7 + $0x80] sm:$0xf]
    %v9305 = vld [vmem:[%s7 + $0x84] sm:$0xf]
    %v9306 = vld [vmem:[%s7 + $0x88] sm:$0xf]
    %v9307 = vld [vmem:[%s7 + $0x8c] sm:$0xf]
    %v9308 = vld [vmem:[%s7 + $0x90] sm:$0xf]
    %v9309 = vld [vmem:[%s7 + $0x94] sm:$0xf]
    %v9310 = vld [vmem:[%s7 + $0x98] sm:$0xf]
    %v9311 = vld [vmem:[%s7 + $0x9c] sm:$0xf]
    %v9312 = vld [vmem:[%s7 + $0xa0] sm:$0xf]
    %v9313 = vld [vmem:[%s7 + $0xa4] sm:$0xf]
    %v9314 = vld [vmem:[%s7 + $0xa8] sm:$0xf]
    %v9315 = vld [vmem:[%s7 + $0xac] sm:$0xf]
    %v9316 = vld [vmem:[%s7 + $0xb0] sm:$0xf]
    %v9317 = vld [vmem:[%s7 + $0xb4] sm:$0xf]
    %v9318 = vld [vmem:[%s7 + $0xb8] sm:$0xf]
    %v9319 = vld [vmem:[%s7 + $0xbc] sm:$0xf]
    %v9320 = vld [vmem:[%s7 + $0xc0] sm:$0xf]
    %v9321 = vld [vmem:[%s7 + $0xc4] sm:$0xf]
    %v9322 = vld [vmem:[%s7 + $0xc8] sm:$0xf]
    %v9323 = vld [vmem:[%s7 + $0xcc] sm:$0xf]
    %v9324 = vld [vmem:[%s7 + $0xd0] sm:$0xf]
    %v9325 = vld [vmem:[%s7 + $0xd4] sm:$0xf]
    %v9326 = vld [vmem:[%s7 + $0xd8] sm:$0xf]
    %v9327 = vld [vmem:[%s7 + $0xdc] sm:$0xf]
    %v9328 = vld [vmem:[%s7 + $0xe0] sm:$0xf]
    %v9329 = vld [vmem:[%s7 + $0xe4] sm:$0xf]
    %v9330 = vld [vmem:[%s7 + $0xe8] sm:$0xf]
    %v9331 = vld [vmem:[%s7 + $0xec] sm:$0xf]
    %v9332 = vld [vmem:[%s7 + $0xf0] sm:$0xf]
    %v9333 = vld [vmem:[%s7 + $0xf4] sm:$0xf]
    %v9334 = vld [vmem:[%s7 + $0xf8] sm:$0xf]
    %v9335 = vld [vmem:[%s7 + $0xfc] sm:$0xf]
    %v9336 = vld [vmem:[%s7 + $0x100] sm:$0xf]
    %v9337 = vld [vmem:[%s7 + $0x104] sm:$0xf]
    %v9338 = vld [vmem:[%s7 + $0x108] sm:$0xf]
    %v9339 = vld [vmem:[%s7 + $0x10c] sm:$0xf]
    %v9340 = vld [vmem:[%s7 + $0x110] sm:$0xf]
    %v9341 = vld [vmem:[%s7 + $0x114] sm:$0xf]
    %v9342 = vld [vmem:[%s7 + $0x118] sm:$0xf]
    %v9343 = vld [vmem:[%s7 + $0x11c] sm:$0xf]
    %v9344 = vld [vmem:[%s7 + $0x120] sm:$0xf]
    %v9345 = vld [vmem:[%s7 + $0x124] sm:$0xf]
    %v9346 = vld [vmem:[%s7 + $0x128] sm:$0xf]
    %v9347 = vld [vmem:[%s7 + $0x12c] sm:$0xf]
    %v9348 = vld [vmem:[%s7 + $0x130] sm:$0xf]
    %v9349 = vld [vmem:[%s7 + $0x134] sm:$0xf]
    %v9350 = vld [vmem:[%s7 + $0x138] sm:$0xf]
    %v9351 = vld [vmem:[%s7 + $0x13c] sm:$0xf]
    %v9352 = vld [vmem:[%s7 + $0x140] sm:$0xf]
    %v9353 = vld [vmem:[%s7 + $0x144] sm:$0xf]
    %v9354 = vld [vmem:[%s7 + $0x148] sm:$0xf]
    %v9355 = vld [vmem:[%s7 + $0x14c] sm:$0xf]
    %v9356 = vld [vmem:[%s7 + $0x150] sm:$0xf]
    %v9357 = vld [vmem:[%s7 + $0x154] sm:$0xf]
    %v9358 = vld [vmem:[%s7 + $0x158] sm:$0xf]
    %v9359 = vld [vmem:[%s7 + $0x15c] sm:$0xf]
    %v9360 = vld [vmem:[%s7 + $0x160] sm:$0xf]
    %v9361 = vld [vmem:[%s7 + $0x164] sm:$0xf]
    %v9362 = vld [vmem:[%s7 + $0x168] sm:$0xf]
    %v9363 = vld [vmem:[%s7 + $0x16c] sm:$0xf]
    %v9364 = vld [vmem:[%s7 + $0x170] sm:$0xf]
    %v9365 = vld [vmem:[%s7 + $0x174] sm:$0xf]
    %v9366 = vld [vmem:[%s7 + $0x178] sm:$0xf]
    %v9367 = vld [vmem:[%s7 + $0x17c] sm:$0xf]
    %v9368 = vld [vmem:[%s7 + $0x180] sm:$0xf]
    %v9369 = vld [vmem:[%s7 + $0x184] sm:$0xf]
    %v9370 = vld [vmem:[%s7 + $0x188] sm:$0xf]
    %v9371 = vld [vmem:[%s7 + $0x18c] sm:$0xf]
    %v9372 = vld [vmem:[%s7 + $0x190] sm:$0xf]
    %v9373 = vld [vmem:[%s7 + $0x194] sm:$0xf]
    %v9374 = vld [vmem:[%s7 + $0x198] sm:$0xf]
    %v9375 = vld [vmem:[%s7 + $0x19c] sm:$0xf]
    %v9376 = vld [vmem:[%s7 + $0x1a0] sm:$0xf]
    %v9377 = vld [vmem:[%s7 + $0x1a4] sm:$0xf]
    %v9378 = vld [vmem:[%s7 + $0x1a8] sm:$0xf]
    %v9379 = vld [vmem:[%s7 + $0x1ac] sm:$0xf]
    %v9380 = vld [vmem:[%s7 + $0x1b0] sm:$0xf]
    %v9381 = vld [vmem:[%s7 + $0x1b4] sm:$0xf]
    %v9382 = vld [vmem:[%s7 + $0x1b8] sm:$0xf]
    %v9383 = vld [vmem:[%s7 + $0x1bc] sm:$0xf]
    %v9384 = vld [vmem:[%s7 + $0x1c0] sm:$0xf]
    %v9385 = vld [vmem:[%s7 + $0x1c4] sm:$0xf]
    %v9386 = vld [vmem:[%s7 + $0x1c8] sm:$0xf]
    %v9387 = vld [vmem:[%s7 + $0x1cc] sm:$0xf]
    %v9388 = vld [vmem:[%s7 + $0x1d0] sm:$0xf]
    %v9389 = vld [vmem:[%s7 + $0x1d4] sm:$0xf]
    %v9390 = vld [vmem:[%s7 + $0x1d8] sm:$0xf]
    %v9391 = vld [vmem:[%s7 + $0x1dc] sm:$0xf]
    %v9392 = vld [vmem:[%s7 + $0x1e0] sm:$0xf]
    %v9393 = vld [vmem:[%s7 + $0x1e4] sm:$0xf]
    %v9394 = vld [vmem:[%s7 + $0x1e8] sm:$0xf]
    %v9395 = vld [vmem:[%s7 + $0x1ec] sm:$0xf]
    %v9396 = vld [vmem:[%s7 + $0x1f0] sm:$0xf]
    %v9397 = vld [vmem:[%s7 + $0x1f4] sm:$0xf]
    %v9398 = vld [vmem:[%s7 + $0x1f8] sm:$0xf]
    %v9399 = vld [vmem:[%s7 + $0x1fc] sm:$0xf]
    %v9400 = vld [vmem:[%s7 + $0x200] sm:$0xf]
    %v9401 = vld [vmem:[%s7 + $0x204] sm:$0xf]
    %v9402 = vld [vmem:[%s7 + $0x208] sm:$0xf]
    %v9403 = vld [vmem:[%s7 + $0x20c] sm:$0xf]
    %v9404 = vld [vmem:[%s7 + $0x210] sm:$0xf]
    %v9405 = vld [vmem:[%s7 + $0x214] sm:$0xf]
    %v9406 = vld [vmem:[%s7 + $0x218] sm:$0xf]
    %v9407 = vld [vmem:[%s7 + $0x21c] sm:$0xf]
    %v9408 = vld [vmem:[%s7 + $0x220] sm:$0xf]
    %v9409 = vld [vmem:[%s7 + $0x224] sm:$0xf]
    %v9410 = vld [vmem:[%s7 + $0x228] sm:$0xf]
    %v9411 = vld [vmem:[%s7 + $0x22c] sm:$0xf]
    %v9412 = vld [vmem:[%s7 + $0x230] sm:$0xf]
    %v9413 = vld [vmem:[%s7 + $0x234] sm:$0xf]
    %v9414 = vld [vmem:[%s7 + $0x238] sm:$0xf]
    %v9415 = vld [vmem:[%s7 + $0x23c] sm:$0xf]
    %v9416 = vld [vmem:[%s7 + $0x240] sm:$0xf]
    %v9417 = vld [vmem:[%s7 + $0x244] sm:$0xf]
    %v9418 = vld [vmem:[%s7 + $0x248] sm:$0xf]
    %v9419 = vld [vmem:[%s7 + $0x24c] sm:$0xf]
    %v9420 = vld [vmem:[%s7 + $0x250] sm:$0xf]
    %v9421 = vld [vmem:[%s7 + $0x254] sm:$0xf]
    %v9422 = vld [vmem:[%s7 + $0x258] sm:$0xf]
    %v9423 = vld [vmem:[%s7 + $0x25c] sm:$0xf]
    %v9424 = vld [vmem:[%s7 + $0x260] sm:$0xf]
    %v9425 = vld [vmem:[%s7 + $0x264] sm:$0xf]
    %v9426 = vld [vmem:[%s7 + $0x268] sm:$0xf]
    %v9427 = vld [vmem:[%s7 + $0x26c] sm:$0xf]
    %v9428 = vld [vmem:[%s7 + $0x270] sm:$0xf]
    %v9429 = vld [vmem:[%s7 + $0x274] sm:$0xf]
    %v9430 = vld [vmem:[%s7 + $0x278] sm:$0xf]
    %v9431 = vld [vmem:[%s7 + $0x27c] sm:$0xf]
    %v9432 = vld [vmem:[%s7 + $0x280] sm:$0xf]
    %v9433 = vld [vmem:[%s7 + $0x284] sm:$0xf]
    %v9434 = vld [vmem:[%s7 + $0x288] sm:$0xf]
    %v9435 = vld [vmem:[%s7 + $0x28c] sm:$0xf]
    %v9436 = vld [vmem:[%s7 + $0x290] sm:$0xf]
    %v9437 = vld [vmem:[%s7 + $0x294] sm:$0xf]
    %v9438 = vld [vmem:[%s7 + $0x298] sm:$0xf]
    %v9439 = vld [vmem:[%s7 + $0x29c] sm:$0xf]
    %v9440 = vld [vmem:[%s7 + $0x2a0] sm:$0xf]
    %v9441 = vld [vmem:[%s7 + $0x2a4] sm:$0xf]
    %v9442 = vld [vmem:[%s7 + $0x2a8] sm:$0xf]
    %v9443 = vld [vmem:[%s7 + $0x2ac] sm:$0xf]
    %v9444 = vld [vmem:[%s7 + $0x2b0] sm:$0xf]
    %v9445 = vld [vmem:[%s7 + $0x2b4] sm:$0xf]
    %v9446 = vld [vmem:[%s7 + $0x2b8] sm:$0xf]
    %v9447 = vld [vmem:[%s7 + $0x2bc] sm:$0xf]
    %v9448 = vld [vmem:[%s7 + $0x2c0] sm:$0xf]
    %v9449 = vld [vmem:[%s7 + $0x2c4] sm:$0xf]
    %v9450 = vld [vmem:[%s7 + $0x2c8] sm:$0xf]
    %v9451 = vld [vmem:[%s7 + $0x2cc] sm:$0xf]
    %v9452 = vld [vmem:[%s7 + $0x2d0] sm:$0xf]
    %v9453 = vld [vmem:[%s7 + $0x2d4] sm:$0xf]
    %v9454 = vld [vmem:[%s7 + $0x2d8] sm:$0xf]
    %v9455 = vld [vmem:[%s7 + $0x2dc] sm:$0xf]
    %v9456 = vld [vmem:[%s7 + $0x2e0] sm:$0xf]
    %v9457 = vld [vmem:[%s7 + $0x2e4] sm:$0xf]
    %v9458 = vld [vmem:[%s7 + $0x2e8] sm:$0xf]
    %v9459 = vld [vmem:[%s7 + $0x2ec] sm:$0xf]
    %v9460 = vld [vmem:[%s7 + $0x2f0] sm:$0xf]
    %v9461 = vld [vmem:[%s7 + $0x2f4] sm:$0xf]
    %v9462 = vld [vmem:[%s7 + $0x2f8] sm:$0xf]
    %v9463 = vld [vmem:[%s7 + $0x2fc] sm:$0xf]
    %v9464 = vld [vmem:[%s7 + $0x300] sm:$0xf]
    %v9465 = vld [vmem:[%s7 + $0x304] sm:$0xf]
    %v9466 = vld [vmem:[%s7 + $0x308] sm:$0xf]
    %v9467 = vld [vmem:[%s7 + $0x30c] sm:$0xf]
    %v9468 = vld [vmem:[%s7 + $0x310] sm:$0xf]
    %v9469 = vld [vmem:[%s7 + $0x314] sm:$0xf]
    %v9470 = vld [vmem:[%s7 + $0x318] sm:$0xf]
    %v9471 = vld [vmem:[%s7 + $0x31c] sm:$0xf]
    %v9472 = vld [vmem:[%s7 + $0x320] sm:$0xf]
    %v9473 = vld [vmem:[%s7 + $0x324] sm:$0xf]
    %v9474 = vld [vmem:[%s7 + $0x328] sm:$0xf]
    %v9475 = vld [vmem:[%s7 + $0x32c] sm:$0xf]
    %v9476 = vld [vmem:[%s7 + $0x330] sm:$0xf]
    %v9477 = vld [vmem:[%s7 + $0x334] sm:$0xf]
    %v9478 = vld [vmem:[%s7 + $0x338] sm:$0xf]
    %v9479 = vld [vmem:[%s7 + $0x33c] sm:$0xf]
    %v9480 = vld [vmem:[%s7 + $0x340] sm:$0xf]
    %v9481 = vld [vmem:[%s7 + $0x344] sm:$0xf]
    %v9482 = vld [vmem:[%s7 + $0x348] sm:$0xf]
    %v9483 = vld [vmem:[%s7 + $0x34c] sm:$0xf]
    %v9484 = vld [vmem:[%s7 + $0x350] sm:$0xf]
    %v9485 = vld [vmem:[%s7 + $0x354] sm:$0xf]
    %v9486 = vld [vmem:[%s7 + $0x358] sm:$0xf]
    %v9487 = vld [vmem:[%s7 + $0x35c] sm:$0xf]
    %v9488 = vld [vmem:[%s7 + $0x360] sm:$0xf]
    %v9489 = vld [vmem:[%s7 + $0x364] sm:$0xf]
    %v9490 = vld [vmem:[%s7 + $0x368] sm:$0xf]
    %v9491 = vld [vmem:[%s7 + $0x36c] sm:$0xf]
    %v9492 = vld [vmem:[%s7 + $0x370] sm:$0xf]
    %v9493 = vld [vmem:[%s7 + $0x374] sm:$0xf]
    %v9494 = vld [vmem:[%s7 + $0x378] sm:$0xf]
    %v9495 = vld [vmem:[%s7 + $0x37c] sm:$0xf]
    %v9496 = vld [vmem:[%s7 + $0x380] sm:$0xf]
    %v9497 = vld [vmem:[%s7 + $0x384] sm:$0xf]
    %v9498 = vld [vmem:[%s7 + $0x388] sm:$0xf]
    %v9499 = vld [vmem:[%s7 + $0x38c] sm:$0xf]
    %v9500 = vld [vmem:[%s7 + $0x390] sm:$0xf]
    %v9501 = vld [vmem:[%s7 + $0x394] sm:$0xf]
    %v9502 = vld [vmem:[%s7 + $0x398] sm:$0xf]
    %v9503 = vld [vmem:[%s7 + $0x39c] sm:$0xf]
    %v9504 = vld [vmem:[%s7 + $0x3a0] sm:$0xf]
    %v9505 = vld [vmem:[%s7 + $0x3a4] sm:$0xf]
    %v9506 = vld [vmem:[%s7 + $0x3a8] sm:$0xf]
    %v9507 = vld [vmem:[%s7 + $0x3ac] sm:$0xf]
    %v9508 = vld [vmem:[%s7 + $0x3b0] sm:$0xf]
    %v9509 = vld [vmem:[%s7 + $0x3b4] sm:$0xf]
    %v9510 = vld [vmem:[%s7 + $0x3b8] sm:$0xf]
    %v9511 = vld [vmem:[%s7 + $0x3bc] sm:$0xf]
    %v9512 = vld [vmem:[%s7 + $0x3c0] sm:$0xf]
    %v9513 = vld [vmem:[%s7 + $0x3c4] sm:$0xf]
    %v9514 = vld [vmem:[%s7 + $0x3c8] sm:$0xf]
    %v9515 = vld [vmem:[%s7 + $0x3cc] sm:$0xf]
    %v9516 = vld [vmem:[%s7 + $0x3d0] sm:$0xf]
    %v9517 = vld [vmem:[%s7 + $0x3d4] sm:$0xf]
    %v9518 = vld [vmem:[%s7 + $0x3d8] sm:$0xf]
    %v9519 = vld [vmem:[%s7 + $0x3dc] sm:$0xf]
    %v9520 = vld [vmem:[%s7 + $0x3e0] sm:$0xf]
    %v9521 = vld [vmem:[%s7 + $0x3e4] sm:$0xf]
    %v9522 = vld [vmem:[%s7 + $0x3e8] sm:$0xf]
    %v9523 = vld [vmem:[%s7 + $0x3ec] sm:$0xf]
    %v9524 = vld [vmem:[%s7 + $0x3f0] sm:$0xf]
    %v9525 = vld [vmem:[%s7 + $0x3f4] sm:$0xf]
    %v9526 = vld [vmem:[%s7 + $0x3f8] sm:$0xf]
    %v9527 = vld [vmem:[%s7 + $0x3fc] sm:$0xf]
    %v9528 = vld [vmem:[%s7 + $0x400] sm:$0xf]
    %v9529 = vld [vmem:[%s7 + $0x404] sm:$0xf]
    %v9530 = vld [vmem:[%s7 + $0x408] sm:$0xf]
    %v9531 = vld [vmem:[%s7 + $0x40c] sm:$0xf]
    %v9532 = vld [vmem:[%s7 + $0x410] sm:$0xf]
    %v9533 = vld [vmem:[%s7 + $0x414] sm:$0xf]
    %v9534 = vld [vmem:[%s7 + $0x418] sm:$0xf]
    %v9535 = vld [vmem:[%s7 + $0x41c] sm:$0xf]
    %v9536 = vld [vmem:[%s7 + $0x420] sm:$0xf]
    %v9537 = vld [vmem:[%s7 + $0x424] sm:$0xf]
    %v9538 = vld [vmem:[%s7 + $0x428] sm:$0xf]
    %v9539 = vld [vmem:[%s7 + $0x42c] sm:$0xf]
    %v9540 = vld [vmem:[%s7 + $0x430] sm:$0xf]
    %v9541 = vld [vmem:[%s7 + $0x434] sm:$0xf]
    %v9542 = vld [vmem:[%s7 + $0x438] sm:$0xf]
    %v9543 = vld [vmem:[%s7 + $0x43c] sm:$0xf]
    %v9544 = vld [vmem:[%s7 + $0x440] sm:$0xf]
    %v9545 = vld [vmem:[%s7 + $0x444] sm:$0xf]
    %v9546 = vld [vmem:[%s7 + $0x448] sm:$0xf]
    %v9547 = vld [vmem:[%s7 + $0x44c] sm:$0xf]
    %v9548 = vld [vmem:[%s7 + $0x450] sm:$0xf]
    %v9549 = vld [vmem:[%s7 + $0x454] sm:$0xf]
    %v9550 = vld [vmem:[%s7 + $0x458] sm:$0xf]
    %v9551 = vld [vmem:[%s7 + $0x45c] sm:$0xf]
    %v9552 = vld [vmem:[%s7 + $0x460] sm:$0xf]
    %v9553 = vld [vmem:[%s7 + $0x464] sm:$0xf]
    %v9554 = vld [vmem:[%s7 + $0x468] sm:$0xf]
    %v9555 = vld [vmem:[%s7 + $0x46c] sm:$0xf]
    %v9556 = vld [vmem:[%s7 + $0x470] sm:$0xf]
    %v9557 = vld [vmem:[%s7 + $0x474] sm:$0xf]
    %v9558 = vld [vmem:[%s7 + $0x478] sm:$0xf]
    %v9559 = vld [vmem:[%s7 + $0x47c] sm:$0xf]
    %v9560 = vld [vmem:[%s7 + $0x480] sm:$0xf]
    %v9561 = vld [vmem:[%s7 + $0x484] sm:$0xf]
    %v9562 = vld [vmem:[%s7 + $0x488] sm:$0xf]
    %v9563 = vld [vmem:[%s7 + $0x48c] sm:$0xf]
    %v9564 = vld [vmem:[%s7 + $0x490] sm:$0xf]
    %v9565 = vld [vmem:[%s7 + $0x494] sm:$0xf]
    %v9566 = vld [vmem:[%s7 + $0x498] sm:$0xf]
    %v9567 = vld [vmem:[%s7 + $0x49c] sm:$0xf]
    %v9568 = vld [vmem:[%s7 + $0x4a0] sm:$0xf]
    %v9569 = vld [vmem:[%s7 + $0x4a4] sm:$0xf]
    %v9570 = vld [vmem:[%s7 + $0x4a8] sm:$0xf]
    %v9571 = vld [vmem:[%s7 + $0x4ac] sm:$0xf]
    %v9572 = vld [vmem:[%s7 + $0x4b0] sm:$0xf]
    %v9573 = vld [vmem:[%s7 + $0x4b4] sm:$0xf]
    %v9574 = vld [vmem:[%s7 + $0x4b8] sm:$0xf]
    %v9575 = vld [vmem:[%s7 + $0x4bc] sm:$0xf]
    %v9576 = vld [vmem:[%s7 + $0x4c0] sm:$0xf]
    %v9577 = vld [vmem:[%s7 + $0x4c4] sm:$0xf]
    %v9578 = vld [vmem:[%s7 + $0x4c8] sm:$0xf]
    %v9579 = vld [vmem:[%s7 + $0x4cc] sm:$0xf]
    %v9580 = vld [vmem:[%s7 + $0x4d0] sm:$0xf]
    %v9581 = vld [vmem:[%s7 + $0x4d4] sm:$0xf]
    %v9582 = vld [vmem:[%s7 + $0x4d8] sm:$0xf]
    %v9583 = vld [vmem:[%s7 + $0x4dc] sm:$0xf]
    %v9584 = vld [vmem:[%s7 + $0x4e0] sm:$0xf]
    %v9585 = vld [vmem:[%s7 + $0x4e4] sm:$0xf]
    %v9586 = vld [vmem:[%s7 + $0x4e8] sm:$0xf]
    %v9587 = vld [vmem:[%s7 + $0x4ec] sm:$0xf]
    %v9588 = vld [vmem:[%s7 + $0x4f0] sm:$0xf]
    %v9589 = vld [vmem:[%s7 + $0x4f4] sm:$0xf]
    %v9590 = vld [vmem:[%s7 + $0x4f8] sm:$0xf]
    %v9591 = vld [vmem:[%s7 + $0x4fc] sm:$0xf]
    %v9592 = vld [vmem:[%s7 + $0x500] sm:$0xf]
    %v9593 = vld [vmem:[%s7 + $0x504] sm:$0xf]
    %v9594 = vld [vmem:[%s7 + $0x508] sm:$0xf]
    %v9595 = vld [vmem:[%s7 + $0x50c] sm:$0xf]
    %v9596 = vld [vmem:[%s7 + $0x510] sm:$0xf]
    %v9597 = vld [vmem:[%s7 + $0x514] sm:$0xf]
    %v9598 = vld [vmem:[%s7 + $0x518] sm:$0xf]
    %v9599 = vld [vmem:[%s7 + $0x51c] sm:$0xf]
    %v9600 = vld [vmem:[%s7 + $0x520] sm:$0xf]
    %v9601 = vld [vmem:[%s7 + $0x524] sm:$0xf]
    %v9602 = vld [vmem:[%s7 + $0x528] sm:$0xf]
    %v9603 = vld [vmem:[%s7 + $0x52c] sm:$0xf]
    %v9604 = vld [vmem:[%s7 + $0x530] sm:$0xf]
    %v9605 = vld [vmem:[%s7 + $0x534] sm:$0xf]
    %v9606 = vld [vmem:[%s7 + $0x538] sm:$0xf]
    %v9607 = vld [vmem:[%s7 + $0x53c] sm:$0xf]
    %v9608 = vld [vmem:[%s7 + $0x540] sm:$0xf]
    %v9609 = vld [vmem:[%s7 + $0x544] sm:$0xf]
    %v9610 = vld [vmem:[%s7 + $0x548] sm:$0xf]
    %v9611 = vld [vmem:[%s7 + $0x54c] sm:$0xf]
    %v9612 = vld [vmem:[%s7 + $0x550] sm:$0xf]
    %v9613 = vld [vmem:[%s7 + $0x554] sm:$0xf]
    %v9614 = vld [vmem:[%s7 + $0x558] sm:$0xf]
    %v9615 = vld [vmem:[%s7 + $0x55c] sm:$0xf]
    %v9616 = vld [vmem:[%s7 + $0x560] sm:$0xf]
    %v9617 = vld [vmem:[%s7 + $0x564] sm:$0xf]
    %v9618 = vld [vmem:[%s7 + $0x568] sm:$0xf]
    %v9619 = vld [vmem:[%s7 + $0x56c] sm:$0xf]
    %v9620 = vld [vmem:[%s7 + $0x570] sm:$0xf]
    %v9621 = vld [vmem:[%s7 + $0x574] sm:$0xf]
    %v9622 = vld [vmem:[%s7 + $0x578] sm:$0xf]
    %v9623 = vld [vmem:[%s7 + $0x57c] sm:$0xf]
    %v9624 = vld [vmem:[%s7 + $0x580] sm:$0xf]
    %v9625 = vld [vmem:[%s7 + $0x584] sm:$0xf]
    %v9626 = vld [vmem:[%s7 + $0x588] sm:$0xf]
    %v9627 = vld [vmem:[%s7 + $0x58c] sm:$0xf]
    %v9628 = vld [vmem:[%s7 + $0x590] sm:$0xf]
    %v9629 = vld [vmem:[%s7 + $0x594] sm:$0xf]
    %v9630 = vld [vmem:[%s7 + $0x598] sm:$0xf]
    %v9631 = vld [vmem:[%s7 + $0x59c] sm:$0xf]
    %v9632 = vld [vmem:[%s7 + $0x5a0] sm:$0xf]
    %v9633 = vld [vmem:[%s7 + $0x5a4] sm:$0xf]
    %v9634 = vld [vmem:[%s7 + $0x5a8] sm:$0xf]
    %v9635 = vld [vmem:[%s7 + $0x5ac] sm:$0xf]
    %v9636 = vld [vmem:[%s7 + $0x5b0] sm:$0xf]
    %v9637 = vld [vmem:[%s7 + $0x5b4] sm:$0xf]
    %v9638 = vld [vmem:[%s7 + $0x5b8] sm:$0xf]
    %v9639 = vld [vmem:[%s7 + $0x5bc] sm:$0xf]
    %v9640 = vld [vmem:[%s7 + $0x5c0] sm:$0xf]
    %v9641 = vld [vmem:[%s7 + $0x5c4] sm:$0xf]
    %v9642 = vld [vmem:[%s7 + $0x5c8] sm:$0xf]
    %v9643 = vld [vmem:[%s7 + $0x5cc] sm:$0xf]
    %v9644 = vld [vmem:[%s7 + $0x5d0] sm:$0xf]
    %v9645 = vld [vmem:[%s7 + $0x5d4] sm:$0xf]
    %v9646 = vld [vmem:[%s7 + $0x5d8] sm:$0xf]
    %v9647 = vld [vmem:[%s7 + $0x5dc] sm:$0xf]
    %v9648 = vld [vmem:[%s7 + $0x5e0] sm:$0xf]
    %v9649 = vld [vmem:[%s7 + $0x5e4] sm:$0xf]
    %v9650 = vld [vmem:[%s7 + $0x5e8] sm:$0xf]
    %v9651 = vld [vmem:[%s7 + $0x5ec] sm:$0xf]
    %v9652 = vld [vmem:[%s7 + $0x5f0] sm:$0xf]
    %v9653 = vld [vmem:[%s7 + $0x5f4] sm:$0xf]
    %v9654 = vld [vmem:[%s7 + $0x5f8] sm:$0xf]
    %v9655 = vld [vmem:[%s7 + $0x5fc] sm:$0xf]
    %v9656 = vld [vmem:[%s7 + $0x600] sm:$0xf]
    %v9657 = vld [vmem:[%s7 + $0x604] sm:$0xf]
    %v9658 = vld [vmem:[%s7 + $0x608] sm:$0xf]
    %v9659 = vld [vmem:[%s7 + $0x60c] sm:$0xf]
    %v9660 = vld [vmem:[%s7 + $0x610] sm:$0xf]
    %v9661 = vld [vmem:[%s7 + $0x614] sm:$0xf]
    %v9662 = vld [vmem:[%s7 + $0x618] sm:$0xf]
    %v9663 = vld [vmem:[%s7 + $0x61c] sm:$0xf]
    %v9672 = vunpack.c.l.b16 %v9272
    %v9673 = vunpack.c.l.b16 %v9273
    %v9674 = vunpack.c.l.b16 %v9274
    %v9675 = vunpack.c.l.b16 %v9275
    %v9676 = vunpack.c.l.b16 %v9276
    %v9677 = vunpack.c.l.b16 %v9277
    %v9678 = vunpack.c.l.b16 %v9278
    %v9679 = vunpack.c.l.b16 %v9279
    %v9680 = vpack.c.b16 %v9673, %v9672
    %v9681 = vpack.c.b16 %v9675, %v9674
    %v9682 = vpack.c.b16 %v9677, %v9676
    %v9683 = vpack.c.b16 %v9679, %v9678
    %v9689 = vsel %vm788, %v9223, 0
    %9691 = vmatpush.bf16.msra.mxu0 0
    %9692 = vmatpush.bf16.msra.mxu0 0
    %9693 = vmatpush.bf16.msra.mxu0 0
    %9694 = vmatpush.bf16.msra.mxu0 0
    %9695 = vmatpush.bf16.msra.mxu0 %v9683
    %9696 = vmatpush.bf16.msra.mxu0 %v9682
    %9697 = vmatpush.bf16.msra.mxu0 %v9681
    %9698 = vmatpush.bf16.msra.mxu0 %v9680
    %9699 = vmatmul.bf16.gmra.mxu0 %v9689
    %v9700 = vpop.f32.mrf.mxu0
    %v9701 = vadd.f32 0.0, %v9700
    %v9702 = vpop.f32.mrf.mxu0
    %9703 = vdwg.mxu0
    %v9712 = vunpack.c.l.b16 %v9280
    %v9713 = vunpack.c.l.b16 %v9281
    %v9714 = vunpack.c.l.b16 %v9282
    %v9715 = vunpack.c.l.b16 %v9283
    %v9716 = vunpack.c.l.b16 %v9284
    %v9717 = vunpack.c.l.b16 %v9285
    %v9718 = vunpack.c.l.b16 %v9286
    %v9719 = vunpack.c.l.b16 %v9287
    %v9720 = vpack.c.b16 %v9713, %v9712
    %v9721 = vpack.c.b16 %v9715, %v9714
    %v9722 = vpack.c.b16 %v9717, %v9716
    %v9723 = vpack.c.b16 %v9719, %v9718
    %v9729 = vsel %vm788, %v9224, 0
    %9731 = vmatpush.bf16.msra.mxu0 0
    %9732 = vmatpush.bf16.msra.mxu0 0
    %9733 = vmatpush.bf16.msra.mxu0 0
    %9734 = vmatpush.bf16.msra.mxu0 0
    %9735 = vmatpush.bf16.msra.mxu0 %v9723
    %9736 = vmatpush.bf16.msra.mxu0 %v9722
    %9737 = vmatpush.bf16.msra.mxu0 %v9721
    %9738 = vmatpush.bf16.msra.mxu0 %v9720
    %9739 = vmatmul.bf16.gmra.mxu0 %v9729
    %v9740 = vpop.f32.mrf.mxu0
    %v9741 = vadd.f32 0.0, %v9740
    %v9742 = vpop.f32.mrf.mxu0
    %9743 = vdwg.mxu0
    %v9752 = vunpack.c.l.b16 %v9288
    %v9753 = vunpack.c.l.b16 %v9289
    %v9754 = vunpack.c.l.b16 %v9290
    %v9755 = vunpack.c.l.b16 %v9291
    %v9756 = vunpack.c.l.b16 %v9292
    %v9757 = vunpack.c.l.b16 %v9293
    %v9758 = vunpack.c.l.b16 %v9294
    %v9759 = vunpack.c.l.b16 %v9295
    %v9760 = vpack.c.b16 %v9753, %v9752
    %v9761 = vpack.c.b16 %v9755, %v9754
    %v9762 = vpack.c.b16 %v9757, %v9756
    %v9763 = vpack.c.b16 %v9759, %v9758
    %v9769 = vsel %vm788, %v9225, 0
    %9771 = vmatpush.bf16.msra.mxu0 0
    %9772 = vmatpush.bf16.msra.mxu0 0
    %9773 = vmatpush.bf16.msra.mxu0 0
    %9774 = vmatpush.bf16.msra.mxu0 0
    %9775 = vmatpush.bf16.msra.mxu0 %v9763
    %9776 = vmatpush.bf16.msra.mxu0 %v9762
    %9777 = vmatpush.bf16.msra.mxu0 %v9761
    %9778 = vmatpush.bf16.msra.mxu0 %v9760
    %9779 = vmatmul.bf16.gmra.mxu0 %v9769
    %v9780 = vpop.f32.mrf.mxu0
    %v9781 = vadd.f32 0.0, %v9780
    %v9782 = vpop.f32.mrf.mxu0
    %9783 = vdwg.mxu0
    %v9792 = vunpack.c.l.b16 %v9296
    %v9793 = vunpack.c.l.b16 %v9297
    %v9794 = vunpack.c.l.b16 %v9298
    %v9795 = vunpack.c.l.b16 %v9299
    %v9796 = vunpack.c.l.b16 %v9300
    %v9797 = vunpack.c.l.b16 %v9301
    %v9798 = vunpack.c.l.b16 %v9302
    %v9799 = vunpack.c.l.b16 %v9303
    %v9800 = vpack.c.b16 %v9793, %v9792
    %v9801 = vpack.c.b16 %v9795, %v9794
    %v9802 = vpack.c.b16 %v9797, %v9796
    %v9803 = vpack.c.b16 %v9799, %v9798
    %v9809 = vsel %vm788, %v9226, 0
    %9811 = vmatpush.bf16.msra.mxu0 0
    %9812 = vmatpush.bf16.msra.mxu0 0
    %9813 = vmatpush.bf16.msra.mxu0 0
    %9814 = vmatpush.bf16.msra.mxu0 0
    %9815 = vmatpush.bf16.msra.mxu0 %v9803
    %9816 = vmatpush.bf16.msra.mxu0 %v9802
    %9817 = vmatpush.bf16.msra.mxu0 %v9801
    %9818 = vmatpush.bf16.msra.mxu0 %v9800
    %9819 = vmatmul.bf16.gmra.mxu0 %v9809
    %v9820 = vpop.f32.mrf.mxu0
    %v9821 = vadd.f32 0.0, %v9820
    %v9822 = vpop.f32.mrf.mxu0
    %9823 = vdwg.mxu0
    %v9832 = vunpack.c.l.b16 %v9304
    %v9833 = vunpack.c.l.b16 %v9305
    %v9834 = vunpack.c.l.b16 %v9306
    %v9835 = vunpack.c.l.b16 %v9307
    %v9836 = vunpack.c.l.b16 %v9308
    %v9837 = vunpack.c.l.b16 %v9309
    %v9838 = vunpack.c.l.b16 %v9310
    %v9839 = vunpack.c.l.b16 %v9311
    %v9840 = vpack.c.b16 %v9833, %v9832
    %v9841 = vpack.c.b16 %v9835, %v9834
    %v9842 = vpack.c.b16 %v9837, %v9836
    %v9843 = vpack.c.b16 %v9839, %v9838
    %v9849 = vsel %vm788, %v9227, 0
    %9851 = vmatpush.bf16.msra.mxu0 0
    %9852 = vmatpush.bf16.msra.mxu0 0
    %9853 = vmatpush.bf16.msra.mxu0 0
    %9854 = vmatpush.bf16.msra.mxu0 0
    %9855 = vmatpush.bf16.msra.mxu0 %v9843
    %9856 = vmatpush.bf16.msra.mxu0 %v9842
    %9857 = vmatpush.bf16.msra.mxu0 %v9841
    %9858 = vmatpush.bf16.msra.mxu0 %v9840
    %9859 = vmatmul.bf16.gmra.mxu0 %v9849
    %v9860 = vpop.f32.mrf.mxu0
    %v9861 = vadd.f32 0.0, %v9860
    %v9862 = vpop.f32.mrf.mxu0
    %9863 = vdwg.mxu0
    %v9872 = vunpack.c.l.b16 %v9312
    %v9873 = vunpack.c.l.b16 %v9313
    %v9874 = vunpack.c.l.b16 %v9314
    %v9875 = vunpack.c.l.b16 %v9315
    %v9876 = vunpack.c.l.b16 %v9316
    %v9877 = vunpack.c.l.b16 %v9317
    %v9878 = vunpack.c.l.b16 %v9318
    %v9879 = vunpack.c.l.b16 %v9319
    %v9880 = vpack.c.b16 %v9873, %v9872
    %v9881 = vpack.c.b16 %v9875, %v9874
    %v9882 = vpack.c.b16 %v9877, %v9876
    %v9883 = vpack.c.b16 %v9879, %v9878
    %v9889 = vsel %vm788, %v9228, 0
    %9891 = vmatpush.bf16.msra.mxu0 0
    %9892 = vmatpush.bf16.msra.mxu0 0
    %9893 = vmatpush.bf16.msra.mxu0 0
    %9894 = vmatpush.bf16.msra.mxu0 0
    %9895 = vmatpush.bf16.msra.mxu0 %v9883
    %9896 = vmatpush.bf16.msra.mxu0 %v9882
    %9897 = vmatpush.bf16.msra.mxu0 %v9881
    %9898 = vmatpush.bf16.msra.mxu0 %v9880
    %9899 = vmatmul.bf16.gmra.mxu0 %v9889
    %v9900 = vpop.f32.mrf.mxu0
    %v9901 = vadd.f32 0.0, %v9900
    %v9902 = vpop.f32.mrf.mxu0
    %9903 = vdwg.mxu0
    %v9912 = vunpack.c.l.b16 %v9320
    %v9913 = vunpack.c.l.b16 %v9321
    %v9914 = vunpack.c.l.b16 %v9322
    %v9915 = vunpack.c.l.b16 %v9323
    %v9916 = vunpack.c.l.b16 %v9324
    %v9917 = vunpack.c.l.b16 %v9325
    %v9918 = vunpack.c.l.b16 %v9326
    %v9919 = vunpack.c.l.b16 %v9327
    %v9920 = vpack.c.b16 %v9913, %v9912
    %v9921 = vpack.c.b16 %v9915, %v9914
    %v9922 = vpack.c.b16 %v9917, %v9916
    %v9923 = vpack.c.b16 %v9919, %v9918
    %v9929 = vsel %vm788, %v9229, 0
    %9931 = vmatpush.bf16.msra.mxu0 0
    %9932 = vmatpush.bf16.msra.mxu0 0
    %9933 = vmatpush.bf16.msra.mxu0 0
    %9934 = vmatpush.bf16.msra.mxu0 0
    %9935 = vmatpush.bf16.msra.mxu0 %v9923
    %9936 = vmatpush.bf16.msra.mxu0 %v9922
    %9937 = vmatpush.bf16.msra.mxu0 %v9921
    %9938 = vmatpush.bf16.msra.mxu0 %v9920
    %9939 = vmatmul.bf16.gmra.mxu0 %v9929
    %v9940 = vpop.f32.mrf.mxu0
    %v9941 = vadd.f32 0.0, %v9940
    %v9942 = vpop.f32.mrf.mxu0
    %9943 = vdwg.mxu0
    %v9952 = vunpack.c.l.b16 %v9328
    %v9953 = vunpack.c.l.b16 %v9329
    %v9954 = vunpack.c.l.b16 %v9330
    %v9955 = vunpack.c.l.b16 %v9331
    %v9956 = vunpack.c.l.b16 %v9332
    %v9957 = vunpack.c.l.b16 %v9333
    %v9958 = vunpack.c.l.b16 %v9334
    %v9959 = vunpack.c.l.b16 %v9335
    %v9960 = vpack.c.b16 %v9953, %v9952
    %v9961 = vpack.c.b16 %v9955, %v9954
    %v9962 = vpack.c.b16 %v9957, %v9956
    %v9963 = vpack.c.b16 %v9959, %v9958
    %v9969 = vsel %vm788, %v9230, 0
    %9971 = vmatpush.bf16.msra.mxu0 0
    %9972 = vmatpush.bf16.msra.mxu0 0
    %9973 = vmatpush.bf16.msra.mxu0 0
    %9974 = vmatpush.bf16.msra.mxu0 0
    %9975 = vmatpush.bf16.msra.mxu0 %v9963
    %9976 = vmatpush.bf16.msra.mxu0 %v9962
    %9977 = vmatpush.bf16.msra.mxu0 %v9961
    %9978 = vmatpush.bf16.msra.mxu0 %v9960
    %9979 = vmatmul.bf16.gmra.mxu0 %v9969
    %v9980 = vpop.f32.mrf.mxu0
    %v9981 = vadd.f32 0.0, %v9980
    %v9982 = vpop.f32.mrf.mxu0
    %9983 = vdwg.mxu0
    %v9992 = vunpack.c.l.b16 %v9336
    %v9993 = vunpack.c.l.b16 %v9337
    %v9994 = vunpack.c.l.b16 %v9338
    %v9995 = vunpack.c.l.b16 %v9339
    %v9996 = vunpack.c.l.b16 %v9340
    %v9997 = vunpack.c.l.b16 %v9341
    %v9998 = vunpack.c.l.b16 %v9342
    %v9999 = vunpack.c.l.b16 %v9343
    %v10000 = vpack.c.b16 %v9993, %v9992
    %v10001 = vpack.c.b16 %v9995, %v9994
    %v10002 = vpack.c.b16 %v9997, %v9996
    %v10003 = vpack.c.b16 %v9999, %v9998
    %v10009 = vsel %vm788, %v9231, 0
    %10011 = vmatpush.bf16.msra.mxu0 0
    %10012 = vmatpush.bf16.msra.mxu0 0
    %10013 = vmatpush.bf16.msra.mxu0 0
    %10014 = vmatpush.bf16.msra.mxu0 0
    %10015 = vmatpush.bf16.msra.mxu0 %v10003
    %10016 = vmatpush.bf16.msra.mxu0 %v10002
    %10017 = vmatpush.bf16.msra.mxu0 %v10001
    %10018 = vmatpush.bf16.msra.mxu0 %v10000
    %10019 = vmatmul.bf16.gmra.mxu0 %v10009
    %v10020 = vpop.f32.mrf.mxu0
    %v10021 = vadd.f32 0.0, %v10020
    %v10022 = vpop.f32.mrf.mxu0
    %10023 = vdwg.mxu0
    %v10032 = vunpack.c.l.b16 %v9344
    %v10033 = vunpack.c.l.b16 %v9345
    %v10034 = vunpack.c.l.b16 %v9346
    %v10035 = vunpack.c.l.b16 %v9347
    %v10036 = vunpack.c.l.b16 %v9348
    %v10037 = vunpack.c.l.b16 %v9349
    %v10038 = vunpack.c.l.b16 %v9350
    %v10039 = vunpack.c.l.b16 %v9351
    %v10040 = vpack.c.b16 %v10033, %v10032
    %v10041 = vpack.c.b16 %v10035, %v10034
    %v10042 = vpack.c.b16 %v10037, %v10036
    %v10043 = vpack.c.b16 %v10039, %v10038
    %v10049 = vsel %vm788, %v9232, 0
    %10051 = vmatpush.bf16.msra.mxu0 0
    %10052 = vmatpush.bf16.msra.mxu0 0
    %10053 = vmatpush.bf16.msra.mxu0 0
    %10054 = vmatpush.bf16.msra.mxu0 0
    %10055 = vmatpush.bf16.msra.mxu0 %v10043
    %10056 = vmatpush.bf16.msra.mxu0 %v10042
    %10057 = vmatpush.bf16.msra.mxu0 %v10041
    %10058 = vmatpush.bf16.msra.mxu0 %v10040
    %10059 = vmatmul.bf16.gmra.mxu0 %v10049
    %v10060 = vpop.f32.mrf.mxu0
    %v10061 = vadd.f32 0.0, %v10060
    %v10062 = vpop.f32.mrf.mxu0
    %10063 = vdwg.mxu0
    %v10072 = vunpack.c.l.b16 %v9352
    %v10073 = vunpack.c.l.b16 %v9353
    %v10074 = vunpack.c.l.b16 %v9354
    %v10075 = vunpack.c.l.b16 %v9355
    %v10076 = vunpack.c.l.b16 %v9356
    %v10077 = vunpack.c.l.b16 %v9357
    %v10078 = vunpack.c.l.b16 %v9358
    %v10079 = vunpack.c.l.b16 %v9359
    %v10080 = vpack.c.b16 %v10073, %v10072
    %v10081 = vpack.c.b16 %v10075, %v10074
    %v10082 = vpack.c.b16 %v10077, %v10076
    %v10083 = vpack.c.b16 %v10079, %v10078
    %v10089 = vsel %vm788, %v9233, 0
    %10091 = vmatpush.bf16.msra.mxu0 0
    %10092 = vmatpush.bf16.msra.mxu0 0
    %10093 = vmatpush.bf16.msra.mxu0 0
    %10094 = vmatpush.bf16.msra.mxu0 0
    %10095 = vmatpush.bf16.msra.mxu0 %v10083
    %10096 = vmatpush.bf16.msra.mxu0 %v10082
    %10097 = vmatpush.bf16.msra.mxu0 %v10081
    %10098 = vmatpush.bf16.msra.mxu0 %v10080
    %10099 = vmatmul.bf16.gmra.mxu0 %v10089
    %v10100 = vpop.f32.mrf.mxu0
    %v10101 = vadd.f32 0.0, %v10100
    %v10102 = vpop.f32.mrf.mxu0
    %10103 = vdwg.mxu0
    %v10112 = vunpack.c.l.b16 %v9360
    %v10113 = vunpack.c.l.b16 %v9361
    %v10114 = vunpack.c.l.b16 %v9362
    %v10115 = vunpack.c.l.b16 %v9363
    %v10116 = vunpack.c.l.b16 %v9364
    %v10117 = vunpack.c.l.b16 %v9365
    %v10118 = vunpack.c.l.b16 %v9366
    %v10119 = vunpack.c.l.b16 %v9367
    %v10120 = vpack.c.b16 %v10113, %v10112
    %v10121 = vpack.c.b16 %v10115, %v10114
    %v10122 = vpack.c.b16 %v10117, %v10116
    %v10123 = vpack.c.b16 %v10119, %v10118
    %v10129 = vsel %vm788, %v9234, 0
    %10131 = vmatpush.bf16.msra.mxu0 0
    %10132 = vmatpush.bf16.msra.mxu0 0
    %10133 = vmatpush.bf16.msra.mxu0 0
    %10134 = vmatpush.bf16.msra.mxu0 0
    %10135 = vmatpush.bf16.msra.mxu0 %v10123
    %10136 = vmatpush.bf16.msra.mxu0 %v10122
    %10137 = vmatpush.bf16.msra.mxu0 %v10121
    %10138 = vmatpush.bf16.msra.mxu0 %v10120
    %10139 = vmatmul.bf16.gmra.mxu0 %v10129
    %v10140 = vpop.f32.mrf.mxu0
    %v10141 = vadd.f32 0.0, %v10140
    %v10142 = vpop.f32.mrf.mxu0
    %10143 = vdwg.mxu0
    %v10152 = vunpack.c.l.b16 %v9368
    %v10153 = vunpack.c.l.b16 %v9369
    %v10154 = vunpack.c.l.b16 %v9370
    %v10155 = vunpack.c.l.b16 %v9371
    %v10156 = vunpack.c.l.b16 %v9372
    %v10157 = vunpack.c.l.b16 %v9373
    %v10158 = vunpack.c.l.b16 %v9374
    %v10159 = vunpack.c.l.b16 %v9375
    %v10160 = vpack.c.b16 %v10153, %v10152
    %v10161 = vpack.c.b16 %v10155, %v10154
    %v10162 = vpack.c.b16 %v10157, %v10156
    %v10163 = vpack.c.b16 %v10159, %v10158
    %v10169 = vsel %vm788, %v9235, 0
    %10171 = vmatpush.bf16.msra.mxu0 0
    %10172 = vmatpush.bf16.msra.mxu0 0
    %10173 = vmatpush.bf16.msra.mxu0 0
    %10174 = vmatpush.bf16.msra.mxu0 0
    %10175 = vmatpush.bf16.msra.mxu0 %v10163
    %10176 = vmatpush.bf16.msra.mxu0 %v10162
    %10177 = vmatpush.bf16.msra.mxu0 %v10161
    %10178 = vmatpush.bf16.msra.mxu0 %v10160
    %10179 = vmatmul.bf16.gmra.mxu0 %v10169
    %v10180 = vpop.f32.mrf.mxu0
    %v10181 = vadd.f32 0.0, %v10180
    %v10182 = vpop.f32.mrf.mxu0
    %10183 = vdwg.mxu0
    %v10192 = vunpack.c.l.b16 %v9376
    %v10193 = vunpack.c.l.b16 %v9377
    %v10194 = vunpack.c.l.b16 %v9378
    %v10195 = vunpack.c.l.b16 %v9379
    %v10196 = vunpack.c.l.b16 %v9380
    %v10197 = vunpack.c.l.b16 %v9381
    %v10198 = vunpack.c.l.b16 %v9382
    %v10199 = vunpack.c.l.b16 %v9383
    %v10200 = vpack.c.b16 %v10193, %v10192
    %v10201 = vpack.c.b16 %v10195, %v10194
    %v10202 = vpack.c.b16 %v10197, %v10196
    %v10203 = vpack.c.b16 %v10199, %v10198
    %v10209 = vsel %vm788, %v9236, 0
    %10211 = vmatpush.bf16.msra.mxu0 0
    %10212 = vmatpush.bf16.msra.mxu0 0
    %10213 = vmatpush.bf16.msra.mxu0 0
    %10214 = vmatpush.bf16.msra.mxu0 0
    %10215 = vmatpush.bf16.msra.mxu0 %v10203
    %10216 = vmatpush.bf16.msra.mxu0 %v10202
    %10217 = vmatpush.bf16.msra.mxu0 %v10201
    %10218 = vmatpush.bf16.msra.mxu0 %v10200
    %10219 = vmatmul.bf16.gmra.mxu0 %v10209
    %v10220 = vpop.f32.mrf.mxu0
    %v10221 = vadd.f32 0.0, %v10220
    %v10222 = vpop.f32.mrf.mxu0
    %10223 = vdwg.mxu0
    %v10232 = vunpack.c.l.b16 %v9384
    %v10233 = vunpack.c.l.b16 %v9385
    %v10234 = vunpack.c.l.b16 %v9386
    %v10235 = vunpack.c.l.b16 %v9387
    %v10236 = vunpack.c.l.b16 %v9388
    %v10237 = vunpack.c.l.b16 %v9389
    %v10238 = vunpack.c.l.b16 %v9390
    %v10239 = vunpack.c.l.b16 %v9391
    %v10240 = vpack.c.b16 %v10233, %v10232
    %v10241 = vpack.c.b16 %v10235, %v10234
    %v10242 = vpack.c.b16 %v10237, %v10236
    %v10243 = vpack.c.b16 %v10239, %v10238
    %v10249 = vsel %vm788, %v9237, 0
    %10251 = vmatpush.bf16.msra.mxu0 0
    %10252 = vmatpush.bf16.msra.mxu0 0
    %10253 = vmatpush.bf16.msra.mxu0 0
    %10254 = vmatpush.bf16.msra.mxu0 0
    %10255 = vmatpush.bf16.msra.mxu0 %v10243
    %10256 = vmatpush.bf16.msra.mxu0 %v10242
    %10257 = vmatpush.bf16.msra.mxu0 %v10241
    %10258 = vmatpush.bf16.msra.mxu0 %v10240
    %10259 = vmatmul.bf16.gmra.mxu0 %v10249
    %v10260 = vpop.f32.mrf.mxu0
    %v10261 = vadd.f32 0.0, %v10260
    %v10262 = vpop.f32.mrf.mxu0
    %10263 = vdwg.mxu0
    %v10272 = vunpack.c.l.b16 %v9392
    %v10273 = vunpack.c.l.b16 %v9393
    %v10274 = vunpack.c.l.b16 %v9394
    %v10275 = vunpack.c.l.b16 %v9395
    %v10276 = vunpack.c.l.b16 %v9396
    %v10277 = vunpack.c.l.b16 %v9397
    %v10278 = vunpack.c.l.b16 %v9398
    %v10279 = vunpack.c.l.b16 %v9399
    %v10280 = vpack.c.b16 %v10273, %v10272
    %v10281 = vpack.c.b16 %v10275, %v10274
    %v10282 = vpack.c.b16 %v10277, %v10276
    %v10283 = vpack.c.b16 %v10279, %v10278
    %v10289 = vsel %vm788, %v9238, 0
    %10291 = vmatpush.bf16.msra.mxu0 0
    %10292 = vmatpush.bf16.msra.mxu0 0
    %10293 = vmatpush.bf16.msra.mxu0 0
    %10294 = vmatpush.bf16.msra.mxu0 0
    %10295 = vmatpush.bf16.msra.mxu0 %v10283
    %10296 = vmatpush.bf16.msra.mxu0 %v10282
    %10297 = vmatpush.bf16.msra.mxu0 %v10281
    %10298 = vmatpush.bf16.msra.mxu0 %v10280
    %10299 = vmatmul.bf16.gmra.mxu0 %v10289
    %v10300 = vpop.f32.mrf.mxu0
    %v10301 = vadd.f32 0.0, %v10300
    %v10302 = vpop.f32.mrf.mxu0
    %10303 = vdwg.mxu0
    %v10312 = vunpack.c.l.b16 %v9400
    %v10313 = vunpack.c.l.b16 %v9401
    %v10314 = vunpack.c.l.b16 %v9402
    %v10315 = vunpack.c.l.b16 %v9403
    %v10316 = vunpack.c.l.b16 %v9404
    %v10317 = vunpack.c.l.b16 %v9405
    %v10318 = vunpack.c.l.b16 %v9406
    %v10319 = vunpack.c.l.b16 %v9407
    %v10320 = vpack.c.b16 %v10313, %v10312
    %v10321 = vpack.c.b16 %v10315, %v10314
    %v10322 = vpack.c.b16 %v10317, %v10316
    %v10323 = vpack.c.b16 %v10319, %v10318
    %v10329 = vsel %vm788, %v9239, 0
    %10331 = vmatpush.bf16.msra.mxu0 0
    %10332 = vmatpush.bf16.msra.mxu0 0
    %10333 = vmatpush.bf16.msra.mxu0 0
    %10334 = vmatpush.bf16.msra.mxu0 0
    %10335 = vmatpush.bf16.msra.mxu0 %v10323
    %10336 = vmatpush.bf16.msra.mxu0 %v10322
    %10337 = vmatpush.bf16.msra.mxu0 %v10321
    %10338 = vmatpush.bf16.msra.mxu0 %v10320
    %10339 = vmatmul.bf16.gmra.mxu0 %v10329
    %v10340 = vpop.f32.mrf.mxu0
    %v10341 = vadd.f32 0.0, %v10340
    %v10342 = vpop.f32.mrf.mxu0
    %10343 = vdwg.mxu0
    %v10352 = vunpack.c.l.b16 %v9408
    %v10353 = vunpack.c.l.b16 %v9409
    %v10354 = vunpack.c.l.b16 %v9410
    %v10355 = vunpack.c.l.b16 %v9411
    %v10356 = vunpack.c.l.b16 %v9412
    %v10357 = vunpack.c.l.b16 %v9413
    %v10358 = vunpack.c.l.b16 %v9414
    %v10359 = vunpack.c.l.b16 %v9415
    %v10360 = vpack.c.b16 %v10353, %v10352
    %v10361 = vpack.c.b16 %v10355, %v10354
    %v10362 = vpack.c.b16 %v10357, %v10356
    %v10363 = vpack.c.b16 %v10359, %v10358
    %v10369 = vsel %vm788, %v9240, 0
    %10371 = vmatpush.bf16.msra.mxu0 0
    %10372 = vmatpush.bf16.msra.mxu0 0
    %10373 = vmatpush.bf16.msra.mxu0 0
    %10374 = vmatpush.bf16.msra.mxu0 0
    %10375 = vmatpush.bf16.msra.mxu0 %v10363
    %10376 = vmatpush.bf16.msra.mxu0 %v10362
    %10377 = vmatpush.bf16.msra.mxu0 %v10361
    %10378 = vmatpush.bf16.msra.mxu0 %v10360
    %10379 = vmatmul.bf16.gmra.mxu0 %v10369
    %v10380 = vpop.f32.mrf.mxu0
    %v10381 = vadd.f32 0.0, %v10380
    %v10382 = vpop.f32.mrf.mxu0
    %10383 = vdwg.mxu0
    %v10392 = vunpack.c.l.b16 %v9416
    %v10393 = vunpack.c.l.b16 %v9417
    %v10394 = vunpack.c.l.b16 %v9418
    %v10395 = vunpack.c.l.b16 %v9419
    %v10396 = vunpack.c.l.b16 %v9420
    %v10397 = vunpack.c.l.b16 %v9421
    %v10398 = vunpack.c.l.b16 %v9422
    %v10399 = vunpack.c.l.b16 %v9423
    %v10400 = vpack.c.b16 %v10393, %v10392
    %v10401 = vpack.c.b16 %v10395, %v10394
    %v10402 = vpack.c.b16 %v10397, %v10396
    %v10403 = vpack.c.b16 %v10399, %v10398
    %v10409 = vsel %vm788, %v9241, 0
    %10411 = vmatpush.bf16.msra.mxu0 0
    %10412 = vmatpush.bf16.msra.mxu0 0
    %10413 = vmatpush.bf16.msra.mxu0 0
    %10414 = vmatpush.bf16.msra.mxu0 0
    %10415 = vmatpush.bf16.msra.mxu0 %v10403
    %10416 = vmatpush.bf16.msra.mxu0 %v10402
    %10417 = vmatpush.bf16.msra.mxu0 %v10401
    %10418 = vmatpush.bf16.msra.mxu0 %v10400
    %10419 = vmatmul.bf16.gmra.mxu0 %v10409
    %v10420 = vpop.f32.mrf.mxu0
    %v10421 = vadd.f32 0.0, %v10420
    %v10422 = vpop.f32.mrf.mxu0
    %10423 = vdwg.mxu0
    %v10432 = vunpack.c.l.b16 %v9424
    %v10433 = vunpack.c.l.b16 %v9425
    %v10434 = vunpack.c.l.b16 %v9426
    %v10435 = vunpack.c.l.b16 %v9427
    %v10436 = vunpack.c.l.b16 %v9428
    %v10437 = vunpack.c.l.b16 %v9429
    %v10438 = vunpack.c.l.b16 %v9430
    %v10439 = vunpack.c.l.b16 %v9431
    %v10440 = vpack.c.b16 %v10433, %v10432
    %v10441 = vpack.c.b16 %v10435, %v10434
    %v10442 = vpack.c.b16 %v10437, %v10436
    %v10443 = vpack.c.b16 %v10439, %v10438
    %v10449 = vsel %vm788, %v9242, 0
    %10451 = vmatpush.bf16.msra.mxu0 0
    %10452 = vmatpush.bf16.msra.mxu0 0
    %10453 = vmatpush.bf16.msra.mxu0 0
    %10454 = vmatpush.bf16.msra.mxu0 0
    %10455 = vmatpush.bf16.msra.mxu0 %v10443
    %10456 = vmatpush.bf16.msra.mxu0 %v10442
    %10457 = vmatpush.bf16.msra.mxu0 %v10441
    %10458 = vmatpush.bf16.msra.mxu0 %v10440
    %10459 = vmatmul.bf16.gmra.mxu0 %v10449
    %v10460 = vpop.f32.mrf.mxu0
    %v10461 = vadd.f32 0.0, %v10460
    %v10462 = vpop.f32.mrf.mxu0
    %10463 = vdwg.mxu0
    %v10472 = vunpack.c.l.b16 %v9432
    %v10473 = vunpack.c.l.b16 %v9433
    %v10474 = vunpack.c.l.b16 %v9434
    %v10475 = vunpack.c.l.b16 %v9435
    %v10476 = vunpack.c.l.b16 %v9436
    %v10477 = vunpack.c.l.b16 %v9437
    %v10478 = vunpack.c.l.b16 %v9438
    %v10479 = vunpack.c.l.b16 %v9439
    %v10480 = vpack.c.b16 %v10473, %v10472
    %v10481 = vpack.c.b16 %v10475, %v10474
    %v10482 = vpack.c.b16 %v10477, %v10476
    %v10483 = vpack.c.b16 %v10479, %v10478
    %v10489 = vsel %vm788, %v9243, 0
    %10491 = vmatpush.bf16.msra.mxu0 0
    %10492 = vmatpush.bf16.msra.mxu0 0
    %10493 = vmatpush.bf16.msra.mxu0 0
    %10494 = vmatpush.bf16.msra.mxu0 0
    %10495 = vmatpush.bf16.msra.mxu0 %v10483
    %10496 = vmatpush.bf16.msra.mxu0 %v10482
    %10497 = vmatpush.bf16.msra.mxu0 %v10481
    %10498 = vmatpush.bf16.msra.mxu0 %v10480
    %10499 = vmatmul.bf16.gmra.mxu0 %v10489
    %v10500 = vpop.f32.mrf.mxu0
    %v10501 = vadd.f32 0.0, %v10500
    %v10502 = vpop.f32.mrf.mxu0
    %10503 = vdwg.mxu0
    %v10512 = vunpack.c.l.b16 %v9440
    %v10513 = vunpack.c.l.b16 %v9441
    %v10514 = vunpack.c.l.b16 %v9442
    %v10515 = vunpack.c.l.b16 %v9443
    %v10516 = vunpack.c.l.b16 %v9444
    %v10517 = vunpack.c.l.b16 %v9445
    %v10518 = vunpack.c.l.b16 %v9446
    %v10519 = vunpack.c.l.b16 %v9447
    %v10520 = vpack.c.b16 %v10513, %v10512
    %v10521 = vpack.c.b16 %v10515, %v10514
    %v10522 = vpack.c.b16 %v10517, %v10516
    %v10523 = vpack.c.b16 %v10519, %v10518
    %v10529 = vsel %vm788, %v9244, 0
    %10531 = vmatpush.bf16.msra.mxu0 0
    %10532 = vmatpush.bf16.msra.mxu0 0
    %10533 = vmatpush.bf16.msra.mxu0 0
    %10534 = vmatpush.bf16.msra.mxu0 0
    %10535 = vmatpush.bf16.msra.mxu0 %v10523
    %10536 = vmatpush.bf16.msra.mxu0 %v10522
    %10537 = vmatpush.bf16.msra.mxu0 %v10521
    %10538 = vmatpush.bf16.msra.mxu0 %v10520
    %10539 = vmatmul.bf16.gmra.mxu0 %v10529
    %v10540 = vpop.f32.mrf.mxu0
    %v10541 = vadd.f32 0.0, %v10540
    %v10542 = vpop.f32.mrf.mxu0
    %10543 = vdwg.mxu0
    %v10552 = vunpack.c.l.b16 %v9448
    %v10553 = vunpack.c.l.b16 %v9449
    %v10554 = vunpack.c.l.b16 %v9450
    %v10555 = vunpack.c.l.b16 %v9451
    %v10556 = vunpack.c.l.b16 %v9452
    %v10557 = vunpack.c.l.b16 %v9453
    %v10558 = vunpack.c.l.b16 %v9454
    %v10559 = vunpack.c.l.b16 %v9455
    %v10560 = vpack.c.b16 %v10553, %v10552
    %v10561 = vpack.c.b16 %v10555, %v10554
    %v10562 = vpack.c.b16 %v10557, %v10556
    %v10563 = vpack.c.b16 %v10559, %v10558
    %v10569 = vsel %vm788, %v9245, 0
    %10571 = vmatpush.bf16.msra.mxu0 0
    %10572 = vmatpush.bf16.msra.mxu0 0
    %10573 = vmatpush.bf16.msra.mxu0 0
    %10574 = vmatpush.bf16.msra.mxu0 0
    %10575 = vmatpush.bf16.msra.mxu0 %v10563
    %10576 = vmatpush.bf16.msra.mxu0 %v10562
    %10577 = vmatpush.bf16.msra.mxu0 %v10561
    %10578 = vmatpush.bf16.msra.mxu0 %v10560
    %10579 = vmatmul.bf16.gmra.mxu0 %v10569
    %v10580 = vpop.f32.mrf.mxu0
    %v10581 = vadd.f32 0.0, %v10580
    %v10582 = vpop.f32.mrf.mxu0
    %10583 = vdwg.mxu0
    %v10592 = vunpack.c.l.b16 %v9456
    %v10593 = vunpack.c.l.b16 %v9457
    %v10594 = vunpack.c.l.b16 %v9458
    %v10595 = vunpack.c.l.b16 %v9459
    %v10596 = vunpack.c.l.b16 %v9460
    %v10597 = vunpack.c.l.b16 %v9461
    %v10598 = vunpack.c.l.b16 %v9462
    %v10599 = vunpack.c.l.b16 %v9463
    %v10600 = vpack.c.b16 %v10593, %v10592
    %v10601 = vpack.c.b16 %v10595, %v10594
    %v10602 = vpack.c.b16 %v10597, %v10596
    %v10603 = vpack.c.b16 %v10599, %v10598
    %v10609 = vsel %vm788, %v9246, 0
    %10611 = vmatpush.bf16.msra.mxu0 0
    %10612 = vmatpush.bf16.msra.mxu0 0
    %10613 = vmatpush.bf16.msra.mxu0 0
    %10614 = vmatpush.bf16.msra.mxu0 0
    %10615 = vmatpush.bf16.msra.mxu0 %v10603
    %10616 = vmatpush.bf16.msra.mxu0 %v10602
    %10617 = vmatpush.bf16.msra.mxu0 %v10601
    %10618 = vmatpush.bf16.msra.mxu0 %v10600
    %10619 = vmatmul.bf16.gmra.mxu0 %v10609
    %v10620 = vpop.f32.mrf.mxu0
    %v10621 = vadd.f32 0.0, %v10620
    %v10622 = vpop.f32.mrf.mxu0
    %10623 = vdwg.mxu0
    %v10632 = vunpack.c.l.b16 %v9464
    %v10633 = vunpack.c.l.b16 %v9465
    %v10634 = vunpack.c.l.b16 %v9466
    %v10635 = vunpack.c.l.b16 %v9467
    %v10636 = vunpack.c.l.b16 %v9468
    %v10637 = vunpack.c.l.b16 %v9469
    %v10638 = vunpack.c.l.b16 %v9470
    %v10639 = vunpack.c.l.b16 %v9471
    %v10640 = vpack.c.b16 %v10633, %v10632
    %v10641 = vpack.c.b16 %v10635, %v10634
    %v10642 = vpack.c.b16 %v10637, %v10636
    %v10643 = vpack.c.b16 %v10639, %v10638
    %v10649 = vsel %vm788, %v9247, 0
    %10651 = vmatpush.bf16.msra.mxu0 0
    %10652 = vmatpush.bf16.msra.mxu0 0
    %10653 = vmatpush.bf16.msra.mxu0 0
    %10654 = vmatpush.bf16.msra.mxu0 0
    %10655 = vmatpush.bf16.msra.mxu0 %v10643
    %10656 = vmatpush.bf16.msra.mxu0 %v10642
    %10657 = vmatpush.bf16.msra.mxu0 %v10641
    %10658 = vmatpush.bf16.msra.mxu0 %v10640
    %10659 = vmatmul.bf16.gmra.mxu0 %v10649
    %v10660 = vpop.f32.mrf.mxu0
    %v10661 = vadd.f32 0.0, %v10660
    %v10662 = vpop.f32.mrf.mxu0
    %10663 = vdwg.mxu0
    %v10672 = vunpack.c.l.b16 %v9472
    %v10673 = vunpack.c.l.b16 %v9473
    %v10674 = vunpack.c.l.b16 %v9474
    %v10675 = vunpack.c.l.b16 %v9475
    %v10676 = vunpack.c.l.b16 %v9476
    %v10677 = vunpack.c.l.b16 %v9477
    %v10678 = vunpack.c.l.b16 %v9478
    %v10679 = vunpack.c.l.b16 %v9479
    %v10680 = vpack.c.b16 %v10673, %v10672
    %v10681 = vpack.c.b16 %v10675, %v10674
    %v10682 = vpack.c.b16 %v10677, %v10676
    %v10683 = vpack.c.b16 %v10679, %v10678
    %v10689 = vsel %vm788, %v9248, 0
    %10691 = vmatpush.bf16.msra.mxu0 0
    %10692 = vmatpush.bf16.msra.mxu0 0
    %10693 = vmatpush.bf16.msra.mxu0 0
    %10694 = vmatpush.bf16.msra.mxu0 0
    %10695 = vmatpush.bf16.msra.mxu0 %v10683
    %10696 = vmatpush.bf16.msra.mxu0 %v10682
    %10697 = vmatpush.bf16.msra.mxu0 %v10681
    %10698 = vmatpush.bf16.msra.mxu0 %v10680
    %10699 = vmatmul.bf16.gmra.mxu0 %v10689
    %v10700 = vpop.f32.mrf.mxu0
    %v10701 = vadd.f32 0.0, %v10700
    %v10702 = vpop.f32.mrf.mxu0
    %10703 = vdwg.mxu0
    %v10712 = vunpack.c.l.b16 %v9480
    %v10713 = vunpack.c.l.b16 %v9481
    %v10714 = vunpack.c.l.b16 %v9482
    %v10715 = vunpack.c.l.b16 %v9483
    %v10716 = vunpack.c.l.b16 %v9484
    %v10717 = vunpack.c.l.b16 %v9485
    %v10718 = vunpack.c.l.b16 %v9486
    %v10719 = vunpack.c.l.b16 %v9487
    %v10720 = vpack.c.b16 %v10713, %v10712
    %v10721 = vpack.c.b16 %v10715, %v10714
    %v10722 = vpack.c.b16 %v10717, %v10716
    %v10723 = vpack.c.b16 %v10719, %v10718
    %v10729 = vsel %vm788, %v9249, 0
    %10731 = vmatpush.bf16.msra.mxu0 0
    %10732 = vmatpush.bf16.msra.mxu0 0
    %10733 = vmatpush.bf16.msra.mxu0 0
    %10734 = vmatpush.bf16.msra.mxu0 0
    %10735 = vmatpush.bf16.msra.mxu0 %v10723
    %10736 = vmatpush.bf16.msra.mxu0 %v10722
    %10737 = vmatpush.bf16.msra.mxu0 %v10721
    %10738 = vmatpush.bf16.msra.mxu0 %v10720
    %10739 = vmatmul.bf16.gmra.mxu0 %v10729
    %v10740 = vpop.f32.mrf.mxu0
    %v10741 = vadd.f32 0.0, %v10740
    %v10742 = vpop.f32.mrf.mxu0
    %10743 = vdwg.mxu0
    %v10752 = vunpack.c.l.b16 %v9488
    %v10753 = vunpack.c.l.b16 %v9489
    %v10754 = vunpack.c.l.b16 %v9490
    %v10755 = vunpack.c.l.b16 %v9491
    %v10756 = vunpack.c.l.b16 %v9492
    %v10757 = vunpack.c.l.b16 %v9493
    %v10758 = vunpack.c.l.b16 %v9494
    %v10759 = vunpack.c.l.b16 %v9495
    %v10760 = vpack.c.b16 %v10753, %v10752
    %v10761 = vpack.c.b16 %v10755, %v10754
    %v10762 = vpack.c.b16 %v10757, %v10756
    %v10763 = vpack.c.b16 %v10759, %v10758
    %v10769 = vsel %vm788, %v9250, 0
    %10771 = vmatpush.bf16.msra.mxu0 0
    %10772 = vmatpush.bf16.msra.mxu0 0
    %10773 = vmatpush.bf16.msra.mxu0 0
    %10774 = vmatpush.bf16.msra.mxu0 0
    %10775 = vmatpush.bf16.msra.mxu0 %v10763
    %10776 = vmatpush.bf16.msra.mxu0 %v10762
    %10777 = vmatpush.bf16.msra.mxu0 %v10761
    %10778 = vmatpush.bf16.msra.mxu0 %v10760
    %10779 = vmatmul.bf16.gmra.mxu0 %v10769
    %v10780 = vpop.f32.mrf.mxu0
    %v10781 = vadd.f32 0.0, %v10780
    %v10782 = vpop.f32.mrf.mxu0
    %10783 = vdwg.mxu0
    %v10792 = vunpack.c.l.b16 %v9496
    %v10793 = vunpack.c.l.b16 %v9497
    %v10794 = vunpack.c.l.b16 %v9498
    %v10795 = vunpack.c.l.b16 %v9499
    %v10796 = vunpack.c.l.b16 %v9500
    %v10797 = vunpack.c.l.b16 %v9501
    %v10798 = vunpack.c.l.b16 %v9502
    %v10799 = vunpack.c.l.b16 %v9503
    %v10800 = vpack.c.b16 %v10793, %v10792
    %v10801 = vpack.c.b16 %v10795, %v10794
    %v10802 = vpack.c.b16 %v10797, %v10796
    %v10803 = vpack.c.b16 %v10799, %v10798
    %v10809 = vsel %vm788, %v9251, 0
    %10811 = vmatpush.bf16.msra.mxu0 0
    %10812 = vmatpush.bf16.msra.mxu0 0
    %10813 = vmatpush.bf16.msra.mxu0 0
    %10814 = vmatpush.bf16.msra.mxu0 0
    %10815 = vmatpush.bf16.msra.mxu0 %v10803
    %10816 = vmatpush.bf16.msra.mxu0 %v10802
    %10817 = vmatpush.bf16.msra.mxu0 %v10801
    %10818 = vmatpush.bf16.msra.mxu0 %v10800
    %10819 = vmatmul.bf16.gmra.mxu0 %v10809
    %v10820 = vpop.f32.mrf.mxu0
    %v10821 = vadd.f32 0.0, %v10820
    %v10822 = vpop.f32.mrf.mxu0
    %10823 = vdwg.mxu0
    %v10832 = vunpack.c.l.b16 %v9504
    %v10833 = vunpack.c.l.b16 %v9505
    %v10834 = vunpack.c.l.b16 %v9506
    %v10835 = vunpack.c.l.b16 %v9507
    %v10836 = vunpack.c.l.b16 %v9508
    %v10837 = vunpack.c.l.b16 %v9509
    %v10838 = vunpack.c.l.b16 %v9510
    %v10839 = vunpack.c.l.b16 %v9511
    %v10840 = vpack.c.b16 %v10833, %v10832
    %v10841 = vpack.c.b16 %v10835, %v10834
    %v10842 = vpack.c.b16 %v10837, %v10836
    %v10843 = vpack.c.b16 %v10839, %v10838
    %v10849 = vsel %vm788, %v9252, 0
    %10851 = vmatpush.bf16.msra.mxu0 0
    %10852 = vmatpush.bf16.msra.mxu0 0
    %10853 = vmatpush.bf16.msra.mxu0 0
    %10854 = vmatpush.bf16.msra.mxu0 0
    %10855 = vmatpush.bf16.msra.mxu0 %v10843
    %10856 = vmatpush.bf16.msra.mxu0 %v10842
    %10857 = vmatpush.bf16.msra.mxu0 %v10841
    %10858 = vmatpush.bf16.msra.mxu0 %v10840
    %10859 = vmatmul.bf16.gmra.mxu0 %v10849
    %v10860 = vpop.f32.mrf.mxu0
    %v10861 = vadd.f32 0.0, %v10860
    %v10862 = vpop.f32.mrf.mxu0
    %10863 = vdwg.mxu0
    %v10872 = vunpack.c.l.b16 %v9512
    %v10873 = vunpack.c.l.b16 %v9513
    %v10874 = vunpack.c.l.b16 %v9514
    %v10875 = vunpack.c.l.b16 %v9515
    %v10876 = vunpack.c.l.b16 %v9516
    %v10877 = vunpack.c.l.b16 %v9517
    %v10878 = vunpack.c.l.b16 %v9518
    %v10879 = vunpack.c.l.b16 %v9519
    %v10880 = vpack.c.b16 %v10873, %v10872
    %v10881 = vpack.c.b16 %v10875, %v10874
    %v10882 = vpack.c.b16 %v10877, %v10876
    %v10883 = vpack.c.b16 %v10879, %v10878
    %v10889 = vsel %vm788, %v9253, 0
    %10891 = vmatpush.bf16.msra.mxu0 0
    %10892 = vmatpush.bf16.msra.mxu0 0
    %10893 = vmatpush.bf16.msra.mxu0 0
    %10894 = vmatpush.bf16.msra.mxu0 0
    %10895 = vmatpush.bf16.msra.mxu0 %v10883
    %10896 = vmatpush.bf16.msra.mxu0 %v10882
    %10897 = vmatpush.bf16.msra.mxu0 %v10881
    %10898 = vmatpush.bf16.msra.mxu0 %v10880
    %10899 = vmatmul.bf16.gmra.mxu0 %v10889
    %v10900 = vpop.f32.mrf.mxu0
    %v10901 = vadd.f32 0.0, %v10900
    %v10902 = vpop.f32.mrf.mxu0
    %10903 = vdwg.mxu0
    %v10912 = vunpack.c.l.b16 %v9520
    %v10913 = vunpack.c.l.b16 %v9521
    %v10914 = vunpack.c.l.b16 %v9522
    %v10915 = vunpack.c.l.b16 %v9523
    %v10916 = vunpack.c.l.b16 %v9524
    %v10917 = vunpack.c.l.b16 %v9525
    %v10918 = vunpack.c.l.b16 %v9526
    %v10919 = vunpack.c.l.b16 %v9527
    %v10920 = vpack.c.b16 %v10913, %v10912
    %v10921 = vpack.c.b16 %v10915, %v10914
    %v10922 = vpack.c.b16 %v10917, %v10916
    %v10923 = vpack.c.b16 %v10919, %v10918
    %v10929 = vsel %vm788, %v9254, 0
    %10931 = vmatpush.bf16.msra.mxu0 0
    %10932 = vmatpush.bf16.msra.mxu0 0
    %10933 = vmatpush.bf16.msra.mxu0 0
    %10934 = vmatpush.bf16.msra.mxu0 0
    %10935 = vmatpush.bf16.msra.mxu0 %v10923
    %10936 = vmatpush.bf16.msra.mxu0 %v10922
    %10937 = vmatpush.bf16.msra.mxu0 %v10921
    %10938 = vmatpush.bf16.msra.mxu0 %v10920
    %10939 = vmatmul.bf16.gmra.mxu0 %v10929
    %v10940 = vpop.f32.mrf.mxu0
    %v10941 = vadd.f32 0.0, %v10940
    %v10942 = vpop.f32.mrf.mxu0
    %10943 = vdwg.mxu0
    %v10952 = vunpack.c.l.b16 %v9528
    %v10953 = vunpack.c.l.b16 %v9529
    %v10954 = vunpack.c.l.b16 %v9530
    %v10955 = vunpack.c.l.b16 %v9531
    %v10956 = vunpack.c.l.b16 %v9532
    %v10957 = vunpack.c.l.b16 %v9533
    %v10958 = vunpack.c.l.b16 %v9534
    %v10959 = vunpack.c.l.b16 %v9535
    %v10960 = vpack.c.b16 %v10953, %v10952
    %v10961 = vpack.c.b16 %v10955, %v10954
    %v10962 = vpack.c.b16 %v10957, %v10956
    %v10963 = vpack.c.b16 %v10959, %v10958
    %v10969 = vsel %vm788, %v9255, 0
    %10971 = vmatpush.bf16.msra.mxu0 0
    %10972 = vmatpush.bf16.msra.mxu0 0
    %10973 = vmatpush.bf16.msra.mxu0 0
    %10974 = vmatpush.bf16.msra.mxu0 0
    %10975 = vmatpush.bf16.msra.mxu0 %v10963
    %10976 = vmatpush.bf16.msra.mxu0 %v10962
    %10977 = vmatpush.bf16.msra.mxu0 %v10961
    %10978 = vmatpush.bf16.msra.mxu0 %v10960
    %10979 = vmatmul.bf16.gmra.mxu0 %v10969
    %v10980 = vpop.f32.mrf.mxu0
    %v10981 = vadd.f32 0.0, %v10980
    %v10982 = vpop.f32.mrf.mxu0
    %10983 = vdwg.mxu0
    %v10992 = vunpack.c.l.b16 %v9536
    %v10993 = vunpack.c.l.b16 %v9537
    %v10994 = vunpack.c.l.b16 %v9538
    %v10995 = vunpack.c.l.b16 %v9539
    %v10996 = vunpack.c.l.b16 %v9540
    %v10997 = vunpack.c.l.b16 %v9541
    %v10998 = vunpack.c.l.b16 %v9542
    %v10999 = vunpack.c.l.b16 %v9543
    %v11000 = vpack.c.b16 %v10993, %v10992
    %v11001 = vpack.c.b16 %v10995, %v10994
    %v11002 = vpack.c.b16 %v10997, %v10996
    %v11003 = vpack.c.b16 %v10999, %v10998
    %v11009 = vsel %vm788, %v9256, 0
    %11011 = vmatpush.bf16.msra.mxu0 0
    %11012 = vmatpush.bf16.msra.mxu0 0
    %11013 = vmatpush.bf16.msra.mxu0 0
    %11014 = vmatpush.bf16.msra.mxu0 0
    %11015 = vmatpush.bf16.msra.mxu0 %v11003
    %11016 = vmatpush.bf16.msra.mxu0 %v11002
    %11017 = vmatpush.bf16.msra.mxu0 %v11001
    %11018 = vmatpush.bf16.msra.mxu0 %v11000
    %11019 = vmatmul.bf16.gmra.mxu0 %v11009
    %v11020 = vpop.f32.mrf.mxu0
    %v11021 = vadd.f32 0.0, %v11020
    %v11022 = vpop.f32.mrf.mxu0
    %11023 = vdwg.mxu0
    %v11032 = vunpack.c.l.b16 %v9544
    %v11033 = vunpack.c.l.b16 %v9545
    %v11034 = vunpack.c.l.b16 %v9546
    %v11035 = vunpack.c.l.b16 %v9547
    %v11036 = vunpack.c.l.b16 %v9548
    %v11037 = vunpack.c.l.b16 %v9549
    %v11038 = vunpack.c.l.b16 %v9550
    %v11039 = vunpack.c.l.b16 %v9551
    %v11040 = vpack.c.b16 %v11033, %v11032
    %v11041 = vpack.c.b16 %v11035, %v11034
    %v11042 = vpack.c.b16 %v11037, %v11036
    %v11043 = vpack.c.b16 %v11039, %v11038
    %v11049 = vsel %vm788, %v9257, 0
    %11051 = vmatpush.bf16.msra.mxu0 0
    %11052 = vmatpush.bf16.msra.mxu0 0
    %11053 = vmatpush.bf16.msra.mxu0 0
    %11054 = vmatpush.bf16.msra.mxu0 0
    %11055 = vmatpush.bf16.msra.mxu0 %v11043
    %11056 = vmatpush.bf16.msra.mxu0 %v11042
    %11057 = vmatpush.bf16.msra.mxu0 %v11041
    %11058 = vmatpush.bf16.msra.mxu0 %v11040
    %11059 = vmatmul.bf16.gmra.mxu0 %v11049
    %v11060 = vpop.f32.mrf.mxu0
    %v11061 = vadd.f32 0.0, %v11060
    %v11062 = vpop.f32.mrf.mxu0
    %11063 = vdwg.mxu0
    %v11072 = vunpack.c.l.b16 %v9552
    %v11073 = vunpack.c.l.b16 %v9553
    %v11074 = vunpack.c.l.b16 %v9554
    %v11075 = vunpack.c.l.b16 %v9555
    %v11076 = vunpack.c.l.b16 %v9556
    %v11077 = vunpack.c.l.b16 %v9557
    %v11078 = vunpack.c.l.b16 %v9558
    %v11079 = vunpack.c.l.b16 %v9559
    %v11080 = vpack.c.b16 %v11073, %v11072
    %v11081 = vpack.c.b16 %v11075, %v11074
    %v11082 = vpack.c.b16 %v11077, %v11076
    %v11083 = vpack.c.b16 %v11079, %v11078
    %v11089 = vsel %vm788, %v9258, 0
    %11091 = vmatpush.bf16.msra.mxu0 0
    %11092 = vmatpush.bf16.msra.mxu0 0
    %11093 = vmatpush.bf16.msra.mxu0 0
    %11094 = vmatpush.bf16.msra.mxu0 0
    %11095 = vmatpush.bf16.msra.mxu0 %v11083
    %11096 = vmatpush.bf16.msra.mxu0 %v11082
    %11097 = vmatpush.bf16.msra.mxu0 %v11081
    %11098 = vmatpush.bf16.msra.mxu0 %v11080
    %11099 = vmatmul.bf16.gmra.mxu0 %v11089
    %v11100 = vpop.f32.mrf.mxu0
    %v11101 = vadd.f32 0.0, %v11100
    %v11102 = vpop.f32.mrf.mxu0
    %11103 = vdwg.mxu0
    %v11112 = vunpack.c.l.b16 %v9560
    %v11113 = vunpack.c.l.b16 %v9561
    %v11114 = vunpack.c.l.b16 %v9562
    %v11115 = vunpack.c.l.b16 %v9563
    %v11116 = vunpack.c.l.b16 %v9564
    %v11117 = vunpack.c.l.b16 %v9565
    %v11118 = vunpack.c.l.b16 %v9566
    %v11119 = vunpack.c.l.b16 %v9567
    %v11120 = vpack.c.b16 %v11113, %v11112
    %v11121 = vpack.c.b16 %v11115, %v11114
    %v11122 = vpack.c.b16 %v11117, %v11116
    %v11123 = vpack.c.b16 %v11119, %v11118
    %v11129 = vsel %vm788, %v9259, 0
    %11131 = vmatpush.bf16.msra.mxu0 0
    %11132 = vmatpush.bf16.msra.mxu0 0
    %11133 = vmatpush.bf16.msra.mxu0 0
    %11134 = vmatpush.bf16.msra.mxu0 0
    %11135 = vmatpush.bf16.msra.mxu0 %v11123
    %11136 = vmatpush.bf16.msra.mxu0 %v11122
    %11137 = vmatpush.bf16.msra.mxu0 %v11121
    %11138 = vmatpush.bf16.msra.mxu0 %v11120
    %11139 = vmatmul.bf16.gmra.mxu0 %v11129
    %v11140 = vpop.f32.mrf.mxu0
    %v11141 = vadd.f32 0.0, %v11140
    %v11142 = vpop.f32.mrf.mxu0
    %11143 = vdwg.mxu0
    %v11152 = vunpack.c.l.b16 %v9568
    %v11153 = vunpack.c.l.b16 %v9569
    %v11154 = vunpack.c.l.b16 %v9570
    %v11155 = vunpack.c.l.b16 %v9571
    %v11156 = vunpack.c.l.b16 %v9572
    %v11157 = vunpack.c.l.b16 %v9573
    %v11158 = vunpack.c.l.b16 %v9574
    %v11159 = vunpack.c.l.b16 %v9575
    %v11160 = vpack.c.b16 %v11153, %v11152
    %v11161 = vpack.c.b16 %v11155, %v11154
    %v11162 = vpack.c.b16 %v11157, %v11156
    %v11163 = vpack.c.b16 %v11159, %v11158
    %v11169 = vsel %vm788, %v9260, 0
    %11171 = vmatpush.bf16.msra.mxu0 0
    %11172 = vmatpush.bf16.msra.mxu0 0
    %11173 = vmatpush.bf16.msra.mxu0 0
    %11174 = vmatpush.bf16.msra.mxu0 0
    %11175 = vmatpush.bf16.msra.mxu0 %v11163
    %11176 = vmatpush.bf16.msra.mxu0 %v11162
    %11177 = vmatpush.bf16.msra.mxu0 %v11161
    %11178 = vmatpush.bf16.msra.mxu0 %v11160
    %11179 = vmatmul.bf16.gmra.mxu0 %v11169
    %v11180 = vpop.f32.mrf.mxu0
    %v11181 = vadd.f32 0.0, %v11180
    %v11182 = vpop.f32.mrf.mxu0
    %11183 = vdwg.mxu0
    %v11192 = vunpack.c.l.b16 %v9576
    %v11193 = vunpack.c.l.b16 %v9577
    %v11194 = vunpack.c.l.b16 %v9578
    %v11195 = vunpack.c.l.b16 %v9579
    %v11196 = vunpack.c.l.b16 %v9580
    %v11197 = vunpack.c.l.b16 %v9581
    %v11198 = vunpack.c.l.b16 %v9582
    %v11199 = vunpack.c.l.b16 %v9583
    %v11200 = vpack.c.b16 %v11193, %v11192
    %v11201 = vpack.c.b16 %v11195, %v11194
    %v11202 = vpack.c.b16 %v11197, %v11196
    %v11203 = vpack.c.b16 %v11199, %v11198
    %v11209 = vsel %vm788, %v9261, 0
    %11211 = vmatpush.bf16.msra.mxu0 0
    %11212 = vmatpush.bf16.msra.mxu0 0
    %11213 = vmatpush.bf16.msra.mxu0 0
    %11214 = vmatpush.bf16.msra.mxu0 0
    %11215 = vmatpush.bf16.msra.mxu0 %v11203
    %11216 = vmatpush.bf16.msra.mxu0 %v11202
    %11217 = vmatpush.bf16.msra.mxu0 %v11201
    %11218 = vmatpush.bf16.msra.mxu0 %v11200
    %11219 = vmatmul.bf16.gmra.mxu0 %v11209
    %v11220 = vpop.f32.mrf.mxu0
    %v11221 = vadd.f32 0.0, %v11220
    %v11222 = vpop.f32.mrf.mxu0
    %11223 = vdwg.mxu0
    %v11232 = vunpack.c.l.b16 %v9584
    %v11233 = vunpack.c.l.b16 %v9585
    %v11234 = vunpack.c.l.b16 %v9586
    %v11235 = vunpack.c.l.b16 %v9587
    %v11236 = vunpack.c.l.b16 %v9588
    %v11237 = vunpack.c.l.b16 %v9589
    %v11238 = vunpack.c.l.b16 %v9590
    %v11239 = vunpack.c.l.b16 %v9591
    %v11240 = vpack.c.b16 %v11233, %v11232
    %v11241 = vpack.c.b16 %v11235, %v11234
    %v11242 = vpack.c.b16 %v11237, %v11236
    %v11243 = vpack.c.b16 %v11239, %v11238
    %v11249 = vsel %vm788, %v9262, 0
    %11251 = vmatpush.bf16.msra.mxu0 0
    %11252 = vmatpush.bf16.msra.mxu0 0
    %11253 = vmatpush.bf16.msra.mxu0 0
    %11254 = vmatpush.bf16.msra.mxu0 0
    %11255 = vmatpush.bf16.msra.mxu0 %v11243
    %11256 = vmatpush.bf16.msra.mxu0 %v11242
    %11257 = vmatpush.bf16.msra.mxu0 %v11241
    %11258 = vmatpush.bf16.msra.mxu0 %v11240
    %11259 = vmatmul.bf16.gmra.mxu0 %v11249
    %v11260 = vpop.f32.mrf.mxu0
    %v11261 = vadd.f32 0.0, %v11260
    %v11262 = vpop.f32.mrf.mxu0
    %11263 = vdwg.mxu0
    %v11272 = vunpack.c.l.b16 %v9592
    %v11273 = vunpack.c.l.b16 %v9593
    %v11274 = vunpack.c.l.b16 %v9594
    %v11275 = vunpack.c.l.b16 %v9595
    %v11276 = vunpack.c.l.b16 %v9596
    %v11277 = vunpack.c.l.b16 %v9597
    %v11278 = vunpack.c.l.b16 %v9598
    %v11279 = vunpack.c.l.b16 %v9599
    %v11280 = vpack.c.b16 %v11273, %v11272
    %v11281 = vpack.c.b16 %v11275, %v11274
    %v11282 = vpack.c.b16 %v11277, %v11276
    %v11283 = vpack.c.b16 %v11279, %v11278
    %v11289 = vsel %vm788, %v9263, 0
    %11291 = vmatpush.bf16.msra.mxu0 0
    %11292 = vmatpush.bf16.msra.mxu0 0
    %11293 = vmatpush.bf16.msra.mxu0 0
    %11294 = vmatpush.bf16.msra.mxu0 0
    %11295 = vmatpush.bf16.msra.mxu0 %v11283
    %11296 = vmatpush.bf16.msra.mxu0 %v11282
    %11297 = vmatpush.bf16.msra.mxu0 %v11281
    %11298 = vmatpush.bf16.msra.mxu0 %v11280
    %11299 = vmatmul.bf16.gmra.mxu0 %v11289
    %v11300 = vpop.f32.mrf.mxu0
    %v11301 = vadd.f32 0.0, %v11300
    %v11302 = vpop.f32.mrf.mxu0
    %11303 = vdwg.mxu0
    %v11312 = vunpack.c.l.b16 %v9600
    %v11313 = vunpack.c.l.b16 %v9601
    %v11314 = vunpack.c.l.b16 %v9602
    %v11315 = vunpack.c.l.b16 %v9603
    %v11316 = vunpack.c.l.b16 %v9604
    %v11317 = vunpack.c.l.b16 %v9605
    %v11318 = vunpack.c.l.b16 %v9606
    %v11319 = vunpack.c.l.b16 %v9607
    %v11320 = vpack.c.b16 %v11313, %v11312
    %v11321 = vpack.c.b16 %v11315, %v11314
    %v11322 = vpack.c.b16 %v11317, %v11316
    %v11323 = vpack.c.b16 %v11319, %v11318
    %v11329 = vsel %vm788, %v9264, 0
    %11331 = vmatpush.bf16.msra.mxu0 0
    %11332 = vmatpush.bf16.msra.mxu0 0
    %11333 = vmatpush.bf16.msra.mxu0 0
    %11334 = vmatpush.bf16.msra.mxu0 0
    %11335 = vmatpush.bf16.msra.mxu0 %v11323
    %11336 = vmatpush.bf16.msra.mxu0 %v11322
    %11337 = vmatpush.bf16.msra.mxu0 %v11321
    %11338 = vmatpush.bf16.msra.mxu0 %v11320
    %11339 = vmatmul.bf16.gmra.mxu0 %v11329
    %v11340 = vpop.f32.mrf.mxu0
    %v11341 = vadd.f32 0.0, %v11340
    %v11342 = vpop.f32.mrf.mxu0
    %11343 = vdwg.mxu0
    %v11352 = vunpack.c.l.b16 %v9608
    %v11353 = vunpack.c.l.b16 %v9609
    %v11354 = vunpack.c.l.b16 %v9610
    %v11355 = vunpack.c.l.b16 %v9611
    %v11356 = vunpack.c.l.b16 %v9612
    %v11357 = vunpack.c.l.b16 %v9613
    %v11358 = vunpack.c.l.b16 %v9614
    %v11359 = vunpack.c.l.b16 %v9615
    %v11360 = vpack.c.b16 %v11353, %v11352
    %v11361 = vpack.c.b16 %v11355, %v11354
    %v11362 = vpack.c.b16 %v11357, %v11356
    %v11363 = vpack.c.b16 %v11359, %v11358
    %v11369 = vsel %vm788, %v9265, 0
    %11371 = vmatpush.bf16.msra.mxu0 0
    %11372 = vmatpush.bf16.msra.mxu0 0
    %11373 = vmatpush.bf16.msra.mxu0 0
    %11374 = vmatpush.bf16.msra.mxu0 0
    %11375 = vmatpush.bf16.msra.mxu0 %v11363
    %11376 = vmatpush.bf16.msra.mxu0 %v11362
    %11377 = vmatpush.bf16.msra.mxu0 %v11361
    %11378 = vmatpush.bf16.msra.mxu0 %v11360
    %11379 = vmatmul.bf16.gmra.mxu0 %v11369
    %v11380 = vpop.f32.mrf.mxu0
    %v11381 = vadd.f32 0.0, %v11380
    %v11382 = vpop.f32.mrf.mxu0
    %11383 = vdwg.mxu0
    %v11392 = vunpack.c.l.b16 %v9616
    %v11393 = vunpack.c.l.b16 %v9617
    %v11394 = vunpack.c.l.b16 %v9618
    %v11395 = vunpack.c.l.b16 %v9619
    %v11396 = vunpack.c.l.b16 %v9620
    %v11397 = vunpack.c.l.b16 %v9621
    %v11398 = vunpack.c.l.b16 %v9622
    %v11399 = vunpack.c.l.b16 %v9623
    %v11400 = vpack.c.b16 %v11393, %v11392
    %v11401 = vpack.c.b16 %v11395, %v11394
    %v11402 = vpack.c.b16 %v11397, %v11396
    %v11403 = vpack.c.b16 %v11399, %v11398
    %v11409 = vsel %vm788, %v9266, 0
    %11411 = vmatpush.bf16.msra.mxu0 0
    %11412 = vmatpush.bf16.msra.mxu0 0
    %11413 = vmatpush.bf16.msra.mxu0 0
    %11414 = vmatpush.bf16.msra.mxu0 0
    %11415 = vmatpush.bf16.msra.mxu0 %v11403
    %11416 = vmatpush.bf16.msra.mxu0 %v11402
    %11417 = vmatpush.bf16.msra.mxu0 %v11401
    %11418 = vmatpush.bf16.msra.mxu0 %v11400
    %11419 = vmatmul.bf16.gmra.mxu0 %v11409
    %v11420 = vpop.f32.mrf.mxu0
    %v11421 = vadd.f32 0.0, %v11420
    %v11422 = vpop.f32.mrf.mxu0
    %11423 = vdwg.mxu0
    %v11432 = vunpack.c.l.b16 %v9624
    %v11433 = vunpack.c.l.b16 %v9625
    %v11434 = vunpack.c.l.b16 %v9626
    %v11435 = vunpack.c.l.b16 %v9627
    %v11436 = vunpack.c.l.b16 %v9628
    %v11437 = vunpack.c.l.b16 %v9629
    %v11438 = vunpack.c.l.b16 %v9630
    %v11439 = vunpack.c.l.b16 %v9631
    %v11440 = vpack.c.b16 %v11433, %v11432
    %v11441 = vpack.c.b16 %v11435, %v11434
    %v11442 = vpack.c.b16 %v11437, %v11436
    %v11443 = vpack.c.b16 %v11439, %v11438
    %v11449 = vsel %vm788, %v9267, 0
    %11451 = vmatpush.bf16.msra.mxu0 0
    %11452 = vmatpush.bf16.msra.mxu0 0
    %11453 = vmatpush.bf16.msra.mxu0 0
    %11454 = vmatpush.bf16.msra.mxu0 0
    %11455 = vmatpush.bf16.msra.mxu0 %v11443
    %11456 = vmatpush.bf16.msra.mxu0 %v11442
    %11457 = vmatpush.bf16.msra.mxu0 %v11441
    %11458 = vmatpush.bf16.msra.mxu0 %v11440
    %11459 = vmatmul.bf16.gmra.mxu0 %v11449
    %v11460 = vpop.f32.mrf.mxu0
    %v11461 = vadd.f32 0.0, %v11460
    %v11462 = vpop.f32.mrf.mxu0
    %11463 = vdwg.mxu0
    %v11472 = vunpack.c.l.b16 %v9632
    %v11473 = vunpack.c.l.b16 %v9633
    %v11474 = vunpack.c.l.b16 %v9634
    %v11475 = vunpack.c.l.b16 %v9635
    %v11476 = vunpack.c.l.b16 %v9636
    %v11477 = vunpack.c.l.b16 %v9637
    %v11478 = vunpack.c.l.b16 %v9638
    %v11479 = vunpack.c.l.b16 %v9639
    %v11480 = vpack.c.b16 %v11473, %v11472
    %v11481 = vpack.c.b16 %v11475, %v11474
    %v11482 = vpack.c.b16 %v11477, %v11476
    %v11483 = vpack.c.b16 %v11479, %v11478
    %v11489 = vsel %vm788, %v9268, 0
    %11491 = vmatpush.bf16.msra.mxu0 0
    %11492 = vmatpush.bf16.msra.mxu0 0
    %11493 = vmatpush.bf16.msra.mxu0 0
    %11494 = vmatpush.bf16.msra.mxu0 0
    %11495 = vmatpush.bf16.msra.mxu0 %v11483
    %11496 = vmatpush.bf16.msra.mxu0 %v11482
    %11497 = vmatpush.bf16.msra.mxu0 %v11481
    %11498 = vmatpush.bf16.msra.mxu0 %v11480
    %11499 = vmatmul.bf16.gmra.mxu0 %v11489
    %v11500 = vpop.f32.mrf.mxu0
    %v11501 = vadd.f32 0.0, %v11500
    %v11502 = vpop.f32.mrf.mxu0
    %11503 = vdwg.mxu0
    %v11512 = vunpack.c.l.b16 %v9640
    %v11513 = vunpack.c.l.b16 %v9641
    %v11514 = vunpack.c.l.b16 %v9642
    %v11515 = vunpack.c.l.b16 %v9643
    %v11516 = vunpack.c.l.b16 %v9644
    %v11517 = vunpack.c.l.b16 %v9645
    %v11518 = vunpack.c.l.b16 %v9646
    %v11519 = vunpack.c.l.b16 %v9647
    %v11520 = vpack.c.b16 %v11513, %v11512
    %v11521 = vpack.c.b16 %v11515, %v11514
    %v11522 = vpack.c.b16 %v11517, %v11516
    %v11523 = vpack.c.b16 %v11519, %v11518
    %v11529 = vsel %vm788, %v9269, 0
    %11531 = vmatpush.bf16.msra.mxu0 0
    %11532 = vmatpush.bf16.msra.mxu0 0
    %11533 = vmatpush.bf16.msra.mxu0 0
    %11534 = vmatpush.bf16.msra.mxu0 0
    %11535 = vmatpush.bf16.msra.mxu0 %v11523
    %11536 = vmatpush.bf16.msra.mxu0 %v11522
    %11537 = vmatpush.bf16.msra.mxu0 %v11521
    %11538 = vmatpush.bf16.msra.mxu0 %v11520
    %11539 = vmatmul.bf16.gmra.mxu0 %v11529
    %v11540 = vpop.f32.mrf.mxu0
    %v11541 = vadd.f32 0.0, %v11540
    %v11542 = vpop.f32.mrf.mxu0
    %11543 = vdwg.mxu0
    %v11552 = vunpack.c.l.b16 %v9648
    %v11553 = vunpack.c.l.b16 %v9649
    %v11554 = vunpack.c.l.b16 %v9650
    %v11555 = vunpack.c.l.b16 %v9651
    %v11556 = vunpack.c.l.b16 %v9652
    %v11557 = vunpack.c.l.b16 %v9653
    %v11558 = vunpack.c.l.b16 %v9654
    %v11559 = vunpack.c.l.b16 %v9655
    %v11560 = vpack.c.b16 %v11553, %v11552
    %v11561 = vpack.c.b16 %v11555, %v11554
    %v11562 = vpack.c.b16 %v11557, %v11556
    %v11563 = vpack.c.b16 %v11559, %v11558
    %v11569 = vsel %vm788, %v9270, 0
    %11571 = vmatpush.bf16.msra.mxu0 0
    %11572 = vmatpush.bf16.msra.mxu0 0
    %11573 = vmatpush.bf16.msra.mxu0 0
    %11574 = vmatpush.bf16.msra.mxu0 0
    %11575 = vmatpush.bf16.msra.mxu0 %v11563
    %11576 = vmatpush.bf16.msra.mxu0 %v11562
    %11577 = vmatpush.bf16.msra.mxu0 %v11561
    %11578 = vmatpush.bf16.msra.mxu0 %v11560
    %11579 = vmatmul.bf16.gmra.mxu0 %v11569
    %v11580 = vpop.f32.mrf.mxu0
    %v11581 = vadd.f32 0.0, %v11580
    %v11582 = vpop.f32.mrf.mxu0
    %11583 = vdwg.mxu0
    %v11592 = vunpack.c.l.b16 %v9656
    %v11593 = vunpack.c.l.b16 %v9657
    %v11594 = vunpack.c.l.b16 %v9658
    %v11595 = vunpack.c.l.b16 %v9659
    %v11596 = vunpack.c.l.b16 %v9660
    %v11597 = vunpack.c.l.b16 %v9661
    %v11598 = vunpack.c.l.b16 %v9662
    %v11599 = vunpack.c.l.b16 %v9663
    %v11600 = vpack.c.b16 %v11593, %v11592
    %v11601 = vpack.c.b16 %v11595, %v11594
    %v11602 = vpack.c.b16 %v11597, %v11596
    %v11603 = vpack.c.b16 %v11599, %v11598
    %v11609 = vsel %vm788, %v9271, 0
    %11611 = vmatpush.bf16.msra.mxu0 0
    %11612 = vmatpush.bf16.msra.mxu0 0
    %11613 = vmatpush.bf16.msra.mxu0 0
    %11614 = vmatpush.bf16.msra.mxu0 0
    %11615 = vmatpush.bf16.msra.mxu0 %v11603
    %11616 = vmatpush.bf16.msra.mxu0 %v11602
    %11617 = vmatpush.bf16.msra.mxu0 %v11601
    %11618 = vmatpush.bf16.msra.mxu0 %v11600
    %11619 = vmatmul.bf16.gmra.mxu0 %v11609
    %v11620 = vpop.f32.mrf.mxu0
    %v11621 = vadd.f32 0.0, %v11620
    %v11622 = vpop.f32.mrf.mxu0
    %11623 = vdwg.mxu0
    %v11624 = vsel %vm5667, %v9701, 0.0
    %v11625 = vsel %vm5667, %v9741, 0.0
    %v11626 = vadd.f32 %v11624, %v11625
    %v11627 = vsel %vm5667, %v9781, 0.0
    %v11628 = vadd.f32 %v11626, %v11627
    %v11629 = vsel %vm5667, %v9821, 0.0
    %v11630 = vadd.f32 %v11628, %v11629
    %v11631 = vsel %vm5667, %v9861, 0.0
    %v11632 = vadd.f32 %v11630, %v11631
    %v11633 = vsel %vm5667, %v9901, 0.0
    %v11634 = vadd.f32 %v11632, %v11633
    %v11635 = vsel %vm5667, %v9941, 0.0
    %v11636 = vadd.f32 %v11634, %v11635
    %v11637 = vsel %vm5667, %v9981, 0.0
    %v11638 = vadd.f32 %v11636, %v11637
    %v11639 = vsel %vm5667, %v10021, 0.0
    %v11640 = vadd.f32 %v11638, %v11639
    %v11641 = vsel %vm5667, %v10061, 0.0
    %v11642 = vadd.f32 %v11640, %v11641
    %v11643 = vsel %vm5667, %v10101, 0.0
    %v11644 = vadd.f32 %v11642, %v11643
    %v11645 = vsel %vm5667, %v10141, 0.0
    %v11646 = vadd.f32 %v11644, %v11645
    %v11647 = vsel %vm5667, %v10181, 0.0
    %v11648 = vadd.f32 %v11646, %v11647
    %v11649 = vsel %vm5667, %v10221, 0.0
    %v11650 = vadd.f32 %v11648, %v11649
    %v11651 = vsel %vm5667, %v10261, 0.0
    %v11652 = vadd.f32 %v11650, %v11651
    %v11653 = vsel %vm5667, %v10301, 0.0
    %v11654 = vadd.f32 %v11652, %v11653
    %v11655 = vsel %vm5667, %v10341, 0.0
    %v11656 = vadd.f32 %v11654, %v11655
    %v11657 = vsel %vm5667, %v10381, 0.0
    %v11658 = vadd.f32 %v11656, %v11657
    %v11659 = vsel %vm5667, %v10421, 0.0
    %v11660 = vadd.f32 %v11658, %v11659
    %v11661 = vsel %vm5667, %v10461, 0.0
    %v11662 = vadd.f32 %v11660, %v11661
    %v11663 = vsel %vm5667, %v10501, 0.0
    %v11664 = vadd.f32 %v11662, %v11663
    %v11665 = vsel %vm5667, %v10541, 0.0
    %v11666 = vadd.f32 %v11664, %v11665
    %v11667 = vsel %vm5667, %v10581, 0.0
    %v11668 = vadd.f32 %v11666, %v11667
    %v11669 = vsel %vm5667, %v10621, 0.0
    %v11670 = vadd.f32 %v11668, %v11669
    %v11671 = vsel %vm5667, %v10661, 0.0
    %v11672 = vadd.f32 %v11670, %v11671
    %v11673 = vsel %vm5667, %v10701, 0.0
    %v11674 = vadd.f32 %v11672, %v11673
    %v11675 = vsel %vm5667, %v10741, 0.0
    %v11676 = vadd.f32 %v11674, %v11675
    %v11677 = vsel %vm5667, %v10781, 0.0
    %v11678 = vadd.f32 %v11676, %v11677
    %v11679 = vsel %vm5667, %v10821, 0.0
    %v11680 = vadd.f32 %v11678, %v11679
    %v11681 = vsel %vm5667, %v10861, 0.0
    %v11682 = vadd.f32 %v11680, %v11681
    %v11683 = vsel %vm5667, %v10901, 0.0
    %v11684 = vadd.f32 %v11682, %v11683
    %v11685 = vsel %vm5667, %v10941, 0.0
    %v11686 = vadd.f32 %v11684, %v11685
    %v11687 = vsel %vm5667, %v10981, 0.0
    %v11688 = vadd.f32 %v11686, %v11687
    %v11689 = vsel %vm5667, %v11021, 0.0
    %v11690 = vadd.f32 %v11688, %v11689
    %v11691 = vsel %vm5667, %v11061, 0.0
    %v11692 = vadd.f32 %v11690, %v11691
    %v11693 = vsel %vm5667, %v11101, 0.0
    %v11694 = vadd.f32 %v11692, %v11693
    %v11695 = vsel %vm5667, %v11141, 0.0
    %v11696 = vadd.f32 %v11694, %v11695
    %v11697 = vsel %vm5667, %v11181, 0.0
    %v11698 = vadd.f32 %v11696, %v11697
    %v11699 = vsel %vm5667, %v11221, 0.0
    %v11700 = vadd.f32 %v11698, %v11699
    %v11701 = vsel %vm5667, %v11261, 0.0
    %v11702 = vadd.f32 %v11700, %v11701
    %v11703 = vsel %vm5667, %v11301, 0.0
    %v11704 = vadd.f32 %v11702, %v11703
    %v11705 = vsel %vm5667, %v11341, 0.0
    %v11706 = vadd.f32 %v11704, %v11705
    %v11707 = vsel %vm5667, %v11381, 0.0
    %v11708 = vadd.f32 %v11706, %v11707
    %v11709 = vsel %vm5667, %v11421, 0.0
    %v11710 = vadd.f32 %v11708, %v11709
    %v11711 = vsel %vm5667, %v11461, 0.0
    %v11712 = vadd.f32 %v11710, %v11711
    %v11713 = vsel %vm5667, %v11501, 0.0
    %v11714 = vadd.f32 %v11712, %v11713
    %v11715 = vsel %vm5667, %v11541, 0.0
    %v11716 = vadd.f32 %v11714, %v11715
    %v11717 = vsel %vm5667, %v11581, 0.0
    %v11718 = vadd.f32 %v11716, %v11717
    %v11719 = vsel %vm5667, %v11621, 0.0
    %v11720 = vadd.f32 %v11718, %v11719
    %v11721 = vld [vmem:[%s8] sm:$0x1]
    %v11723 = vperm.slane %v11721, 0
    %v11725 = vadd.f32 %v11720, %v11723
    %v11726 = vmax.f32 %v11725, 0.0
    %v11727 = vpack.c.bf16 %v11726, %v11726
    %v11728 = vld [vmem:[%s9] sm:$0xf]
    %v11729 = vld [vmem:[%s9 + $0x4] sm:$0xf]
    %v11730 = vld [vmem:[%s9 + $0x8] sm:$0xf]
    %v11731 = vld [vmem:[%s9 + $0xc] sm:$0xf]
    %v11732 = vld [vmem:[%s9 + $0x10] sm:$0xf]
    %v11733 = vld [vmem:[%s9 + $0x14] sm:$0xf]
    %v11734 = vld [vmem:[%s9 + $0x18] sm:$0xf]
    %v11735 = vld [vmem:[%s9 + $0x1c] sm:$0xf]
    %v11736 = vld [vmem:[%s10] sm:$0x1]
    %v11738 = vperm.slane %v11736, 0
    %v11748 = vunpack.c.l.b16 %v11728
    %v11749 = vunpack.c.l.b16 %v11729
    %v11750 = vunpack.c.l.b16 %v11730
    %v11751 = vunpack.c.l.b16 %v11731
    %v11752 = vunpack.c.l.b16 %v11732
    %v11753 = vunpack.c.l.b16 %v11733
    %v11754 = vunpack.c.l.b16 %v11734
    %v11755 = vunpack.c.l.b16 %v11735
    %v11756 = vpack.c.b16 %v11749, %v11748
    %v11757 = vpack.c.b16 %v11751, %v11750
    %v11758 = vpack.c.b16 %v11753, %v11752
    %v11759 = vpack.c.b16 %v11755, %v11754
    %v11765 = vsel %vm788, %v11727, 0
    %11767 = vmatpush.bf16.msra.mxu0 0
    %11768 = vmatpush.bf16.msra.mxu0 0
    %11769 = vmatpush.bf16.msra.mxu0 0
    %11770 = vmatpush.bf16.msra.mxu0 0
    %11771 = vmatpush.bf16.msra.mxu0 %v11759
    %11772 = vmatpush.bf16.msra.mxu0 %v11758
    %11773 = vmatpush.bf16.msra.mxu0 %v11757
    %11774 = vmatpush.bf16.msra.mxu0 %v11756
    %11775 = vmatmul.bf16.gmra.mxu0 %v11765
    %v11776 = vpop.f32.mrf.mxu0
    %v11777 = vadd.f32 %v11738, %v11776
    %v11778 = vpop.f32.mrf.mxu0
    %11779 = vdwg.mxu0
    %vm11780 = vcmask 74752
    %11781 = vst.msk [vmem:[#allocation2] sm:$0x3] %vm11780, %v11777
    // Predicated region
    $region46: #{neural_net_forward.1} parent=1 // pred_check
      _
    $region47: #{neural_net_forward.1} parent=1 // pred_check_branch
      %11783 = sbr.rel (0) target = $region49
    $region48: #{neural_net_forward.1} parent=1 // pred_region
      %11785 = vsyncadd [#allocation3], 0
      %s11787 = sshll.u32 [#allocation2], 4
      %s11788 = int_to_ptr.vmem [resolvable:$true] %s11787
      %s11789 = sshll.u32 %s11, 4
      %s11790 = int_to_ptr.hbm [resolvable:$true] %s11789
      %11792 = dma.vmem_to_hbm [thread:$0]  %s11788, 32, %s11790, [#allocation3]
    $region49: #{neural_net_forward.1} parent=1 // pred_fallthru
      _
    // Predicated region
    $region50: #{neural_net_forward.1} parent=1 // pred_check
      _
    $region51: #{neural_net_forward.1} parent=1 // pred_check_branch
      %11794 = sbr.rel (0) target = $region53
    $region52: #{neural_net_forward.1} parent=1 // pred_region
      _
    $region53: #{neural_net_forward.1} parent=1 // pred_fallthru
      _
    // Predicated region
    $region54: #{neural_net_forward.1} parent=1 // pred_check
      _
    $region55: #{neural_net_forward.1} parent=1 // pred_check_branch
      %11796 = sbr.rel (0) target = $region57
    $region56: #{neural_net_forward.1} parent=1 // pred_region
      _
    $region57: #{neural_net_forward.1} parent=1 // pred_fallthru
      _
    // Predicated region
    $region58: #{neural_net_forward.1} parent=1 // pred_check
      _
    $region59: #{neural_net_forward.1} parent=1 // pred_check_branch
      %11798 = sbr.rel (0) target = $region61
    $region60: #{neural_net_forward.1} parent=1 // pred_region
      %11800 = dma.done [#allocation3], 32
    $region61: #{neural_net_forward.1} parent=1 // pred_fallthru
      _
    // Predicated region
    $region62: #{neural_net_forward.1} parent=1 // pred_check
      _
    $region63: #{neural_net_forward.1} parent=1 // pred_check_branch
      %11802 = sbr.rel (0) target = $region65
    $region64: #{neural_net_forward.1} parent=1 // pred_region
      _
    $region65: #{neural_net_forward.1} parent=1 // pred_fallthru
      _
    // Predicated region
    $region66: #{neural_net_forward.1} parent=1 // pred_check
      _
    $region67: #{neural_net_forward.1} parent=1 // pred_check_branch
      %11804 = sbr.rel (0) target = $region69
    $region68: #{neural_net_forward.1} parent=1 // pred_region
      _
    $region69: #{neural_net_forward.1} parent=1 // pred_fallthru
      _
    %11805 = vsyncpa [#allocation3], 1

</llo_original>
